<compile_context>
chip_gen: v6e
topology: v6e:2x2x1
jax: 0.10.0
libtpu: 0.0.40
codegen_flags: <defaults>
</compile_context>

<pallas_src>
import functools

import jax
import jax.numpy as jnp
from jax.experimental import pallas as pl
from jax.experimental.pallas import tpu as pltpu

LANE = 128
PADL = 16  # interior start column; multiple of 16 => aligned bf16 (16,128) stores


def _round_up(x, m):
    return (x + m - 1) // m * m


def _fused_bfs_kernel(*refs, H, W, cin_raw, cins, couts):
    # refs = (x, w_0..w_{L-1}, b_0..b_{L-1}, o, act_a, act_b, col)
    # x     : (Bt, H, W, cin_raw)            f32  raw input tile (true channels)
    # w_l   : (9*cins[l], couts[l])          bf16 per-layer zero-padded HWIO weight
    # b_l   : (1, couts[l])                  f32  per-layer zero-padded bias
    # o     : (Bt, H, W, couts[-1])          f32  lane-dense logits (sliced outside)
    # act_a/act_b : (Bt, H+2, PADL+W+1, cact) bf16 ping-pong padded activations
    # col   : (Bt*H*W, 9*max(cins))          bf16 im2col slab
    n_layers = len(couts)
    x_ref = refs[0]
    w_refs = refs[1:1 + n_layers]
    b_refs = refs[1 + n_layers:1 + 2 * n_layers]
    o_ref = refs[1 + 2 * n_layers]
    act_a, act_b, col_ref = refs[2 + 2 * n_layers:]

    bf = jnp.bfloat16
    Bt = x_ref.shape[0]
    M = Bt * H * W
    cact = act_a.shape[3]

    # --- zero ONLY the 1-wide SAME border frame the 3x3 windows actually read.
    # Interiors are fully rewritten every layer and scratch persists across grid
    # steps, so this replaces the old two full-buffer zero passes per step.
    zrow = jnp.zeros((Bt, 1, W + 2, cact), bf)
    zcol = jnp.zeros((Bt, H, 1, cact), bf)
    for buf in (act_a, act_b):
        buf[:, 0:1, PADL - 1:PADL + W + 1, :] = zrow
        buf[:, H + 1:H + 2, PADL - 1:PADL + W + 1, :] = zrow
        buf[:, 1:H + 1, PADL - 1:PADL, :] = zcol
        buf[:, 1:H + 1, PADL + W:PADL + W + 1, :] = zcol

    # --- in-kernel channel pad + bf16 cast of the raw input tile, one aligned
    # interior store (wrapper no longer pads the input in HBM).
    x_bf = x_ref[...].astype(bf)
    if cins[0] > cin_raw:
        x_bf = jnp.concatenate(
            [x_bf, jnp.zeros((Bt, H, W, cins[0] - cin_raw), bf)], axis=-1)
    act_a[:, 1:H + 1, PADL:PADL + W, :cins[0]] = x_bf

    src, dst = act_a, act_b
    for l in range(n_layers):
        cpi, cpo = cins[l], couts[l]
        # im2col: write the 9 shifted (M, cpi) windows straight into the bf16
        # slab (lane offsets are multiples of 128 -> unmasked aligned stores),
        # then ONE deep MXU matmul with K = 9*cpi. Accumulation is f32.
        for k in range(9):
            dy, dx = divmod(k, 3)
            c0 = PADL - 1 + dx
            patch = src[:, dy:dy + H, c0:c0 + W, :cpi]        # (Bt,H,W,cpi) bf16
            col_ref[:, k * cpi:(k + 1) * cpi] = patch.reshape(M, cpi)
        im2col = col_ref[:, :9 * cpi]                         # (M, 9*cpi) bf16
        y = jnp.dot(im2col, w_refs[l][...], preferred_element_type=jnp.float32)
        y = y + b_refs[l][...]                                # (1, cpo) f32 bias

        if l < n_layers - 1:
            y = jnp.maximum(y, 0.0).astype(bf)                # ReLU (not last)
            # Aligned interior store into the other ping-pong buffer.
            dst[:, 1:H + 1, PADL:PADL + W, :cpo] = y.reshape(Bt, H, W, cpo)
            src, dst = dst, src
        else:
            # Lane-dense (cpo = k*128) final f32 store; wrapper slices channels.
            o_ref[...] = y.reshape(Bt, H, W, cpo)


def _pick_batch_tile(B, H, W, per_batch_bytes, fixed_bytes, budget):
    """Smallest divisor of B whose M=bt*H*W >= 512, preferring grid >= 2."""
    target_m = 512
    divisors = [d for d in range(1, B + 1) if B % d == 0]

    def fits(bt):
        return fixed_bytes + bt * per_batch_bytes <= budget

    # Prefer grid length >= 2 so v7x's two TensorCores both get work.
    cands = [d for d in divisors if B // d >= 2 and fits(d)]
    if not cands:
        cands = [d for d in divisors if fits(d)] or [1]
    for d in cands:                 # smallest tile that fills the MXU
        if d * H * W >= target_m:
            return d
    return cands[-1]                # otherwise largest VMEM-feasible tile


def procedure_cloning_bfs_forward(x, params):
    """x: (B, H, W, C_obs) NHWC -> {'logit': (B, H, W, action_shape + 1)}."""
    B, H, W, cin = x.shape
    n_layers = len(params)
    cins_raw = [w.shape[2] for w, _ in params]
    couts_raw = [w.shape[3] for w, _ in params]
    assert cins_raw[0] == cin
    cout_final = couts_raw[-1]

    # Per-layer channel padding: each layer's cin/cout rounded to 128
    # individually (no global max pad -> no MAC blow-up on mixed 128/256 stacks).
    cins = [_round_up(c, LANE) for c in cins_raw]
    couts = [_round_up(c, LANE) for c in couts_raw]

    w_ops, b_ops = [], []
    for l, (w, b) in enumerate(params):
        kh, kw, ci, co = w.shape
        wp = jnp.zeros((kh, kw, cins[l], couts[l]), jnp.float32)
        wp = wp.at[:, :, :ci, :co].set(w)
        w_ops.append(wp.reshape(kh * kw * cins[l], couts[l]).astype(jnp.bfloat16))
        b_ops.append(jnp.zeros((1, couts[l]), jnp.float32).at[0, :co].set(b))

    cact = max([cins[0]] + couts[:-1]) if n_layers > 1 else cins[0]
    ccol = 9 * max(cins)
    Wp = PADL + W + 1

    # VMEM accounting (bytes) — includes the im2col slab and f32 temporaries.
    fixed = (sum(w.size * 2 for w in w_ops) + sum(b.size * 4 for b in b_ops)) * 2
    per_batch = (
        2 * (H + 2) * Wp * cact * 2                # bf16 ping-pong activations
        + H * W * ccol * 2                         # bf16 im2col slab
        + 2 * H * W * cin * 4                      # double-buffered input block
        + 2 * H * W * couts[-1] * 4                # double-buffered output block
        + 3 * H * W * max(cact, couts[-1]) * 4     # patch copies + f32 accumulator
    )
    budget = 44 * 1024 * 1024                      # headroom under v7x's 64 MiB
    bt = _pick_batch_tile(B, H, W, per_batch, fixed, budget)
    grid = (B // bt,)
    vmem_limit = int(min(56 * 1024 * 1024,
                         max(32 * 1024 * 1024, 2 * (fixed + bt * per_batch))))

    kernel = functools.partial(
        _fused_bfs_kernel, H=H, W=W, cin_raw=cin,
        cins=tuple(cins), couts=tuple(couts))

    in_specs = (
        [pl.BlockSpec((bt, H, W, cin), lambda bi: (bi, 0, 0, 0))]
        + [pl.BlockSpec(w.shape, lambda bi: (0, 0)) for w in w_ops]
        + [pl.BlockSpec(b.shape, lambda bi: (0, 0)) for b in b_ops]
    )

    out = pl.pallas_call(
        kernel,
        out_shape=jax.ShapeDtypeStruct((B, H, W, couts[-1]), jnp.float32),
        grid=grid,
        in_specs=in_specs,
        out_specs=pl.BlockSpec((bt, H, W, couts[-1]), lambda bi: (bi, 0, 0, 0)),
        scratch_shapes=[
            pltpu.VMEM((bt, H + 2, Wp, cact), jnp.bfloat16),
            pltpu.VMEM((bt, H + 2, Wp, cact), jnp.bfloat16),
            pltpu.VMEM((bt * H * W, ccol), jnp.bfloat16),
        ],
        compiler_params=pltpu.CompilerParams(
            dimension_semantics=("parallel",),
            vmem_limit_bytes=vmem_limit,
        ),
    )(x, *w_ops, *b_ops)

    # TODO(synk): the 128 -> (action_shape+1) channel slice is one extra HBM
    # pass; fuse it into the consumer when integrating into a larger model.
    return {"logit": out[..., :cout_final]}


def init_params(key, obs_channels, hidden_size_list, action_shape):
    # Mirrors ProcedureCloningBFS.__init__:
    # encoder_hidden_size_list + [action_shape + 1] conv layers, all 3x3/s1/p1.
    channels = [obs_channels] + list(hidden_size_list) + [action_shape + 1]
    params = []
    for i in range(len(channels) - 1):
        key, kw, kb = jax.random.split(key, 3)
        cin, cout = channels[i], channels[i + 1]
        w = jax.random.normal(kw, (3, 3, cin, cout), jnp.float32) * 0.1
        bias = jax.random.normal(kb, (cout,), jnp.float32) * 0.01
        params.append((w, bias))
    return params


def _reference_forward(x, params):
    # Pure-JAX reference matching the kernel's numerics: bf16 MXU inputs with
    # f32 accumulation, f32 bias/ReLU, bf16 inter-layer activations.
    h = x.astype(jnp.bfloat16)
    n = len(params)
    y = None
    for i, (w, b) in enumerate(params):
        y = jax.lax.conv_general_dilated(
            h, w.astype(jnp.bfloat16), window_strides=(1, 1), padding="SAME",
            dimension_numbers=("NHWC", "HWIO", "NHWC"),
            preferred_element_type=jnp.float32)
        y = y + b
        if i < n - 1:
            h = jnp.maximum(y, 0.0).astype(jnp.bfloat16)
    return y


if __name__ == "__main__":
    key = jax.random.PRNGKey(0)
    B, H, W = 2, 8, 8
    obs_channels = 4
    hidden_size_list = [8, 8, 16, 16]  # scaled-down analogue of [128,128,256,256]
    action_shape = 3                   # final conv channels = action_shape + 1 = 4

    key, kx, kp = jax.random.split(key, 3)
    x = jax.random.normal(kx, (B, H, W, obs_channels), jnp.float32)
    params = init_params(kp, obs_channels, hidden_size_list, action_shape)

    out = procedure_cloning_bfs_forward(x, params)
    logit = jax.block_until_ready(out["logit"])
    assert logit.shape == (B, H, W, action_shape + 1), logit.shape

    ref = _reference_forward(x, params)
    max_err = float(jnp.max(jnp.abs(logit - ref)))
    assert max_err < 2e-2, max_err

    print("KERNEL_OK")
</pallas_src>

<mosaic_0001>
module attributes {stable_mosaic.version = 11 : i64} {
  func.func @_fused_bfs_kernel(%arg0: i32, %arg1: memref<1x8x8x4xf32, #tpu.memory_space<vmem>>, %arg2: memref<1152x128xbf16, #tpu.memory_space<vmem>>, %arg3: memref<1152x128xbf16, #tpu.memory_space<vmem>>, %arg4: memref<1152x128xbf16, #tpu.memory_space<vmem>>, %arg5: memref<1152x128xbf16, #tpu.memory_space<vmem>>, %arg6: memref<1152x128xbf16, #tpu.memory_space<vmem>>, %arg7: memref<1x128xf32, #tpu.memory_space<vmem>>, %arg8: memref<1x128xf32, #tpu.memory_space<vmem>>, %arg9: memref<1x128xf32, #tpu.memory_space<vmem>>, %arg10: memref<1x128xf32, #tpu.memory_space<vmem>>, %arg11: memref<1x128xf32, #tpu.memory_space<vmem>>, %arg12: memref<1x8x8x128xf32, #tpu.memory_space<vmem>>, %arg13: memref<1x10x25x128xbf16, #tpu.memory_space<vmem>>, %arg14: memref<1x10x25x128xbf16, #tpu.memory_space<vmem>>, %arg15: memref<64x1152xbf16, #tpu.memory_space<vmem>>) attributes {dimension_semantics = [#tpu.dimension_semantics<parallel>], iteration_bounds = array<i64: 2>, scalar_prefetch = 0 : i64, scratch_operands = 3 : i64, tpu.core_type = #tpu.core_type<tc>, window_params = [{transform_indices = @transform_0, window_bounds = array<i64: 1, 8, 8, 4>}, {pipeline_mode = #tpu.pipeline_mode<synchronous>, transform_indices = @transform_1, window_bounds = array<i64: 1152, 128>}, {pipeline_mode = #tpu.pipeline_mode<synchronous>, transform_indices = @transform_2, window_bounds = array<i64: 1152, 128>}, {pipeline_mode = #tpu.pipeline_mode<synchronous>, transform_indices = @transform_3, window_bounds = array<i64: 1152, 128>}, {pipeline_mode = #tpu.pipeline_mode<synchronous>, transform_indices = @transform_4, window_bounds = array<i64: 1152, 128>}, {pipeline_mode = #tpu.pipeline_mode<synchronous>, transform_indices = @transform_5, window_bounds = array<i64: 1152, 128>}, {pipeline_mode = #tpu.pipeline_mode<synchronous>, transform_indices = @transform_6, window_bounds = array<i64: 1, 128>}, {pipeline_mode = #tpu.pipeline_mode<synchronous>, transform_indices = @transform_7, window_bounds = array<i64: 1, 128>}, {pipeline_mode = #tpu.pipeline_mode<synchronous>, transform_indices = @transform_8, window_bounds = array<i64: 1, 128>}, {pipeline_mode = #tpu.pipeline_mode<synchronous>, transform_indices = @transform_9, window_bounds = array<i64: 1, 128>}, {pipeline_mode = #tpu.pipeline_mode<synchronous>, transform_indices = @transform_10, window_bounds = array<i64: 1, 128>}, {transform_indices = @transform_11, window_bounds = array<i64: 1, 8, 8, 128>}]} {
    %cst = arith.constant 0.000000e+00 : bf16
    %0 = vector.broadcast %cst : bf16 to vector<1x1x10x128xbf16>
    %cst_0 = arith.constant 0.000000e+00 : bf16
    %1 = vector.broadcast %cst_0 : bf16 to vector<1x8x1x128xbf16>
    %c0 = arith.constant 0 : index
    %c0_1 = arith.constant 0 : index
    %c15 = arith.constant 15 : index
    %c0_2 = arith.constant 0 : index
    %2 = vector.load %arg13[%c0, %c0_1, %c15, %c0_2] : memref<1x10x25x128xbf16, #tpu.memory_space<vmem>>, vector<1x1x10x128xbf16>
    tpu.vector_store %arg13[%c0, %c0_1, %c15, %c0_2], %0 {strides = array<i32>} : memref<1x10x25x128xbf16, #tpu.memory_space<vmem>>, vector<1x1x10x128xbf16>,
    %c0_3 = arith.constant 0 : index
    %c9 = arith.constant 9 : index
    %c15_4 = arith.constant 15 : index
    %c0_5 = arith.constant 0 : index
    %3 = vector.load %arg13[%c0_3, %c9, %c15_4, %c0_5] : memref<1x10x25x128xbf16, #tpu.memory_space<vmem>>, vector<1x1x10x128xbf16>
    tpu.vector_store %arg13[%c0_3, %c9, %c15_4, %c0_5], %0 {strides = array<i32>} : memref<1x10x25x128xbf16, #tpu.memory_space<vmem>>, vector<1x1x10x128xbf16>,
    %c0_6 = arith.constant 0 : index
    %c1 = arith.constant 1 : index
    %c15_7 = arith.constant 15 : index
    %c0_8 = arith.constant 0 : index
    %4 = vector.load %arg13[%c0_6, %c1, %c15_7, %c0_8] : memref<1x10x25x128xbf16, #tpu.memory_space<vmem>>, vector<1x8x1x128xbf16>
    tpu.vector_store %arg13[%c0_6, %c1, %c15_7, %c0_8], %1 {strides = array<i32>} : memref<1x10x25x128xbf16, #tpu.memory_space<vmem>>, vector<1x8x1x128xbf16>,
    %c0_9 = arith.constant 0 : index
    %c1_10 = arith.constant 1 : index
    %c24 = arith.constant 24 : index
    %c0_11 = arith.constant 0 : index
    %5 = vector.load %arg13[%c0_9, %c1_10, %c24, %c0_11] : memref<1x10x25x128xbf16, #tpu.memory_space<vmem>>, vector<1x8x1x128xbf16>
    tpu.vector_store %arg13[%c0_9, %c1_10, %c24, %c0_11], %1 {strides = array<i32>} : memref<1x10x25x128xbf16, #tpu.memory_space<vmem>>, vector<1x8x1x128xbf16>,
    %c0_12 = arith.constant 0 : index
    %c0_13 = arith.constant 0 : index
    %c15_14 = arith.constant 15 : index
    %c0_15 = arith.constant 0 : index
    %6 = vector.load %arg14[%c0_12, %c0_13, %c15_14, %c0_15] : memref<1x10x25x128xbf16, #tpu.memory_space<vmem>>, vector<1x1x10x128xbf16>
    tpu.vector_store %arg14[%c0_12, %c0_13, %c15_14, %c0_15], %0 {strides = array<i32>} : memref<1x10x25x128xbf16, #tpu.memory_space<vmem>>, vector<1x1x10x128xbf16>,
    %c0_16 = arith.constant 0 : index
    %c9_17 = arith.constant 9 : index
    %c15_18 = arith.constant 15 : index
    %c0_19 = arith.constant 0 : index
    %7 = vector.load %arg14[%c0_16, %c9_17, %c15_18, %c0_19] : memref<1x10x25x128xbf16, #tpu.memory_space<vmem>>, vector<1x1x10x128xbf16>
    tpu.vector_store %arg14[%c0_16, %c9_17, %c15_18, %c0_19], %0 {strides = array<i32>} : memref<1x10x25x128xbf16, #tpu.memory_space<vmem>>, vector<1x1x10x128xbf16>,
    %c0_20 = arith.constant 0 : index
    %c1_21 = arith.constant 1 : index
    %c15_22 = arith.constant 15 : index
    %c0_23 = arith.constant 0 : index
    %8 = vector.load %arg14[%c0_20, %c1_21, %c15_22, %c0_23] : memref<1x10x25x128xbf16, #tpu.memory_space<vmem>>, vector<1x8x1x128xbf16>
    tpu.vector_store %arg14[%c0_20, %c1_21, %c15_22, %c0_23], %1 {strides = array<i32>} : memref<1x10x25x128xbf16, #tpu.memory_space<vmem>>, vector<1x8x1x128xbf16>,
    %c0_24 = arith.constant 0 : index
    %c1_25 = arith.constant 1 : index
    %c24_26 = arith.constant 24 : index
    %c0_27 = arith.constant 0 : index
    %9 = vector.load %arg14[%c0_24, %c1_25, %c24_26, %c0_27] : memref<1x10x25x128xbf16, #tpu.memory_space<vmem>>, vector<1x8x1x128xbf16>
    tpu.vector_store %arg14[%c0_24, %c1_25, %c24_26, %c0_27], %1 {strides = array<i32>} : memref<1x10x25x128xbf16, #tpu.memory_space<vmem>>, vector<1x8x1x128xbf16>,
    %c0_28 = arith.constant 0 : index
    %c0_29 = arith.constant 0 : index
    %c0_30 = arith.constant 0 : index
    %c0_31 = arith.constant 0 : index
    %10 = vector.load %arg1[%c0_28, %c0_29, %c0_30, %c0_31] : memref<1x8x8x4xf32, #tpu.memory_space<vmem>>, vector<1x8x8x4xf32>
    %11 = arith.truncf %10 : vector<1x8x8x4xf32> to vector<1x8x8x4xbf16>
    %cst_32 = arith.constant 0.000000e+00 : bf16
    %12 = vector.broadcast %cst_32 : bf16 to vector<1x8x8x124xbf16>
    %13 = tpu.concatenate %11, %12 in 3 : vector<1x8x8x4xbf16>, vector<1x8x8x124xbf16> -> vector<1x8x8x128xbf16>
    %c0_33 = arith.constant 0 : index
    %c1_34 = arith.constant 1 : index
    %c16 = arith.constant 16 : index
    %c0_35 = arith.constant 0 : index
    %14 = vector.load %arg13[%c0_33, %c1_34, %c16, %c0_35] : memref<1x10x25x128xbf16, #tpu.memory_space<vmem>>, vector<1x8x8x128xbf16>
    tpu.vector_store %arg13[%c0_33, %c1_34, %c16, %c0_35], %13 {strides = array<i32>} : memref<1x10x25x128xbf16, #tpu.memory_space<vmem>>, vector<1x8x8x128xbf16>,
    %c0_36 = arith.constant 0 : index
    %c0_37 = arith.constant 0 : index
    %c15_38 = arith.constant 15 : index
    %c0_39 = arith.constant 0 : index
    %15 = vector.load %arg13[%c0_36, %c0_37, %c15_38, %c0_39] : memref<1x10x25x128xbf16, #tpu.memory_space<vmem>>, vector<1x8x8x128xbf16>
    %16 = vector.shape_cast %15 : vector<1x8x8x128xbf16> to vector<64x128xbf16>
    %c0_40 = arith.constant 0 : index
    %c0_41 = arith.constant 0 : index
    %17 = vector.load %arg15[%c0_40, %c0_41] : memref<64x1152xbf16, #tpu.memory_space<vmem>>, vector<64x128xbf16>
    tpu.vector_store %arg15[%c0_40, %c0_41], %16 {strides = array<i32>} : memref<64x1152xbf16, #tpu.memory_space<vmem>>, vector<64x128xbf16>,
    %c0_42 = arith.constant 0 : index
    %c0_43 = arith.constant 0 : index
    %c16_44 = arith.constant 16 : index
    %c0_45 = arith.constant 0 : index
    %18 = vector.load %arg13[%c0_42, %c0_43, %c16_44, %c0_45] : memref<1x10x25x128xbf16, #tpu.memory_space<vmem>>, vector<1x8x8x128xbf16>
    %19 = vector.shape_cast %18 : vector<1x8x8x128xbf16> to vector<64x128xbf16>
    %c0_46 = arith.constant 0 : index
    %c128 = arith.constant 128 : index
    %20 = vector.load %arg15[%c0_46, %c128] : memref<64x1152xbf16, #tpu.memory_space<vmem>>, vector<64x128xbf16>
    tpu.vector_store %arg15[%c0_46, %c128], %19 {strides = array<i32>} : memref<64x1152xbf16, #tpu.memory_space<vmem>>, vector<64x128xbf16>,
    %c0_47 = arith.constant 0 : index
    %c0_48 = arith.constant 0 : index
    %c17 = arith.constant 17 : index
    %c0_49 = arith.constant 0 : index
    %21 = vector.load %arg13[%c0_47, %c0_48, %c17, %c0_49] : memref<1x10x25x128xbf16, #tpu.memory_space<vmem>>, vector<1x8x8x128xbf16>
    %22 = vector.shape_cast %21 : vector<1x8x8x128xbf16> to vector<64x128xbf16>
    %c0_50 = arith.constant 0 : index
    %c256 = arith.constant 256 : index
    %23 = vector.load %arg15[%c0_50, %c256] : memref<64x1152xbf16, #tpu.memory_space<vmem>>, vector<64x128xbf16>
    tpu.vector_store %arg15[%c0_50, %c256], %22 {strides = array<i32>} : memref<64x1152xbf16, #tpu.memory_space<vmem>>, vector<64x128xbf16>,
    %c0_51 = arith.constant 0 : index
    %c1_52 = arith.constant 1 : index
    %c15_53 = arith.constant 15 : index
    %c0_54 = arith.constant 0 : index
    %24 = vector.load %arg13[%c0_51, %c1_52, %c15_53, %c0_54] : memref<1x10x25x128xbf16, #tpu.memory_space<vmem>>, vector<1x8x8x128xbf16>
    %25 = vector.shape_cast %24 : vector<1x8x8x128xbf16> to vector<64x128xbf16>
    %c0_55 = arith.constant 0 : index
    %c384 = arith.constant 384 : index
    %26 = vector.load %arg15[%c0_55, %c384] : memref<64x1152xbf16, #tpu.memory_space<vmem>>, vector<64x128xbf16>
    tpu.vector_store %arg15[%c0_55, %c384], %25 {strides = array<i32>} : memref<64x1152xbf16, #tpu.memory_space<vmem>>, vector<64x128xbf16>,
    %c0_56 = arith.constant 0 : index
    %c1_57 = arith.constant 1 : index
    %c16_58 = arith.constant 16 : index
    %c0_59 = arith.constant 0 : index
    %27 = vector.load %arg13[%c0_56, %c1_57, %c16_58, %c0_59] : memref<1x10x25x128xbf16, #tpu.memory_space<vmem>>, vector<1x8x8x128xbf16>
    %28 = vector.shape_cast %27 : vector<1x8x8x128xbf16> to vector<64x128xbf16>
    %c0_60 = arith.constant 0 : index
    %c512 = arith.constant 512 : index
    %29 = vector.load %arg15[%c0_60, %c512] : memref<64x1152xbf16, #tpu.memory_space<vmem>>, vector<64x128xbf16>
    tpu.vector_store %arg15[%c0_60, %c512], %28 {strides = array<i32>} : memref<64x1152xbf16, #tpu.memory_space<vmem>>, vector<64x128xbf16>,
    %c0_61 = arith.constant 0 : index
    %c1_62 = arith.constant 1 : index
    %c17_63 = arith.constant 17 : index
    %c0_64 = arith.constant 0 : index
    %30 = vector.load %arg13[%c0_61, %c1_62, %c17_63, %c0_64] : memref<1x10x25x128xbf16, #tpu.memory_space<vmem>>, vector<1x8x8x128xbf16>
    %31 = vector.shape_cast %30 : vector<1x8x8x128xbf16> to vector<64x128xbf16>
    %c0_65 = arith.constant 0 : index
    %c640 = arith.constant 640 : index
    %32 = vector.load %arg15[%c0_65, %c640] : memref<64x1152xbf16, #tpu.memory_space<vmem>>, vector<64x128xbf16>
    tpu.vector_store %arg15[%c0_65, %c640], %31 {strides = array<i32>} : memref<64x1152xbf16, #tpu.memory_space<vmem>>, vector<64x128xbf16>,
    %c0_66 = arith.constant 0 : index
    %c2 = arith.constant 2 : index
    %c15_67 = arith.constant 15 : index
    %c0_68 = arith.constant 0 : index
    %33 = vector.load %arg13[%c0_66, %c2, %c15_67, %c0_68] : memref<1x10x25x128xbf16, #tpu.memory_space<vmem>>, vector<1x8x8x128xbf16>
    %34 = vector.shape_cast %33 : vector<1x8x8x128xbf16> to vector<64x128xbf16>
    %c0_69 = arith.constant 0 : index
    %c768 = arith.constant 768 : index
    %35 = vector.load %arg15[%c0_69, %c768] : memref<64x1152xbf16, #tpu.memory_space<vmem>>, vector<64x128xbf16>
    tpu.vector_store %arg15[%c0_69, %c768], %34 {strides = array<i32>} : memref<64x1152xbf16, #tpu.memory_space<vmem>>, vector<64x128xbf16>,
    %c0_70 = arith.constant 0 : index
    %c2_71 = arith.constant 2 : index
    %c16_72 = arith.constant 16 : index
    %c0_73 = arith.constant 0 : index
    %36 = vector.load %arg13[%c0_70, %c2_71, %c16_72, %c0_73] : memref<1x10x25x128xbf16, #tpu.memory_space<vmem>>, vector<1x8x8x128xbf16>
    %37 = vector.shape_cast %36 : vector<1x8x8x128xbf16> to vector<64x128xbf16>
    %c0_74 = arith.constant 0 : index
    %c896 = arith.constant 896 : index
    %38 = vector.load %arg15[%c0_74, %c896] : memref<64x1152xbf16, #tpu.memory_space<vmem>>, vector<64x128xbf16>
    tpu.vector_store %arg15[%c0_74, %c896], %37 {strides = array<i32>} : memref<64x1152xbf16, #tpu.memory_space<vmem>>, vector<64x128xbf16>,
    %c0_75 = arith.constant 0 : index
    %c2_76 = arith.constant 2 : index
    %c17_77 = arith.constant 17 : index
    %c0_78 = arith.constant 0 : index
    %39 = vector.load %arg13[%c0_75, %c2_76, %c17_77, %c0_78] : memref<1x10x25x128xbf16, #tpu.memory_space<vmem>>, vector<1x8x8x128xbf16>
    %40 = vector.shape_cast %39 : vector<1x8x8x128xbf16> to vector<64x128xbf16>
    %c0_79 = arith.constant 0 : index
    %c1024 = arith.constant 1024 : index
    %41 = vector.load %arg15[%c0_79, %c1024] : memref<64x1152xbf16, #tpu.memory_space<vmem>>, vector<64x128xbf16>
    tpu.vector_store %arg15[%c0_79, %c1024], %40 {strides = array<i32>} : memref<64x1152xbf16, #tpu.memory_space<vmem>>, vector<64x128xbf16>,
    %c0_80 = arith.constant 0 : index
    %c0_81 = arith.constant 0 : index
    %42 = vector.load %arg15[%c0_80, %c0_81] : memref<64x1152xbf16, #tpu.memory_space<vmem>>, vector<64x1152xbf16>
    %c0_82 = arith.constant 0 : index
    %c0_83 = arith.constant 0 : index
    %43 = vector.load %arg2[%c0_82, %c0_83] : memref<1152x128xbf16, #tpu.memory_space<vmem>>, vector<1152x128xbf16>
    %cst_84 = arith.constant dense<0.000000e+00> : vector<64x128xf32>
    %44 = tpu.matmul %42, %43, %cst_84 {dimension_numbers = #tpu.dot_dimension_numbers<[1], [0], [0], [1], [0, 0, 1, 1], [], []>} : vector<64x1152xbf16>, vector<1152x128xbf16>, vector<64x128xf32> -> vector<64x128xf32>
    %c0_85 = arith.constant 0 : index
    %c0_86 = arith.constant 0 : index
    %45 = vector.load %arg7[%c0_85, %c0_86] : memref<1x128xf32, #tpu.memory_space<vmem>>, vector<1x128xf32>
    %46 = vector.broadcast %45 : vector<1x128xf32> to vector<64x128xf32>
    %47 = arith.addf %44, %46 : vector<64x128xf32>
    %cst_87 = arith.constant 0.000000e+00 : f32
    %48 = vector.broadcast %cst_87 : f32 to vector<64x128xf32>
    %49 = arith.maximumf %47, %48 : vector<64x128xf32>
    %50 = arith.truncf %49 : vector<64x128xf32> to vector<64x128xbf16>
    %51 = vector.shape_cast %50 : vector<64x128xbf16> to vector<1x8x8x128xbf16>
    %c0_88 = arith.constant 0 : index
    %c1_89 = arith.constant 1 : index
    %c16_90 = arith.constant 16 : index
    %c0_91 = arith.constant 0 : index
    %52 = vector.load %arg14[%c0_88, %c1_89, %c16_90, %c0_91] : memref<1x10x25x128xbf16, #tpu.memory_space<vmem>>, vector<1x8x8x128xbf16>
    tpu.vector_store %arg14[%c0_88, %c1_89, %c16_90, %c0_91], %51 {strides = array<i32>} : memref<1x10x25x128xbf16, #tpu.memory_space<vmem>>, vector<1x8x8x128xbf16>,
    %c0_92 = arith.constant 0 : index
    %c0_93 = arith.constant 0 : index
    %c15_94 = arith.constant 15 : index
    %c0_95 = arith.constant 0 : index
    %53 = vector.load %arg14[%c0_92, %c0_93, %c15_94, %c0_95] : memref<1x10x25x128xbf16, #tpu.memory_space<vmem>>, vector<1x8x8x128xbf16>
    %54 = vector.shape_cast %53 : vector<1x8x8x128xbf16> to vector<64x128xbf16>
    %c0_96 = arith.constant 0 : index
    %c0_97 = arith.constant 0 : index
    %55 = vector.load %arg15[%c0_96, %c0_97] : memref<64x1152xbf16, #tpu.memory_space<vmem>>, vector<64x128xbf16>
    tpu.vector_store %arg15[%c0_96, %c0_97], %54 {strides = array<i32>} : memref<64x1152xbf16, #tpu.memory_space<vmem>>, vector<64x128xbf16>,
    %c0_98 = arith.constant 0 : index
    %c0_99 = arith.constant 0 : index
    %c16_100 = arith.constant 16 : index
    %c0_101 = arith.constant 0 : index
    %56 = vector.load %arg14[%c0_98, %c0_99, %c16_100, %c0_101] : memref<1x10x25x128xbf16, #tpu.memory_space<vmem>>, vector<1x8x8x128xbf16>
    %57 = vector.shape_cast %56 : vector<1x8x8x128xbf16> to vector<64x128xbf16>
    %c0_102 = arith.constant 0 : index
    %c128_103 = arith.constant 128 : index
    %58 = vector.load %arg15[%c0_102, %c128_103] : memref<64x1152xbf16, #tpu.memory_space<vmem>>, vector<64x128xbf16>
    tpu.vector_store %arg15[%c0_102, %c128_103], %57 {strides = array<i32>} : memref<64x1152xbf16, #tpu.memory_space<vmem>>, vector<64x128xbf16>,
    %c0_104 = arith.constant 0 : index
    %c0_105 = arith.constant 0 : index
    %c17_106 = arith.constant 17 : index
    %c0_107 = arith.constant 0 : index
    %59 = vector.load %arg14[%c0_104, %c0_105, %c17_106, %c0_107] : memref<1x10x25x128xbf16, #tpu.memory_space<vmem>>, vector<1x8x8x128xbf16>
    %60 = vector.shape_cast %59 : vector<1x8x8x128xbf16> to vector<64x128xbf16>
    %c0_108 = arith.constant 0 : index
    %c256_109 = arith.constant 256 : index
    %61 = vector.load %arg15[%c0_108, %c256_109] : memref<64x1152xbf16, #tpu.memory_space<vmem>>, vector<64x128xbf16>
    tpu.vector_store %arg15[%c0_108, %c256_109], %60 {strides = array<i32>} : memref<64x1152xbf16, #tpu.memory_space<vmem>>, vector<64x128xbf16>,
    %c0_110 = arith.constant 0 : index
    %c1_111 = arith.constant 1 : index
    %c15_112 = arith.constant 15 : index
    %c0_113 = arith.constant 0 : index
    %62 = vector.load %arg14[%c0_110, %c1_111, %c15_112, %c0_113] : memref<1x10x25x128xbf16, #tpu.memory_space<vmem>>, vector<1x8x8x128xbf16>
    %63 = vector.shape_cast %62 : vector<1x8x8x128xbf16> to vector<64x128xbf16>
    %c0_114 = arith.constant 0 : index
    %c384_115 = arith.constant 384 : index
    %64 = vector.load %arg15[%c0_114, %c384_115] : memref<64x1152xbf16, #tpu.memory_space<vmem>>, vector<64x128xbf16>
    tpu.vector_store %arg15[%c0_114, %c384_115], %63 {strides = array<i32>} : memref<64x1152xbf16, #tpu.memory_space<vmem>>, vector<64x128xbf16>,
    %c0_116 = arith.constant 0 : index
    %c1_117 = arith.constant 1 : index
    %c16_118 = arith.constant 16 : index
    %c0_119 = arith.constant 0 : index
    %65 = vector.load %arg14[%c0_116, %c1_117, %c16_118, %c0_119] : memref<1x10x25x128xbf16, #tpu.memory_space<vmem>>, vector<1x8x8x128xbf16>
    %66 = vector.shape_cast %65 : vector<1x8x8x128xbf16> to vector<64x128xbf16>
    %c0_120 = arith.constant 0 : index
    %c512_121 = arith.constant 512 : index
    %67 = vector.load %arg15[%c0_120, %c512_121] : memref<64x1152xbf16, #tpu.memory_space<vmem>>, vector<64x128xbf16>
    tpu.vector_store %arg15[%c0_120, %c512_121], %66 {strides = array<i32>} : memref<64x1152xbf16, #tpu.memory_space<vmem>>, vector<64x128xbf16>,
    %c0_122 = arith.constant 0 : index
    %c1_123 = arith.constant 1 : index
    %c17_124 = arith.constant 17 : index
    %c0_125 = arith.constant 0 : index
    %68 = vector.load %arg14[%c0_122, %c1_123, %c17_124, %c0_125] : memref<1x10x25x128xbf16, #tpu.memory_space<vmem>>, vector<1x8x8x128xbf16>
    %69 = vector.shape_cast %68 : vector<1x8x8x128xbf16> to vector<64x128xbf16>
    %c0_126 = arith.constant 0 : index
    %c640_127 = arith.constant 640 : index
    %70 = vector.load %arg15[%c0_126, %c640_127] : memref<64x1152xbf16, #tpu.memory_space<vmem>>, vector<64x128xbf16>
    tpu.vector_store %arg15[%c0_126, %c640_127], %69 {strides = array<i32>} : memref<64x1152xbf16, #tpu.memory_space<vmem>>, vector<64x128xbf16>,
    %c0_128 = arith.constant 0 : index
    %c2_129 = arith.constant 2 : index
    %c15_130 = arith.constant 15 : index
    %c0_131 = arith.constant 0 : index
    %71 = vector.load %arg14[%c0_128, %c2_129, %c15_130, %c0_131] : memref<1x10x25x128xbf16, #tpu.memory_space<vmem>>, vector<1x8x8x128xbf16>
    %72 = vector.shape_cast %71 : vector<1x8x8x128xbf16> to vector<64x128xbf16>
    %c0_132 = arith.constant 0 : index
    %c768_133 = arith.constant 768 : index
    %73 = vector.load %arg15[%c0_132, %c768_133] : memref<64x1152xbf16, #tpu.memory_space<vmem>>, vector<64x128xbf16>
    tpu.vector_store %arg15[%c0_132, %c768_133], %72 {strides = array<i32>} : memref<64x1152xbf16, #tpu.memory_space<vmem>>, vector<64x128xbf16>,
    %c0_134 = arith.constant 0 : index
    %c2_135 = arith.constant 2 : index
    %c16_136 = arith.constant 16 : index
    %c0_137 = arith.constant 0 : index
    %74 = vector.load %arg14[%c0_134, %c2_135, %c16_136, %c0_137] : memref<1x10x25x128xbf16, #tpu.memory_space<vmem>>, vector<1x8x8x128xbf16>
    %75 = vector.shape_cast %74 : vector<1x8x8x128xbf16> to vector<64x128xbf16>
    %c0_138 = arith.constant 0 : index
    %c896_139 = arith.constant 896 : index
    %76 = vector.load %arg15[%c0_138, %c896_139] : memref<64x1152xbf16, #tpu.memory_space<vmem>>, vector<64x128xbf16>
    tpu.vector_store %arg15[%c0_138, %c896_139], %75 {strides = array<i32>} : memref<64x1152xbf16, #tpu.memory_space<vmem>>, vector<64x128xbf16>,
    %c0_140 = arith.constant 0 : index
    %c2_141 = arith.constant 2 : index
    %c17_142 = arith.constant 17 : index
    %c0_143 = arith.constant 0 : index
    %77 = vector.load %arg14[%c0_140, %c2_141, %c17_142, %c0_143] : memref<1x10x25x128xbf16, #tpu.memory_space<vmem>>, vector<1x8x8x128xbf16>
    %78 = vector.shape_cast %77 : vector<1x8x8x128xbf16> to vector<64x128xbf16>
    %c0_144 = arith.constant 0 : index
    %c1024_145 = arith.constant 1024 : index
    %79 = vector.load %arg15[%c0_144, %c1024_145] : memref<64x1152xbf16, #tpu.memory_space<vmem>>, vector<64x128xbf16>
    tpu.vector_store %arg15[%c0_144, %c1024_145], %78 {strides = array<i32>} : memref<64x1152xbf16, #tpu.memory_space<vmem>>, vector<64x128xbf16>,
    %c0_146 = arith.constant 0 : index
    %c0_147 = arith.constant 0 : index
    %80 = vector.load %arg15[%c0_146, %c0_147] : memref<64x1152xbf16, #tpu.memory_space<vmem>>, vector<64x1152xbf16>
    %c0_148 = arith.constant 0 : index
    %c0_149 = arith.constant 0 : index
    %81 = vector.load %arg3[%c0_148, %c0_149] : memref<1152x128xbf16, #tpu.memory_space<vmem>>, vector<1152x128xbf16>
    %cst_150 = arith.constant dense<0.000000e+00> : vector<64x128xf32>
    %82 = tpu.matmul %80, %81, %cst_150 {dimension_numbers = #tpu.dot_dimension_numbers<[1], [0], [0], [1], [0, 0, 1, 1], [], []>} : vector<64x1152xbf16>, vector<1152x128xbf16>, vector<64x128xf32> -> vector<64x128xf32>
    %c0_151 = arith.constant 0 : index
    %c0_152 = arith.constant 0 : index
    %83 = vector.load %arg8[%c0_151, %c0_152] : memref<1x128xf32, #tpu.memory_space<vmem>>, vector<1x128xf32>
    %84 = vector.broadcast %83 : vector<1x128xf32> to vector<64x128xf32>
    %85 = arith.addf %82, %84 : vector<64x128xf32>
    %cst_153 = arith.constant 0.000000e+00 : f32
    %86 = vector.broadcast %cst_153 : f32 to vector<64x128xf32>
    %87 = arith.maximumf %85, %86 : vector<64x128xf32>
    %88 = arith.truncf %87 : vector<64x128xf32> to vector<64x128xbf16>
    %89 = vector.shape_cast %88 : vector<64x128xbf16> to vector<1x8x8x128xbf16>
    %c0_154 = arith.constant 0 : index
    %c1_155 = arith.constant 1 : index
    %c16_156 = arith.constant 16 : index
    %c0_157 = arith.constant 0 : index
    %90 = vector.load %arg13[%c0_154, %c1_155, %c16_156, %c0_157] : memref<1x10x25x128xbf16, #tpu.memory_space<vmem>>, vector<1x8x8x128xbf16>
    tpu.vector_store %arg13[%c0_154, %c1_155, %c16_156, %c0_157], %89 {strides = array<i32>} : memref<1x10x25x128xbf16, #tpu.memory_space<vmem>>, vector<1x8x8x128xbf16>,
    %c0_158 = arith.constant 0 : index
    %c0_159 = arith.constant 0 : index
    %c15_160 = arith.constant 15 : index
    %c0_161 = arith.constant 0 : index
    %91 = vector.load %arg13[%c0_158, %c0_159, %c15_160, %c0_161] : memref<1x10x25x128xbf16, #tpu.memory_space<vmem>>, vector<1x8x8x128xbf16>
    %92 = vector.shape_cast %91 : vector<1x8x8x128xbf16> to vector<64x128xbf16>
    %c0_162 = arith.constant 0 : index
    %c0_163 = arith.constant 0 : index
    %93 = vector.load %arg15[%c0_162, %c0_163] : memref<64x1152xbf16, #tpu.memory_space<vmem>>, vector<64x128xbf16>
    tpu.vector_store %arg15[%c0_162, %c0_163], %92 {strides = array<i32>} : memref<64x1152xbf16, #tpu.memory_space<vmem>>, vector<64x128xbf16>,
    %c0_164 = arith.constant 0 : index
    %c0_165 = arith.constant 0 : index
    %c16_166 = arith.constant 16 : index
    %c0_167 = arith.constant 0 : index
    %94 = vector.load %arg13[%c0_164, %c0_165, %c16_166, %c0_167] : memref<1x10x25x128xbf16, #tpu.memory_space<vmem>>, vector<1x8x8x128xbf16>
    %95 = vector.shape_cast %94 : vector<1x8x8x128xbf16> to vector<64x128xbf16>
    %c0_168 = arith.constant 0 : index
    %c128_169 = arith.constant 128 : index
    %96 = vector.load %arg15[%c0_168, %c128_169] : memref<64x1152xbf16, #tpu.memory_space<vmem>>, vector<64x128xbf16>
    tpu.vector_store %arg15[%c0_168, %c128_169], %95 {strides = array<i32>} : memref<64x1152xbf16, #tpu.memory_space<vmem>>, vector<64x128xbf16>,
    %c0_170 = arith.constant 0 : index
    %c0_171 = arith.constant 0 : index
    %c17_172 = arith.constant 17 : index
    %c0_173 = arith.constant 0 : index
    %97 = vector.load %arg13[%c0_170, %c0_171, %c17_172, %c0_173] : memref<1x10x25x128xbf16, #tpu.memory_space<vmem>>, vector<1x8x8x128xbf16>
    %98 = vector.shape_cast %97 : vector<1x8x8x128xbf16> to vector<64x128xbf16>
    %c0_174 = arith.constant 0 : index
    %c256_175 = arith.constant 256 : index
    %99 = vector.load %arg15[%c0_174, %c256_175] : memref<64x1152xbf16, #tpu.memory_space<vmem>>, vector<64x128xbf16>
    tpu.vector_store %arg15[%c0_174, %c256_175], %98 {strides = array<i32>} : memref<64x1152xbf16, #tpu.memory_space<vmem>>, vector<64x128xbf16>,
    %c0_176 = arith.constant 0 : index
    %c1_177 = arith.constant 1 : index
    %c15_178 = arith.constant 15 : index
    %c0_179 = arith.constant 0 : index
    %100 = vector.load %arg13[%c0_176, %c1_177, %c15_178, %c0_179] : memref<1x10x25x128xbf16, #tpu.memory_space<vmem>>, vector<1x8x8x128xbf16>
    %101 = vector.shape_cast %100 : vector<1x8x8x128xbf16> to vector<64x128xbf16>
    %c0_180 = arith.constant 0 : index
    %c384_181 = arith.constant 384 : index
    %102 = vector.load %arg15[%c0_180, %c384_181] : memref<64x1152xbf16, #tpu.memory_space<vmem>>, vector<64x128xbf16>
    tpu.vector_store %arg15[%c0_180, %c384_181], %101 {strides = array<i32>} : memref<64x1152xbf16, #tpu.memory_space<vmem>>, vector<64x128xbf16>,
    %c0_182 = arith.constant 0 : index
    %c1_183 = arith.constant 1 : index
    %c16_184 = arith.constant 16 : index
    %c0_185 = arith.constant 0 : index
    %103 = vector.load %arg13[%c0_182, %c1_183, %c16_184, %c0_185] : memref<1x10x25x128xbf16, #tpu.memory_space<vmem>>, vector<1x8x8x128xbf16>
    %104 = vector.shape_cast %103 : vector<1x8x8x128xbf16> to vector<64x128xbf16>
    %c0_186 = arith.constant 0 : index
    %c512_187 = arith.constant 512 : index
    %105 = vector.load %arg15[%c0_186, %c512_187] : memref<64x1152xbf16, #tpu.memory_space<vmem>>, vector<64x128xbf16>
    tpu.vector_store %arg15[%c0_186, %c512_187], %104 {strides = array<i32>} : memref<64x1152xbf16, #tpu.memory_space<vmem>>, vector<64x128xbf16>,
    %c0_188 = arith.constant 0 : index
    %c1_189 = arith.constant 1 : index
    %c17_190 = arith.constant 17 : index
    %c0_191 = arith.constant 0 : index
    %106 = vector.load %arg13[%c0_188, %c1_189, %c17_190, %c0_191] : memref<1x10x25x128xbf16, #tpu.memory_space<vmem>>, vector<1x8x8x128xbf16>
    %107 = vector.shape_cast %106 : vector<1x8x8x128xbf16> to vector<64x128xbf16>
    %c0_192 = arith.constant 0 : index
    %c640_193 = arith.constant 640 : index
    %108 = vector.load %arg15[%c0_192, %c640_193] : memref<64x1152xbf16, #tpu.memory_space<vmem>>, vector<64x128xbf16>
    tpu.vector_store %arg15[%c0_192, %c640_193], %107 {strides = array<i32>} : memref<64x1152xbf16, #tpu.memory_space<vmem>>, vector<64x128xbf16>,
    %c0_194 = arith.constant 0 : index
    %c2_195 = arith.constant 2 : index
    %c15_196 = arith.constant 15 : index
    %c0_197 = arith.constant 0 : index
    %109 = vector.load %arg13[%c0_194, %c2_195, %c15_196, %c0_197] : memref<1x10x25x128xbf16, #tpu.memory_space<vmem>>, vector<1x8x8x128xbf16>
    %110 = vector.shape_cast %109 : vector<1x8x8x128xbf16> to vector<64x128xbf16>
    %c0_198 = arith.constant 0 : index
    %c768_199 = arith.constant 768 : index
    %111 = vector.load %arg15[%c0_198, %c768_199] : memref<64x1152xbf16, #tpu.memory_space<vmem>>, vector<64x128xbf16>
    tpu.vector_store %arg15[%c0_198, %c768_199], %110 {strides = array<i32>} : memref<64x1152xbf16, #tpu.memory_space<vmem>>, vector<64x128xbf16>,
    %c0_200 = arith.constant 0 : index
    %c2_201 = arith.constant 2 : index
    %c16_202 = arith.constant 16 : index
    %c0_203 = arith.constant 0 : index
    %112 = vector.load %arg13[%c0_200, %c2_201, %c16_202, %c0_203] : memref<1x10x25x128xbf16, #tpu.memory_space<vmem>>, vector<1x8x8x128xbf16>
    %113 = vector.shape_cast %112 : vector<1x8x8x128xbf16> to vector<64x128xbf16>
    %c0_204 = arith.constant 0 : index
    %c896_205 = arith.constant 896 : index
    %114 = vector.load %arg15[%c0_204, %c896_205] : memref<64x1152xbf16, #tpu.memory_space<vmem>>, vector<64x128xbf16>
    tpu.vector_store %arg15[%c0_204, %c896_205], %113 {strides = array<i32>} : memref<64x1152xbf16, #tpu.memory_space<vmem>>, vector<64x128xbf16>,
    %c0_206 = arith.constant 0 : index
    %c2_207 = arith.constant 2 : index
    %c17_208 = arith.constant 17 : index
    %c0_209 = arith.constant 0 : index
    %115 = vector.load %arg13[%c0_206, %c2_207, %c17_208, %c0_209] : memref<1x10x25x128xbf16, #tpu.memory_space<vmem>>, vector<1x8x8x128xbf16>
    %116 = vector.shape_cast %115 : vector<1x8x8x128xbf16> to vector<64x128xbf16>
    %c0_210 = arith.constant 0 : index
    %c1024_211 = arith.constant 1024 : index
    %117 = vector.load %arg15[%c0_210, %c1024_211] : memref<64x1152xbf16, #tpu.memory_space<vmem>>, vector<64x128xbf16>
    tpu.vector_store %arg15[%c0_210, %c1024_211], %116 {strides = array<i32>} : memref<64x1152xbf16, #tpu.memory_space<vmem>>, vector<64x128xbf16>,
    %c0_212 = arith.constant 0 : index
    %c0_213 = arith.constant 0 : index
    %118 = vector.load %arg15[%c0_212, %c0_213] : memref<64x1152xbf16, #tpu.memory_space<vmem>>, vector<64x1152xbf16>
    %c0_214 = arith.constant 0 : index
    %c0_215 = arith.constant 0 : index
    %119 = vector.load %arg4[%c0_214, %c0_215] : memref<1152x128xbf16, #tpu.memory_space<vmem>>, vector<1152x128xbf16>
    %cst_216 = arith.constant dense<0.000000e+00> : vector<64x128xf32>
    %120 = tpu.matmul %118, %119, %cst_216 {dimension_numbers = #tpu.dot_dimension_numbers<[1], [0], [0], [1], [0, 0, 1, 1], [], []>} : vector<64x1152xbf16>, vector<1152x128xbf16>, vector<64x128xf32> -> vector<64x128xf32>
    %c0_217 = arith.constant 0 : index
    %c0_218 = arith.constant 0 : index
    %121 = vector.load %arg9[%c0_217, %c0_218] : memref<1x128xf32, #tpu.memory_space<vmem>>, vector<1x128xf32>
    %122 = vector.broadcast %121 : vector<1x128xf32> to vector<64x128xf32>
    %123 = arith.addf %120, %122 : vector<64x128xf32>
    %cst_219 = arith.constant 0.000000e+00 : f32
    %124 = vector.broadcast %cst_219 : f32 to vector<64x128xf32>
    %125 = arith.maximumf %123, %124 : vector<64x128xf32>
    %126 = arith.truncf %125 : vector<64x128xf32> to vector<64x128xbf16>
    %127 = vector.shape_cast %126 : vector<64x128xbf16> to vector<1x8x8x128xbf16>
    %c0_220 = arith.constant 0 : index
    %c1_221 = arith.constant 1 : index
    %c16_222 = arith.constant 16 : index
    %c0_223 = arith.constant 0 : index
    %128 = vector.load %arg14[%c0_220, %c1_221, %c16_222, %c0_223] : memref<1x10x25x128xbf16, #tpu.memory_space<vmem>>, vector<1x8x8x128xbf16>
    tpu.vector_store %arg14[%c0_220, %c1_221, %c16_222, %c0_223], %127 {strides = array<i32>} : memref<1x10x25x128xbf16, #tpu.memory_space<vmem>>, vector<1x8x8x128xbf16>,
    %c0_224 = arith.constant 0 : index
    %c0_225 = arith.constant 0 : index
    %c15_226 = arith.constant 15 : index
    %c0_227 = arith.constant 0 : index
    %129 = vector.load %arg14[%c0_224, %c0_225, %c15_226, %c0_227] : memref<1x10x25x128xbf16, #tpu.memory_space<vmem>>, vector<1x8x8x128xbf16>
    %130 = vector.shape_cast %129 : vector<1x8x8x128xbf16> to vector<64x128xbf16>
    %c0_228 = arith.constant 0 : index
    %c0_229 = arith.constant 0 : index
    %131 = vector.load %arg15[%c0_228, %c0_229] : memref<64x1152xbf16, #tpu.memory_space<vmem>>, vector<64x128xbf16>
    tpu.vector_store %arg15[%c0_228, %c0_229], %130 {strides = array<i32>} : memref<64x1152xbf16, #tpu.memory_space<vmem>>, vector<64x128xbf16>,
    %c0_230 = arith.constant 0 : index
    %c0_231 = arith.constant 0 : index
    %c16_232 = arith.constant 16 : index
    %c0_233 = arith.constant 0 : index
    %132 = vector.load %arg14[%c0_230, %c0_231, %c16_232, %c0_233] : memref<1x10x25x128xbf16, #tpu.memory_space<vmem>>, vector<1x8x8x128xbf16>
    %133 = vector.shape_cast %132 : vector<1x8x8x128xbf16> to vector<64x128xbf16>
    %c0_234 = arith.constant 0 : index
    %c128_235 = arith.constant 128 : index
    %134 = vector.load %arg15[%c0_234, %c128_235] : memref<64x1152xbf16, #tpu.memory_space<vmem>>, vector<64x128xbf16>
    tpu.vector_store %arg15[%c0_234, %c128_235], %133 {strides = array<i32>} : memref<64x1152xbf16, #tpu.memory_space<vmem>>, vector<64x128xbf16>,
    %c0_236 = arith.constant 0 : index
    %c0_237 = arith.constant 0 : index
    %c17_238 = arith.constant 17 : index
    %c0_239 = arith.constant 0 : index
    %135 = vector.load %arg14[%c0_236, %c0_237, %c17_238, %c0_239] : memref<1x10x25x128xbf16, #tpu.memory_space<vmem>>, vector<1x8x8x128xbf16>
    %136 = vector.shape_cast %135 : vector<1x8x8x128xbf16> to vector<64x128xbf16>
    %c0_240 = arith.constant 0 : index
    %c256_241 = arith.constant 256 : index
    %137 = vector.load %arg15[%c0_240, %c256_241] : memref<64x1152xbf16, #tpu.memory_space<vmem>>, vector<64x128xbf16>
    tpu.vector_store %arg15[%c0_240, %c256_241], %136 {strides = array<i32>} : memref<64x1152xbf16, #tpu.memory_space<vmem>>, vector<64x128xbf16>,
    %c0_242 = arith.constant 0 : index
    %c1_243 = arith.constant 1 : index
    %c15_244 = arith.constant 15 : index
    %c0_245 = arith.constant 0 : index
    %138 = vector.load %arg14[%c0_242, %c1_243, %c15_244, %c0_245] : memref<1x10x25x128xbf16, #tpu.memory_space<vmem>>, vector<1x8x8x128xbf16>
    %139 = vector.shape_cast %138 : vector<1x8x8x128xbf16> to vector<64x128xbf16>
    %c0_246 = arith.constant 0 : index
    %c384_247 = arith.constant 384 : index
    %140 = vector.load %arg15[%c0_246, %c384_247] : memref<64x1152xbf16, #tpu.memory_space<vmem>>, vector<64x128xbf16>
    tpu.vector_store %arg15[%c0_246, %c384_247], %139 {strides = array<i32>} : memref<64x1152xbf16, #tpu.memory_space<vmem>>, vector<64x128xbf16>,
    %c0_248 = arith.constant 0 : index
    %c1_249 = arith.constant 1 : index
    %c16_250 = arith.constant 16 : index
    %c0_251 = arith.constant 0 : index
    %141 = vector.load %arg14[%c0_248, %c1_249, %c16_250, %c0_251] : memref<1x10x25x128xbf16, #tpu.memory_space<vmem>>, vector<1x8x8x128xbf16>
    %142 = vector.shape_cast %141 : vector<1x8x8x128xbf16> to vector<64x128xbf16>
    %c0_252 = arith.constant 0 : index
    %c512_253 = arith.constant 512 : index
    %143 = vector.load %arg15[%c0_252, %c512_253] : memref<64x1152xbf16, #tpu.memory_space<vmem>>, vector<64x128xbf16>
    tpu.vector_store %arg15[%c0_252, %c512_253], %142 {strides = array<i32>} : memref<64x1152xbf16, #tpu.memory_space<vmem>>, vector<64x128xbf16>,
    %c0_254 = arith.constant 0 : index
    %c1_255 = arith.constant 1 : index
    %c17_256 = arith.constant 17 : index
    %c0_257 = arith.constant 0 : index
    %144 = vector.load %arg14[%c0_254, %c1_255, %c17_256, %c0_257] : memref<1x10x25x128xbf16, #tpu.memory_space<vmem>>, vector<1x8x8x128xbf16>
    %145 = vector.shape_cast %144 : vector<1x8x8x128xbf16> to vector<64x128xbf16>
    %c0_258 = arith.constant 0 : index
    %c640_259 = arith.constant 640 : index
    %146 = vector.load %arg15[%c0_258, %c640_259] : memref<64x1152xbf16, #tpu.memory_space<vmem>>, vector<64x128xbf16>
    tpu.vector_store %arg15[%c0_258, %c640_259], %145 {strides = array<i32>} : memref<64x1152xbf16, #tpu.memory_space<vmem>>, vector<64x128xbf16>,
    %c0_260 = arith.constant 0 : index
    %c2_261 = arith.constant 2 : index
    %c15_262 = arith.constant 15 : index
    %c0_263 = arith.constant 0 : index
    %147 = vector.load %arg14[%c0_260, %c2_261, %c15_262, %c0_263] : memref<1x10x25x128xbf16, #tpu.memory_space<vmem>>, vector<1x8x8x128xbf16>
    %148 = vector.shape_cast %147 : vector<1x8x8x128xbf16> to vector<64x128xbf16>
    %c0_264 = arith.constant 0 : index
    %c768_265 = arith.constant 768 : index
    %149 = vector.load %arg15[%c0_264, %c768_265] : memref<64x1152xbf16, #tpu.memory_space<vmem>>, vector<64x128xbf16>
    tpu.vector_store %arg15[%c0_264, %c768_265], %148 {strides = array<i32>} : memref<64x1152xbf16, #tpu.memory_space<vmem>>, vector<64x128xbf16>,
    %c0_266 = arith.constant 0 : index
    %c2_267 = arith.constant 2 : index
    %c16_268 = arith.constant 16 : index
    %c0_269 = arith.constant 0 : index
    %150 = vector.load %arg14[%c0_266, %c2_267, %c16_268, %c0_269] : memref<1x10x25x128xbf16, #tpu.memory_space<vmem>>, vector<1x8x8x128xbf16>
    %151 = vector.shape_cast %150 : vector<1x8x8x128xbf16> to vector<64x128xbf16>
    %c0_270 = arith.constant 0 : index
    %c896_271 = arith.constant 896 : index
    %152 = vector.load %arg15[%c0_270, %c896_271] : memref<64x1152xbf16, #tpu.memory_space<vmem>>, vector<64x128xbf16>
    tpu.vector_store %arg15[%c0_270, %c896_271], %151 {strides = array<i32>} : memref<64x1152xbf16, #tpu.memory_space<vmem>>, vector<64x128xbf16>,
    %c0_272 = arith.constant 0 : index
    %c2_273 = arith.constant 2 : index
    %c17_274 = arith.constant 17 : index
    %c0_275 = arith.constant 0 : index
    %153 = vector.load %arg14[%c0_272, %c2_273, %c17_274, %c0_275] : memref<1x10x25x128xbf16, #tpu.memory_space<vmem>>, vector<1x8x8x128xbf16>
    %154 = vector.shape_cast %153 : vector<1x8x8x128xbf16> to vector<64x128xbf16>
    %c0_276 = arith.constant 0 : index
    %c1024_277 = arith.constant 1024 : index
    %155 = vector.load %arg15[%c0_276, %c1024_277] : memref<64x1152xbf16, #tpu.memory_space<vmem>>, vector<64x128xbf16>
    tpu.vector_store %arg15[%c0_276, %c1024_277], %154 {strides = array<i32>} : memref<64x1152xbf16, #tpu.memory_space<vmem>>, vector<64x128xbf16>,
    %c0_278 = arith.constant 0 : index
    %c0_279 = arith.constant 0 : index
    %156 = vector.load %arg15[%c0_278, %c0_279] : memref<64x1152xbf16, #tpu.memory_space<vmem>>, vector<64x1152xbf16>
    %c0_280 = arith.constant 0 : index
    %c0_281 = arith.constant 0 : index
    %157 = vector.load %arg5[%c0_280, %c0_281] : memref<1152x128xbf16, #tpu.memory_space<vmem>>, vector<1152x128xbf16>
    %cst_282 = arith.constant dense<0.000000e+00> : vector<64x128xf32>
    %158 = tpu.matmul %156, %157, %cst_282 {dimension_numbers = #tpu.dot_dimension_numbers<[1], [0], [0], [1], [0, 0, 1, 1], [], []>} : vector<64x1152xbf16>, vector<1152x128xbf16>, vector<64x128xf32> -> vector<64x128xf32>
    %c0_283 = arith.constant 0 : index
    %c0_284 = arith.constant 0 : index
    %159 = vector.load %arg10[%c0_283, %c0_284] : memref<1x128xf32, #tpu.memory_space<vmem>>, vector<1x128xf32>
    %160 = vector.broadcast %159 : vector<1x128xf32> to vector<64x128xf32>
    %161 = arith.addf %158, %160 : vector<64x128xf32>
    %cst_285 = arith.constant 0.000000e+00 : f32
    %162 = vector.broadcast %cst_285 : f32 to vector<64x128xf32>
    %163 = arith.maximumf %161, %162 : vector<64x128xf32>
    %164 = arith.truncf %163 : vector<64x128xf32> to vector<64x128xbf16>
    %165 = vector.shape_cast %164 : vector<64x128xbf16> to vector<1x8x8x128xbf16>
    %c0_286 = arith.constant 0 : index
    %c1_287 = arith.constant 1 : index
    %c16_288 = arith.constant 16 : index
    %c0_289 = arith.constant 0 : index
    %166 = vector.load %arg13[%c0_286, %c1_287, %c16_288, %c0_289] : memref<1x10x25x128xbf16, #tpu.memory_space<vmem>>, vector<1x8x8x128xbf16>
    tpu.vector_store %arg13[%c0_286, %c1_287, %c16_288, %c0_289], %165 {strides = array<i32>} : memref<1x10x25x128xbf16, #tpu.memory_space<vmem>>, vector<1x8x8x128xbf16>,
    %c0_290 = arith.constant 0 : index
    %c0_291 = arith.constant 0 : index
    %c15_292 = arith.constant 15 : index
    %c0_293 = arith.constant 0 : index
    %167 = vector.load %arg13[%c0_290, %c0_291, %c15_292, %c0_293] : memref<1x10x25x128xbf16, #tpu.memory_space<vmem>>, vector<1x8x8x128xbf16>
    %168 = vector.shape_cast %167 : vector<1x8x8x128xbf16> to vector<64x128xbf16>
    %c0_294 = arith.constant 0 : index
    %c0_295 = arith.constant 0 : index
    %169 = vector.load %arg15[%c0_294, %c0_295] : memref<64x1152xbf16, #tpu.memory_space<vmem>>, vector<64x128xbf16>
    tpu.vector_store %arg15[%c0_294, %c0_295], %168 {strides = array<i32>} : memref<64x1152xbf16, #tpu.memory_space<vmem>>, vector<64x128xbf16>,
    %c0_296 = arith.constant 0 : index
    %c0_297 = arith.constant 0 : index
    %c16_298 = arith.constant 16 : index
    %c0_299 = arith.constant 0 : index
    %170 = vector.load %arg13[%c0_296, %c0_297, %c16_298, %c0_299] : memref<1x10x25x128xbf16, #tpu.memory_space<vmem>>, vector<1x8x8x128xbf16>
    %171 = vector.shape_cast %170 : vector<1x8x8x128xbf16> to vector<64x128xbf16>
    %c0_300 = arith.constant 0 : index
    %c128_301 = arith.constant 128 : index
    %172 = vector.load %arg15[%c0_300, %c128_301] : memref<64x1152xbf16, #tpu.memory_space<vmem>>, vector<64x128xbf16>
    tpu.vector_store %arg15[%c0_300, %c128_301], %171 {strides = array<i32>} : memref<64x1152xbf16, #tpu.memory_space<vmem>>, vector<64x128xbf16>,
    %c0_302 = arith.constant 0 : index
    %c0_303 = arith.constant 0 : index
    %c17_304 = arith.constant 17 : index
    %c0_305 = arith.constant 0 : index
    %173 = vector.load %arg13[%c0_302, %c0_303, %c17_304, %c0_305] : memref<1x10x25x128xbf16, #tpu.memory_space<vmem>>, vector<1x8x8x128xbf16>
    %174 = vector.shape_cast %173 : vector<1x8x8x128xbf16> to vector<64x128xbf16>
    %c0_306 = arith.constant 0 : index
    %c256_307 = arith.constant 256 : index
    %175 = vector.load %arg15[%c0_306, %c256_307] : memref<64x1152xbf16, #tpu.memory_space<vmem>>, vector<64x128xbf16>
    tpu.vector_store %arg15[%c0_306, %c256_307], %174 {strides = array<i32>} : memref<64x1152xbf16, #tpu.memory_space<vmem>>, vector<64x128xbf16>,
    %c0_308 = arith.constant 0 : index
    %c1_309 = arith.constant 1 : index
    %c15_310 = arith.constant 15 : index
    %c0_311 = arith.constant 0 : index
    %176 = vector.load %arg13[%c0_308, %c1_309, %c15_310, %c0_311] : memref<1x10x25x128xbf16, #tpu.memory_space<vmem>>, vector<1x8x8x128xbf16>
    %177 = vector.shape_cast %176 : vector<1x8x8x128xbf16> to vector<64x128xbf16>
    %c0_312 = arith.constant 0 : index
    %c384_313 = arith.constant 384 : index
    %178 = vector.load %arg15[%c0_312, %c384_313] : memref<64x1152xbf16, #tpu.memory_space<vmem>>, vector<64x128xbf16>
    tpu.vector_store %arg15[%c0_312, %c384_313], %177 {strides = array<i32>} : memref<64x1152xbf16, #tpu.memory_space<vmem>>, vector<64x128xbf16>,
    %c0_314 = arith.constant 0 : index
    %c1_315 = arith.constant 1 : index
    %c16_316 = arith.constant 16 : index
    %c0_317 = arith.constant 0 : index
    %179 = vector.load %arg13[%c0_314, %c1_315, %c16_316, %c0_317] : memref<1x10x25x128xbf16, #tpu.memory_space<vmem>>, vector<1x8x8x128xbf16>
    %180 = vector.shape_cast %179 : vector<1x8x8x128xbf16> to vector<64x128xbf16>
    %c0_318 = arith.constant 0 : index
    %c512_319 = arith.constant 512 : index
    %181 = vector.load %arg15[%c0_318, %c512_319] : memref<64x1152xbf16, #tpu.memory_space<vmem>>, vector<64x128xbf16>
    tpu.vector_store %arg15[%c0_318, %c512_319], %180 {strides = array<i32>} : memref<64x1152xbf16, #tpu.memory_space<vmem>>, vector<64x128xbf16>,
    %c0_320 = arith.constant 0 : index
    %c1_321 = arith.constant 1 : index
    %c17_322 = arith.constant 17 : index
    %c0_323 = arith.constant 0 : index
    %182 = vector.load %arg13[%c0_320, %c1_321, %c17_322, %c0_323] : memref<1x10x25x128xbf16, #tpu.memory_space<vmem>>, vector<1x8x8x128xbf16>
    %183 = vector.shape_cast %182 : vector<1x8x8x128xbf16> to vector<64x128xbf16>
    %c0_324 = arith.constant 0 : index
    %c640_325 = arith.constant 640 : index
    %184 = vector.load %arg15[%c0_324, %c640_325] : memref<64x1152xbf16, #tpu.memory_space<vmem>>, vector<64x128xbf16>
    tpu.vector_store %arg15[%c0_324, %c640_325], %183 {strides = array<i32>} : memref<64x1152xbf16, #tpu.memory_space<vmem>>, vector<64x128xbf16>,
    %c0_326 = arith.constant 0 : index
    %c2_327 = arith.constant 2 : index
    %c15_328 = arith.constant 15 : index
    %c0_329 = arith.constant 0 : index
    %185 = vector.load %arg13[%c0_326, %c2_327, %c15_328, %c0_329] : memref<1x10x25x128xbf16, #tpu.memory_space<vmem>>, vector<1x8x8x128xbf16>
    %186 = vector.shape_cast %185 : vector<1x8x8x128xbf16> to vector<64x128xbf16>
    %c0_330 = arith.constant 0 : index
    %c768_331 = arith.constant 768 : index
    %187 = vector.load %arg15[%c0_330, %c768_331] : memref<64x1152xbf16, #tpu.memory_space<vmem>>, vector<64x128xbf16>
    tpu.vector_store %arg15[%c0_330, %c768_331], %186 {strides = array<i32>} : memref<64x1152xbf16, #tpu.memory_space<vmem>>, vector<64x128xbf16>,
    %c0_332 = arith.constant 0 : index
    %c2_333 = arith.constant 2 : index
    %c16_334 = arith.constant 16 : index
    %c0_335 = arith.constant 0 : index
    %188 = vector.load %arg13[%c0_332, %c2_333, %c16_334, %c0_335] : memref<1x10x25x128xbf16, #tpu.memory_space<vmem>>, vector<1x8x8x128xbf16>
    %189 = vector.shape_cast %188 : vector<1x8x8x128xbf16> to vector<64x128xbf16>
    %c0_336 = arith.constant 0 : index
    %c896_337 = arith.constant 896 : index
    %190 = vector.load %arg15[%c0_336, %c896_337] : memref<64x1152xbf16, #tpu.memory_space<vmem>>, vector<64x128xbf16>
    tpu.vector_store %arg15[%c0_336, %c896_337], %189 {strides = array<i32>} : memref<64x1152xbf16, #tpu.memory_space<vmem>>, vector<64x128xbf16>,
    %c0_338 = arith.constant 0 : index
    %c2_339 = arith.constant 2 : index
    %c17_340 = arith.constant 17 : index
    %c0_341 = arith.constant 0 : index
    %191 = vector.load %arg13[%c0_338, %c2_339, %c17_340, %c0_341] : memref<1x10x25x128xbf16, #tpu.memory_space<vmem>>, vector<1x8x8x128xbf16>
    %192 = vector.shape_cast %191 : vector<1x8x8x128xbf16> to vector<64x128xbf16>
    %c0_342 = arith.constant 0 : index
    %c1024_343 = arith.constant 1024 : index
    %193 = vector.load %arg15[%c0_342, %c1024_343] : memref<64x1152xbf16, #tpu.memory_space<vmem>>, vector<64x128xbf16>
    tpu.vector_store %arg15[%c0_342, %c1024_343], %192 {strides = array<i32>} : memref<64x1152xbf16, #tpu.memory_space<vmem>>, vector<64x128xbf16>,
    %c0_344 = arith.constant 0 : index
    %c0_345 = arith.constant 0 : index
    %194 = vector.load %arg15[%c0_344, %c0_345] : memref<64x1152xbf16, #tpu.memory_space<vmem>>, vector<64x1152xbf16>
    %c0_346 = arith.constant 0 : index
    %c0_347 = arith.constant 0 : index
    %195 = vector.load %arg6[%c0_346, %c0_347] : memref<1152x128xbf16, #tpu.memory_space<vmem>>, vector<1152x128xbf16>
    %cst_348 = arith.constant dense<0.000000e+00> : vector<64x128xf32>
    %196 = tpu.matmul %194, %195, %cst_348 {dimension_numbers = #tpu.dot_dimension_numbers<[1], [0], [0], [1], [0, 0, 1, 1], [], []>} : vector<64x1152xbf16>, vector<1152x128xbf16>, vector<64x128xf32> -> vector<64x128xf32>
    %c0_349 = arith.constant 0 : index
    %c0_350 = arith.constant 0 : index
    %197 = vector.load %arg11[%c0_349, %c0_350] : memref<1x128xf32, #tpu.memory_space<vmem>>, vector<1x128xf32>
    %198 = vector.broadcast %197 : vector<1x128xf32> to vector<64x128xf32>
    %199 = arith.addf %196, %198 : vector<64x128xf32>
    %200 = vector.shape_cast %199 : vector<64x128xf32> to vector<1x8x8x128xf32>
    %c0_351 = arith.constant 0 : index
    %c0_352 = arith.constant 0 : index
    %c0_353 = arith.constant 0 : index
    %c0_354 = arith.constant 0 : index
    %201 = vector.load %arg12[%c0_351, %c0_352, %c0_353, %c0_354] : memref<1x8x8x128xf32, #tpu.memory_space<vmem>>, vector<1x8x8x128xf32>
    tpu.vector_store %arg12[%c0_351, %c0_352, %c0_353, %c0_354], %200 {strides = array<i32>} : memref<1x8x8x128xf32, #tpu.memory_space<vmem>>, vector<1x8x8x128xf32>,
    return
  }
  func.func @transform_0(%arg0: i32) -> (i32, i32, i32, i32) {
    %c0_i32 = arith.constant 0 : i32
    %c0_i32_0 = arith.constant 0 : i32
    %c0_i32_1 = arith.constant 0 : i32
    %c0_i32_2 = arith.constant 0 : i32
    return %arg0, %c0_i32, %c0_i32_0, %c0_i32_1 : i32, i32, i32, i32
  }
  func.func @transform_1(%arg0: i32) -> (i32, i32) {
    %c0_i32 = arith.constant 0 : i32
    %c0_i32_0 = arith.constant 0 : i32
    %c0_i32_1 = arith.constant 0 : i32
    return %c0_i32, %c0_i32_0 : i32, i32
  }
  func.func @transform_2(%arg0: i32) -> (i32, i32) {
    %c0_i32 = arith.constant 0 : i32
    %c0_i32_0 = arith.constant 0 : i32
    %c0_i32_1 = arith.constant 0 : i32
    return %c0_i32, %c0_i32_0 : i32, i32
  }
  func.func @transform_3(%arg0: i32) -> (i32, i32) {
    %c0_i32 = arith.constant 0 : i32
    %c0_i32_0 = arith.constant 0 : i32
    %c0_i32_1 = arith.constant 0 : i32
    return %c0_i32, %c0_i32_0 : i32, i32
  }
  func.func @transform_4(%arg0: i32) -> (i32, i32) {
    %c0_i32 = arith.constant 0 : i32
    %c0_i32_0 = arith.constant 0 : i32
    %c0_i32_1 = arith.constant 0 : i32
    return %c0_i32, %c0_i32_0 : i32, i32
  }
  func.func @transform_5(%arg0: i32) -> (i32, i32) {
    %c0_i32 = arith.constant 0 : i32
    %c0_i32_0 = arith.constant 0 : i32
    %c0_i32_1 = arith.constant 0 : i32
    return %c0_i32, %c0_i32_0 : i32, i32
  }
  func.func @transform_6(%arg0: i32) -> (i32, i32) {
    %c0_i32 = arith.constant 0 : i32
    %c0_i32_0 = arith.constant 0 : i32
    %c0_i32_1 = arith.constant 0 : i32
    return %c0_i32, %c0_i32_0 : i32, i32
  }
  func.func @transform_7(%arg0: i32) -> (i32, i32) {
    %c0_i32 = arith.constant 0 : i32
    %c0_i32_0 = arith.constant 0 : i32
    %c0_i32_1 = arith.constant 0 : i32
    return %c0_i32, %c0_i32_0 : i32, i32
  }
  func.func @transform_8(%arg0: i32) -> (i32, i32) {
    %c0_i32 = arith.constant 0 : i32
    %c0_i32_0 = arith.constant 0 : i32
    %c0_i32_1 = arith.constant 0 : i32
    return %c0_i32, %c0_i32_0 : i32, i32
  }
  func.func @transform_9(%arg0: i32) -> (i32, i32) {
    %c0_i32 = arith.constant 0 : i32
    %c0_i32_0 = arith.constant 0 : i32
    %c0_i32_1 = arith.constant 0 : i32
    return %c0_i32, %c0_i32_0 : i32, i32
  }
  func.func @transform_10(%arg0: i32) -> (i32, i32) {
    %c0_i32 = arith.constant 0 : i32
    %c0_i32_0 = arith.constant 0 : i32
    %c0_i32_1 = arith.constant 0 : i32
    return %c0_i32, %c0_i32_0 : i32, i32
  }
  func.func @transform_11(%arg0: i32) -> (i32, i32, i32, i32) {
    %c0_i32 = arith.constant 0 : i32
    %c0_i32_0 = arith.constant 0 : i32
    %c0_i32_1 = arith.constant 0 : i32
    %c0_i32_2 = arith.constant 0 : i32
    return %arg0, %c0_i32, %c0_i32_0, %c0_i32_1 : i32, i32, i32, i32
  }
}

</mosaic_0001>

<llo_original>
// kernel: tpu_custom_call.1
$region0: #{tpu_custom_call.1}
  #allocation0 [shape = 'u32[]', space=smem, size = 0x4, offset = 0x4, fixed_abs, tag = 'smem constant byte address 0x4 - core index']
  #allocation1 [shape = 'u32[144,128]{1,0:T(1,128)}', space=vmem, size = 0x12000, scoped, tag = 'internal scratch']
  #allocation2 [shape = 'bf16[1,10,25,128]{3,2,1,0:T(8,128)(2,1)}', space=vmem, size = 0x14000, scoped, tag = 'scratch operand']
  #allocation3 [shape = 'bf16[1,10,25,128]{3,2,1,0:T(8,128)(2,1)}', space=vmem, size = 0x14000, scoped, tag = 'scratch operand']
  #allocation4 [shape = 'bf16[64,1152]{1,0:T(8,128)(2,1)}', space=vmem, size = 0x24000, scoped, tag = 'scratch operand']
  %s0 = inlined_call_operand.vmem [shape: f32[2,8,8,4], index: 0, kind: input, shape index: {}]
  %s1 = inlined_call_operand.hbm [shape: bf16[1152,128], index: 1, kind: input, shape index: {}]
  %s2 = inlined_call_operand.hbm [shape: bf16[1152,128], index: 2, kind: input, shape index: {}]
  %s3 = inlined_call_operand.hbm [shape: bf16[1152,128], index: 3, kind: input, shape index: {}]
  %s4 = inlined_call_operand.hbm [shape: bf16[1152,128], index: 4, kind: input, shape index: {}]
  %s5 = inlined_call_operand.hbm [shape: bf16[1152,128], index: 5, kind: input, shape index: {}]
  %s6 = inlined_call_operand.vmem [shape: f32[1,128], index: 6, kind: input, shape index: {}]
  %s7 = inlined_call_operand.vmem [shape: f32[1,128], index: 7, kind: input, shape index: {}]
  %s8 = inlined_call_operand.vmem [shape: f32[1,128], index: 8, kind: input, shape index: {}]
  %s9 = inlined_call_operand.vmem [shape: f32[1,128], index: 9, kind: input, shape index: {}]
  %s10 = inlined_call_operand.vmem [shape: f32[1,128], index: 10, kind: input, shape index: {}]
  %s11 = inlined_call_operand.hbm [shape: f32[2,8,8,128], index: 11, kind: output, shape index: {}]
  %s12 = sld [smem:[#allocation0]]
  $region97: #{tpu_custom_call.1} parent=0
    _
  %s14 = ssub.s32 1, %s12
  %s15 = scalar_select 0, %s14, %s12
  $region1: #{tpu_custom_call.1} parent=0
    #allocation5 [shape = 'u8[294912]{0}', space=vmem, size = 0x48000, scoped, tag = 'input window, operand 1, single buffered']
    #allocation6 [shape = 's32[2]{0}', space=sflag, size = 0x8, scoped, tag = 'scoped memory for tpu_custom_call.1']
    #allocation7 [shape = 's32[2]{0}', space=sflag, size = 0x8, scoped, tag = 'scoped memory for tpu_custom_call.1']
    #allocation8 [shape = 'u8[294912]{0}', space=vmem, size = 0x48000, scoped, tag = 'input window, operand 2, single buffered']
    #allocation9 [shape = 's32[1]{0}', space=sflag, size = 0x4, scoped, tag = 'scoped memory for tpu_custom_call.1']
    #allocation10 [shape = 'u8[294912]{0}', space=vmem, size = 0x48000, scoped, tag = 'input window, operand 3, single buffered']
    #allocation11 [shape = 'u8[294912]{0}', space=vmem, size = 0x48000, scoped, tag = 'input window, operand 4, single buffered']
    #allocation12 [shape = 's32[1]{0}', space=sflag, size = 0x4, scoped, tag = 'scoped memory for tpu_custom_call.1']
    #allocation13 [shape = 'u8[294912]{0}', space=vmem, size = 0x48000, scoped, tag = 'input window, operand 5, single buffered']
    #allocation14 [shape = 'u8[65536]{0}', space=vmem, size = 0x10000, scoped, tag = 'output window, operand 0']
    %16 = vsyncpa [#allocation6], 0
    %17 = vsyncpa [#allocation9], 0
    %18 = vsyncpa [#allocation12], 0
    %19 = vsyncpa [#allocation7], 0
    %s20 = scalar_lea.sflag [#allocation7], 1
    %21 = vsyncpa %s20, 0
    loop: start=0, step=1, limit=4
    $region2: #{tpu_custom_call.1} parent=1 // loop_pre_header
      _
    $region3: #{tpu_custom_call.1} parent=1 // loop_header
      %s23 = sphi 0, %s27
      %p24 = scmp.ge.s32.totalorder %s23, 4
      %s33 = sphi 0, %s35
      %s36 = sphi 0, %s33
      %s37 = sphi 0, %s36
      %s53 = sphi 0, %s37
      %s57 = sphi 0, %s57
      %s59 = sphi 0, %s57
      %s60 = sphi 0, %s59
      %s74 = sphi 0, %s60
      %s78 = sphi 0, %s78
      %s80 = sphi 0, %s78
      %s81 = sphi 0, %s80
      %s95 = sphi 0, %s81
      %s99 = sphi 0, %s99
      %s101 = sphi 0, %s99
      %s102 = sphi 0, %s101
      %s116 = sphi 0, %s102
      %s120 = sphi 0, %s120
      %s122 = sphi 0, %s120
      %s123 = sphi 0, %s122
      %s137 = sphi 0, %s123
      %s141 = sphi 0, %s141
      %s143 = sphi 0, %s141
      %s144 = sphi 0, %s143
      %s158 = sphi 0, %s144
      %s162 = sphi 0, %s162
      %s164 = sphi 0, %s162
      %s165 = sphi 0, %s164
      %s179 = sphi 0, %s165
      %s183 = sphi 0, %s183
      %s185 = sphi 0, %s183
      %s186 = sphi 0, %s185
      %s200 = sphi 0, %s186
      %s204 = sphi 0, %s204
      %s206 = sphi 0, %s204
      %s207 = sphi 0, %s206
      %s221 = sphi 0, %s207
      %s225 = sphi 0, %s225
      %s227 = sphi 0, %s225
      %s228 = sphi 0, %s227
      %s242 = sphi 0, %s228
      %s246 = sphi 0, %s246
      %s248 = sphi 0, %s246
      %s249 = sphi 0, %s248
      %s263 = sphi 0, %s249
      %s269 = sphi 0, %s271
      %s272 = sphi 0, %s269
      %s273 = sphi 0, %s272
      %s289 = sphi 0, %s273
    $region4: #{tpu_custom_call.1} parent=1 // loop_header_branch
      %26 = sbr.rel (%p24) target = $region8
    $region5: #{tpu_custom_call.1} parent=1 // loop_body
      %s28 = ssub.s32 %s23, 1
      %s29 = ssub.s32 %s23, 2
      %s30 = sadd.s32 %s23, 1
      %s31 = ssub.s32 %s23, %s30
      %p32 = scmp.eq.s32.totalorder %s31, 0
      %s34 = sadd.s32 %s33, 1
      %s35 = scalar_select %p32, %s33, %s34
      %p38 = pneg %p32
      %p39 = scmp.eq.s32.totalorder %s23, 1
      %p40 = por %p38, %p39
      %p41 = scmp.ne.s32.totalorder %s33, %s36
      %p42 = scmp.eq.s32.totalorder %s23, 0
      %p43 = por %p41, %p42
      %p44 = scmp.ne.s32.totalorder %s33, %s36
      %p45 = scmp.eq.s32.totalorder %s28, 1
      %p46 = por %p44, %p45
      %p47 = scmp.ne.s32.totalorder %s36, %s37
      %p48 = scmp.eq.s32.totalorder %s28, 0
      %p49 = por %p47, %p48
      %p50 = scmp.ne.s32.totalorder %s36, %s37
      %p51 = scmp.eq.s32.totalorder %s29, 1
      %p52 = por %p50, %p51
      %p54 = scmp.ne.s32.totalorder %s37, %s53
      %p55 = scmp.eq.s32.totalorder %s29, 0
      %p56 = por %p54, %p55
      %s58 = sadd.s32 %s57, 1
      %p61 = scmp.eq.s32.totalorder %s23, 1
      %p62 = scmp.ne.s32.totalorder %s57, %s59
      %p63 = scmp.eq.s32.totalorder %s23, 0
      %p64 = por %p62, %p63
      %p65 = scmp.ne.s32.totalorder %s57, %s59
      %p66 = scmp.eq.s32.totalorder %s28, 1
      %p67 = por %p65, %p66
      %p68 = scmp.ne.s32.totalorder %s59, %s60
      %p69 = scmp.eq.s32.totalorder %s28, 0
      %p70 = por %p68, %p69
      %p71 = scmp.ne.s32.totalorder %s59, %s60
      %p72 = scmp.eq.s32.totalorder %s29, 1
      %p73 = por %p71, %p72
      %p75 = scmp.ne.s32.totalorder %s60, %s74
      %p76 = scmp.eq.s32.totalorder %s29, 0
      %p77 = por %p75, %p76
      %s79 = sadd.s32 %s78, 1
      %p82 = scmp.eq.s32.totalorder %s23, 1
      %p83 = scmp.ne.s32.totalorder %s78, %s80
      %p84 = scmp.eq.s32.totalorder %s23, 0
      %p85 = por %p83, %p84
      %p86 = scmp.ne.s32.totalorder %s78, %s80
      %p87 = scmp.eq.s32.totalorder %s28, 1
      %p88 = por %p86, %p87
      %p89 = scmp.ne.s32.totalorder %s80, %s81
      %p90 = scmp.eq.s32.totalorder %s28, 0
      %p91 = por %p89, %p90
      %p92 = scmp.ne.s32.totalorder %s80, %s81
      %p93 = scmp.eq.s32.totalorder %s29, 1
      %p94 = por %p92, %p93
      %p96 = scmp.ne.s32.totalorder %s81, %s95
      %p97 = scmp.eq.s32.totalorder %s29, 0
      %p98 = por %p96, %p97
      %s100 = sadd.s32 %s99, 1
      %p103 = scmp.eq.s32.totalorder %s23, 1
      %p104 = scmp.ne.s32.totalorder %s99, %s101
      %p105 = scmp.eq.s32.totalorder %s23, 0
      %p106 = por %p104, %p105
      %p107 = scmp.ne.s32.totalorder %s99, %s101
      %p108 = scmp.eq.s32.totalorder %s28, 1
      %p109 = por %p107, %p108
      %p110 = scmp.ne.s32.totalorder %s101, %s102
      %p111 = scmp.eq.s32.totalorder %s28, 0
      %p112 = por %p110, %p111
      %p113 = scmp.ne.s32.totalorder %s101, %s102
      %p114 = scmp.eq.s32.totalorder %s29, 1
      %p115 = por %p113, %p114
      %p117 = scmp.ne.s32.totalorder %s102, %s116
      %p118 = scmp.eq.s32.totalorder %s29, 0
      %p119 = por %p117, %p118
      %s121 = sadd.s32 %s120, 1
      %p124 = scmp.eq.s32.totalorder %s23, 1
      %p125 = scmp.ne.s32.totalorder %s120, %s122
      %p126 = scmp.eq.s32.totalorder %s23, 0
      %p127 = por %p125, %p126
      %p128 = scmp.ne.s32.totalorder %s120, %s122
      %p129 = scmp.eq.s32.totalorder %s28, 1
      %p130 = por %p128, %p129
      %p131 = scmp.ne.s32.totalorder %s122, %s123
      %p132 = scmp.eq.s32.totalorder %s28, 0
      %p133 = por %p131, %p132
      %p134 = scmp.ne.s32.totalorder %s122, %s123
      %p135 = scmp.eq.s32.totalorder %s29, 1
      %p136 = por %p134, %p135
      %p138 = scmp.ne.s32.totalorder %s123, %s137
      %p139 = scmp.eq.s32.totalorder %s29, 0
      %p140 = por %p138, %p139
      %s142 = sadd.s32 %s141, 1
      %p145 = scmp.eq.s32.totalorder %s23, 1
      %p146 = scmp.ne.s32.totalorder %s141, %s143
      %p147 = scmp.eq.s32.totalorder %s23, 0
      %p148 = por %p146, %p147
      %p149 = scmp.ne.s32.totalorder %s141, %s143
      %p150 = scmp.eq.s32.totalorder %s28, 1
      %p151 = por %p149, %p150
      %p152 = scmp.ne.s32.totalorder %s143, %s144
      %p153 = scmp.eq.s32.totalorder %s28, 0
      %p154 = por %p152, %p153
      %p155 = scmp.ne.s32.totalorder %s143, %s144
      %p156 = scmp.eq.s32.totalorder %s29, 1
      %p157 = por %p155, %p156
      %p159 = scmp.ne.s32.totalorder %s144, %s158
      %p160 = scmp.eq.s32.totalorder %s29, 0
      %p161 = por %p159, %p160
      %s163 = sadd.s32 %s162, 1
      %p166 = scmp.eq.s32.totalorder %s23, 1
      %p167 = scmp.ne.s32.totalorder %s162, %s164
      %p168 = scmp.eq.s32.totalorder %s23, 0
      %p169 = por %p167, %p168
      %p170 = scmp.ne.s32.totalorder %s162, %s164
      %p171 = scmp.eq.s32.totalorder %s28, 1
      %p172 = por %p170, %p171
      %p173 = scmp.ne.s32.totalorder %s164, %s165
      %p174 = scmp.eq.s32.totalorder %s28, 0
      %p175 = por %p173, %p174
      %p176 = scmp.ne.s32.totalorder %s164, %s165
      %p177 = scmp.eq.s32.totalorder %s29, 1
      %p178 = por %p176, %p177
      %p180 = scmp.ne.s32.totalorder %s165, %s179
      %p181 = scmp.eq.s32.totalorder %s29, 0
      %p182 = por %p180, %p181
      %s184 = sadd.s32 %s183, 1
      %p187 = scmp.eq.s32.totalorder %s23, 1
      %p188 = scmp.ne.s32.totalorder %s183, %s185
      %p189 = scmp.eq.s32.totalorder %s23, 0
      %p190 = por %p188, %p189
      %p191 = scmp.ne.s32.totalorder %s183, %s185
      %p192 = scmp.eq.s32.totalorder %s28, 1
      %p193 = por %p191, %p192
      %p194 = scmp.ne.s32.totalorder %s185, %s186
      %p195 = scmp.eq.s32.totalorder %s28, 0
      %p196 = por %p194, %p195
      %p197 = scmp.ne.s32.totalorder %s185, %s186
      %p198 = scmp.eq.s32.totalorder %s29, 1
      %p199 = por %p197, %p198
      %p201 = scmp.ne.s32.totalorder %s186, %s200
      %p202 = scmp.eq.s32.totalorder %s29, 0
      %p203 = por %p201, %p202
      %s205 = sadd.s32 %s204, 1
      %p208 = scmp.eq.s32.totalorder %s23, 1
      %p209 = scmp.ne.s32.totalorder %s204, %s206
      %p210 = scmp.eq.s32.totalorder %s23, 0
      %p211 = por %p209, %p210
      %p212 = scmp.ne.s32.totalorder %s204, %s206
      %p213 = scmp.eq.s32.totalorder %s28, 1
      %p214 = por %p212, %p213
      %p215 = scmp.ne.s32.totalorder %s206, %s207
      %p216 = scmp.eq.s32.totalorder %s28, 0
      %p217 = por %p215, %p216
      %p218 = scmp.ne.s32.totalorder %s206, %s207
      %p219 = scmp.eq.s32.totalorder %s29, 1
      %p220 = por %p218, %p219
      %p222 = scmp.ne.s32.totalorder %s207, %s221
      %p223 = scmp.eq.s32.totalorder %s29, 0
      %p224 = por %p222, %p223
      %s226 = sadd.s32 %s225, 1
      %p229 = scmp.eq.s32.totalorder %s23, 1
      %p230 = scmp.ne.s32.totalorder %s225, %s227
      %p231 = scmp.eq.s32.totalorder %s23, 0
      %p232 = por %p230, %p231
      %p233 = scmp.ne.s32.totalorder %s225, %s227
      %p234 = scmp.eq.s32.totalorder %s28, 1
      %p235 = por %p233, %p234
      %p236 = scmp.ne.s32.totalorder %s227, %s228
      %p237 = scmp.eq.s32.totalorder %s28, 0
      %p238 = por %p236, %p237
      %p239 = scmp.ne.s32.totalorder %s227, %s228
      %p240 = scmp.eq.s32.totalorder %s29, 1
      %p241 = por %p239, %p240
      %p243 = scmp.ne.s32.totalorder %s228, %s242
      %p244 = scmp.eq.s32.totalorder %s29, 0
      %p245 = por %p243, %p244
      %s247 = sadd.s32 %s246, 1
      %p250 = scmp.eq.s32.totalorder %s23, 1
      %p251 = scmp.ne.s32.totalorder %s246, %s248
      %p252 = scmp.eq.s32.totalorder %s23, 0
      %p253 = por %p251, %p252
      %p254 = scmp.ne.s32.totalorder %s246, %s248
      %p255 = scmp.eq.s32.totalorder %s28, 1
      %p256 = por %p254, %p255
      %p257 = scmp.ne.s32.totalorder %s248, %s249
      %p258 = scmp.eq.s32.totalorder %s28, 0
      %p259 = por %p257, %p258
      %p260 = scmp.ne.s32.totalorder %s248, %s249
      %p261 = scmp.eq.s32.totalorder %s29, 1
      %p262 = por %p260, %p261
      %p264 = scmp.ne.s32.totalorder %s249, %s263
      %p265 = scmp.eq.s32.totalorder %s29, 0
      %p266 = por %p264, %p265
      %s267 = ssub.s32 %s23, %s30
      %p268 = scmp.eq.s32.totalorder %s267, 0
      %s270 = sadd.s32 %s269, 1
      %s271 = scalar_select %p268, %s269, %s270
      %p274 = pneg %p268
      %p275 = scmp.eq.s32.totalorder %s23, 1
      %p276 = por %p274, %p275
      %p277 = scmp.ne.s32.totalorder %s269, %s272
      %p278 = scmp.eq.s32.totalorder %s23, 0
      %p279 = por %p277, %p278
      %p280 = scmp.ne.s32.totalorder %s269, %s272
      %p281 = scmp.eq.s32.totalorder %s28, 1
      %p282 = por %p280, %p281
      %p283 = scmp.ne.s32.totalorder %s272, %s273
      %p284 = scmp.eq.s32.totalorder %s28, 0
      %p285 = por %p283, %p284
      %p286 = scmp.ne.s32.totalorder %s272, %s273
      %p287 = scmp.eq.s32.totalorder %s29, 1
      %p288 = por %p286, %p287
      %p290 = scmp.ne.s32.totalorder %s273, %s289
      %p291 = scmp.eq.s32.totalorder %s29, 0
      %p292 = por %p290, %p291
      %p293 = scmp.le.s32.totalorder 1, %s23
      %p294 = scmp.lt.s32.totalorder %s23, 3
      %p295 = pnand %p293, %p294
      %p296 = pneg %p295
      // Predicated region
      $region9: #{tpu_custom_call.1} parent=5 // pred_check
        _
      $region10: #{tpu_custom_call.1} parent=5 // pred_check_branch
        %298 = sbr.rel (%p295) target = $region12
      $region11: #{tpu_custom_call.1} parent=5 // pred_region
        %s299 = ssub.s32 %s23, 1
        // Predicated region
        $region13: #{tpu_custom_call.1} parent=11 // pred_check
          %p300 = pneg %p70
        $region14: #{tpu_custom_call.1} parent=11 // pred_check_branch
          %302 = sbr.rel (%p300) target = $region16
        $region15: #{tpu_custom_call.1} parent=11 // pred_region
          %s304 = ssub.s32 9216, 9216
          %305 = vsyncadd [#allocation6], %s304
          %s306 = sshll.u32 [#allocation5], 4
          %s307 = int_to_ptr.vmem [resolvable:$true] %s306
          %312 = dma.hbm_to_vmem [thread:$0]  %s1, 9216, %s307, [#allocation6], 64, 64, 4
        $region16: #{tpu_custom_call.1} parent=11 // pred_fallthru
          _
        // Predicated region
        $region17: #{tpu_custom_call.1} parent=11 // pred_check
          %p313 = pneg %p91
        $region18: #{tpu_custom_call.1} parent=11 // pred_check_branch
          %315 = sbr.rel (%p313) target = $region20
        $region19: #{tpu_custom_call.1} parent=11 // pred_region
          %s317 = ssub.s32 9216, 9216
          %318 = vsyncadd [#allocation9], %s317
          %s319 = sshll.u32 [#allocation8], 4
          %s320 = int_to_ptr.vmem [resolvable:$true] %s319
          %325 = dma.hbm_to_vmem [thread:$0]  %s2, 9216, %s320, [#allocation9], 64, 64, 4
        $region20: #{tpu_custom_call.1} parent=11 // pred_fallthru
          _
        // Predicated region
        $region21: #{tpu_custom_call.1} parent=11 // pred_check
          %p326 = pneg %p112
        $region22: #{tpu_custom_call.1} parent=11 // pred_check_branch
          %328 = sbr.rel (%p326) target = $region24
        $region23: #{tpu_custom_call.1} parent=11 // pred_region
          %s330 = ssub.s32 9216, 9216
          %331 = vsyncadd [#allocation9], %s330
          %s332 = sshll.u32 [#allocation10], 4
          %s333 = int_to_ptr.vmem [resolvable:$true] %s332
          %338 = dma.hbm_to_vmem [thread:$0]  %s3, 9216, %s333, [#allocation9], 64, 64, 4
        $region24: #{tpu_custom_call.1} parent=11 // pred_fallthru
          _
        // Predicated region
        $region25: #{tpu_custom_call.1} parent=11 // pred_check
          %p339 = pneg %p133
        $region26: #{tpu_custom_call.1} parent=11 // pred_check_branch
          %341 = sbr.rel (%p339) target = $region28
        $region27: #{tpu_custom_call.1} parent=11 // pred_region
          %s343 = ssub.s32 9216, 9216
          %344 = vsyncadd [#allocation12], %s343
          %s345 = sshll.u32 [#allocation11], 4
          %s346 = int_to_ptr.vmem [resolvable:$true] %s345
          %351 = dma.hbm_to_vmem [thread:$0]  %s4, 9216, %s346, [#allocation12], 64, 64, 4
        $region28: #{tpu_custom_call.1} parent=11 // pred_fallthru
          _
        // Predicated region
        $region29: #{tpu_custom_call.1} parent=11 // pred_check
          %p352 = pneg %p154
        $region30: #{tpu_custom_call.1} parent=11 // pred_check_branch
          %354 = sbr.rel (%p352) target = $region32
        $region31: #{tpu_custom_call.1} parent=11 // pred_region
          %s356 = ssub.s32 9216, 9216
          %357 = vsyncadd [#allocation12], %s356
          %s358 = sshll.u32 [#allocation13], 4
          %s359 = int_to_ptr.vmem [resolvable:$true] %s358
          %364 = dma.hbm_to_vmem [thread:$0]  %s5, 9216, %s359, [#allocation12], 64, 64, 4
        $region32: #{tpu_custom_call.1} parent=11 // pred_fallthru
          _
        // Predicated region
        $region33: #{tpu_custom_call.1} parent=11 // pred_check
          %p365 = pneg %p175
        $region34: #{tpu_custom_call.1} parent=11 // pred_check_branch
          %367 = sbr.rel (%p365) target = $region36
        $region35: #{tpu_custom_call.1} parent=11 // pred_region
          _
        $region36: #{tpu_custom_call.1} parent=11 // pred_fallthru
          _
        // Predicated region
        $region37: #{tpu_custom_call.1} parent=11 // pred_check
          %p368 = pneg %p196
        $region38: #{tpu_custom_call.1} parent=11 // pred_check_branch
          %370 = sbr.rel (%p368) target = $region40
        $region39: #{tpu_custom_call.1} parent=11 // pred_region
          _
        $region40: #{tpu_custom_call.1} parent=11 // pred_fallthru
          _
        // Predicated region
        $region41: #{tpu_custom_call.1} parent=11 // pred_check
          %p371 = pneg %p217
        $region42: #{tpu_custom_call.1} parent=11 // pred_check_branch
          %373 = sbr.rel (%p371) target = $region44
        $region43: #{tpu_custom_call.1} parent=11 // pred_region
          _
        $region44: #{tpu_custom_call.1} parent=11 // pred_fallthru
          _
        // Predicated region
        $region45: #{tpu_custom_call.1} parent=11 // pred_check
          %p374 = pneg %p238
        $region46: #{tpu_custom_call.1} parent=11 // pred_check_branch
          %376 = sbr.rel (%p374) target = $region48
        $region47: #{tpu_custom_call.1} parent=11 // pred_region
          _
        $region48: #{tpu_custom_call.1} parent=11 // pred_fallthru
          _
        // Predicated region
        $region49: #{tpu_custom_call.1} parent=11 // pred_check
          %p377 = pneg %p259
        $region50: #{tpu_custom_call.1} parent=11 // pred_check_branch
          %379 = sbr.rel (%p377) target = $region52
        $region51: #{tpu_custom_call.1} parent=11 // pred_region
          _
        $region52: #{tpu_custom_call.1} parent=11 // pred_fallthru
          _
      $region12: #{tpu_custom_call.1} parent=5 // pred_fallthru
        _
      %p380 = scmp.lt.s32.totalorder %s23, 2
      // Predicated region
      $region53: #{tpu_custom_call.1} parent=5 // pred_check
        %p381 = pneg %p380
      $region54: #{tpu_custom_call.1} parent=5 // pred_check_branch
        %383 = sbr.rel (%p381) target = $region56
      $region55: #{tpu_custom_call.1} parent=5 // pred_region
        // Predicated region
        $region57: #{tpu_custom_call.1} parent=55 // pred_check
          %p384 = pneg %p43
        $region58: #{tpu_custom_call.1} parent=55 // pred_check_branch
          %386 = sbr.rel (%p384) target = $region60
        $region59: #{tpu_custom_call.1} parent=55 // pred_region
          %p387 = scmp.lt.s32.totalorder %s23, 1
          %s388 = scalar_select %p387, %s23, 1
          %s389 = smul.addr %s388, 8
          %s390 = smul.addr %s389, 8
          %s391 = scalar_lea.vmem %s0, %s390
        $region60: #{tpu_custom_call.1} parent=55 // pred_fallthru
          _
      $region56: #{tpu_custom_call.1} parent=5 // pred_fallthru
        _
      %p392 = scmp.le.s32.totalorder 1, %s23
      %p393 = scmp.lt.s32.totalorder %s23, 3
      %p394 = pnand %p392, %p393
      %p395 = pneg %p394
      // Predicated region
      $region61: #{tpu_custom_call.1} parent=5 // pred_check
        _
      $region62: #{tpu_custom_call.1} parent=5 // pred_check_branch
        %397 = sbr.rel (%p394) target = $region64
      $region63: #{tpu_custom_call.1} parent=5 // pred_region
        %s398 = ssub.s32 %s23, 1
        // Predicated region
        $region65: #{tpu_custom_call.1} parent=63 // pred_check
          %p399 = pneg %p70
        $region66: #{tpu_custom_call.1} parent=63 // pred_check_branch
          %401 = sbr.rel (%p399) target = $region68
        $region67: #{tpu_custom_call.1} parent=63 // pred_region
          %402 = dma.done [#allocation6], 9216
        $region68: #{tpu_custom_call.1} parent=63 // pred_fallthru
          _
        // Predicated region
        $region69: #{tpu_custom_call.1} parent=63 // pred_check
          %p403 = pneg %p91
        $region70: #{tpu_custom_call.1} parent=63 // pred_check_branch
          %405 = sbr.rel (%p403) target = $region72
        $region71: #{tpu_custom_call.1} parent=63 // pred_region
          %406 = dma.done [#allocation9], 9216
        $region72: #{tpu_custom_call.1} parent=63 // pred_fallthru
          _
        // Predicated region
        $region73: #{tpu_custom_call.1} parent=63 // pred_check
          %p407 = pneg %p112
        $region74: #{tpu_custom_call.1} parent=63 // pred_check_branch
          %409 = sbr.rel (%p407) target = $region76
        $region75: #{tpu_custom_call.1} parent=63 // pred_region
          %410 = dma.done [#allocation9], 9216
        $region76: #{tpu_custom_call.1} parent=63 // pred_fallthru
          _
        // Predicated region
        $region77: #{tpu_custom_call.1} parent=63 // pred_check
          %p411 = pneg %p133
        $region78: #{tpu_custom_call.1} parent=63 // pred_check_branch
          %413 = sbr.rel (%p411) target = $region80
        $region79: #{tpu_custom_call.1} parent=63 // pred_region
          %414 = dma.done [#allocation12], 9216
        $region80: #{tpu_custom_call.1} parent=63 // pred_fallthru
          _
        // Predicated region
        $region81: #{tpu_custom_call.1} parent=63 // pred_check
          %p415 = pneg %p154
        $region82: #{tpu_custom_call.1} parent=63 // pred_check_branch
          %417 = sbr.rel (%p415) target = $region84
        $region83: #{tpu_custom_call.1} parent=63 // pred_region
          %418 = dma.done [#allocation12], 9216
        $region84: #{tpu_custom_call.1} parent=63 // pred_fallthru
          _
        %p419 = scmp.lt.s32.totalorder %s28, 1
        %s420 = scalar_select %p419, %s28, 1
        %s421 = smul.addr %s420, 8
        %s422 = smul.addr %s421, 8
        %s423 = scalar_lea.vmem %s0, %s422
        %p424 = pneg %p49
        %p425 = pneg %p46
        %p426 = pneg %p70
        %p427 = pneg %p67
        %p428 = pneg %p91
        %p429 = pneg %p88
        %p430 = pneg %p112
        %p431 = pneg %p109
        %p432 = pneg %p133
        %p433 = pneg %p130
        %p434 = pneg %p154
        %p435 = pneg %p151
        %p436 = pneg %p175
        %p437 = pneg %p172
        %p438 = pneg %p196
        %p439 = pneg %p193
        %p440 = pneg %p217
        %p441 = pneg %p214
        %p442 = pneg %p238
        %p443 = pneg %p235
        %p444 = pneg %p259
        %p445 = pneg %p256
        %p446 = pneg %p285
        %p447 = pneg %p282
        %s448 = sand.u32 %s272, 1
        %s449 = scalar_lea.sflag [#allocation7], %s448
        %s450 = sand.u32 %s272, 1
        %s451 = smul.addr %s450, 64
        %s452 = scalar_lea.vmem [#allocation14], %s451
        %p453 = scmp.lt.s32.totalorder %s28, 1
        %s454 = scalar_select %p453, %s28, 1
        %s455 = smul.addr %s454, 8
        %s456 = smul.addr %s455, 8
        %s457 = scalar_lea.vmem %s0, %s456
        %vm459 = vcmask 1043459
        %vm460 = vsmask.f32 7950
        %vm461 = vmand %vm459, %vm460
        %v462 = vld [vmem:[#allocation2 + $0x4] sm:$0x8]
        %v463 = vsel %vm461, 0, %v462
        %464 = vst [vmem:[#allocation2 + $0x4] sm:$0x8] %v463
        %465 = vst [vmem:[#allocation2 + $0x8] sm:$0xf] 0
        %vm466 = vcmask 1040384
        %vm467 = vsmask.f32 256
        %vm468 = vmand %vm466, %vm467
        %v469 = vld [vmem:[#allocation2 + $0xc] sm:$0x1]
        %v470 = vsel %vm468, 0, %v469
        %471 = vst [vmem:[#allocation2 + $0xc] sm:$0x1] %v470
        %s472 = scalar_lea.vmem [#allocation2], 144
        %v473 = vld [vmem:[%s472 + $0x4] sm:$0x8]
        %v474 = vsel %vm461, 0, %v473
        %475 = vst [vmem:[%s472 + $0x4] sm:$0x8] %v474
        %476 = vst [vmem:[%s472 + $0x8] sm:$0xf] 0
        %v477 = vld [vmem:[%s472 + $0xc] sm:$0x1]
        %v478 = vsel %vm468, 0, %v477
        %479 = vst [vmem:[%s472 + $0xc] sm:$0x1] %v478
        %s480 = scalar_lea.vmem [#allocation2], 16
        %v481 = vld [vmem:[%s480 + $0x4] sm:$0x8]
        %v482 = vsel %vm461, 0, %v481
        %483 = vst [vmem:[%s480 + $0x4] sm:$0x8] %v482
        %v484 = vld [vmem:[%s480 + $0x14] sm:$0x8]
        %v485 = vsel %vm461, 0, %v484
        %486 = vst [vmem:[%s480 + $0x14] sm:$0x8] %v485
        %v487 = vld [vmem:[%s480 + $0x24] sm:$0x8]
        %v488 = vsel %vm461, 0, %v487
        %489 = vst [vmem:[%s480 + $0x24] sm:$0x8] %v488
        %v490 = vld [vmem:[%s480 + $0x34] sm:$0x8]
        %v491 = vsel %vm461, 0, %v490
        %492 = vst [vmem:[%s480 + $0x34] sm:$0x8] %v491
        %v493 = vld [vmem:[%s480 + $0x44] sm:$0x8]
        %v494 = vsel %vm461, 0, %v493
        %495 = vst [vmem:[%s480 + $0x44] sm:$0x8] %v494
        %v496 = vld [vmem:[%s480 + $0x54] sm:$0x8]
        %v497 = vsel %vm461, 0, %v496
        %498 = vst [vmem:[%s480 + $0x54] sm:$0x8] %v497
        %v499 = vld [vmem:[%s480 + $0x64] sm:$0x8]
        %v500 = vsel %vm461, 0, %v499
        %501 = vst [vmem:[%s480 + $0x64] sm:$0x8] %v500
        %v502 = vld [vmem:[%s480 + $0x74] sm:$0x8]
        %v503 = vsel %vm461, 0, %v502
        %504 = vst [vmem:[%s480 + $0x74] sm:$0x8] %v503
        %v505 = vld [vmem:[%s480 + $0xc] sm:$0x1]
        %v506 = vsel %vm468, 0, %v505
        %507 = vst [vmem:[%s480 + $0xc] sm:$0x1] %v506
        %v508 = vld [vmem:[%s480 + $0x1c] sm:$0x1]
        %v509 = vsel %vm468, 0, %v508
        %510 = vst [vmem:[%s480 + $0x1c] sm:$0x1] %v509
        %v511 = vld [vmem:[%s480 + $0x2c] sm:$0x1]
        %v512 = vsel %vm468, 0, %v511
        %513 = vst [vmem:[%s480 + $0x2c] sm:$0x1] %v512
        %v514 = vld [vmem:[%s480 + $0x3c] sm:$0x1]
        %v515 = vsel %vm468, 0, %v514
        %516 = vst [vmem:[%s480 + $0x3c] sm:$0x1] %v515
        %v517 = vld [vmem:[%s480 + $0x4c] sm:$0x1]
        %v518 = vsel %vm468, 0, %v517
        %519 = vst [vmem:[%s480 + $0x4c] sm:$0x1] %v518
        %v520 = vld [vmem:[%s480 + $0x5c] sm:$0x1]
        %v521 = vsel %vm468, 0, %v520
        %522 = vst [vmem:[%s480 + $0x5c] sm:$0x1] %v521
        %v523 = vld [vmem:[%s480 + $0x6c] sm:$0x1]
        %v524 = vsel %vm468, 0, %v523
        %525 = vst [vmem:[%s480 + $0x6c] sm:$0x1] %v524
        %v526 = vld [vmem:[%s480 + $0x7c] sm:$0x1]
        %v527 = vsel %vm468, 0, %v526
        %528 = vst [vmem:[%s480 + $0x7c] sm:$0x1] %v527
        %v529 = vld [vmem:[#allocation3 + $0x4] sm:$0x8]
        %v530 = vsel %vm461, 0, %v529
        %531 = vst [vmem:[#allocation3 + $0x4] sm:$0x8] %v530
        %532 = vst [vmem:[#allocation3 + $0x8] sm:$0xf] 0
        %v533 = vld [vmem:[#allocation3 + $0xc] sm:$0x1]
        %v534 = vsel %vm468, 0, %v533
        %535 = vst [vmem:[#allocation3 + $0xc] sm:$0x1] %v534
        %s536 = scalar_lea.vmem [#allocation3], 144
        %v537 = vld [vmem:[%s536 + $0x4] sm:$0x8]
        %v538 = vsel %vm461, 0, %v537
        %539 = vst [vmem:[%s536 + $0x4] sm:$0x8] %v538
        %540 = vst [vmem:[%s536 + $0x8] sm:$0xf] 0
        %v541 = vld [vmem:[%s536 + $0xc] sm:$0x1]
        %v542 = vsel %vm468, 0, %v541
        %543 = vst [vmem:[%s536 + $0xc] sm:$0x1] %v542
        %s544 = scalar_lea.vmem [#allocation3], 16
        %v545 = vld [vmem:[%s544 + $0x4] sm:$0x8]
        %v546 = vsel %vm461, 0, %v545
        %547 = vst [vmem:[%s544 + $0x4] sm:$0x8] %v546
        %v548 = vld [vmem:[%s544 + $0x14] sm:$0x8]
        %v549 = vsel %vm461, 0, %v548
        %550 = vst [vmem:[%s544 + $0x14] sm:$0x8] %v549
        %v551 = vld [vmem:[%s544 + $0x24] sm:$0x8]
        %v552 = vsel %vm461, 0, %v551
        %553 = vst [vmem:[%s544 + $0x24] sm:$0x8] %v552
        %v554 = vld [vmem:[%s544 + $0x34] sm:$0x8]
        %v555 = vsel %vm461, 0, %v554
        %556 = vst [vmem:[%s544 + $0x34] sm:$0x8] %v555
        %v557 = vld [vmem:[%s544 + $0x44] sm:$0x8]
        %v558 = vsel %vm461, 0, %v557
        %559 = vst [vmem:[%s544 + $0x44] sm:$0x8] %v558
        %v560 = vld [vmem:[%s544 + $0x54] sm:$0x8]
        %v561 = vsel %vm461, 0, %v560
        %562 = vst [vmem:[%s544 + $0x54] sm:$0x8] %v561
        %v563 = vld [vmem:[%s544 + $0x64] sm:$0x8]
        %v564 = vsel %vm461, 0, %v563
        %565 = vst [vmem:[%s544 + $0x64] sm:$0x8] %v564
        %v566 = vld [vmem:[%s544 + $0x74] sm:$0x8]
        %v567 = vsel %vm461, 0, %v566
        %568 = vst [vmem:[%s544 + $0x74] sm:$0x8] %v567
        %v569 = vld [vmem:[%s544 + $0xc] sm:$0x1]
        %v570 = vsel %vm468, 0, %v569
        %571 = vst [vmem:[%s544 + $0xc] sm:$0x1] %v570
        %v572 = vld [vmem:[%s544 + $0x1c] sm:$0x1]
        %v573 = vsel %vm468, 0, %v572
        %574 = vst [vmem:[%s544 + $0x1c] sm:$0x1] %v573
        %v575 = vld [vmem:[%s544 + $0x2c] sm:$0x1]
        %v576 = vsel %vm468, 0, %v575
        %577 = vst [vmem:[%s544 + $0x2c] sm:$0x1] %v576
        %v578 = vld [vmem:[%s544 + $0x3c] sm:$0x1]
        %v579 = vsel %vm468, 0, %v578
        %580 = vst [vmem:[%s544 + $0x3c] sm:$0x1] %v579
        %v581 = vld [vmem:[%s544 + $0x4c] sm:$0x1]
        %v582 = vsel %vm468, 0, %v581
        %583 = vst [vmem:[%s544 + $0x4c] sm:$0x1] %v582
        %v584 = vld [vmem:[%s544 + $0x5c] sm:$0x1]
        %v585 = vsel %vm468, 0, %v584
        %586 = vst [vmem:[%s544 + $0x5c] sm:$0x1] %v585
        %v587 = vld [vmem:[%s544 + $0x6c] sm:$0x1]
        %v588 = vsel %vm468, 0, %v587
        %589 = vst [vmem:[%s544 + $0x6c] sm:$0x1] %v588
        %v590 = vld [vmem:[%s544 + $0x7c] sm:$0x1]
        %v591 = vsel %vm468, 0, %v590
        %592 = vst [vmem:[%s544 + $0x7c] sm:$0x1] %v591
        %v593 = vld [vmem:[%s457] sm:$0xff]
        %v594 = vld [vmem:[%s457 + $0x8] sm:$0xff]
        %v595 = vld [vmem:[%s457 + $0x10] sm:$0xff]
        %v596 = vld [vmem:[%s457 + $0x18] sm:$0xff]
        %v597 = vld [vmem:[%s457 + $0x20] sm:$0xff]
        %v598 = vld [vmem:[%s457 + $0x28] sm:$0xff]
        %v599 = vld [vmem:[%s457 + $0x30] sm:$0xff]
        %v600 = vld [vmem:[%s457 + $0x38] sm:$0xff]
        %v601 = vpack.c.bf16 %v593, %v593
        %v602 = vpack.c.bf16 %v594, %v594
        %v603 = vpack.c.bf16 %v595, %v595
        %v604 = vpack.c.bf16 %v596, %v596
        %v605 = vpack.c.bf16 %v597, %v597
        %v606 = vpack.c.bf16 %v598, %v598
        %v607 = vpack.c.bf16 %v599, %v599
        %v608 = vpack.c.bf16 %v600, %v600
        %vm609 = vcmask 31744
        %v612 = vsel %vm609, %v601, 0
        %v615 = vsel %vm609, %v602, 0
        %v618 = vsel %vm609, %v603, 0
        %v621 = vsel %vm609, %v604, 0
        %v624 = vsel %vm609, %v605, 0
        %v627 = vsel %vm609, %v606, 0
        %v630 = vsel %vm609, %v607, 0
        %v633 = vsel %vm609, %v608, 0
        %635 = vst [vmem:[%s480 + $0x8] sm:$0xf] %v612
        %636 = vst [vmem:[%s480 + $0x18] sm:$0xf] %v615
        %637 = vst [vmem:[%s480 + $0x28] sm:$0xf] %v618
        %638 = vst [vmem:[%s480 + $0x38] sm:$0xf] %v621
        %639 = vst [vmem:[%s480 + $0x48] sm:$0xf] %v624
        %640 = vst [vmem:[%s480 + $0x58] sm:$0xf] %v627
        %641 = vst [vmem:[%s480 + $0x68] sm:$0xf] %v630
        %642 = vst [vmem:[%s480 + $0x78] sm:$0xf] %v633
        %v643 = vld [vmem:[#allocation2 + $0x4] sm:$0x8]
        %v644 = vld [vmem:[#allocation2 + $0x8] sm:$0xf]
        %v645 = vld [vmem:[#allocation2 + $0x14] sm:$0x8]
        %v646 = vld [vmem:[#allocation2 + $0x18] sm:$0xf]
        %v647 = vld [vmem:[#allocation2 + $0x24] sm:$0x8]
        %v648 = vld [vmem:[#allocation2 + $0x28] sm:$0xf]
        %v649 = vld [vmem:[#allocation2 + $0x34] sm:$0x8]
        %v650 = vld [vmem:[#allocation2 + $0x38] sm:$0xf]
        %v651 = vld [vmem:[#allocation2 + $0x44] sm:$0x8]
        %v652 = vld [vmem:[#allocation2 + $0x48] sm:$0xf]
        %v653 = vld [vmem:[#allocation2 + $0x54] sm:$0x8]
        %v654 = vld [vmem:[#allocation2 + $0x58] sm:$0xf]
        %v655 = vld [vmem:[#allocation2 + $0x64] sm:$0x8]
        %v656 = vld [vmem:[#allocation2 + $0x68] sm:$0xf]
        %v657 = vld [vmem:[#allocation2 + $0x74] sm:$0x8]
        %v658 = vld [vmem:[#allocation2 + $0x78] sm:$0xf]
        %vm659 = vsmask.f32 4368
        %vm660 = vmor %vm467, %vm659
        %v662 = vshrl.u32 %v643, 16
        %v664 = vrot.slane %v662, 7
        %v665 = vrot.slane %v664, 4
        %v667 = vshrl.u32 %v644, 16
        %v669 = vrot.slane %v667, 7
        %v670 = vshll.u32 %v644, 16
        %v672 = vor.u32 %v669, %v670
        %v673 = vsel %vm660, %v665, %v672
        %v675 = vshrl.u32 %v645, 16
        %v677 = vrot.slane %v675, 7
        %v678 = vrot.slane %v677, 4
        %v680 = vshrl.u32 %v646, 16
        %v682 = vrot.slane %v680, 7
        %v683 = vshll.u32 %v646, 16
        %v685 = vor.u32 %v682, %v683
        %v686 = vsel %vm660, %v678, %v685
        %v688 = vshrl.u32 %v647, 16
        %v690 = vrot.slane %v688, 7
        %v691 = vrot.slane %v690, 4
        %v693 = vshrl.u32 %v648, 16
        %v695 = vrot.slane %v693, 7
        %v696 = vshll.u32 %v648, 16
        %v698 = vor.u32 %v695, %v696
        %v699 = vsel %vm660, %v691, %v698
        %v701 = vshrl.u32 %v649, 16
        %v703 = vrot.slane %v701, 7
        %v704 = vrot.slane %v703, 4
        %v706 = vshrl.u32 %v650, 16
        %v708 = vrot.slane %v706, 7
        %v709 = vshll.u32 %v650, 16
        %v711 = vor.u32 %v708, %v709
        %v712 = vsel %vm660, %v704, %v711
        %v714 = vshrl.u32 %v651, 16
        %v716 = vrot.slane %v714, 7
        %v717 = vrot.slane %v716, 4
        %v719 = vshrl.u32 %v652, 16
        %v721 = vrot.slane %v719, 7
        %v722 = vshll.u32 %v652, 16
        %v724 = vor.u32 %v721, %v722
        %v725 = vsel %vm660, %v717, %v724
        %v727 = vshrl.u32 %v653, 16
        %v729 = vrot.slane %v727, 7
        %v730 = vrot.slane %v729, 4
        %v732 = vshrl.u32 %v654, 16
        %v734 = vrot.slane %v732, 7
        %v735 = vshll.u32 %v654, 16
        %v737 = vor.u32 %v734, %v735
        %v738 = vsel %vm660, %v730, %v737
        %v740 = vshrl.u32 %v655, 16
        %v742 = vrot.slane %v740, 7
        %v743 = vrot.slane %v742, 4
        %v745 = vshrl.u32 %v656, 16
        %v747 = vrot.slane %v745, 7
        %v748 = vshll.u32 %v656, 16
        %v750 = vor.u32 %v747, %v748
        %v751 = vsel %vm660, %v743, %v750
        %v753 = vshrl.u32 %v657, 16
        %v755 = vrot.slane %v753, 7
        %v756 = vrot.slane %v755, 4
        %v758 = vshrl.u32 %v658, 16
        %v760 = vrot.slane %v758, 7
        %v761 = vshll.u32 %v658, 16
        %v763 = vor.u32 %v760, %v761
        %v764 = vsel %vm660, %v756, %v763
        %773 = vst [vmem:[#allocation4] sm:$0xf] %v673
        %774 = vst [vmem:[#allocation4 + $0x24] sm:$0xf] %v686
        %775 = vst [vmem:[#allocation4 + $0x48] sm:$0xf] %v699
        %776 = vst [vmem:[#allocation4 + $0x6c] sm:$0xf] %v712
        %777 = vst [vmem:[#allocation4 + $0x90] sm:$0xf] %v725
        %778 = vst [vmem:[#allocation4 + $0xb4] sm:$0xf] %v738
        %779 = vst [vmem:[#allocation4 + $0xd8] sm:$0xf] %v751
        %780 = vst [vmem:[#allocation4 + $0xfc] sm:$0xf] %v764
        %v781 = vld [vmem:[#allocation2 + $0x8] sm:$0xf]
        %v782 = vld [vmem:[#allocation2 + $0x18] sm:$0xf]
        %v783 = vld [vmem:[#allocation2 + $0x28] sm:$0xf]
        %v784 = vld [vmem:[#allocation2 + $0x38] sm:$0xf]
        %v785 = vld [vmem:[#allocation2 + $0x48] sm:$0xf]
        %v786 = vld [vmem:[#allocation2 + $0x58] sm:$0xf]
        %v787 = vld [vmem:[#allocation2 + $0x68] sm:$0xf]
        %v788 = vld [vmem:[#allocation2 + $0x78] sm:$0xf]
        %789 = vst [vmem:[#allocation4 + $0x4] sm:$0xf] %v781
        %790 = vst [vmem:[#allocation4 + $0x28] sm:$0xf] %v782
        %791 = vst [vmem:[#allocation4 + $0x4c] sm:$0xf] %v783
        %792 = vst [vmem:[#allocation4 + $0x70] sm:$0xf] %v784
        %793 = vst [vmem:[#allocation4 + $0x94] sm:$0xf] %v785
        %794 = vst [vmem:[#allocation4 + $0xb8] sm:$0xf] %v786
        %795 = vst [vmem:[#allocation4 + $0xdc] sm:$0xf] %v787
        %796 = vst [vmem:[#allocation4 + $0x100] sm:$0xf] %v788
        %v797 = vld [vmem:[#allocation2 + $0x8] sm:$0xf]
        %v798 = vld [vmem:[#allocation2 + $0xc] sm:$0x1]
        %v799 = vld [vmem:[#allocation2 + $0x18] sm:$0xf]
        %v800 = vld [vmem:[#allocation2 + $0x1c] sm:$0x1]
        %v801 = vld [vmem:[#allocation2 + $0x28] sm:$0xf]
        %v802 = vld [vmem:[#allocation2 + $0x2c] sm:$0x1]
        %v803 = vld [vmem:[#allocation2 + $0x38] sm:$0xf]
        %v804 = vld [vmem:[#allocation2 + $0x3c] sm:$0x1]
        %v805 = vld [vmem:[#allocation2 + $0x48] sm:$0xf]
        %v806 = vld [vmem:[#allocation2 + $0x4c] sm:$0x1]
        %v807 = vld [vmem:[#allocation2 + $0x58] sm:$0xf]
        %v808 = vld [vmem:[#allocation2 + $0x5c] sm:$0x1]
        %v809 = vld [vmem:[#allocation2 + $0x68] sm:$0xf]
        %v810 = vld [vmem:[#allocation2 + $0x6c] sm:$0x1]
        %v811 = vld [vmem:[#allocation2 + $0x78] sm:$0xf]
        %v812 = vld [vmem:[#allocation2 + $0x7c] sm:$0x1]
        %vm813 = vsmask.f32 3328
        %vm814 = vsmask.f32 7440
        %vm815 = vmor %vm813, %vm814
        %v817 = vshrl.u32 %v797, 16
        %v819 = vrot.slane %v817, 4
        %v820 = vshll.u32 %v797, 16
        %v822 = vrot.slane %v820, 5
        %v823 = vor.u32 %v819, %v822
        %v824 = vrot.slane %v823, 4
        %v826 = vshll.u32 %v798, 16
        %v828 = vrot.slane %v826, 5
        %v829 = vsel %vm815, %v824, %v828
        %v831 = vshrl.u32 %v799, 16
        %v833 = vrot.slane %v831, 4
        %v834 = vshll.u32 %v799, 16
        %v836 = vrot.slane %v834, 5
        %v837 = vor.u32 %v833, %v836
        %v838 = vrot.slane %v837, 4
        %v840 = vshll.u32 %v800, 16
        %v842 = vrot.slane %v840, 5
        %v843 = vsel %vm815, %v838, %v842
        %v845 = vshrl.u32 %v801, 16
        %v847 = vrot.slane %v845, 4
        %v848 = vshll.u32 %v801, 16
        %v850 = vrot.slane %v848, 5
        %v851 = vor.u32 %v847, %v850
        %v852 = vrot.slane %v851, 4
        %v854 = vshll.u32 %v802, 16
        %v856 = vrot.slane %v854, 5
        %v857 = vsel %vm815, %v852, %v856
        %v859 = vshrl.u32 %v803, 16
        %v861 = vrot.slane %v859, 4
        %v862 = vshll.u32 %v803, 16
        %v864 = vrot.slane %v862, 5
        %v865 = vor.u32 %v861, %v864
        %v866 = vrot.slane %v865, 4
        %v868 = vshll.u32 %v804, 16
        %v870 = vrot.slane %v868, 5
        %v871 = vsel %vm815, %v866, %v870
        %v873 = vshrl.u32 %v805, 16
        %v875 = vrot.slane %v873, 4
        %v876 = vshll.u32 %v805, 16
        %v878 = vrot.slane %v876, 5
        %v879 = vor.u32 %v875, %v878
        %v880 = vrot.slane %v879, 4
        %v882 = vshll.u32 %v806, 16
        %v884 = vrot.slane %v882, 5
        %v885 = vsel %vm815, %v880, %v884
        %v887 = vshrl.u32 %v807, 16
        %v889 = vrot.slane %v887, 4
        %v890 = vshll.u32 %v807, 16
        %v892 = vrot.slane %v890, 5
        %v893 = vor.u32 %v889, %v892
        %v894 = vrot.slane %v893, 4
        %v896 = vshll.u32 %v808, 16
        %v898 = vrot.slane %v896, 5
        %v899 = vsel %vm815, %v894, %v898
        %v901 = vshrl.u32 %v809, 16
        %v903 = vrot.slane %v901, 4
        %v904 = vshll.u32 %v809, 16
        %v906 = vrot.slane %v904, 5
        %v907 = vor.u32 %v903, %v906
        %v908 = vrot.slane %v907, 4
        %v910 = vshll.u32 %v810, 16
        %v912 = vrot.slane %v910, 5
        %v913 = vsel %vm815, %v908, %v912
        %v915 = vshrl.u32 %v811, 16
        %v917 = vrot.slane %v915, 4
        %v918 = vshll.u32 %v811, 16
        %v920 = vrot.slane %v918, 5
        %v921 = vor.u32 %v917, %v920
        %v922 = vrot.slane %v921, 4
        %v924 = vshll.u32 %v812, 16
        %v926 = vrot.slane %v924, 5
        %v927 = vsel %vm815, %v922, %v926
        %936 = vst [vmem:[#allocation4 + $0x8] sm:$0xf] %v829
        %937 = vst [vmem:[#allocation4 + $0x2c] sm:$0xf] %v843
        %938 = vst [vmem:[#allocation4 + $0x50] sm:$0xf] %v857
        %939 = vst [vmem:[#allocation4 + $0x74] sm:$0xf] %v871
        %940 = vst [vmem:[#allocation4 + $0x98] sm:$0xf] %v885
        %941 = vst [vmem:[#allocation4 + $0xbc] sm:$0xf] %v899
        %942 = vst [vmem:[#allocation4 + $0xe0] sm:$0xf] %v913
        %943 = vst [vmem:[#allocation4 + $0x104] sm:$0xf] %v927
        %v944 = vld [vmem:[%s480 + $0x4] sm:$0x8]
        %v945 = vld [vmem:[%s480 + $0x8] sm:$0xf]
        %v946 = vld [vmem:[%s480 + $0x14] sm:$0x8]
        %v947 = vld [vmem:[%s480 + $0x18] sm:$0xf]
        %v948 = vld [vmem:[%s480 + $0x24] sm:$0x8]
        %v949 = vld [vmem:[%s480 + $0x28] sm:$0xf]
        %v950 = vld [vmem:[%s480 + $0x34] sm:$0x8]
        %v951 = vld [vmem:[%s480 + $0x38] sm:$0xf]
        %v952 = vld [vmem:[%s480 + $0x44] sm:$0x8]
        %v953 = vld [vmem:[%s480 + $0x48] sm:$0xf]
        %v954 = vld [vmem:[%s480 + $0x54] sm:$0x8]
        %v955 = vld [vmem:[%s480 + $0x58] sm:$0xf]
        %v956 = vld [vmem:[%s480 + $0x64] sm:$0x8]
        %v957 = vld [vmem:[%s480 + $0x68] sm:$0xf]
        %v958 = vld [vmem:[%s480 + $0x74] sm:$0x8]
        %v959 = vld [vmem:[%s480 + $0x78] sm:$0xf]
        %v961 = vshrl.u32 %v944, 16
        %v963 = vrot.slane %v961, 7
        %v964 = vrot.slane %v963, 4
        %v966 = vshrl.u32 %v945, 16
        %v968 = vrot.slane %v966, 7
        %v969 = vshll.u32 %v945, 16
        %v971 = vor.u32 %v968, %v969
        %v972 = vsel %vm660, %v964, %v971
        %v974 = vshrl.u32 %v946, 16
        %v976 = vrot.slane %v974, 7
        %v977 = vrot.slane %v976, 4
        %v979 = vshrl.u32 %v947, 16
        %v981 = vrot.slane %v979, 7
        %v982 = vshll.u32 %v947, 16
        %v984 = vor.u32 %v981, %v982
        %v985 = vsel %vm660, %v977, %v984
        %v987 = vshrl.u32 %v948, 16
        %v989 = vrot.slane %v987, 7
        %v990 = vrot.slane %v989, 4
        %v992 = vshrl.u32 %v949, 16
        %v994 = vrot.slane %v992, 7
        %v995 = vshll.u32 %v949, 16
        %v997 = vor.u32 %v994, %v995
        %v998 = vsel %vm660, %v990, %v997
        %v1000 = vshrl.u32 %v950, 16
        %v1002 = vrot.slane %v1000, 7
        %v1003 = vrot.slane %v1002, 4
        %v1005 = vshrl.u32 %v951, 16
        %v1007 = vrot.slane %v1005, 7
        %v1008 = vshll.u32 %v951, 16
        %v1010 = vor.u32 %v1007, %v1008
        %v1011 = vsel %vm660, %v1003, %v1010
        %v1013 = vshrl.u32 %v952, 16
        %v1015 = vrot.slane %v1013, 7
        %v1016 = vrot.slane %v1015, 4
        %v1018 = vshrl.u32 %v953, 16
        %v1020 = vrot.slane %v1018, 7
        %v1021 = vshll.u32 %v953, 16
        %v1023 = vor.u32 %v1020, %v1021
        %v1024 = vsel %vm660, %v1016, %v1023
        %v1026 = vshrl.u32 %v954, 16
        %v1028 = vrot.slane %v1026, 7
        %v1029 = vrot.slane %v1028, 4
        %v1031 = vshrl.u32 %v955, 16
        %v1033 = vrot.slane %v1031, 7
        %v1034 = vshll.u32 %v955, 16
        %v1036 = vor.u32 %v1033, %v1034
        %v1037 = vsel %vm660, %v1029, %v1036
        %v1039 = vshrl.u32 %v956, 16
        %v1041 = vrot.slane %v1039, 7
        %v1042 = vrot.slane %v1041, 4
        %v1044 = vshrl.u32 %v957, 16
        %v1046 = vrot.slane %v1044, 7
        %v1047 = vshll.u32 %v957, 16
        %v1049 = vor.u32 %v1046, %v1047
        %v1050 = vsel %vm660, %v1042, %v1049
        %v1052 = vshrl.u32 %v958, 16
        %v1054 = vrot.slane %v1052, 7
        %v1055 = vrot.slane %v1054, 4
        %v1057 = vshrl.u32 %v959, 16
        %v1059 = vrot.slane %v1057, 7
        %v1060 = vshll.u32 %v959, 16
        %v1062 = vor.u32 %v1059, %v1060
        %v1063 = vsel %vm660, %v1055, %v1062
        %1072 = vst [vmem:[#allocation4 + $0xc] sm:$0xf] %v972
        %1073 = vst [vmem:[#allocation4 + $0x30] sm:$0xf] %v985
        %1074 = vst [vmem:[#allocation4 + $0x54] sm:$0xf] %v998
        %1075 = vst [vmem:[#allocation4 + $0x78] sm:$0xf] %v1011
        %1076 = vst [vmem:[#allocation4 + $0x9c] sm:$0xf] %v1024
        %1077 = vst [vmem:[#allocation4 + $0xc0] sm:$0xf] %v1037
        %1078 = vst [vmem:[#allocation4 + $0xe4] sm:$0xf] %v1050
        %1079 = vst [vmem:[#allocation4 + $0x108] sm:$0xf] %v1063
        %v1080 = vld [vmem:[%s480 + $0x8] sm:$0xf]
        %v1081 = vld [vmem:[%s480 + $0x18] sm:$0xf]
        %v1082 = vld [vmem:[%s480 + $0x28] sm:$0xf]
        %v1083 = vld [vmem:[%s480 + $0x38] sm:$0xf]
        %v1084 = vld [vmem:[%s480 + $0x48] sm:$0xf]
        %v1085 = vld [vmem:[%s480 + $0x58] sm:$0xf]
        %v1086 = vld [vmem:[%s480 + $0x68] sm:$0xf]
        %v1087 = vld [vmem:[%s480 + $0x78] sm:$0xf]
        %1088 = vst [vmem:[#allocation4 + $0x10] sm:$0xf] %v1080
        %1089 = vst [vmem:[#allocation4 + $0x34] sm:$0xf] %v1081
        %1090 = vst [vmem:[#allocation4 + $0x58] sm:$0xf] %v1082
        %1091 = vst [vmem:[#allocation4 + $0x7c] sm:$0xf] %v1083
        %1092 = vst [vmem:[#allocation4 + $0xa0] sm:$0xf] %v1084
        %1093 = vst [vmem:[#allocation4 + $0xc4] sm:$0xf] %v1085
        %1094 = vst [vmem:[#allocation4 + $0xe8] sm:$0xf] %v1086
        %1095 = vst [vmem:[#allocation4 + $0x10c] sm:$0xf] %v1087
        %v1096 = vld [vmem:[%s480 + $0x8] sm:$0xf]
        %v1097 = vld [vmem:[%s480 + $0xc] sm:$0x1]
        %v1098 = vld [vmem:[%s480 + $0x18] sm:$0xf]
        %v1099 = vld [vmem:[%s480 + $0x1c] sm:$0x1]
        %v1100 = vld [vmem:[%s480 + $0x28] sm:$0xf]
        %v1101 = vld [vmem:[%s480 + $0x2c] sm:$0x1]
        %v1102 = vld [vmem:[%s480 + $0x38] sm:$0xf]
        %v1103 = vld [vmem:[%s480 + $0x3c] sm:$0x1]
        %v1104 = vld [vmem:[%s480 + $0x48] sm:$0xf]
        %v1105 = vld [vmem:[%s480 + $0x4c] sm:$0x1]
        %v1106 = vld [vmem:[%s480 + $0x58] sm:$0xf]
        %v1107 = vld [vmem:[%s480 + $0x5c] sm:$0x1]
        %v1108 = vld [vmem:[%s480 + $0x68] sm:$0xf]
        %v1109 = vld [vmem:[%s480 + $0x6c] sm:$0x1]
        %v1110 = vld [vmem:[%s480 + $0x78] sm:$0xf]
        %v1111 = vld [vmem:[%s480 + $0x7c] sm:$0x1]
        %v1113 = vshrl.u32 %v1096, 16
        %v1115 = vrot.slane %v1113, 4
        %v1116 = vshll.u32 %v1096, 16
        %v1118 = vrot.slane %v1116, 5
        %v1119 = vor.u32 %v1115, %v1118
        %v1120 = vrot.slane %v1119, 4
        %v1122 = vshll.u32 %v1097, 16
        %v1124 = vrot.slane %v1122, 5
        %v1125 = vsel %vm815, %v1120, %v1124
        %v1127 = vshrl.u32 %v1098, 16
        %v1129 = vrot.slane %v1127, 4
        %v1130 = vshll.u32 %v1098, 16
        %v1132 = vrot.slane %v1130, 5
        %v1133 = vor.u32 %v1129, %v1132
        %v1134 = vrot.slane %v1133, 4
        %v1136 = vshll.u32 %v1099, 16
        %v1138 = vrot.slane %v1136, 5
        %v1139 = vsel %vm815, %v1134, %v1138
        %v1141 = vshrl.u32 %v1100, 16
        %v1143 = vrot.slane %v1141, 4
        %v1144 = vshll.u32 %v1100, 16
        %v1146 = vrot.slane %v1144, 5
        %v1147 = vor.u32 %v1143, %v1146
        %v1148 = vrot.slane %v1147, 4
        %v1150 = vshll.u32 %v1101, 16
        %v1152 = vrot.slane %v1150, 5
        %v1153 = vsel %vm815, %v1148, %v1152
        %v1155 = vshrl.u32 %v1102, 16
        %v1157 = vrot.slane %v1155, 4
        %v1158 = vshll.u32 %v1102, 16
        %v1160 = vrot.slane %v1158, 5
        %v1161 = vor.u32 %v1157, %v1160
        %v1162 = vrot.slane %v1161, 4
        %v1164 = vshll.u32 %v1103, 16
        %v1166 = vrot.slane %v1164, 5
        %v1167 = vsel %vm815, %v1162, %v1166
        %v1169 = vshrl.u32 %v1104, 16
        %v1171 = vrot.slane %v1169, 4
        %v1172 = vshll.u32 %v1104, 16
        %v1174 = vrot.slane %v1172, 5
        %v1175 = vor.u32 %v1171, %v1174
        %v1176 = vrot.slane %v1175, 4
        %v1178 = vshll.u32 %v1105, 16
        %v1180 = vrot.slane %v1178, 5
        %v1181 = vsel %vm815, %v1176, %v1180
        %v1183 = vshrl.u32 %v1106, 16
        %v1185 = vrot.slane %v1183, 4
        %v1186 = vshll.u32 %v1106, 16
        %v1188 = vrot.slane %v1186, 5
        %v1189 = vor.u32 %v1185, %v1188
        %v1190 = vrot.slane %v1189, 4
        %v1192 = vshll.u32 %v1107, 16
        %v1194 = vrot.slane %v1192, 5
        %v1195 = vsel %vm815, %v1190, %v1194
        %v1197 = vshrl.u32 %v1108, 16
        %v1199 = vrot.slane %v1197, 4
        %v1200 = vshll.u32 %v1108, 16
        %v1202 = vrot.slane %v1200, 5
        %v1203 = vor.u32 %v1199, %v1202
        %v1204 = vrot.slane %v1203, 4
        %v1206 = vshll.u32 %v1109, 16
        %v1208 = vrot.slane %v1206, 5
        %v1209 = vsel %vm815, %v1204, %v1208
        %v1211 = vshrl.u32 %v1110, 16
        %v1213 = vrot.slane %v1211, 4
        %v1214 = vshll.u32 %v1110, 16
        %v1216 = vrot.slane %v1214, 5
        %v1217 = vor.u32 %v1213, %v1216
        %v1218 = vrot.slane %v1217, 4
        %v1220 = vshll.u32 %v1111, 16
        %v1222 = vrot.slane %v1220, 5
        %v1223 = vsel %vm815, %v1218, %v1222
        %1232 = vst [vmem:[#allocation4 + $0x14] sm:$0xf] %v1125
        %1233 = vst [vmem:[#allocation4 + $0x38] sm:$0xf] %v1139
        %1234 = vst [vmem:[#allocation4 + $0x5c] sm:$0xf] %v1153
        %1235 = vst [vmem:[#allocation4 + $0x80] sm:$0xf] %v1167
        %1236 = vst [vmem:[#allocation4 + $0xa4] sm:$0xf] %v1181
        %1237 = vst [vmem:[#allocation4 + $0xc8] sm:$0xf] %v1195
        %1238 = vst [vmem:[#allocation4 + $0xec] sm:$0xf] %v1209
        %1239 = vst [vmem:[#allocation4 + $0x110] sm:$0xf] %v1223
        %s1240 = scalar_lea.vmem [#allocation2], 32
        %v1241 = vld [vmem:[%s1240 + $0x4] sm:$0x8]
        %v1242 = vld [vmem:[%s1240 + $0x8] sm:$0xf]
        %v1243 = vld [vmem:[%s1240 + $0x14] sm:$0x8]
        %v1244 = vld [vmem:[%s1240 + $0x18] sm:$0xf]
        %v1245 = vld [vmem:[%s1240 + $0x24] sm:$0x8]
        %v1246 = vld [vmem:[%s1240 + $0x28] sm:$0xf]
        %v1247 = vld [vmem:[%s1240 + $0x34] sm:$0x8]
        %v1248 = vld [vmem:[%s1240 + $0x38] sm:$0xf]
        %v1249 = vld [vmem:[%s1240 + $0x44] sm:$0x8]
        %v1250 = vld [vmem:[%s1240 + $0x48] sm:$0xf]
        %v1251 = vld [vmem:[%s1240 + $0x54] sm:$0x8]
        %v1252 = vld [vmem:[%s1240 + $0x58] sm:$0xf]
        %v1253 = vld [vmem:[%s1240 + $0x64] sm:$0x8]
        %v1254 = vld [vmem:[%s1240 + $0x68] sm:$0xf]
        %v1255 = vld [vmem:[%s1240 + $0x74] sm:$0x8]
        %v1256 = vld [vmem:[%s1240 + $0x78] sm:$0xf]
        %v1258 = vshrl.u32 %v1241, 16
        %v1260 = vrot.slane %v1258, 7
        %v1261 = vrot.slane %v1260, 4
        %v1263 = vshrl.u32 %v1242, 16
        %v1265 = vrot.slane %v1263, 7
        %v1266 = vshll.u32 %v1242, 16
        %v1268 = vor.u32 %v1265, %v1266
        %v1269 = vsel %vm660, %v1261, %v1268
        %v1271 = vshrl.u32 %v1243, 16
        %v1273 = vrot.slane %v1271, 7
        %v1274 = vrot.slane %v1273, 4
        %v1276 = vshrl.u32 %v1244, 16
        %v1278 = vrot.slane %v1276, 7
        %v1279 = vshll.u32 %v1244, 16
        %v1281 = vor.u32 %v1278, %v1279
        %v1282 = vsel %vm660, %v1274, %v1281
        %v1284 = vshrl.u32 %v1245, 16
        %v1286 = vrot.slane %v1284, 7
        %v1287 = vrot.slane %v1286, 4
        %v1289 = vshrl.u32 %v1246, 16
        %v1291 = vrot.slane %v1289, 7
        %v1292 = vshll.u32 %v1246, 16
        %v1294 = vor.u32 %v1291, %v1292
        %v1295 = vsel %vm660, %v1287, %v1294
        %v1297 = vshrl.u32 %v1247, 16
        %v1299 = vrot.slane %v1297, 7
        %v1300 = vrot.slane %v1299, 4
        %v1302 = vshrl.u32 %v1248, 16
        %v1304 = vrot.slane %v1302, 7
        %v1305 = vshll.u32 %v1248, 16
        %v1307 = vor.u32 %v1304, %v1305
        %v1308 = vsel %vm660, %v1300, %v1307
        %v1310 = vshrl.u32 %v1249, 16
        %v1312 = vrot.slane %v1310, 7
        %v1313 = vrot.slane %v1312, 4
        %v1315 = vshrl.u32 %v1250, 16
        %v1317 = vrot.slane %v1315, 7
        %v1318 = vshll.u32 %v1250, 16
        %v1320 = vor.u32 %v1317, %v1318
        %v1321 = vsel %vm660, %v1313, %v1320
        %v1323 = vshrl.u32 %v1251, 16
        %v1325 = vrot.slane %v1323, 7
        %v1326 = vrot.slane %v1325, 4
        %v1328 = vshrl.u32 %v1252, 16
        %v1330 = vrot.slane %v1328, 7
        %v1331 = vshll.u32 %v1252, 16
        %v1333 = vor.u32 %v1330, %v1331
        %v1334 = vsel %vm660, %v1326, %v1333
        %v1336 = vshrl.u32 %v1253, 16
        %v1338 = vrot.slane %v1336, 7
        %v1339 = vrot.slane %v1338, 4
        %v1341 = vshrl.u32 %v1254, 16
        %v1343 = vrot.slane %v1341, 7
        %v1344 = vshll.u32 %v1254, 16
        %v1346 = vor.u32 %v1343, %v1344
        %v1347 = vsel %vm660, %v1339, %v1346
        %v1349 = vshrl.u32 %v1255, 16
        %v1351 = vrot.slane %v1349, 7
        %v1352 = vrot.slane %v1351, 4
        %v1354 = vshrl.u32 %v1256, 16
        %v1356 = vrot.slane %v1354, 7
        %v1357 = vshll.u32 %v1256, 16
        %v1359 = vor.u32 %v1356, %v1357
        %v1360 = vsel %vm660, %v1352, %v1359
        %1369 = vst [vmem:[#allocation4 + $0x18] sm:$0xf] %v1269
        %1370 = vst [vmem:[#allocation4 + $0x3c] sm:$0xf] %v1282
        %1371 = vst [vmem:[#allocation4 + $0x60] sm:$0xf] %v1295
        %1372 = vst [vmem:[#allocation4 + $0x84] sm:$0xf] %v1308
        %1373 = vst [vmem:[#allocation4 + $0xa8] sm:$0xf] %v1321
        %1374 = vst [vmem:[#allocation4 + $0xcc] sm:$0xf] %v1334
        %1375 = vst [vmem:[#allocation4 + $0xf0] sm:$0xf] %v1347
        %1376 = vst [vmem:[#allocation4 + $0x114] sm:$0xf] %v1360
        %v1377 = vld [vmem:[%s1240 + $0x8] sm:$0xf]
        %v1378 = vld [vmem:[%s1240 + $0x18] sm:$0xf]
        %v1379 = vld [vmem:[%s1240 + $0x28] sm:$0xf]
        %v1380 = vld [vmem:[%s1240 + $0x38] sm:$0xf]
        %v1381 = vld [vmem:[%s1240 + $0x48] sm:$0xf]
        %v1382 = vld [vmem:[%s1240 + $0x58] sm:$0xf]
        %v1383 = vld [vmem:[%s1240 + $0x68] sm:$0xf]
        %v1384 = vld [vmem:[%s1240 + $0x78] sm:$0xf]
        %1385 = vst [vmem:[#allocation4 + $0x1c] sm:$0xf] %v1377
        %1386 = vst [vmem:[#allocation4 + $0x40] sm:$0xf] %v1378
        %1387 = vst [vmem:[#allocation4 + $0x64] sm:$0xf] %v1379
        %1388 = vst [vmem:[#allocation4 + $0x88] sm:$0xf] %v1380
        %1389 = vst [vmem:[#allocation4 + $0xac] sm:$0xf] %v1381
        %1390 = vst [vmem:[#allocation4 + $0xd0] sm:$0xf] %v1382
        %1391 = vst [vmem:[#allocation4 + $0xf4] sm:$0xf] %v1383
        %1392 = vst [vmem:[#allocation4 + $0x118] sm:$0xf] %v1384
        %v1393 = vld [vmem:[%s1240 + $0x8] sm:$0xf]
        %v1394 = vld [vmem:[%s1240 + $0xc] sm:$0x1]
        %v1395 = vld [vmem:[%s1240 + $0x18] sm:$0xf]
        %v1396 = vld [vmem:[%s1240 + $0x1c] sm:$0x1]
        %v1397 = vld [vmem:[%s1240 + $0x28] sm:$0xf]
        %v1398 = vld [vmem:[%s1240 + $0x2c] sm:$0x1]
        %v1399 = vld [vmem:[%s1240 + $0x38] sm:$0xf]
        %v1400 = vld [vmem:[%s1240 + $0x3c] sm:$0x1]
        %v1401 = vld [vmem:[%s1240 + $0x48] sm:$0xf]
        %v1402 = vld [vmem:[%s1240 + $0x4c] sm:$0x1]
        %v1403 = vld [vmem:[%s1240 + $0x58] sm:$0xf]
        %v1404 = vld [vmem:[%s1240 + $0x5c] sm:$0x1]
        %v1405 = vld [vmem:[%s1240 + $0x68] sm:$0xf]
        %v1406 = vld [vmem:[%s1240 + $0x6c] sm:$0x1]
        %v1407 = vld [vmem:[%s1240 + $0x78] sm:$0xf]
        %v1408 = vld [vmem:[%s1240 + $0x7c] sm:$0x1]
        %v1410 = vshrl.u32 %v1393, 16
        %v1412 = vrot.slane %v1410, 4
        %v1413 = vshll.u32 %v1393, 16
        %v1415 = vrot.slane %v1413, 5
        %v1416 = vor.u32 %v1412, %v1415
        %v1417 = vrot.slane %v1416, 4
        %v1419 = vshll.u32 %v1394, 16
        %v1421 = vrot.slane %v1419, 5
        %v1422 = vsel %vm815, %v1417, %v1421
        %v1424 = vshrl.u32 %v1395, 16
        %v1426 = vrot.slane %v1424, 4
        %v1427 = vshll.u32 %v1395, 16
        %v1429 = vrot.slane %v1427, 5
        %v1430 = vor.u32 %v1426, %v1429
        %v1431 = vrot.slane %v1430, 4
        %v1433 = vshll.u32 %v1396, 16
        %v1435 = vrot.slane %v1433, 5
        %v1436 = vsel %vm815, %v1431, %v1435
        %v1438 = vshrl.u32 %v1397, 16
        %v1440 = vrot.slane %v1438, 4
        %v1441 = vshll.u32 %v1397, 16
        %v1443 = vrot.slane %v1441, 5
        %v1444 = vor.u32 %v1440, %v1443
        %v1445 = vrot.slane %v1444, 4
        %v1447 = vshll.u32 %v1398, 16
        %v1449 = vrot.slane %v1447, 5
        %v1450 = vsel %vm815, %v1445, %v1449
        %v1452 = vshrl.u32 %v1399, 16
        %v1454 = vrot.slane %v1452, 4
        %v1455 = vshll.u32 %v1399, 16
        %v1457 = vrot.slane %v1455, 5
        %v1458 = vor.u32 %v1454, %v1457
        %v1459 = vrot.slane %v1458, 4
        %v1461 = vshll.u32 %v1400, 16
        %v1463 = vrot.slane %v1461, 5
        %v1464 = vsel %vm815, %v1459, %v1463
        %v1466 = vshrl.u32 %v1401, 16
        %v1468 = vrot.slane %v1466, 4
        %v1469 = vshll.u32 %v1401, 16
        %v1471 = vrot.slane %v1469, 5
        %v1472 = vor.u32 %v1468, %v1471
        %v1473 = vrot.slane %v1472, 4
        %v1475 = vshll.u32 %v1402, 16
        %v1477 = vrot.slane %v1475, 5
        %v1478 = vsel %vm815, %v1473, %v1477
        %v1480 = vshrl.u32 %v1403, 16
        %v1482 = vrot.slane %v1480, 4
        %v1483 = vshll.u32 %v1403, 16
        %v1485 = vrot.slane %v1483, 5
        %v1486 = vor.u32 %v1482, %v1485
        %v1487 = vrot.slane %v1486, 4
        %v1489 = vshll.u32 %v1404, 16
        %v1491 = vrot.slane %v1489, 5
        %v1492 = vsel %vm815, %v1487, %v1491
        %v1494 = vshrl.u32 %v1405, 16
        %v1496 = vrot.slane %v1494, 4
        %v1497 = vshll.u32 %v1405, 16
        %v1499 = vrot.slane %v1497, 5
        %v1500 = vor.u32 %v1496, %v1499
        %v1501 = vrot.slane %v1500, 4
        %v1503 = vshll.u32 %v1406, 16
        %v1505 = vrot.slane %v1503, 5
        %v1506 = vsel %vm815, %v1501, %v1505
        %v1508 = vshrl.u32 %v1407, 16
        %v1510 = vrot.slane %v1508, 4
        %v1511 = vshll.u32 %v1407, 16
        %v1513 = vrot.slane %v1511, 5
        %v1514 = vor.u32 %v1510, %v1513
        %v1515 = vrot.slane %v1514, 4
        %v1517 = vshll.u32 %v1408, 16
        %v1519 = vrot.slane %v1517, 5
        %v1520 = vsel %vm815, %v1515, %v1519
        %1529 = vst [vmem:[#allocation4 + $0x20] sm:$0xf] %v1422
        %1530 = vst [vmem:[#allocation4 + $0x44] sm:$0xf] %v1436
        %1531 = vst [vmem:[#allocation4 + $0x68] sm:$0xf] %v1450
        %1532 = vst [vmem:[#allocation4 + $0x8c] sm:$0xf] %v1464
        %1533 = vst [vmem:[#allocation4 + $0xb0] sm:$0xf] %v1478
        %1534 = vst [vmem:[#allocation4 + $0xd4] sm:$0xf] %v1492
        %1535 = vst [vmem:[#allocation4 + $0xf8] sm:$0xf] %v1506
        %1536 = vst [vmem:[#allocation4 + $0x11c] sm:$0xf] %v1520
        %v1537 = vld [vmem:[#allocation4] sm:$0xff]
        %v1538 = vld [vmem:[#allocation4 + $0x8] sm:$0xff]
        %v1539 = vld [vmem:[#allocation4 + $0x10] sm:$0xff]
        %v1540 = vld [vmem:[#allocation4 + $0x18] sm:$0xff]
        %v1541 = vld [vmem:[#allocation4 + $0x20] sm:$0xf]
        %v1542 = vld [vmem:[#allocation4 + $0x24] sm:$0xff]
        %v1543 = vld [vmem:[#allocation4 + $0x2c] sm:$0xff]
        %v1544 = vld [vmem:[#allocation4 + $0x34] sm:$0xff]
        %v1545 = vld [vmem:[#allocation4 + $0x3c] sm:$0xff]
        %v1546 = vld [vmem:[#allocation4 + $0x44] sm:$0xf]
        %v1547 = vld [vmem:[#allocation4 + $0x48] sm:$0xff]
        %v1548 = vld [vmem:[#allocation4 + $0x50] sm:$0xff]
        %v1549 = vld [vmem:[#allocation4 + $0x58] sm:$0xff]
        %v1550 = vld [vmem:[#allocation4 + $0x60] sm:$0xff]
        %v1551 = vld [vmem:[#allocation4 + $0x68] sm:$0xf]
        %v1552 = vld [vmem:[#allocation4 + $0x6c] sm:$0xff]
        %v1553 = vld [vmem:[#allocation4 + $0x74] sm:$0xff]
        %v1554 = vld [vmem:[#allocation4 + $0x7c] sm:$0xff]
        %v1555 = vld [vmem:[#allocation4 + $0x84] sm:$0xff]
        %v1556 = vld [vmem:[#allocation4 + $0x8c] sm:$0xf]
        %v1557 = vld [vmem:[#allocation4 + $0x90] sm:$0xff]
        %v1558 = vld [vmem:[#allocation4 + $0x98] sm:$0xff]
        %v1559 = vld [vmem:[#allocation4 + $0xa0] sm:$0xff]
        %v1560 = vld [vmem:[#allocation4 + $0xa8] sm:$0xff]
        %v1561 = vld [vmem:[#allocation4 + $0xb0] sm:$0xf]
        %v1562 = vld [vmem:[#allocation4 + $0xb4] sm:$0xff]
        %v1563 = vld [vmem:[#allocation4 + $0xbc] sm:$0xff]
        %v1564 = vld [vmem:[#allocation4 + $0xc4] sm:$0xff]
        %v1565 = vld [vmem:[#allocation4 + $0xcc] sm:$0xff]
        %v1566 = vld [vmem:[#allocation4 + $0xd4] sm:$0xf]
        %v1567 = vld [vmem:[#allocation4 + $0xd8] sm:$0xff]
        %v1568 = vld [vmem:[#allocation4 + $0xe0] sm:$0xff]
        %v1569 = vld [vmem:[#allocation4 + $0xe8] sm:$0xff]
        %v1570 = vld [vmem:[#allocation4 + $0xf0] sm:$0xff]
        %v1571 = vld [vmem:[#allocation4 + $0xf8] sm:$0xf]
        %v1572 = vld [vmem:[#allocation4 + $0xfc] sm:$0xff]
        %v1573 = vld [vmem:[#allocation4 + $0x104] sm:$0xff]
        %v1574 = vld [vmem:[#allocation4 + $0x10c] sm:$0xff]
        %v1575 = vld [vmem:[#allocation4 + $0x114] sm:$0xff]
        %v1576 = vld [vmem:[#allocation4 + $0x11c] sm:$0xf]
        %v1577 = vld [vmem:[#allocation5] sm:$0xf]
        %v1578 = vld [vmem:[#allocation5 + $0x4] sm:$0xf]
        %v1579 = vld [vmem:[#allocation5 + $0x8] sm:$0xf]
        %v1580 = vld [vmem:[#allocation5 + $0xc] sm:$0xf]
        %v1581 = vld [vmem:[#allocation5 + $0x10] sm:$0xf]
        %v1582 = vld [vmem:[#allocation5 + $0x14] sm:$0xf]
        %v1583 = vld [vmem:[#allocation5 + $0x18] sm:$0xf]
        %v1584 = vld [vmem:[#allocation5 + $0x1c] sm:$0xf]
        %v1585 = vld [vmem:[#allocation5 + $0x20] sm:$0xf]
        %v1586 = vld [vmem:[#allocation5 + $0x24] sm:$0xf]
        %v1587 = vld [vmem:[#allocation5 + $0x28] sm:$0xf]
        %v1588 = vld [vmem:[#allocation5 + $0x2c] sm:$0xf]
        %v1589 = vld [vmem:[#allocation5 + $0x30] sm:$0xf]
        %v1590 = vld [vmem:[#allocation5 + $0x34] sm:$0xf]
        %v1591 = vld [vmem:[#allocation5 + $0x38] sm:$0xf]
        %v1592 = vld [vmem:[#allocation5 + $0x3c] sm:$0xf]
        %v1593 = vld [vmem:[#allocation5 + $0x40] sm:$0xf]
        %v1594 = vld [vmem:[#allocation5 + $0x44] sm:$0xf]
        %v1595 = vld [vmem:[#allocation5 + $0x48] sm:$0xf]
        %v1596 = vld [vmem:[#allocation5 + $0x4c] sm:$0xf]
        %v1597 = vld [vmem:[#allocation5 + $0x50] sm:$0xf]
        %v1598 = vld [vmem:[#allocation5 + $0x54] sm:$0xf]
        %v1599 = vld [vmem:[#allocation5 + $0x58] sm:$0xf]
        %v1600 = vld [vmem:[#allocation5 + $0x5c] sm:$0xf]
        %v1601 = vld [vmem:[#allocation5 + $0x60] sm:$0xf]
        %v1602 = vld [vmem:[#allocation5 + $0x64] sm:$0xf]
        %v1603 = vld [vmem:[#allocation5 + $0x68] sm:$0xf]
        %v1604 = vld [vmem:[#allocation5 + $0x6c] sm:$0xf]
        %v1605 = vld [vmem:[#allocation5 + $0x70] sm:$0xf]
        %v1606 = vld [vmem:[#allocation5 + $0x74] sm:$0xf]
        %v1607 = vld [vmem:[#allocation5 + $0x78] sm:$0xf]
        %v1608 = vld [vmem:[#allocation5 + $0x7c] sm:$0xf]
        %v1609 = vld [vmem:[#allocation5 + $0x80] sm:$0xf]
        %v1610 = vld [vmem:[#allocation5 + $0x84] sm:$0xf]
        %v1611 = vld [vmem:[#allocation5 + $0x88] sm:$0xf]
        %v1612 = vld [vmem:[#allocation5 + $0x8c] sm:$0xf]
        %v1613 = vld [vmem:[#allocation5 + $0x90] sm:$0xf]
        %v1614 = vld [vmem:[#allocation5 + $0x94] sm:$0xf]
        %v1615 = vld [vmem:[#allocation5 + $0x98] sm:$0xf]
        %v1616 = vld [vmem:[#allocation5 + $0x9c] sm:$0xf]
        %v1617 = vld [vmem:[#allocation5 + $0xa0] sm:$0xf]
        %v1618 = vld [vmem:[#allocation5 + $0xa4] sm:$0xf]
        %v1619 = vld [vmem:[#allocation5 + $0xa8] sm:$0xf]
        %v1620 = vld [vmem:[#allocation5 + $0xac] sm:$0xf]
        %v1621 = vld [vmem:[#allocation5 + $0xb0] sm:$0xf]
        %v1622 = vld [vmem:[#allocation5 + $0xb4] sm:$0xf]
        %v1623 = vld [vmem:[#allocation5 + $0xb8] sm:$0xf]
        %v1624 = vld [vmem:[#allocation5 + $0xbc] sm:$0xf]
        %v1625 = vld [vmem:[#allocation5 + $0xc0] sm:$0xf]
        %v1626 = vld [vmem:[#allocation5 + $0xc4] sm:$0xf]
        %v1627 = vld [vmem:[#allocation5 + $0xc8] sm:$0xf]
        %v1628 = vld [vmem:[#allocation5 + $0xcc] sm:$0xf]
        %v1629 = vld [vmem:[#allocation5 + $0xd0] sm:$0xf]
        %v1630 = vld [vmem:[#allocation5 + $0xd4] sm:$0xf]
        %v1631 = vld [vmem:[#allocation5 + $0xd8] sm:$0xf]
        %v1632 = vld [vmem:[#allocation5 + $0xdc] sm:$0xf]
        %v1633 = vld [vmem:[#allocation5 + $0xe0] sm:$0xf]
        %v1634 = vld [vmem:[#allocation5 + $0xe4] sm:$0xf]
        %v1635 = vld [vmem:[#allocation5 + $0xe8] sm:$0xf]
        %v1636 = vld [vmem:[#allocation5 + $0xec] sm:$0xf]
        %v1637 = vld [vmem:[#allocation5 + $0xf0] sm:$0xf]
        %v1638 = vld [vmem:[#allocation5 + $0xf4] sm:$0xf]
        %v1639 = vld [vmem:[#allocation5 + $0xf8] sm:$0xf]
        %v1640 = vld [vmem:[#allocation5 + $0xfc] sm:$0xf]
        %v1641 = vld [vmem:[#allocation5 + $0x100] sm:$0xf]
        %v1642 = vld [vmem:[#allocation5 + $0x104] sm:$0xf]
        %v1643 = vld [vmem:[#allocation5 + $0x108] sm:$0xf]
        %v1644 = vld [vmem:[#allocation5 + $0x10c] sm:$0xf]
        %v1645 = vld [vmem:[#allocation5 + $0x110] sm:$0xf]
        %v1646 = vld [vmem:[#allocation5 + $0x114] sm:$0xf]
        %v1647 = vld [vmem:[#allocation5 + $0x118] sm:$0xf]
        %v1648 = vld [vmem:[#allocation5 + $0x11c] sm:$0xf]
        %v1649 = vld [vmem:[#allocation5 + $0x120] sm:$0xf]
        %v1650 = vld [vmem:[#allocation5 + $0x124] sm:$0xf]
        %v1651 = vld [vmem:[#allocation5 + $0x128] sm:$0xf]
        %v1652 = vld [vmem:[#allocation5 + $0x12c] sm:$0xf]
        %v1653 = vld [vmem:[#allocation5 + $0x130] sm:$0xf]
        %v1654 = vld [vmem:[#allocation5 + $0x134] sm:$0xf]
        %v1655 = vld [vmem:[#allocation5 + $0x138] sm:$0xf]
        %v1656 = vld [vmem:[#allocation5 + $0x13c] sm:$0xf]
        %v1657 = vld [vmem:[#allocation5 + $0x140] sm:$0xf]
        %v1658 = vld [vmem:[#allocation5 + $0x144] sm:$0xf]
        %v1659 = vld [vmem:[#allocation5 + $0x148] sm:$0xf]
        %v1660 = vld [vmem:[#allocation5 + $0x14c] sm:$0xf]
        %v1661 = vld [vmem:[#allocation5 + $0x150] sm:$0xf]
        %v1662 = vld [vmem:[#allocation5 + $0x154] sm:$0xf]
        %v1663 = vld [vmem:[#allocation5 + $0x158] sm:$0xf]
        %v1664 = vld [vmem:[#allocation5 + $0x15c] sm:$0xf]
        %v1665 = vld [vmem:[#allocation5 + $0x160] sm:$0xf]
        %v1666 = vld [vmem:[#allocation5 + $0x164] sm:$0xf]
        %v1667 = vld [vmem:[#allocation5 + $0x168] sm:$0xf]
        %v1668 = vld [vmem:[#allocation5 + $0x16c] sm:$0xf]
        %v1669 = vld [vmem:[#allocation5 + $0x170] sm:$0xf]
        %v1670 = vld [vmem:[#allocation5 + $0x174] sm:$0xf]
        %v1671 = vld [vmem:[#allocation5 + $0x178] sm:$0xf]
        %v1672 = vld [vmem:[#allocation5 + $0x17c] sm:$0xf]
        %v1673 = vld [vmem:[#allocation5 + $0x180] sm:$0xf]
        %v1674 = vld [vmem:[#allocation5 + $0x184] sm:$0xf]
        %v1675 = vld [vmem:[#allocation5 + $0x188] sm:$0xf]
        %v1676 = vld [vmem:[#allocation5 + $0x18c] sm:$0xf]
        %v1677 = vld [vmem:[#allocation5 + $0x190] sm:$0xf]
        %v1678 = vld [vmem:[#allocation5 + $0x194] sm:$0xf]
        %v1679 = vld [vmem:[#allocation5 + $0x198] sm:$0xf]
        %v1680 = vld [vmem:[#allocation5 + $0x19c] sm:$0xf]
        %v1681 = vld [vmem:[#allocation5 + $0x1a0] sm:$0xf]
        %v1682 = vld [vmem:[#allocation5 + $0x1a4] sm:$0xf]
        %v1683 = vld [vmem:[#allocation5 + $0x1a8] sm:$0xf]
        %v1684 = vld [vmem:[#allocation5 + $0x1ac] sm:$0xf]
        %v1685 = vld [vmem:[#allocation5 + $0x1b0] sm:$0xf]
        %v1686 = vld [vmem:[#allocation5 + $0x1b4] sm:$0xf]
        %v1687 = vld [vmem:[#allocation5 + $0x1b8] sm:$0xf]
        %v1688 = vld [vmem:[#allocation5 + $0x1bc] sm:$0xf]
        %v1689 = vld [vmem:[#allocation5 + $0x1c0] sm:$0xf]
        %v1690 = vld [vmem:[#allocation5 + $0x1c4] sm:$0xf]
        %v1691 = vld [vmem:[#allocation5 + $0x1c8] sm:$0xf]
        %v1692 = vld [vmem:[#allocation5 + $0x1cc] sm:$0xf]
        %v1693 = vld [vmem:[#allocation5 + $0x1d0] sm:$0xf]
        %v1694 = vld [vmem:[#allocation5 + $0x1d4] sm:$0xf]
        %v1695 = vld [vmem:[#allocation5 + $0x1d8] sm:$0xf]
        %v1696 = vld [vmem:[#allocation5 + $0x1dc] sm:$0xf]
        %v1697 = vld [vmem:[#allocation5 + $0x1e0] sm:$0xf]
        %v1698 = vld [vmem:[#allocation5 + $0x1e4] sm:$0xf]
        %v1699 = vld [vmem:[#allocation5 + $0x1e8] sm:$0xf]
        %v1700 = vld [vmem:[#allocation5 + $0x1ec] sm:$0xf]
        %v1701 = vld [vmem:[#allocation5 + $0x1f0] sm:$0xf]
        %v1702 = vld [vmem:[#allocation5 + $0x1f4] sm:$0xf]
        %v1703 = vld [vmem:[#allocation5 + $0x1f8] sm:$0xf]
        %v1704 = vld [vmem:[#allocation5 + $0x1fc] sm:$0xf]
        %v1705 = vld [vmem:[#allocation5 + $0x200] sm:$0xf]
        %v1706 = vld [vmem:[#allocation5 + $0x204] sm:$0xf]
        %v1707 = vld [vmem:[#allocation5 + $0x208] sm:$0xf]
        %v1708 = vld [vmem:[#allocation5 + $0x20c] sm:$0xf]
        %v1709 = vld [vmem:[#allocation5 + $0x210] sm:$0xf]
        %v1710 = vld [vmem:[#allocation5 + $0x214] sm:$0xf]
        %v1711 = vld [vmem:[#allocation5 + $0x218] sm:$0xf]
        %v1712 = vld [vmem:[#allocation5 + $0x21c] sm:$0xf]
        %v1713 = vld [vmem:[#allocation5 + $0x220] sm:$0xf]
        %v1714 = vld [vmem:[#allocation5 + $0x224] sm:$0xf]
        %v1715 = vld [vmem:[#allocation5 + $0x228] sm:$0xf]
        %v1716 = vld [vmem:[#allocation5 + $0x22c] sm:$0xf]
        %v1717 = vld [vmem:[#allocation5 + $0x230] sm:$0xf]
        %v1718 = vld [vmem:[#allocation5 + $0x234] sm:$0xf]
        %v1719 = vld [vmem:[#allocation5 + $0x238] sm:$0xf]
        %v1720 = vld [vmem:[#allocation5 + $0x23c] sm:$0xf]
        %v1721 = vld [vmem:[%s6] sm:$0x1]
        %v1723 = vlaneseq
        %v1724 = vshrl.u32 %v1723, 7
        %v1725 = vsub.s32 0, %v1724
        %v1726 = vrot.slane %v1721, %v1725
        %v1768 = vunpack.c.l.b16 %v1537
        %v1769 = vunpack.c.h.b16 %v1537
        %v1770 = vunpack.c.l.b16 %v1538
        %v1771 = vunpack.c.h.b16 %v1538
        %v1772 = vunpack.c.l.b16 %v1539
        %v1773 = vunpack.c.h.b16 %v1539
        %v1774 = vunpack.c.l.b16 %v1540
        %v1775 = vunpack.c.h.b16 %v1540
        %v1776 = vunpack.c.l.b16 %v1541
        %v1777 = vunpack.c.l.b16 %v1542
        %v1778 = vunpack.c.h.b16 %v1542
        %v1779 = vunpack.c.l.b16 %v1543
        %v1780 = vunpack.c.h.b16 %v1543
        %v1781 = vunpack.c.l.b16 %v1544
        %v1782 = vunpack.c.h.b16 %v1544
        %v1783 = vunpack.c.l.b16 %v1545
        %v1784 = vunpack.c.h.b16 %v1545
        %v1785 = vunpack.c.l.b16 %v1546
        %v1786 = vunpack.c.l.b16 %v1547
        %v1787 = vunpack.c.h.b16 %v1547
        %v1788 = vunpack.c.l.b16 %v1548
        %v1789 = vunpack.c.h.b16 %v1548
        %v1790 = vunpack.c.l.b16 %v1549
        %v1791 = vunpack.c.h.b16 %v1549
        %v1792 = vunpack.c.l.b16 %v1550
        %v1793 = vunpack.c.h.b16 %v1550
        %v1794 = vunpack.c.l.b16 %v1551
        %v1795 = vunpack.c.l.b16 %v1552
        %v1796 = vunpack.c.h.b16 %v1552
        %v1797 = vunpack.c.l.b16 %v1553
        %v1798 = vunpack.c.h.b16 %v1553
        %v1799 = vunpack.c.l.b16 %v1554
        %v1800 = vunpack.c.h.b16 %v1554
        %v1801 = vunpack.c.l.b16 %v1555
        %v1802 = vunpack.c.h.b16 %v1555
        %v1803 = vunpack.c.l.b16 %v1556
        %v1804 = vunpack.c.l.b16 %v1557
        %v1805 = vunpack.c.h.b16 %v1557
        %v1806 = vunpack.c.l.b16 %v1558
        %v1807 = vunpack.c.h.b16 %v1558
        %v1808 = vunpack.c.l.b16 %v1559
        %v1809 = vunpack.c.h.b16 %v1559
        %v1810 = vunpack.c.l.b16 %v1560
        %v1811 = vunpack.c.h.b16 %v1560
        %v1812 = vunpack.c.l.b16 %v1561
        %v1813 = vunpack.c.l.b16 %v1562
        %v1814 = vunpack.c.h.b16 %v1562
        %v1815 = vunpack.c.l.b16 %v1563
        %v1816 = vunpack.c.h.b16 %v1563
        %v1817 = vunpack.c.l.b16 %v1564
        %v1818 = vunpack.c.h.b16 %v1564
        %v1819 = vunpack.c.l.b16 %v1565
        %v1820 = vunpack.c.h.b16 %v1565
        %v1821 = vunpack.c.l.b16 %v1566
        %v1822 = vunpack.c.l.b16 %v1567
        %v1823 = vunpack.c.h.b16 %v1567
        %v1824 = vunpack.c.l.b16 %v1568
        %v1825 = vunpack.c.h.b16 %v1568
        %v1826 = vunpack.c.l.b16 %v1569
        %v1827 = vunpack.c.h.b16 %v1569
        %v1828 = vunpack.c.l.b16 %v1570
        %v1829 = vunpack.c.h.b16 %v1570
        %v1830 = vunpack.c.l.b16 %v1571
        %v1831 = vunpack.c.l.b16 %v1572
        %v1832 = vunpack.c.h.b16 %v1572
        %v1833 = vunpack.c.l.b16 %v1573
        %v1834 = vunpack.c.h.b16 %v1573
        %v1835 = vunpack.c.l.b16 %v1574
        %v1836 = vunpack.c.h.b16 %v1574
        %v1837 = vunpack.c.l.b16 %v1575
        %v1838 = vunpack.c.h.b16 %v1575
        %v1839 = vunpack.c.l.b16 %v1576
        %v1840 = vpack.c.b16 %v1777, %v1768
        %v1841 = vpack.c.b16 %v1778, %v1769
        %v1842 = vpack.c.b16 %v1779, %v1770
        %v1843 = vpack.c.b16 %v1780, %v1771
        %v1844 = vpack.c.b16 %v1781, %v1772
        %v1845 = vpack.c.b16 %v1782, %v1773
        %v1846 = vpack.c.b16 %v1783, %v1774
        %v1847 = vpack.c.b16 %v1784, %v1775
        %v1848 = vpack.c.b16 %v1785, %v1776
        %v1849 = vpack.c.b16 %v1795, %v1786
        %v1850 = vpack.c.b16 %v1796, %v1787
        %v1851 = vpack.c.b16 %v1797, %v1788
        %v1852 = vpack.c.b16 %v1798, %v1789
        %v1853 = vpack.c.b16 %v1799, %v1790
        %v1854 = vpack.c.b16 %v1800, %v1791
        %v1855 = vpack.c.b16 %v1801, %v1792
        %v1856 = vpack.c.b16 %v1802, %v1793
        %v1857 = vpack.c.b16 %v1803, %v1794
        %v1858 = vpack.c.b16 %v1813, %v1804
        %v1859 = vpack.c.b16 %v1814, %v1805
        %v1860 = vpack.c.b16 %v1815, %v1806
        %v1861 = vpack.c.b16 %v1816, %v1807
        %v1862 = vpack.c.b16 %v1817, %v1808
        %v1863 = vpack.c.b16 %v1818, %v1809
        %v1864 = vpack.c.b16 %v1819, %v1810
        %v1865 = vpack.c.b16 %v1820, %v1811
        %v1866 = vpack.c.b16 %v1821, %v1812
        %v1867 = vpack.c.b16 %v1831, %v1822
        %v1868 = vpack.c.b16 %v1832, %v1823
        %v1869 = vpack.c.b16 %v1833, %v1824
        %v1870 = vpack.c.b16 %v1834, %v1825
        %v1871 = vpack.c.b16 %v1835, %v1826
        %v1872 = vpack.c.b16 %v1836, %v1827
        %v1873 = vpack.c.b16 %v1837, %v1828
        %v1874 = vpack.c.b16 %v1838, %v1829
        %v1875 = vpack.c.b16 %v1839, %v1830
        %v2056 = vunpack.c.l.b16 %v1577
        %v2057 = vunpack.c.l.b16 %v1578
        %v2058 = vunpack.c.l.b16 %v1579
        %v2059 = vunpack.c.l.b16 %v1580
        %v2060 = vunpack.c.l.b16 %v1581
        %v2061 = vunpack.c.l.b16 %v1582
        %v2062 = vunpack.c.l.b16 %v1583
        %v2063 = vunpack.c.l.b16 %v1584
        %v2064 = vunpack.c.l.b16 %v1585
        %v2065 = vunpack.c.l.b16 %v1586
        %v2066 = vunpack.c.l.b16 %v1587
        %v2067 = vunpack.c.l.b16 %v1588
        %v2068 = vunpack.c.l.b16 %v1589
        %v2069 = vunpack.c.l.b16 %v1590
        %v2070 = vunpack.c.l.b16 %v1591
        %v2071 = vunpack.c.l.b16 %v1592
        %v2072 = vunpack.c.l.b16 %v1593
        %v2073 = vunpack.c.l.b16 %v1594
        %v2074 = vunpack.c.l.b16 %v1595
        %v2075 = vunpack.c.l.b16 %v1596
        %v2076 = vunpack.c.l.b16 %v1597
        %v2077 = vunpack.c.l.b16 %v1598
        %v2078 = vunpack.c.l.b16 %v1599
        %v2079 = vunpack.c.l.b16 %v1600
        %v2080 = vunpack.c.l.b16 %v1601
        %v2081 = vunpack.c.l.b16 %v1602
        %v2082 = vunpack.c.l.b16 %v1603
        %v2083 = vunpack.c.l.b16 %v1604
        %v2084 = vunpack.c.l.b16 %v1605
        %v2085 = vunpack.c.l.b16 %v1606
        %v2086 = vunpack.c.l.b16 %v1607
        %v2087 = vunpack.c.l.b16 %v1608
        %v2088 = vunpack.c.l.b16 %v1609
        %v2089 = vunpack.c.l.b16 %v1610
        %v2090 = vunpack.c.l.b16 %v1611
        %v2091 = vunpack.c.l.b16 %v1612
        %v2092 = vunpack.c.l.b16 %v1613
        %v2093 = vunpack.c.l.b16 %v1614
        %v2094 = vunpack.c.l.b16 %v1615
        %v2095 = vunpack.c.l.b16 %v1616
        %v2096 = vunpack.c.l.b16 %v1617
        %v2097 = vunpack.c.l.b16 %v1618
        %v2098 = vunpack.c.l.b16 %v1619
        %v2099 = vunpack.c.l.b16 %v1620
        %v2100 = vunpack.c.l.b16 %v1621
        %v2101 = vunpack.c.l.b16 %v1622
        %v2102 = vunpack.c.l.b16 %v1623
        %v2103 = vunpack.c.l.b16 %v1624
        %v2104 = vunpack.c.l.b16 %v1625
        %v2105 = vunpack.c.l.b16 %v1626
        %v2106 = vunpack.c.l.b16 %v1627
        %v2107 = vunpack.c.l.b16 %v1628
        %v2108 = vunpack.c.l.b16 %v1629
        %v2109 = vunpack.c.l.b16 %v1630
        %v2110 = vunpack.c.l.b16 %v1631
        %v2111 = vunpack.c.l.b16 %v1632
        %v2112 = vunpack.c.l.b16 %v1633
        %v2113 = vunpack.c.l.b16 %v1634
        %v2114 = vunpack.c.l.b16 %v1635
        %v2115 = vunpack.c.l.b16 %v1636
        %v2116 = vunpack.c.l.b16 %v1637
        %v2117 = vunpack.c.l.b16 %v1638
        %v2118 = vunpack.c.l.b16 %v1639
        %v2119 = vunpack.c.l.b16 %v1640
        %v2120 = vunpack.c.l.b16 %v1641
        %v2121 = vunpack.c.l.b16 %v1642
        %v2122 = vunpack.c.l.b16 %v1643
        %v2123 = vunpack.c.l.b16 %v1644
        %v2124 = vunpack.c.l.b16 %v1645
        %v2125 = vunpack.c.l.b16 %v1646
        %v2126 = vunpack.c.l.b16 %v1647
        %v2127 = vunpack.c.l.b16 %v1648
        %v2128 = vunpack.c.l.b16 %v1649
        %v2129 = vunpack.c.l.b16 %v1650
        %v2130 = vunpack.c.l.b16 %v1651
        %v2131 = vunpack.c.l.b16 %v1652
        %v2132 = vunpack.c.l.b16 %v1653
        %v2133 = vunpack.c.l.b16 %v1654
        %v2134 = vunpack.c.l.b16 %v1655
        %v2135 = vunpack.c.l.b16 %v1656
        %v2136 = vunpack.c.l.b16 %v1657
        %v2137 = vunpack.c.l.b16 %v1658
        %v2138 = vunpack.c.l.b16 %v1659
        %v2139 = vunpack.c.l.b16 %v1660
        %v2140 = vunpack.c.l.b16 %v1661
        %v2141 = vunpack.c.l.b16 %v1662
        %v2142 = vunpack.c.l.b16 %v1663
        %v2143 = vunpack.c.l.b16 %v1664
        %v2144 = vunpack.c.l.b16 %v1665
        %v2145 = vunpack.c.l.b16 %v1666
        %v2146 = vunpack.c.l.b16 %v1667
        %v2147 = vunpack.c.l.b16 %v1668
        %v2148 = vunpack.c.l.b16 %v1669
        %v2149 = vunpack.c.l.b16 %v1670
        %v2150 = vunpack.c.l.b16 %v1671
        %v2151 = vunpack.c.l.b16 %v1672
        %v2152 = vunpack.c.l.b16 %v1673
        %v2153 = vunpack.c.l.b16 %v1674
        %v2154 = vunpack.c.l.b16 %v1675
        %v2155 = vunpack.c.l.b16 %v1676
        %v2156 = vunpack.c.l.b16 %v1677
        %v2157 = vunpack.c.l.b16 %v1678
        %v2158 = vunpack.c.l.b16 %v1679
        %v2159 = vunpack.c.l.b16 %v1680
        %v2160 = vunpack.c.l.b16 %v1681
        %v2161 = vunpack.c.l.b16 %v1682
        %v2162 = vunpack.c.l.b16 %v1683
        %v2163 = vunpack.c.l.b16 %v1684
        %v2164 = vunpack.c.l.b16 %v1685
        %v2165 = vunpack.c.l.b16 %v1686
        %v2166 = vunpack.c.l.b16 %v1687
        %v2167 = vunpack.c.l.b16 %v1688
        %v2168 = vunpack.c.l.b16 %v1689
        %v2169 = vunpack.c.l.b16 %v1690
        %v2170 = vunpack.c.l.b16 %v1691
        %v2171 = vunpack.c.l.b16 %v1692
        %v2172 = vunpack.c.l.b16 %v1693
        %v2173 = vunpack.c.l.b16 %v1694
        %v2174 = vunpack.c.l.b16 %v1695
        %v2175 = vunpack.c.l.b16 %v1696
        %v2176 = vunpack.c.l.b16 %v1697
        %v2177 = vunpack.c.l.b16 %v1698
        %v2178 = vunpack.c.l.b16 %v1699
        %v2179 = vunpack.c.l.b16 %v1700
        %v2180 = vunpack.c.l.b16 %v1701
        %v2181 = vunpack.c.l.b16 %v1702
        %v2182 = vunpack.c.l.b16 %v1703
        %v2183 = vunpack.c.l.b16 %v1704
        %v2184 = vunpack.c.l.b16 %v1705
        %v2185 = vunpack.c.l.b16 %v1706
        %v2186 = vunpack.c.l.b16 %v1707
        %v2187 = vunpack.c.l.b16 %v1708
        %v2188 = vunpack.c.l.b16 %v1709
        %v2189 = vunpack.c.l.b16 %v1710
        %v2190 = vunpack.c.l.b16 %v1711
        %v2191 = vunpack.c.l.b16 %v1712
        %v2192 = vunpack.c.l.b16 %v1713
        %v2193 = vunpack.c.l.b16 %v1714
        %v2194 = vunpack.c.l.b16 %v1715
        %v2195 = vunpack.c.l.b16 %v1716
        %v2196 = vunpack.c.l.b16 %v1717
        %v2197 = vunpack.c.l.b16 %v1718
        %v2198 = vunpack.c.l.b16 %v1719
        %v2199 = vunpack.c.l.b16 %v1720
        %v2200 = vpack.c.b16 %v2057, %v2056
        %v2201 = vpack.c.b16 %v2059, %v2058
        %v2202 = vpack.c.b16 %v2061, %v2060
        %v2203 = vpack.c.b16 %v2063, %v2062
        %v2204 = vpack.c.b16 %v2065, %v2064
        %v2205 = vpack.c.b16 %v2067, %v2066
        %v2206 = vpack.c.b16 %v2069, %v2068
        %v2207 = vpack.c.b16 %v2071, %v2070
        %v2208 = vpack.c.b16 %v2073, %v2072
        %v2209 = vpack.c.b16 %v2075, %v2074
        %v2210 = vpack.c.b16 %v2077, %v2076
        %v2211 = vpack.c.b16 %v2079, %v2078
        %v2212 = vpack.c.b16 %v2081, %v2080
        %v2213 = vpack.c.b16 %v2083, %v2082
        %v2214 = vpack.c.b16 %v2085, %v2084
        %v2215 = vpack.c.b16 %v2087, %v2086
        %v2216 = vpack.c.b16 %v2089, %v2088
        %v2217 = vpack.c.b16 %v2091, %v2090
        %v2218 = vpack.c.b16 %v2093, %v2092
        %v2219 = vpack.c.b16 %v2095, %v2094
        %v2220 = vpack.c.b16 %v2097, %v2096
        %v2221 = vpack.c.b16 %v2099, %v2098
        %v2222 = vpack.c.b16 %v2101, %v2100
        %v2223 = vpack.c.b16 %v2103, %v2102
        %v2224 = vpack.c.b16 %v2105, %v2104
        %v2225 = vpack.c.b16 %v2107, %v2106
        %v2226 = vpack.c.b16 %v2109, %v2108
        %v2227 = vpack.c.b16 %v2111, %v2110
        %v2228 = vpack.c.b16 %v2113, %v2112
        %v2229 = vpack.c.b16 %v2115, %v2114
        %v2230 = vpack.c.b16 %v2117, %v2116
        %v2231 = vpack.c.b16 %v2119, %v2118
        %v2232 = vpack.c.b16 %v2121, %v2120
        %v2233 = vpack.c.b16 %v2123, %v2122
        %v2234 = vpack.c.b16 %v2125, %v2124
        %v2235 = vpack.c.b16 %v2127, %v2126
        %v2236 = vpack.c.b16 %v2129, %v2128
        %v2237 = vpack.c.b16 %v2131, %v2130
        %v2238 = vpack.c.b16 %v2133, %v2132
        %v2239 = vpack.c.b16 %v2135, %v2134
        %v2240 = vpack.c.b16 %v2137, %v2136
        %v2241 = vpack.c.b16 %v2139, %v2138
        %v2242 = vpack.c.b16 %v2141, %v2140
        %v2243 = vpack.c.b16 %v2143, %v2142
        %v2244 = vpack.c.b16 %v2145, %v2144
        %v2245 = vpack.c.b16 %v2147, %v2146
        %v2246 = vpack.c.b16 %v2149, %v2148
        %v2247 = vpack.c.b16 %v2151, %v2150
        %v2248 = vpack.c.b16 %v2153, %v2152
        %v2249 = vpack.c.b16 %v2155, %v2154
        %v2250 = vpack.c.b16 %v2157, %v2156
        %v2251 = vpack.c.b16 %v2159, %v2158
        %v2252 = vpack.c.b16 %v2161, %v2160
        %v2253 = vpack.c.b16 %v2163, %v2162
        %v2254 = vpack.c.b16 %v2165, %v2164
        %v2255 = vpack.c.b16 %v2167, %v2166
        %v2256 = vpack.c.b16 %v2169, %v2168
        %v2257 = vpack.c.b16 %v2171, %v2170
        %v2258 = vpack.c.b16 %v2173, %v2172
        %v2259 = vpack.c.b16 %v2175, %v2174
        %v2260 = vpack.c.b16 %v2177, %v2176
        %v2261 = vpack.c.b16 %v2179, %v2178
        %v2262 = vpack.c.b16 %v2181, %v2180
        %v2263 = vpack.c.b16 %v2183, %v2182
        %v2264 = vpack.c.b16 %v2185, %v2184
        %v2265 = vpack.c.b16 %v2187, %v2186
        %v2266 = vpack.c.b16 %v2189, %v2188
        %v2267 = vpack.c.b16 %v2191, %v2190
        %v2268 = vpack.c.b16 %v2193, %v2192
        %v2269 = vpack.c.b16 %v2195, %v2194
        %v2270 = vpack.c.b16 %v2197, %v2196
        %v2271 = vpack.c.b16 %v2199, %v2198
        %2344 = vmatprep.subr.bf16.mxu0 0
        %2345 = vmatpush1.bf16.msra.mxu0 %v2207
        %2346 = vmatprep.subr.bf16.mxu0 0
        %2347 = vmatpush1.bf16.msra.mxu0 %v2206
        %2348 = vmatprep.subr.bf16.mxu0 0
        %2349 = vmatpush1.bf16.msra.mxu0 %v2205
        %2350 = vmatprep.subr.bf16.mxu0 0
        %2351 = vmatpush1.bf16.msra.mxu0 %v2204
        %2352 = vmatprep.subr.bf16.mxu0 0
        %2353 = vmatpush1.bf16.msra.mxu0 %v2203
        %2354 = vmatprep.subr.bf16.mxu0 0
        %2355 = vmatpush1.bf16.msra.mxu0 %v2202
        %2356 = vmatprep.subr.bf16.mxu0 0
        %2357 = vmatpush1.bf16.msra.mxu0 %v2201
        %2358 = vmatprep.subr.bf16.mxu0 0
        %2359 = vmatpush1.bf16.msra.mxu0 %v2200
        %2360 = vmatprep.subr.bf16.mxu0 0
        %2361 = vmatpush2.bf16.msra.mxu0 %v2215
        %2362 = vmatprep.subr.bf16.mxu0 0
        %2363 = vmatpush2.bf16.msra.mxu0 %v2214
        %2364 = vmatprep.subr.bf16.mxu0 0
        %2365 = vmatpush2.bf16.msra.mxu0 %v2213
        %2366 = vmatprep.subr.bf16.mxu0 0
        %2367 = vmatpush2.bf16.msra.mxu0 %v2212
        %2368 = vmatprep.subr.bf16.mxu0 0
        %2369 = vmatpush2.bf16.msra.mxu0 %v2211
        %2370 = vmatprep.subr.bf16.mxu0 0
        %2371 = vmatpush2.bf16.msra.mxu0 %v2210
        %2372 = vmatprep.subr.bf16.mxu0 0
        %2373 = vmatpush2.bf16.msra.mxu0 %v2209
        %2374 = vmatprep.subr.bf16.mxu0 0
        %2375 = vmatpush2.bf16.msra.mxu0 %v2208
        %2376 = vmatprep.mubr.bf16.mxu0 %v1841
        %2377 = vmatmul.mubr.bf16.gmra.mxu0 %v1840
        %v2378 = vpop.f32.mrf.mxu0
        %v2379 = vadd.f32 %v1726, %v2378
        %v2380 = vpop.f32.mrf.mxu0
        %v2381 = vpop.f32.mrf.mxu0
        %v2382 = vadd.f32 %v1726, %v2381
        %v2383 = vpop.f32.mrf.mxu0
        %2384 = vmatprep.mubr.bf16.mxu0 %v1850
        %2385 = vmatmul.mubr.bf16.gmra.mxu0 %v1849
        %v2386 = vpop.f32.mrf.mxu0
        %v2387 = vadd.f32 %v1726, %v2386
        %v2388 = vpop.f32.mrf.mxu0
        %v2389 = vpop.f32.mrf.mxu0
        %v2390 = vadd.f32 %v1726, %v2389
        %v2391 = vpop.f32.mrf.mxu0
        %2392 = vmatprep.mubr.bf16.mxu0 %v1859
        %2393 = vmatmul.mubr.bf16.gmra.mxu0 %v1858
        %v2394 = vpop.f32.mrf.mxu0
        %v2395 = vadd.f32 %v1726, %v2394
        %v2396 = vpop.f32.mrf.mxu0
        %v2397 = vpop.f32.mrf.mxu0
        %v2398 = vadd.f32 %v1726, %v2397
        %v2399 = vpop.f32.mrf.mxu0
        %2400 = vmatprep.mubr.bf16.mxu0 %v1868
        %2401 = vmatmul.mubr.bf16.gmra.mxu0 %v1867
        %v2402 = vpop.f32.mrf.mxu0
        %v2403 = vadd.f32 %v1726, %v2402
        %v2404 = vpop.f32.mrf.mxu0
        %v2405 = vpop.f32.mrf.mxu0
        %v2406 = vadd.f32 %v1726, %v2405
        %v2407 = vpop.f32.mrf.mxu0
        %2408 = vdwg.mxu0
        %2409 = vmatprep.subr.bf16.mxu0 0
        %2410 = vmatpush1.bf16.msra.mxu0 %v2223
        %2411 = vmatprep.subr.bf16.mxu0 0
        %2412 = vmatpush1.bf16.msra.mxu0 %v2222
        %2413 = vmatprep.subr.bf16.mxu0 0
        %2414 = vmatpush1.bf16.msra.mxu0 %v2221
        %2415 = vmatprep.subr.bf16.mxu0 0
        %2416 = vmatpush1.bf16.msra.mxu0 %v2220
        %2417 = vmatprep.subr.bf16.mxu0 0
        %2418 = vmatpush1.bf16.msra.mxu0 %v2219
        %2419 = vmatprep.subr.bf16.mxu0 0
        %2420 = vmatpush1.bf16.msra.mxu0 %v2218
        %2421 = vmatprep.subr.bf16.mxu0 0
        %2422 = vmatpush1.bf16.msra.mxu0 %v2217
        %2423 = vmatprep.subr.bf16.mxu0 0
        %2424 = vmatpush1.bf16.msra.mxu0 %v2216
        %2425 = vmatprep.subr.bf16.mxu0 0
        %2426 = vmatpush2.bf16.msra.mxu0 %v2231
        %2427 = vmatprep.subr.bf16.mxu0 0
        %2428 = vmatpush2.bf16.msra.mxu0 %v2230
        %2429 = vmatprep.subr.bf16.mxu0 0
        %2430 = vmatpush2.bf16.msra.mxu0 %v2229
        %2431 = vmatprep.subr.bf16.mxu0 0
        %2432 = vmatpush2.bf16.msra.mxu0 %v2228
        %2433 = vmatprep.subr.bf16.mxu0 0
        %2434 = vmatpush2.bf16.msra.mxu0 %v2227
        %2435 = vmatprep.subr.bf16.mxu0 0
        %2436 = vmatpush2.bf16.msra.mxu0 %v2226
        %2437 = vmatprep.subr.bf16.mxu0 0
        %2438 = vmatpush2.bf16.msra.mxu0 %v2225
        %2439 = vmatprep.subr.bf16.mxu0 0
        %2440 = vmatpush2.bf16.msra.mxu0 %v2224
        %2441 = vmatprep.mubr.bf16.mxu0 %v1843
        %2442 = vmatmul.mubr.bf16.gmra.mxu0 %v1842
        %v2443 = vpop.f32.mrf.mxu0
        %v2444 = vadd.f32 %v2379, %v2443
        %v2445 = vpop.f32.mrf.mxu0
        %v2446 = vpop.f32.mrf.mxu0
        %v2447 = vadd.f32 %v2382, %v2446
        %v2448 = vpop.f32.mrf.mxu0
        %2449 = vmatprep.mubr.bf16.mxu0 %v1852
        %2450 = vmatmul.mubr.bf16.gmra.mxu0 %v1851
        %v2451 = vpop.f32.mrf.mxu0
        %v2452 = vadd.f32 %v2387, %v2451
        %v2453 = vpop.f32.mrf.mxu0
        %v2454 = vpop.f32.mrf.mxu0
        %v2455 = vadd.f32 %v2390, %v2454
        %v2456 = vpop.f32.mrf.mxu0
        %2457 = vmatprep.mubr.bf16.mxu0 %v1861
        %2458 = vmatmul.mubr.bf16.gmra.mxu0 %v1860
        %v2459 = vpop.f32.mrf.mxu0
        %v2460 = vadd.f32 %v2395, %v2459
        %v2461 = vpop.f32.mrf.mxu0
        %v2462 = vpop.f32.mrf.mxu0
        %v2463 = vadd.f32 %v2398, %v2462
        %v2464 = vpop.f32.mrf.mxu0
        %2465 = vmatprep.mubr.bf16.mxu0 %v1870
        %2466 = vmatmul.mubr.bf16.gmra.mxu0 %v1869
        %v2467 = vpop.f32.mrf.mxu0
        %v2468 = vadd.f32 %v2403, %v2467
        %v2469 = vpop.f32.mrf.mxu0
        %v2470 = vpop.f32.mrf.mxu0
        %v2471 = vadd.f32 %v2406, %v2470
        %v2472 = vpop.f32.mrf.mxu0
        %2473 = vdwg.mxu0
        %2474 = vmatprep.subr.bf16.mxu0 0
        %2475 = vmatpush1.bf16.msra.mxu0 %v2239
        %2476 = vmatprep.subr.bf16.mxu0 0
        %2477 = vmatpush1.bf16.msra.mxu0 %v2238
        %2478 = vmatprep.subr.bf16.mxu0 0
        %2479 = vmatpush1.bf16.msra.mxu0 %v2237
        %2480 = vmatprep.subr.bf16.mxu0 0
        %2481 = vmatpush1.bf16.msra.mxu0 %v2236
        %2482 = vmatprep.subr.bf16.mxu0 0
        %2483 = vmatpush1.bf16.msra.mxu0 %v2235
        %2484 = vmatprep.subr.bf16.mxu0 0
        %2485 = vmatpush1.bf16.msra.mxu0 %v2234
        %2486 = vmatprep.subr.bf16.mxu0 0
        %2487 = vmatpush1.bf16.msra.mxu0 %v2233
        %2488 = vmatprep.subr.bf16.mxu0 0
        %2489 = vmatpush1.bf16.msra.mxu0 %v2232
        %2490 = vmatprep.subr.bf16.mxu0 0
        %2491 = vmatpush2.bf16.msra.mxu0 %v2247
        %2492 = vmatprep.subr.bf16.mxu0 0
        %2493 = vmatpush2.bf16.msra.mxu0 %v2246
        %2494 = vmatprep.subr.bf16.mxu0 0
        %2495 = vmatpush2.bf16.msra.mxu0 %v2245
        %2496 = vmatprep.subr.bf16.mxu0 0
        %2497 = vmatpush2.bf16.msra.mxu0 %v2244
        %2498 = vmatprep.subr.bf16.mxu0 0
        %2499 = vmatpush2.bf16.msra.mxu0 %v2243
        %2500 = vmatprep.subr.bf16.mxu0 0
        %2501 = vmatpush2.bf16.msra.mxu0 %v2242
        %2502 = vmatprep.subr.bf16.mxu0 0
        %2503 = vmatpush2.bf16.msra.mxu0 %v2241
        %2504 = vmatprep.subr.bf16.mxu0 0
        %2505 = vmatpush2.bf16.msra.mxu0 %v2240
        %2506 = vmatprep.mubr.bf16.mxu0 %v1845
        %2507 = vmatmul.mubr.bf16.gmra.mxu0 %v1844
        %v2508 = vpop.f32.mrf.mxu0
        %v2509 = vadd.f32 %v2444, %v2508
        %v2510 = vpop.f32.mrf.mxu0
        %v2511 = vpop.f32.mrf.mxu0
        %v2512 = vadd.f32 %v2447, %v2511
        %v2513 = vpop.f32.mrf.mxu0
        %2514 = vmatprep.mubr.bf16.mxu0 %v1854
        %2515 = vmatmul.mubr.bf16.gmra.mxu0 %v1853
        %v2516 = vpop.f32.mrf.mxu0
        %v2517 = vadd.f32 %v2452, %v2516
        %v2518 = vpop.f32.mrf.mxu0
        %v2519 = vpop.f32.mrf.mxu0
        %v2520 = vadd.f32 %v2455, %v2519
        %v2521 = vpop.f32.mrf.mxu0
        %2522 = vmatprep.mubr.bf16.mxu0 %v1863
        %2523 = vmatmul.mubr.bf16.gmra.mxu0 %v1862
        %v2524 = vpop.f32.mrf.mxu0
        %v2525 = vadd.f32 %v2460, %v2524
        %v2526 = vpop.f32.mrf.mxu0
        %v2527 = vpop.f32.mrf.mxu0
        %v2528 = vadd.f32 %v2463, %v2527
        %v2529 = vpop.f32.mrf.mxu0
        %2530 = vmatprep.mubr.bf16.mxu0 %v1872
        %2531 = vmatmul.mubr.bf16.gmra.mxu0 %v1871
        %v2532 = vpop.f32.mrf.mxu0
        %v2533 = vadd.f32 %v2468, %v2532
        %v2534 = vpop.f32.mrf.mxu0
        %v2535 = vpop.f32.mrf.mxu0
        %v2536 = vadd.f32 %v2471, %v2535
        %v2537 = vpop.f32.mrf.mxu0
        %2538 = vdwg.mxu0
        %2539 = vmatprep.subr.bf16.mxu0 0
        %2540 = vmatpush1.bf16.msra.mxu0 %v2255
        %2541 = vmatprep.subr.bf16.mxu0 0
        %2542 = vmatpush1.bf16.msra.mxu0 %v2254
        %2543 = vmatprep.subr.bf16.mxu0 0
        %2544 = vmatpush1.bf16.msra.mxu0 %v2253
        %2545 = vmatprep.subr.bf16.mxu0 0
        %2546 = vmatpush1.bf16.msra.mxu0 %v2252
        %2547 = vmatprep.subr.bf16.mxu0 0
        %2548 = vmatpush1.bf16.msra.mxu0 %v2251
        %2549 = vmatprep.subr.bf16.mxu0 0
        %2550 = vmatpush1.bf16.msra.mxu0 %v2250
        %2551 = vmatprep.subr.bf16.mxu0 0
        %2552 = vmatpush1.bf16.msra.mxu0 %v2249
        %2553 = vmatprep.subr.bf16.mxu0 0
        %2554 = vmatpush1.bf16.msra.mxu0 %v2248
        %2555 = vmatprep.subr.bf16.mxu0 0
        %2556 = vmatpush2.bf16.msra.mxu0 %v2263
        %2557 = vmatprep.subr.bf16.mxu0 0
        %2558 = vmatpush2.bf16.msra.mxu0 %v2262
        %2559 = vmatprep.subr.bf16.mxu0 0
        %2560 = vmatpush2.bf16.msra.mxu0 %v2261
        %2561 = vmatprep.subr.bf16.mxu0 0
        %2562 = vmatpush2.bf16.msra.mxu0 %v2260
        %2563 = vmatprep.subr.bf16.mxu0 0
        %2564 = vmatpush2.bf16.msra.mxu0 %v2259
        %2565 = vmatprep.subr.bf16.mxu0 0
        %2566 = vmatpush2.bf16.msra.mxu0 %v2258
        %2567 = vmatprep.subr.bf16.mxu0 0
        %2568 = vmatpush2.bf16.msra.mxu0 %v2257
        %2569 = vmatprep.subr.bf16.mxu0 0
        %2570 = vmatpush2.bf16.msra.mxu0 %v2256
        %2571 = vmatprep.mubr.bf16.mxu0 %v1847
        %2572 = vmatmul.mubr.bf16.gmra.mxu0 %v1846
        %v2573 = vpop.f32.mrf.mxu0
        %v2574 = vadd.f32 %v2509, %v2573
        %v2575 = vpop.f32.mrf.mxu0
        %v2576 = vpop.f32.mrf.mxu0
        %v2577 = vadd.f32 %v2512, %v2576
        %v2578 = vpop.f32.mrf.mxu0
        %2579 = vmatprep.mubr.bf16.mxu0 %v1856
        %2580 = vmatmul.mubr.bf16.gmra.mxu0 %v1855
        %v2581 = vpop.f32.mrf.mxu0
        %v2582 = vadd.f32 %v2517, %v2581
        %v2583 = vpop.f32.mrf.mxu0
        %v2584 = vpop.f32.mrf.mxu0
        %v2585 = vadd.f32 %v2520, %v2584
        %v2586 = vpop.f32.mrf.mxu0
        %2587 = vmatprep.mubr.bf16.mxu0 %v1865
        %2588 = vmatmul.mubr.bf16.gmra.mxu0 %v1864
        %v2589 = vpop.f32.mrf.mxu0
        %v2590 = vadd.f32 %v2525, %v2589
        %v2591 = vpop.f32.mrf.mxu0
        %v2592 = vpop.f32.mrf.mxu0
        %v2593 = vadd.f32 %v2528, %v2592
        %v2594 = vpop.f32.mrf.mxu0
        %2595 = vmatprep.mubr.bf16.mxu0 %v1874
        %2596 = vmatmul.mubr.bf16.gmra.mxu0 %v1873
        %v2597 = vpop.f32.mrf.mxu0
        %v2598 = vadd.f32 %v2533, %v2597
        %v2599 = vpop.f32.mrf.mxu0
        %v2600 = vpop.f32.mrf.mxu0
        %v2601 = vadd.f32 %v2536, %v2600
        %v2602 = vpop.f32.mrf.mxu0
        %2603 = vdwg.mxu0
        %2604 = vmatprep.subr.bf16.mxu0 0
        %2605 = vmatpush1.bf16.msra.mxu0 %v2271
        %2606 = vmatprep.subr.bf16.mxu0 0
        %2607 = vmatpush1.bf16.msra.mxu0 %v2270
        %2608 = vmatprep.subr.bf16.mxu0 0
        %2609 = vmatpush1.bf16.msra.mxu0 %v2269
        %2610 = vmatprep.subr.bf16.mxu0 0
        %2611 = vmatpush1.bf16.msra.mxu0 %v2268
        %2612 = vmatprep.subr.bf16.mxu0 0
        %2613 = vmatpush1.bf16.msra.mxu0 %v2267
        %2614 = vmatprep.subr.bf16.mxu0 0
        %2615 = vmatpush1.bf16.msra.mxu0 %v2266
        %2616 = vmatprep.subr.bf16.mxu0 0
        %2617 = vmatpush1.bf16.msra.mxu0 %v2265
        %2618 = vmatprep.subr.bf16.mxu0 0
        %2619 = vmatpush1.bf16.msra.mxu0 %v2264
        %2620 = vmatprep.subr.bf16.mxu0 0
        %2621 = vmatpush2.bf16.msra.mxu0 0
        %2622 = vmatprep.subr.bf16.mxu0 0
        %2623 = vmatpush2.bf16.msra.mxu0 0
        %2624 = vmatprep.subr.bf16.mxu0 0
        %2625 = vmatpush2.bf16.msra.mxu0 0
        %2626 = vmatprep.subr.bf16.mxu0 0
        %2627 = vmatpush2.bf16.msra.mxu0 0
        %2628 = vmatprep.subr.bf16.mxu0 0
        %2629 = vmatpush2.bf16.msra.mxu0 0
        %2630 = vmatprep.subr.bf16.mxu0 0
        %2631 = vmatpush2.bf16.msra.mxu0 0
        %2632 = vmatprep.subr.bf16.mxu0 0
        %2633 = vmatpush2.bf16.msra.mxu0 0
        %2634 = vmatprep.subr.bf16.mxu0 0
        %2635 = vmatpush2.bf16.msra.mxu0 0
        %2636 = vmatprep.mubr.bf16.mxu0 0
        %2637 = vmatmul.mubr.bf16.gmra.mxu0 %v1848
        %v2638 = vpop.f32.mrf.mxu0
        %v2639 = vadd.f32 %v2574, %v2638
        %v2640 = vpop.f32.mrf.mxu0
        %v2641 = vpop.f32.mrf.mxu0
        %v2642 = vadd.f32 %v2577, %v2641
        %v2643 = vpop.f32.mrf.mxu0
        %2644 = vmatprep.mubr.bf16.mxu0 0
        %2645 = vmatmul.mubr.bf16.gmra.mxu0 %v1857
        %v2646 = vpop.f32.mrf.mxu0
        %v2647 = vadd.f32 %v2582, %v2646
        %v2648 = vpop.f32.mrf.mxu0
        %v2649 = vpop.f32.mrf.mxu0
        %v2650 = vadd.f32 %v2585, %v2649
        %v2651 = vpop.f32.mrf.mxu0
        %2652 = vmatprep.mubr.bf16.mxu0 0
        %2653 = vmatmul.mubr.bf16.gmra.mxu0 %v1866
        %v2654 = vpop.f32.mrf.mxu0
        %v2655 = vadd.f32 %v2590, %v2654
        %v2656 = vpop.f32.mrf.mxu0
        %v2657 = vpop.f32.mrf.mxu0
        %v2658 = vadd.f32 %v2593, %v2657
        %v2659 = vpop.f32.mrf.mxu0
        %2660 = vmatprep.mubr.bf16.mxu0 0
        %2661 = vmatmul.mubr.bf16.gmra.mxu0 %v1875
        %v2662 = vpop.f32.mrf.mxu0
        %v2663 = vadd.f32 %v2598, %v2662
        %v2664 = vpop.f32.mrf.mxu0
        %v2665 = vpop.f32.mrf.mxu0
        %v2666 = vadd.f32 %v2601, %v2665
        %v2667 = vpop.f32.mrf.mxu0
        %2668 = vdwg.mxu0
        %v2669 = vmax.f32 %v2639, 0.0
        %v2670 = vmax.f32 %v2642, 0.0
        %v2671 = vmax.f32 %v2647, 0.0
        %v2672 = vmax.f32 %v2650, 0.0
        %v2673 = vmax.f32 %v2655, 0.0
        %v2674 = vmax.f32 %v2658, 0.0
        %v2675 = vmax.f32 %v2663, 0.0
        %v2676 = vmax.f32 %v2666, 0.0
        %v2677 = vpack.c.bf16 %v2670, %v2669
        %v2678 = vpack.c.bf16 %v2672, %v2671
        %v2679 = vpack.c.bf16 %v2674, %v2673
        %v2680 = vpack.c.bf16 %v2676, %v2675
        %v2685 = vunpack.c.l.b16 %v2677
        %v2686 = vunpack.c.h.b16 %v2677
        %v2687 = vunpack.c.l.b16 %v2678
        %v2688 = vunpack.c.h.b16 %v2678
        %v2689 = vunpack.c.l.b16 %v2679
        %v2690 = vunpack.c.h.b16 %v2679
        %v2691 = vunpack.c.l.b16 %v2680
        %v2692 = vunpack.c.h.b16 %v2680
        %v2693 = vpack.c.b16 %v2685, %v2685
        %v2694 = vpack.c.b16 %v2686, %v2686
        %v2695 = vpack.c.b16 %v2687, %v2687
        %v2696 = vpack.c.b16 %v2688, %v2688
        %v2697 = vpack.c.b16 %v2689, %v2689
        %v2698 = vpack.c.b16 %v2690, %v2690
        %v2699 = vpack.c.b16 %v2691, %v2691
        %v2700 = vpack.c.b16 %v2692, %v2692
        %2709 = vst [vmem:[%s544 + $0x8] sm:$0xf] %v2693
        %2710 = vst [vmem:[%s544 + $0x18] sm:$0xf] %v2694
        %2711 = vst [vmem:[%s544 + $0x28] sm:$0xf] %v2695
        %2712 = vst [vmem:[%s544 + $0x38] sm:$0xf] %v2696
        %2713 = vst [vmem:[%s544 + $0x48] sm:$0xf] %v2697
        %2714 = vst [vmem:[%s544 + $0x58] sm:$0xf] %v2698
        %2715 = vst [vmem:[%s544 + $0x68] sm:$0xf] %v2699
        %2716 = vst [vmem:[%s544 + $0x78] sm:$0xf] %v2700
        %v2717 = vld [vmem:[#allocation3 + $0x4] sm:$0x8]
        %v2718 = vld [vmem:[#allocation3 + $0x8] sm:$0xf]
        %v2719 = vld [vmem:[#allocation3 + $0x14] sm:$0x8]
        %v2720 = vld [vmem:[#allocation3 + $0x18] sm:$0xf]
        %v2721 = vld [vmem:[#allocation3 + $0x24] sm:$0x8]
        %v2722 = vld [vmem:[#allocation3 + $0x28] sm:$0xf]
        %v2723 = vld [vmem:[#allocation3 + $0x34] sm:$0x8]
        %v2724 = vld [vmem:[#allocation3 + $0x38] sm:$0xf]
        %v2725 = vld [vmem:[#allocation3 + $0x44] sm:$0x8]
        %v2726 = vld [vmem:[#allocation3 + $0x48] sm:$0xf]
        %v2727 = vld [vmem:[#allocation3 + $0x54] sm:$0x8]
        %v2728 = vld [vmem:[#allocation3 + $0x58] sm:$0xf]
        %v2729 = vld [vmem:[#allocation3 + $0x64] sm:$0x8]
        %v2730 = vld [vmem:[#allocation3 + $0x68] sm:$0xf]
        %v2731 = vld [vmem:[#allocation3 + $0x74] sm:$0x8]
        %v2732 = vld [vmem:[#allocation3 + $0x78] sm:$0xf]
        %v2734 = vshrl.u32 %v2717, 16
        %v2736 = vrot.slane %v2734, 7
        %v2737 = vrot.slane %v2736, 4
        %v2739 = vshrl.u32 %v2718, 16
        %v2741 = vrot.slane %v2739, 7
        %v2742 = vshll.u32 %v2718, 16
        %v2744 = vor.u32 %v2741, %v2742
        %v2745 = vsel %vm660, %v2737, %v2744
        %v2747 = vshrl.u32 %v2719, 16
        %v2749 = vrot.slane %v2747, 7
        %v2750 = vrot.slane %v2749, 4
        %v2752 = vshrl.u32 %v2720, 16
        %v2754 = vrot.slane %v2752, 7
        %v2755 = vshll.u32 %v2720, 16
        %v2757 = vor.u32 %v2754, %v2755
        %v2758 = vsel %vm660, %v2750, %v2757
        %v2760 = vshrl.u32 %v2721, 16
        %v2762 = vrot.slane %v2760, 7
        %v2763 = vrot.slane %v2762, 4
        %v2765 = vshrl.u32 %v2722, 16
        %v2767 = vrot.slane %v2765, 7
        %v2768 = vshll.u32 %v2722, 16
        %v2770 = vor.u32 %v2767, %v2768
        %v2771 = vsel %vm660, %v2763, %v2770
        %v2773 = vshrl.u32 %v2723, 16
        %v2775 = vrot.slane %v2773, 7
        %v2776 = vrot.slane %v2775, 4
        %v2778 = vshrl.u32 %v2724, 16
        %v2780 = vrot.slane %v2778, 7
        %v2781 = vshll.u32 %v2724, 16
        %v2783 = vor.u32 %v2780, %v2781
        %v2784 = vsel %vm660, %v2776, %v2783
        %v2786 = vshrl.u32 %v2725, 16
        %v2788 = vrot.slane %v2786, 7
        %v2789 = vrot.slane %v2788, 4
        %v2791 = vshrl.u32 %v2726, 16
        %v2793 = vrot.slane %v2791, 7
        %v2794 = vshll.u32 %v2726, 16
        %v2796 = vor.u32 %v2793, %v2794
        %v2797 = vsel %vm660, %v2789, %v2796
        %v2799 = vshrl.u32 %v2727, 16
        %v2801 = vrot.slane %v2799, 7
        %v2802 = vrot.slane %v2801, 4
        %v2804 = vshrl.u32 %v2728, 16
        %v2806 = vrot.slane %v2804, 7
        %v2807 = vshll.u32 %v2728, 16
        %v2809 = vor.u32 %v2806, %v2807
        %v2810 = vsel %vm660, %v2802, %v2809
        %v2812 = vshrl.u32 %v2729, 16
        %v2814 = vrot.slane %v2812, 7
        %v2815 = vrot.slane %v2814, 4
        %v2817 = vshrl.u32 %v2730, 16
        %v2819 = vrot.slane %v2817, 7
        %v2820 = vshll.u32 %v2730, 16
        %v2822 = vor.u32 %v2819, %v2820
        %v2823 = vsel %vm660, %v2815, %v2822
        %v2825 = vshrl.u32 %v2731, 16
        %v2827 = vrot.slane %v2825, 7
        %v2828 = vrot.slane %v2827, 4
        %v2830 = vshrl.u32 %v2732, 16
        %v2832 = vrot.slane %v2830, 7
        %v2833 = vshll.u32 %v2732, 16
        %v2835 = vor.u32 %v2832, %v2833
        %v2836 = vsel %vm660, %v2828, %v2835
        %2845 = vst [vmem:[#allocation4] sm:$0xf] %v2745
        %2846 = vst [vmem:[#allocation4 + $0x24] sm:$0xf] %v2758
        %2847 = vst [vmem:[#allocation4 + $0x48] sm:$0xf] %v2771
        %2848 = vst [vmem:[#allocation4 + $0x6c] sm:$0xf] %v2784
        %2849 = vst [vmem:[#allocation4 + $0x90] sm:$0xf] %v2797
        %2850 = vst [vmem:[#allocation4 + $0xb4] sm:$0xf] %v2810
        %2851 = vst [vmem:[#allocation4 + $0xd8] sm:$0xf] %v2823
        %2852 = vst [vmem:[#allocation4 + $0xfc] sm:$0xf] %v2836
        %v2853 = vld [vmem:[#allocation3 + $0x8] sm:$0xf]
        %v2854 = vld [vmem:[#allocation3 + $0x18] sm:$0xf]
        %v2855 = vld [vmem:[#allocation3 + $0x28] sm:$0xf]
        %v2856 = vld [vmem:[#allocation3 + $0x38] sm:$0xf]
        %v2857 = vld [vmem:[#allocation3 + $0x48] sm:$0xf]
        %v2858 = vld [vmem:[#allocation3 + $0x58] sm:$0xf]
        %v2859 = vld [vmem:[#allocation3 + $0x68] sm:$0xf]
        %v2860 = vld [vmem:[#allocation3 + $0x78] sm:$0xf]
        %2861 = vst [vmem:[#allocation4 + $0x4] sm:$0xf] %v2853
        %2862 = vst [vmem:[#allocation4 + $0x28] sm:$0xf] %v2854
        %2863 = vst [vmem:[#allocation4 + $0x4c] sm:$0xf] %v2855
        %2864 = vst [vmem:[#allocation4 + $0x70] sm:$0xf] %v2856
        %2865 = vst [vmem:[#allocation4 + $0x94] sm:$0xf] %v2857
        %2866 = vst [vmem:[#allocation4 + $0xb8] sm:$0xf] %v2858
        %2867 = vst [vmem:[#allocation4 + $0xdc] sm:$0xf] %v2859
        %2868 = vst [vmem:[#allocation4 + $0x100] sm:$0xf] %v2860
        %v2869 = vld [vmem:[#allocation3 + $0x8] sm:$0xf]
        %v2870 = vld [vmem:[#allocation3 + $0xc] sm:$0x1]
        %v2871 = vld [vmem:[#allocation3 + $0x18] sm:$0xf]
        %v2872 = vld [vmem:[#allocation3 + $0x1c] sm:$0x1]
        %v2873 = vld [vmem:[#allocation3 + $0x28] sm:$0xf]
        %v2874 = vld [vmem:[#allocation3 + $0x2c] sm:$0x1]
        %v2875 = vld [vmem:[#allocation3 + $0x38] sm:$0xf]
        %v2876 = vld [vmem:[#allocation3 + $0x3c] sm:$0x1]
        %v2877 = vld [vmem:[#allocation3 + $0x48] sm:$0xf]
        %v2878 = vld [vmem:[#allocation3 + $0x4c] sm:$0x1]
        %v2879 = vld [vmem:[#allocation3 + $0x58] sm:$0xf]
        %v2880 = vld [vmem:[#allocation3 + $0x5c] sm:$0x1]
        %v2881 = vld [vmem:[#allocation3 + $0x68] sm:$0xf]
        %v2882 = vld [vmem:[#allocation3 + $0x6c] sm:$0x1]
        %v2883 = vld [vmem:[#allocation3 + $0x78] sm:$0xf]
        %v2884 = vld [vmem:[#allocation3 + $0x7c] sm:$0x1]
        %v2886 = vshrl.u32 %v2869, 16
        %v2888 = vrot.slane %v2886, 4
        %v2889 = vshll.u32 %v2869, 16
        %v2891 = vrot.slane %v2889, 5
        %v2892 = vor.u32 %v2888, %v2891
        %v2893 = vrot.slane %v2892, 4
        %v2895 = vshll.u32 %v2870, 16
        %v2897 = vrot.slane %v2895, 5
        %v2898 = vsel %vm815, %v2893, %v2897
        %v2900 = vshrl.u32 %v2871, 16
        %v2902 = vrot.slane %v2900, 4
        %v2903 = vshll.u32 %v2871, 16
        %v2905 = vrot.slane %v2903, 5
        %v2906 = vor.u32 %v2902, %v2905
        %v2907 = vrot.slane %v2906, 4
        %v2909 = vshll.u32 %v2872, 16
        %v2911 = vrot.slane %v2909, 5
        %v2912 = vsel %vm815, %v2907, %v2911
        %v2914 = vshrl.u32 %v2873, 16
        %v2916 = vrot.slane %v2914, 4
        %v2917 = vshll.u32 %v2873, 16
        %v2919 = vrot.slane %v2917, 5
        %v2920 = vor.u32 %v2916, %v2919
        %v2921 = vrot.slane %v2920, 4
        %v2923 = vshll.u32 %v2874, 16
        %v2925 = vrot.slane %v2923, 5
        %v2926 = vsel %vm815, %v2921, %v2925
        %v2928 = vshrl.u32 %v2875, 16
        %v2930 = vrot.slane %v2928, 4
        %v2931 = vshll.u32 %v2875, 16
        %v2933 = vrot.slane %v2931, 5
        %v2934 = vor.u32 %v2930, %v2933
        %v2935 = vrot.slane %v2934, 4
        %v2937 = vshll.u32 %v2876, 16
        %v2939 = vrot.slane %v2937, 5
        %v2940 = vsel %vm815, %v2935, %v2939
        %v2942 = vshrl.u32 %v2877, 16
        %v2944 = vrot.slane %v2942, 4
        %v2945 = vshll.u32 %v2877, 16
        %v2947 = vrot.slane %v2945, 5
        %v2948 = vor.u32 %v2944, %v2947
        %v2949 = vrot.slane %v2948, 4
        %v2951 = vshll.u32 %v2878, 16
        %v2953 = vrot.slane %v2951, 5
        %v2954 = vsel %vm815, %v2949, %v2953
        %v2956 = vshrl.u32 %v2879, 16
        %v2958 = vrot.slane %v2956, 4
        %v2959 = vshll.u32 %v2879, 16
        %v2961 = vrot.slane %v2959, 5
        %v2962 = vor.u32 %v2958, %v2961
        %v2963 = vrot.slane %v2962, 4
        %v2965 = vshll.u32 %v2880, 16
        %v2967 = vrot.slane %v2965, 5
        %v2968 = vsel %vm815, %v2963, %v2967
        %v2970 = vshrl.u32 %v2881, 16
        %v2972 = vrot.slane %v2970, 4
        %v2973 = vshll.u32 %v2881, 16
        %v2975 = vrot.slane %v2973, 5
        %v2976 = vor.u32 %v2972, %v2975
        %v2977 = vrot.slane %v2976, 4
        %v2979 = vshll.u32 %v2882, 16
        %v2981 = vrot.slane %v2979, 5
        %v2982 = vsel %vm815, %v2977, %v2981
        %v2984 = vshrl.u32 %v2883, 16
        %v2986 = vrot.slane %v2984, 4
        %v2987 = vshll.u32 %v2883, 16
        %v2989 = vrot.slane %v2987, 5
        %v2990 = vor.u32 %v2986, %v2989
        %v2991 = vrot.slane %v2990, 4
        %v2993 = vshll.u32 %v2884, 16
        %v2995 = vrot.slane %v2993, 5
        %v2996 = vsel %vm815, %v2991, %v2995
        %3005 = vst [vmem:[#allocation4 + $0x8] sm:$0xf] %v2898
        %3006 = vst [vmem:[#allocation4 + $0x2c] sm:$0xf] %v2912
        %3007 = vst [vmem:[#allocation4 + $0x50] sm:$0xf] %v2926
        %3008 = vst [vmem:[#allocation4 + $0x74] sm:$0xf] %v2940
        %3009 = vst [vmem:[#allocation4 + $0x98] sm:$0xf] %v2954
        %3010 = vst [vmem:[#allocation4 + $0xbc] sm:$0xf] %v2968
        %3011 = vst [vmem:[#allocation4 + $0xe0] sm:$0xf] %v2982
        %3012 = vst [vmem:[#allocation4 + $0x104] sm:$0xf] %v2996
        %v3013 = vld [vmem:[%s544 + $0x4] sm:$0x8]
        %v3014 = vld [vmem:[%s544 + $0x8] sm:$0xf]
        %v3015 = vld [vmem:[%s544 + $0x14] sm:$0x8]
        %v3016 = vld [vmem:[%s544 + $0x18] sm:$0xf]
        %v3017 = vld [vmem:[%s544 + $0x24] sm:$0x8]
        %v3018 = vld [vmem:[%s544 + $0x28] sm:$0xf]
        %v3019 = vld [vmem:[%s544 + $0x34] sm:$0x8]
        %v3020 = vld [vmem:[%s544 + $0x38] sm:$0xf]
        %v3021 = vld [vmem:[%s544 + $0x44] sm:$0x8]
        %v3022 = vld [vmem:[%s544 + $0x48] sm:$0xf]
        %v3023 = vld [vmem:[%s544 + $0x54] sm:$0x8]
        %v3024 = vld [vmem:[%s544 + $0x58] sm:$0xf]
        %v3025 = vld [vmem:[%s544 + $0x64] sm:$0x8]
        %v3026 = vld [vmem:[%s544 + $0x68] sm:$0xf]
        %v3027 = vld [vmem:[%s544 + $0x74] sm:$0x8]
        %v3028 = vld [vmem:[%s544 + $0x78] sm:$0xf]
        %v3030 = vshrl.u32 %v3013, 16
        %v3032 = vrot.slane %v3030, 7
        %v3033 = vrot.slane %v3032, 4
        %v3035 = vshrl.u32 %v3014, 16
        %v3037 = vrot.slane %v3035, 7
        %v3038 = vshll.u32 %v3014, 16
        %v3040 = vor.u32 %v3037, %v3038
        %v3041 = vsel %vm660, %v3033, %v3040
        %v3043 = vshrl.u32 %v3015, 16
        %v3045 = vrot.slane %v3043, 7
        %v3046 = vrot.slane %v3045, 4
        %v3048 = vshrl.u32 %v3016, 16
        %v3050 = vrot.slane %v3048, 7
        %v3051 = vshll.u32 %v3016, 16
        %v3053 = vor.u32 %v3050, %v3051
        %v3054 = vsel %vm660, %v3046, %v3053
        %v3056 = vshrl.u32 %v3017, 16
        %v3058 = vrot.slane %v3056, 7
        %v3059 = vrot.slane %v3058, 4
        %v3061 = vshrl.u32 %v3018, 16
        %v3063 = vrot.slane %v3061, 7
        %v3064 = vshll.u32 %v3018, 16
        %v3066 = vor.u32 %v3063, %v3064
        %v3067 = vsel %vm660, %v3059, %v3066
        %v3069 = vshrl.u32 %v3019, 16
        %v3071 = vrot.slane %v3069, 7
        %v3072 = vrot.slane %v3071, 4
        %v3074 = vshrl.u32 %v3020, 16
        %v3076 = vrot.slane %v3074, 7
        %v3077 = vshll.u32 %v3020, 16
        %v3079 = vor.u32 %v3076, %v3077
        %v3080 = vsel %vm660, %v3072, %v3079
        %v3082 = vshrl.u32 %v3021, 16
        %v3084 = vrot.slane %v3082, 7
        %v3085 = vrot.slane %v3084, 4
        %v3087 = vshrl.u32 %v3022, 16
        %v3089 = vrot.slane %v3087, 7
        %v3090 = vshll.u32 %v3022, 16
        %v3092 = vor.u32 %v3089, %v3090
        %v3093 = vsel %vm660, %v3085, %v3092
        %v3095 = vshrl.u32 %v3023, 16
        %v3097 = vrot.slane %v3095, 7
        %v3098 = vrot.slane %v3097, 4
        %v3100 = vshrl.u32 %v3024, 16
        %v3102 = vrot.slane %v3100, 7
        %v3103 = vshll.u32 %v3024, 16
        %v3105 = vor.u32 %v3102, %v3103
        %v3106 = vsel %vm660, %v3098, %v3105
        %v3108 = vshrl.u32 %v3025, 16
        %v3110 = vrot.slane %v3108, 7
        %v3111 = vrot.slane %v3110, 4
        %v3113 = vshrl.u32 %v3026, 16
        %v3115 = vrot.slane %v3113, 7
        %v3116 = vshll.u32 %v3026, 16
        %v3118 = vor.u32 %v3115, %v3116
        %v3119 = vsel %vm660, %v3111, %v3118
        %v3121 = vshrl.u32 %v3027, 16
        %v3123 = vrot.slane %v3121, 7
        %v3124 = vrot.slane %v3123, 4
        %v3126 = vshrl.u32 %v3028, 16
        %v3128 = vrot.slane %v3126, 7
        %v3129 = vshll.u32 %v3028, 16
        %v3131 = vor.u32 %v3128, %v3129
        %v3132 = vsel %vm660, %v3124, %v3131
        %3141 = vst [vmem:[#allocation4 + $0xc] sm:$0xf] %v3041
        %3142 = vst [vmem:[#allocation4 + $0x30] sm:$0xf] %v3054
        %3143 = vst [vmem:[#allocation4 + $0x54] sm:$0xf] %v3067
        %3144 = vst [vmem:[#allocation4 + $0x78] sm:$0xf] %v3080
        %3145 = vst [vmem:[#allocation4 + $0x9c] sm:$0xf] %v3093
        %3146 = vst [vmem:[#allocation4 + $0xc0] sm:$0xf] %v3106
        %3147 = vst [vmem:[#allocation4 + $0xe4] sm:$0xf] %v3119
        %3148 = vst [vmem:[#allocation4 + $0x108] sm:$0xf] %v3132
        %v3149 = vld [vmem:[%s544 + $0x8] sm:$0xf]
        %v3150 = vld [vmem:[%s544 + $0x18] sm:$0xf]
        %v3151 = vld [vmem:[%s544 + $0x28] sm:$0xf]
        %v3152 = vld [vmem:[%s544 + $0x38] sm:$0xf]
        %v3153 = vld [vmem:[%s544 + $0x48] sm:$0xf]
        %v3154 = vld [vmem:[%s544 + $0x58] sm:$0xf]
        %v3155 = vld [vmem:[%s544 + $0x68] sm:$0xf]
        %v3156 = vld [vmem:[%s544 + $0x78] sm:$0xf]
        %3157 = vst [vmem:[#allocation4 + $0x10] sm:$0xf] %v3149
        %3158 = vst [vmem:[#allocation4 + $0x34] sm:$0xf] %v3150
        %3159 = vst [vmem:[#allocation4 + $0x58] sm:$0xf] %v3151
        %3160 = vst [vmem:[#allocation4 + $0x7c] sm:$0xf] %v3152
        %3161 = vst [vmem:[#allocation4 + $0xa0] sm:$0xf] %v3153
        %3162 = vst [vmem:[#allocation4 + $0xc4] sm:$0xf] %v3154
        %3163 = vst [vmem:[#allocation4 + $0xe8] sm:$0xf] %v3155
        %3164 = vst [vmem:[#allocation4 + $0x10c] sm:$0xf] %v3156
        %v3165 = vld [vmem:[%s544 + $0x8] sm:$0xf]
        %v3166 = vld [vmem:[%s544 + $0xc] sm:$0x1]
        %v3167 = vld [vmem:[%s544 + $0x18] sm:$0xf]
        %v3168 = vld [vmem:[%s544 + $0x1c] sm:$0x1]
        %v3169 = vld [vmem:[%s544 + $0x28] sm:$0xf]
        %v3170 = vld [vmem:[%s544 + $0x2c] sm:$0x1]
        %v3171 = vld [vmem:[%s544 + $0x38] sm:$0xf]
        %v3172 = vld [vmem:[%s544 + $0x3c] sm:$0x1]
        %v3173 = vld [vmem:[%s544 + $0x48] sm:$0xf]
        %v3174 = vld [vmem:[%s544 + $0x4c] sm:$0x1]
        %v3175 = vld [vmem:[%s544 + $0x58] sm:$0xf]
        %v3176 = vld [vmem:[%s544 + $0x5c] sm:$0x1]
        %v3177 = vld [vmem:[%s544 + $0x68] sm:$0xf]
        %v3178 = vld [vmem:[%s544 + $0x6c] sm:$0x1]
        %v3179 = vld [vmem:[%s544 + $0x78] sm:$0xf]
        %v3180 = vld [vmem:[%s544 + $0x7c] sm:$0x1]
        %v3182 = vshrl.u32 %v3165, 16
        %v3184 = vrot.slane %v3182, 4
        %v3185 = vshll.u32 %v3165, 16
        %v3187 = vrot.slane %v3185, 5
        %v3188 = vor.u32 %v3184, %v3187
        %v3189 = vrot.slane %v3188, 4
        %v3191 = vshll.u32 %v3166, 16
        %v3193 = vrot.slane %v3191, 5
        %v3194 = vsel %vm815, %v3189, %v3193
        %v3196 = vshrl.u32 %v3167, 16
        %v3198 = vrot.slane %v3196, 4
        %v3199 = vshll.u32 %v3167, 16
        %v3201 = vrot.slane %v3199, 5
        %v3202 = vor.u32 %v3198, %v3201
        %v3203 = vrot.slane %v3202, 4
        %v3205 = vshll.u32 %v3168, 16
        %v3207 = vrot.slane %v3205, 5
        %v3208 = vsel %vm815, %v3203, %v3207
        %v3210 = vshrl.u32 %v3169, 16
        %v3212 = vrot.slane %v3210, 4
        %v3213 = vshll.u32 %v3169, 16
        %v3215 = vrot.slane %v3213, 5
        %v3216 = vor.u32 %v3212, %v3215
        %v3217 = vrot.slane %v3216, 4
        %v3219 = vshll.u32 %v3170, 16
        %v3221 = vrot.slane %v3219, 5
        %v3222 = vsel %vm815, %v3217, %v3221
        %v3224 = vshrl.u32 %v3171, 16
        %v3226 = vrot.slane %v3224, 4
        %v3227 = vshll.u32 %v3171, 16
        %v3229 = vrot.slane %v3227, 5
        %v3230 = vor.u32 %v3226, %v3229
        %v3231 = vrot.slane %v3230, 4
        %v3233 = vshll.u32 %v3172, 16
        %v3235 = vrot.slane %v3233, 5
        %v3236 = vsel %vm815, %v3231, %v3235
        %v3238 = vshrl.u32 %v3173, 16
        %v3240 = vrot.slane %v3238, 4
        %v3241 = vshll.u32 %v3173, 16
        %v3243 = vrot.slane %v3241, 5
        %v3244 = vor.u32 %v3240, %v3243
        %v3245 = vrot.slane %v3244, 4
        %v3247 = vshll.u32 %v3174, 16
        %v3249 = vrot.slane %v3247, 5
        %v3250 = vsel %vm815, %v3245, %v3249
        %v3252 = vshrl.u32 %v3175, 16
        %v3254 = vrot.slane %v3252, 4
        %v3255 = vshll.u32 %v3175, 16
        %v3257 = vrot.slane %v3255, 5
        %v3258 = vor.u32 %v3254, %v3257
        %v3259 = vrot.slane %v3258, 4
        %v3261 = vshll.u32 %v3176, 16
        %v3263 = vrot.slane %v3261, 5
        %v3264 = vsel %vm815, %v3259, %v3263
        %v3266 = vshrl.u32 %v3177, 16
        %v3268 = vrot.slane %v3266, 4
        %v3269 = vshll.u32 %v3177, 16
        %v3271 = vrot.slane %v3269, 5
        %v3272 = vor.u32 %v3268, %v3271
        %v3273 = vrot.slane %v3272, 4
        %v3275 = vshll.u32 %v3178, 16
        %v3277 = vrot.slane %v3275, 5
        %v3278 = vsel %vm815, %v3273, %v3277
        %v3280 = vshrl.u32 %v3179, 16
        %v3282 = vrot.slane %v3280, 4
        %v3283 = vshll.u32 %v3179, 16
        %v3285 = vrot.slane %v3283, 5
        %v3286 = vor.u32 %v3282, %v3285
        %v3287 = vrot.slane %v3286, 4
        %v3289 = vshll.u32 %v3180, 16
        %v3291 = vrot.slane %v3289, 5
        %v3292 = vsel %vm815, %v3287, %v3291
        %3301 = vst [vmem:[#allocation4 + $0x14] sm:$0xf] %v3194
        %3302 = vst [vmem:[#allocation4 + $0x38] sm:$0xf] %v3208
        %3303 = vst [vmem:[#allocation4 + $0x5c] sm:$0xf] %v3222
        %3304 = vst [vmem:[#allocation4 + $0x80] sm:$0xf] %v3236
        %3305 = vst [vmem:[#allocation4 + $0xa4] sm:$0xf] %v3250
        %3306 = vst [vmem:[#allocation4 + $0xc8] sm:$0xf] %v3264
        %3307 = vst [vmem:[#allocation4 + $0xec] sm:$0xf] %v3278
        %3308 = vst [vmem:[#allocation4 + $0x110] sm:$0xf] %v3292
        %s3309 = scalar_lea.vmem [#allocation3], 32
        %v3310 = vld [vmem:[%s3309 + $0x4] sm:$0x8]
        %v3311 = vld [vmem:[%s3309 + $0x8] sm:$0xf]
        %v3312 = vld [vmem:[%s3309 + $0x14] sm:$0x8]
        %v3313 = vld [vmem:[%s3309 + $0x18] sm:$0xf]
        %v3314 = vld [vmem:[%s3309 + $0x24] sm:$0x8]
        %v3315 = vld [vmem:[%s3309 + $0x28] sm:$0xf]
        %v3316 = vld [vmem:[%s3309 + $0x34] sm:$0x8]
        %v3317 = vld [vmem:[%s3309 + $0x38] sm:$0xf]
        %v3318 = vld [vmem:[%s3309 + $0x44] sm:$0x8]
        %v3319 = vld [vmem:[%s3309 + $0x48] sm:$0xf]
        %v3320 = vld [vmem:[%s3309 + $0x54] sm:$0x8]
        %v3321 = vld [vmem:[%s3309 + $0x58] sm:$0xf]
        %v3322 = vld [vmem:[%s3309 + $0x64] sm:$0x8]
        %v3323 = vld [vmem:[%s3309 + $0x68] sm:$0xf]
        %v3324 = vld [vmem:[%s3309 + $0x74] sm:$0x8]
        %v3325 = vld [vmem:[%s3309 + $0x78] sm:$0xf]
        %v3327 = vshrl.u32 %v3310, 16
        %v3329 = vrot.slane %v3327, 7
        %v3330 = vrot.slane %v3329, 4
        %v3332 = vshrl.u32 %v3311, 16
        %v3334 = vrot.slane %v3332, 7
        %v3335 = vshll.u32 %v3311, 16
        %v3337 = vor.u32 %v3334, %v3335
        %v3338 = vsel %vm660, %v3330, %v3337
        %v3340 = vshrl.u32 %v3312, 16
        %v3342 = vrot.slane %v3340, 7
        %v3343 = vrot.slane %v3342, 4
        %v3345 = vshrl.u32 %v3313, 16
        %v3347 = vrot.slane %v3345, 7
        %v3348 = vshll.u32 %v3313, 16
        %v3350 = vor.u32 %v3347, %v3348
        %v3351 = vsel %vm660, %v3343, %v3350
        %v3353 = vshrl.u32 %v3314, 16
        %v3355 = vrot.slane %v3353, 7
        %v3356 = vrot.slane %v3355, 4
        %v3358 = vshrl.u32 %v3315, 16
        %v3360 = vrot.slane %v3358, 7
        %v3361 = vshll.u32 %v3315, 16
        %v3363 = vor.u32 %v3360, %v3361
        %v3364 = vsel %vm660, %v3356, %v3363
        %v3366 = vshrl.u32 %v3316, 16
        %v3368 = vrot.slane %v3366, 7
        %v3369 = vrot.slane %v3368, 4
        %v3371 = vshrl.u32 %v3317, 16
        %v3373 = vrot.slane %v3371, 7
        %v3374 = vshll.u32 %v3317, 16
        %v3376 = vor.u32 %v3373, %v3374
        %v3377 = vsel %vm660, %v3369, %v3376
        %v3379 = vshrl.u32 %v3318, 16
        %v3381 = vrot.slane %v3379, 7
        %v3382 = vrot.slane %v3381, 4
        %v3384 = vshrl.u32 %v3319, 16
        %v3386 = vrot.slane %v3384, 7
        %v3387 = vshll.u32 %v3319, 16
        %v3389 = vor.u32 %v3386, %v3387
        %v3390 = vsel %vm660, %v3382, %v3389
        %v3392 = vshrl.u32 %v3320, 16
        %v3394 = vrot.slane %v3392, 7
        %v3395 = vrot.slane %v3394, 4
        %v3397 = vshrl.u32 %v3321, 16
        %v3399 = vrot.slane %v3397, 7
        %v3400 = vshll.u32 %v3321, 16
        %v3402 = vor.u32 %v3399, %v3400
        %v3403 = vsel %vm660, %v3395, %v3402
        %v3405 = vshrl.u32 %v3322, 16
        %v3407 = vrot.slane %v3405, 7
        %v3408 = vrot.slane %v3407, 4
        %v3410 = vshrl.u32 %v3323, 16
        %v3412 = vrot.slane %v3410, 7
        %v3413 = vshll.u32 %v3323, 16
        %v3415 = vor.u32 %v3412, %v3413
        %v3416 = vsel %vm660, %v3408, %v3415
        %v3418 = vshrl.u32 %v3324, 16
        %v3420 = vrot.slane %v3418, 7
        %v3421 = vrot.slane %v3420, 4
        %v3423 = vshrl.u32 %v3325, 16
        %v3425 = vrot.slane %v3423, 7
        %v3426 = vshll.u32 %v3325, 16
        %v3428 = vor.u32 %v3425, %v3426
        %v3429 = vsel %vm660, %v3421, %v3428
        %3438 = vst [vmem:[#allocation4 + $0x18] sm:$0xf] %v3338
        %3439 = vst [vmem:[#allocation4 + $0x3c] sm:$0xf] %v3351
        %3440 = vst [vmem:[#allocation4 + $0x60] sm:$0xf] %v3364
        %3441 = vst [vmem:[#allocation4 + $0x84] sm:$0xf] %v3377
        %3442 = vst [vmem:[#allocation4 + $0xa8] sm:$0xf] %v3390
        %3443 = vst [vmem:[#allocation4 + $0xcc] sm:$0xf] %v3403
        %3444 = vst [vmem:[#allocation4 + $0xf0] sm:$0xf] %v3416
        %3445 = vst [vmem:[#allocation4 + $0x114] sm:$0xf] %v3429
        %v3446 = vld [vmem:[%s3309 + $0x8] sm:$0xf]
        %v3447 = vld [vmem:[%s3309 + $0x18] sm:$0xf]
        %v3448 = vld [vmem:[%s3309 + $0x28] sm:$0xf]
        %v3449 = vld [vmem:[%s3309 + $0x38] sm:$0xf]
        %v3450 = vld [vmem:[%s3309 + $0x48] sm:$0xf]
        %v3451 = vld [vmem:[%s3309 + $0x58] sm:$0xf]
        %v3452 = vld [vmem:[%s3309 + $0x68] sm:$0xf]
        %v3453 = vld [vmem:[%s3309 + $0x78] sm:$0xf]
        %3454 = vst [vmem:[#allocation4 + $0x1c] sm:$0xf] %v3446
        %3455 = vst [vmem:[#allocation4 + $0x40] sm:$0xf] %v3447
        %3456 = vst [vmem:[#allocation4 + $0x64] sm:$0xf] %v3448
        %3457 = vst [vmem:[#allocation4 + $0x88] sm:$0xf] %v3449
        %3458 = vst [vmem:[#allocation4 + $0xac] sm:$0xf] %v3450
        %3459 = vst [vmem:[#allocation4 + $0xd0] sm:$0xf] %v3451
        %3460 = vst [vmem:[#allocation4 + $0xf4] sm:$0xf] %v3452
        %3461 = vst [vmem:[#allocation4 + $0x118] sm:$0xf] %v3453
        %v3462 = vld [vmem:[%s3309 + $0x8] sm:$0xf]
        %v3463 = vld [vmem:[%s3309 + $0xc] sm:$0x1]
        %v3464 = vld [vmem:[%s3309 + $0x18] sm:$0xf]
        %v3465 = vld [vmem:[%s3309 + $0x1c] sm:$0x1]
        %v3466 = vld [vmem:[%s3309 + $0x28] sm:$0xf]
        %v3467 = vld [vmem:[%s3309 + $0x2c] sm:$0x1]
        %v3468 = vld [vmem:[%s3309 + $0x38] sm:$0xf]
        %v3469 = vld [vmem:[%s3309 + $0x3c] sm:$0x1]
        %v3470 = vld [vmem:[%s3309 + $0x48] sm:$0xf]
        %v3471 = vld [vmem:[%s3309 + $0x4c] sm:$0x1]
        %v3472 = vld [vmem:[%s3309 + $0x58] sm:$0xf]
        %v3473 = vld [vmem:[%s3309 + $0x5c] sm:$0x1]
        %v3474 = vld [vmem:[%s3309 + $0x68] sm:$0xf]
        %v3475 = vld [vmem:[%s3309 + $0x6c] sm:$0x1]
        %v3476 = vld [vmem:[%s3309 + $0x78] sm:$0xf]
        %v3477 = vld [vmem:[%s3309 + $0x7c] sm:$0x1]
        %v3479 = vshrl.u32 %v3462, 16
        %v3481 = vrot.slane %v3479, 4
        %v3482 = vshll.u32 %v3462, 16
        %v3484 = vrot.slane %v3482, 5
        %v3485 = vor.u32 %v3481, %v3484
        %v3486 = vrot.slane %v3485, 4
        %v3488 = vshll.u32 %v3463, 16
        %v3490 = vrot.slane %v3488, 5
        %v3491 = vsel %vm815, %v3486, %v3490
        %v3493 = vshrl.u32 %v3464, 16
        %v3495 = vrot.slane %v3493, 4
        %v3496 = vshll.u32 %v3464, 16
        %v3498 = vrot.slane %v3496, 5
        %v3499 = vor.u32 %v3495, %v3498
        %v3500 = vrot.slane %v3499, 4
        %v3502 = vshll.u32 %v3465, 16
        %v3504 = vrot.slane %v3502, 5
        %v3505 = vsel %vm815, %v3500, %v3504
        %v3507 = vshrl.u32 %v3466, 16
        %v3509 = vrot.slane %v3507, 4
        %v3510 = vshll.u32 %v3466, 16
        %v3512 = vrot.slane %v3510, 5
        %v3513 = vor.u32 %v3509, %v3512
        %v3514 = vrot.slane %v3513, 4
        %v3516 = vshll.u32 %v3467, 16
        %v3518 = vrot.slane %v3516, 5
        %v3519 = vsel %vm815, %v3514, %v3518
        %v3521 = vshrl.u32 %v3468, 16
        %v3523 = vrot.slane %v3521, 4
        %v3524 = vshll.u32 %v3468, 16
        %v3526 = vrot.slane %v3524, 5
        %v3527 = vor.u32 %v3523, %v3526
        %v3528 = vrot.slane %v3527, 4
        %v3530 = vshll.u32 %v3469, 16
        %v3532 = vrot.slane %v3530, 5
        %v3533 = vsel %vm815, %v3528, %v3532
        %v3535 = vshrl.u32 %v3470, 16
        %v3537 = vrot.slane %v3535, 4
        %v3538 = vshll.u32 %v3470, 16
        %v3540 = vrot.slane %v3538, 5
        %v3541 = vor.u32 %v3537, %v3540
        %v3542 = vrot.slane %v3541, 4
        %v3544 = vshll.u32 %v3471, 16
        %v3546 = vrot.slane %v3544, 5
        %v3547 = vsel %vm815, %v3542, %v3546
        %v3549 = vshrl.u32 %v3472, 16
        %v3551 = vrot.slane %v3549, 4
        %v3552 = vshll.u32 %v3472, 16
        %v3554 = vrot.slane %v3552, 5
        %v3555 = vor.u32 %v3551, %v3554
        %v3556 = vrot.slane %v3555, 4
        %v3558 = vshll.u32 %v3473, 16
        %v3560 = vrot.slane %v3558, 5
        %v3561 = vsel %vm815, %v3556, %v3560
        %v3563 = vshrl.u32 %v3474, 16
        %v3565 = vrot.slane %v3563, 4
        %v3566 = vshll.u32 %v3474, 16
        %v3568 = vrot.slane %v3566, 5
        %v3569 = vor.u32 %v3565, %v3568
        %v3570 = vrot.slane %v3569, 4
        %v3572 = vshll.u32 %v3475, 16
        %v3574 = vrot.slane %v3572, 5
        %v3575 = vsel %vm815, %v3570, %v3574
        %v3577 = vshrl.u32 %v3476, 16
        %v3579 = vrot.slane %v3577, 4
        %v3580 = vshll.u32 %v3476, 16
        %v3582 = vrot.slane %v3580, 5
        %v3583 = vor.u32 %v3579, %v3582
        %v3584 = vrot.slane %v3583, 4
        %v3586 = vshll.u32 %v3477, 16
        %v3588 = vrot.slane %v3586, 5
        %v3589 = vsel %vm815, %v3584, %v3588
        %3598 = vst [vmem:[#allocation4 + $0x20] sm:$0xf] %v3491
        %3599 = vst [vmem:[#allocation4 + $0x44] sm:$0xf] %v3505
        %3600 = vst [vmem:[#allocation4 + $0x68] sm:$0xf] %v3519
        %3601 = vst [vmem:[#allocation4 + $0x8c] sm:$0xf] %v3533
        %3602 = vst [vmem:[#allocation4 + $0xb0] sm:$0xf] %v3547
        %3603 = vst [vmem:[#allocation4 + $0xd4] sm:$0xf] %v3561
        %3604 = vst [vmem:[#allocation4 + $0xf8] sm:$0xf] %v3575
        %3605 = vst [vmem:[#allocation4 + $0x11c] sm:$0xf] %v3589
        %v3606 = vld [vmem:[#allocation4] sm:$0xff]
        %v3607 = vld [vmem:[#allocation4 + $0x8] sm:$0xff]
        %v3608 = vld [vmem:[#allocation4 + $0x10] sm:$0xff]
        %v3609 = vld [vmem:[#allocation4 + $0x18] sm:$0xff]
        %v3610 = vld [vmem:[#allocation4 + $0x20] sm:$0xf]
        %v3611 = vld [vmem:[#allocation4 + $0x24] sm:$0xff]
        %v3612 = vld [vmem:[#allocation4 + $0x2c] sm:$0xff]
        %v3613 = vld [vmem:[#allocation4 + $0x34] sm:$0xff]
        %v3614 = vld [vmem:[#allocation4 + $0x3c] sm:$0xff]
        %v3615 = vld [vmem:[#allocation4 + $0x44] sm:$0xf]
        %v3616 = vld [vmem:[#allocation4 + $0x48] sm:$0xff]
        %v3617 = vld [vmem:[#allocation4 + $0x50] sm:$0xff]
        %v3618 = vld [vmem:[#allocation4 + $0x58] sm:$0xff]
        %v3619 = vld [vmem:[#allocation4 + $0x60] sm:$0xff]
        %v3620 = vld [vmem:[#allocation4 + $0x68] sm:$0xf]
        %v3621 = vld [vmem:[#allocation4 + $0x6c] sm:$0xff]
        %v3622 = vld [vmem:[#allocation4 + $0x74] sm:$0xff]
        %v3623 = vld [vmem:[#allocation4 + $0x7c] sm:$0xff]
        %v3624 = vld [vmem:[#allocation4 + $0x84] sm:$0xff]
        %v3625 = vld [vmem:[#allocation4 + $0x8c] sm:$0xf]
        %v3626 = vld [vmem:[#allocation4 + $0x90] sm:$0xff]
        %v3627 = vld [vmem:[#allocation4 + $0x98] sm:$0xff]
        %v3628 = vld [vmem:[#allocation4 + $0xa0] sm:$0xff]
        %v3629 = vld [vmem:[#allocation4 + $0xa8] sm:$0xff]
        %v3630 = vld [vmem:[#allocation4 + $0xb0] sm:$0xf]
        %v3631 = vld [vmem:[#allocation4 + $0xb4] sm:$0xff]
        %v3632 = vld [vmem:[#allocation4 + $0xbc] sm:$0xff]
        %v3633 = vld [vmem:[#allocation4 + $0xc4] sm:$0xff]
        %v3634 = vld [vmem:[#allocation4 + $0xcc] sm:$0xff]
        %v3635 = vld [vmem:[#allocation4 + $0xd4] sm:$0xf]
        %v3636 = vld [vmem:[#allocation4 + $0xd8] sm:$0xff]
        %v3637 = vld [vmem:[#allocation4 + $0xe0] sm:$0xff]
        %v3638 = vld [vmem:[#allocation4 + $0xe8] sm:$0xff]
        %v3639 = vld [vmem:[#allocation4 + $0xf0] sm:$0xff]
        %v3640 = vld [vmem:[#allocation4 + $0xf8] sm:$0xf]
        %v3641 = vld [vmem:[#allocation4 + $0xfc] sm:$0xff]
        %v3642 = vld [vmem:[#allocation4 + $0x104] sm:$0xff]
        %v3643 = vld [vmem:[#allocation4 + $0x10c] sm:$0xff]
        %v3644 = vld [vmem:[#allocation4 + $0x114] sm:$0xff]
        %v3645 = vld [vmem:[#allocation4 + $0x11c] sm:$0xf]
        %v3646 = vld [vmem:[#allocation8] sm:$0xf]
        %v3647 = vld [vmem:[#allocation8 + $0x4] sm:$0xf]
        %v3648 = vld [vmem:[#allocation8 + $0x8] sm:$0xf]
        %v3649 = vld [vmem:[#allocation8 + $0xc] sm:$0xf]
        %v3650 = vld [vmem:[#allocation8 + $0x10] sm:$0xf]
        %v3651 = vld [vmem:[#allocation8 + $0x14] sm:$0xf]
        %v3652 = vld [vmem:[#allocation8 + $0x18] sm:$0xf]
        %v3653 = vld [vmem:[#allocation8 + $0x1c] sm:$0xf]
        %v3654 = vld [vmem:[#allocation8 + $0x20] sm:$0xf]
        %v3655 = vld [vmem:[#allocation8 + $0x24] sm:$0xf]
        %v3656 = vld [vmem:[#allocation8 + $0x28] sm:$0xf]
        %v3657 = vld [vmem:[#allocation8 + $0x2c] sm:$0xf]
        %v3658 = vld [vmem:[#allocation8 + $0x30] sm:$0xf]
        %v3659 = vld [vmem:[#allocation8 + $0x34] sm:$0xf]
        %v3660 = vld [vmem:[#allocation8 + $0x38] sm:$0xf]
        %v3661 = vld [vmem:[#allocation8 + $0x3c] sm:$0xf]
        %v3662 = vld [vmem:[#allocation8 + $0x40] sm:$0xf]
        %v3663 = vld [vmem:[#allocation8 + $0x44] sm:$0xf]
        %v3664 = vld [vmem:[#allocation8 + $0x48] sm:$0xf]
        %v3665 = vld [vmem:[#allocation8 + $0x4c] sm:$0xf]
        %v3666 = vld [vmem:[#allocation8 + $0x50] sm:$0xf]
        %v3667 = vld [vmem:[#allocation8 + $0x54] sm:$0xf]
        %v3668 = vld [vmem:[#allocation8 + $0x58] sm:$0xf]
        %v3669 = vld [vmem:[#allocation8 + $0x5c] sm:$0xf]
        %v3670 = vld [vmem:[#allocation8 + $0x60] sm:$0xf]
        %v3671 = vld [vmem:[#allocation8 + $0x64] sm:$0xf]
        %v3672 = vld [vmem:[#allocation8 + $0x68] sm:$0xf]
        %v3673 = vld [vmem:[#allocation8 + $0x6c] sm:$0xf]
        %v3674 = vld [vmem:[#allocation8 + $0x70] sm:$0xf]
        %v3675 = vld [vmem:[#allocation8 + $0x74] sm:$0xf]
        %v3676 = vld [vmem:[#allocation8 + $0x78] sm:$0xf]
        %v3677 = vld [vmem:[#allocation8 + $0x7c] sm:$0xf]
        %v3678 = vld [vmem:[#allocation8 + $0x80] sm:$0xf]
        %v3679 = vld [vmem:[#allocation8 + $0x84] sm:$0xf]
        %v3680 = vld [vmem:[#allocation8 + $0x88] sm:$0xf]
        %v3681 = vld [vmem:[#allocation8 + $0x8c] sm:$0xf]
        %v3682 = vld [vmem:[#allocation8 + $0x90] sm:$0xf]
        %v3683 = vld [vmem:[#allocation8 + $0x94] sm:$0xf]
        %v3684 = vld [vmem:[#allocation8 + $0x98] sm:$0xf]
        %v3685 = vld [vmem:[#allocation8 + $0x9c] sm:$0xf]
        %v3686 = vld [vmem:[#allocation8 + $0xa0] sm:$0xf]
        %v3687 = vld [vmem:[#allocation8 + $0xa4] sm:$0xf]
        %v3688 = vld [vmem:[#allocation8 + $0xa8] sm:$0xf]
        %v3689 = vld [vmem:[#allocation8 + $0xac] sm:$0xf]
        %v3690 = vld [vmem:[#allocation8 + $0xb0] sm:$0xf]
        %v3691 = vld [vmem:[#allocation8 + $0xb4] sm:$0xf]
        %v3692 = vld [vmem:[#allocation8 + $0xb8] sm:$0xf]
        %v3693 = vld [vmem:[#allocation8 + $0xbc] sm:$0xf]
        %v3694 = vld [vmem:[#allocation8 + $0xc0] sm:$0xf]
        %v3695 = vld [vmem:[#allocation8 + $0xc4] sm:$0xf]
        %v3696 = vld [vmem:[#allocation8 + $0xc8] sm:$0xf]
        %v3697 = vld [vmem:[#allocation8 + $0xcc] sm:$0xf]
        %v3698 = vld [vmem:[#allocation8 + $0xd0] sm:$0xf]
        %v3699 = vld [vmem:[#allocation8 + $0xd4] sm:$0xf]
        %v3700 = vld [vmem:[#allocation8 + $0xd8] sm:$0xf]
        %v3701 = vld [vmem:[#allocation8 + $0xdc] sm:$0xf]
        %v3702 = vld [vmem:[#allocation8 + $0xe0] sm:$0xf]
        %v3703 = vld [vmem:[#allocation8 + $0xe4] sm:$0xf]
        %v3704 = vld [vmem:[#allocation8 + $0xe8] sm:$0xf]
        %v3705 = vld [vmem:[#allocation8 + $0xec] sm:$0xf]
        %v3706 = vld [vmem:[#allocation8 + $0xf0] sm:$0xf]
        %v3707 = vld [vmem:[#allocation8 + $0xf4] sm:$0xf]
        %v3708 = vld [vmem:[#allocation8 + $0xf8] sm:$0xf]
        %v3709 = vld [vmem:[#allocation8 + $0xfc] sm:$0xf]
        %v3710 = vld [vmem:[#allocation8 + $0x100] sm:$0xf]
        %v3711 = vld [vmem:[#allocation8 + $0x104] sm:$0xf]
        %v3712 = vld [vmem:[#allocation8 + $0x108] sm:$0xf]
        %v3713 = vld [vmem:[#allocation8 + $0x10c] sm:$0xf]
        %v3714 = vld [vmem:[#allocation8 + $0x110] sm:$0xf]
        %v3715 = vld [vmem:[#allocation8 + $0x114] sm:$0xf]
        %v3716 = vld [vmem:[#allocation8 + $0x118] sm:$0xf]
        %v3717 = vld [vmem:[#allocation8 + $0x11c] sm:$0xf]
        %v3718 = vld [vmem:[#allocation8 + $0x120] sm:$0xf]
        %v3719 = vld [vmem:[#allocation8 + $0x124] sm:$0xf]
        %v3720 = vld [vmem:[#allocation8 + $0x128] sm:$0xf]
        %v3721 = vld [vmem:[#allocation8 + $0x12c] sm:$0xf]
        %v3722 = vld [vmem:[#allocation8 + $0x130] sm:$0xf]
        %v3723 = vld [vmem:[#allocation8 + $0x134] sm:$0xf]
        %v3724 = vld [vmem:[#allocation8 + $0x138] sm:$0xf]
        %v3725 = vld [vmem:[#allocation8 + $0x13c] sm:$0xf]
        %v3726 = vld [vmem:[#allocation8 + $0x140] sm:$0xf]
        %v3727 = vld [vmem:[#allocation8 + $0x144] sm:$0xf]
        %v3728 = vld [vmem:[#allocation8 + $0x148] sm:$0xf]
        %v3729 = vld [vmem:[#allocation8 + $0x14c] sm:$0xf]
        %v3730 = vld [vmem:[#allocation8 + $0x150] sm:$0xf]
        %v3731 = vld [vmem:[#allocation8 + $0x154] sm:$0xf]
        %v3732 = vld [vmem:[#allocation8 + $0x158] sm:$0xf]
        %v3733 = vld [vmem:[#allocation8 + $0x15c] sm:$0xf]
        %v3734 = vld [vmem:[#allocation8 + $0x160] sm:$0xf]
        %v3735 = vld [vmem:[#allocation8 + $0x164] sm:$0xf]
        %v3736 = vld [vmem:[#allocation8 + $0x168] sm:$0xf]
        %v3737 = vld [vmem:[#allocation8 + $0x16c] sm:$0xf]
        %v3738 = vld [vmem:[#allocation8 + $0x170] sm:$0xf]
        %v3739 = vld [vmem:[#allocation8 + $0x174] sm:$0xf]
        %v3740 = vld [vmem:[#allocation8 + $0x178] sm:$0xf]
        %v3741 = vld [vmem:[#allocation8 + $0x17c] sm:$0xf]
        %v3742 = vld [vmem:[#allocation8 + $0x180] sm:$0xf]
        %v3743 = vld [vmem:[#allocation8 + $0x184] sm:$0xf]
        %v3744 = vld [vmem:[#allocation8 + $0x188] sm:$0xf]
        %v3745 = vld [vmem:[#allocation8 + $0x18c] sm:$0xf]
        %v3746 = vld [vmem:[#allocation8 + $0x190] sm:$0xf]
        %v3747 = vld [vmem:[#allocation8 + $0x194] sm:$0xf]
        %v3748 = vld [vmem:[#allocation8 + $0x198] sm:$0xf]
        %v3749 = vld [vmem:[#allocation8 + $0x19c] sm:$0xf]
        %v3750 = vld [vmem:[#allocation8 + $0x1a0] sm:$0xf]
        %v3751 = vld [vmem:[#allocation8 + $0x1a4] sm:$0xf]
        %v3752 = vld [vmem:[#allocation8 + $0x1a8] sm:$0xf]
        %v3753 = vld [vmem:[#allocation8 + $0x1ac] sm:$0xf]
        %v3754 = vld [vmem:[#allocation8 + $0x1b0] sm:$0xf]
        %v3755 = vld [vmem:[#allocation8 + $0x1b4] sm:$0xf]
        %v3756 = vld [vmem:[#allocation8 + $0x1b8] sm:$0xf]
        %v3757 = vld [vmem:[#allocation8 + $0x1bc] sm:$0xf]
        %v3758 = vld [vmem:[#allocation8 + $0x1c0] sm:$0xf]
        %v3759 = vld [vmem:[#allocation8 + $0x1c4] sm:$0xf]
        %v3760 = vld [vmem:[#allocation8 + $0x1c8] sm:$0xf]
        %v3761 = vld [vmem:[#allocation8 + $0x1cc] sm:$0xf]
        %v3762 = vld [vmem:[#allocation8 + $0x1d0] sm:$0xf]
        %v3763 = vld [vmem:[#allocation8 + $0x1d4] sm:$0xf]
        %v3764 = vld [vmem:[#allocation8 + $0x1d8] sm:$0xf]
        %v3765 = vld [vmem:[#allocation8 + $0x1dc] sm:$0xf]
        %v3766 = vld [vmem:[#allocation8 + $0x1e0] sm:$0xf]
        %v3767 = vld [vmem:[#allocation8 + $0x1e4] sm:$0xf]
        %v3768 = vld [vmem:[#allocation8 + $0x1e8] sm:$0xf]
        %v3769 = vld [vmem:[#allocation8 + $0x1ec] sm:$0xf]
        %v3770 = vld [vmem:[#allocation8 + $0x1f0] sm:$0xf]
        %v3771 = vld [vmem:[#allocation8 + $0x1f4] sm:$0xf]
        %v3772 = vld [vmem:[#allocation8 + $0x1f8] sm:$0xf]
        %v3773 = vld [vmem:[#allocation8 + $0x1fc] sm:$0xf]
        %v3774 = vld [vmem:[#allocation8 + $0x200] sm:$0xf]
        %v3775 = vld [vmem:[#allocation8 + $0x204] sm:$0xf]
        %v3776 = vld [vmem:[#allocation8 + $0x208] sm:$0xf]
        %v3777 = vld [vmem:[#allocation8 + $0x20c] sm:$0xf]
        %v3778 = vld [vmem:[#allocation8 + $0x210] sm:$0xf]
        %v3779 = vld [vmem:[#allocation8 + $0x214] sm:$0xf]
        %v3780 = vld [vmem:[#allocation8 + $0x218] sm:$0xf]
        %v3781 = vld [vmem:[#allocation8 + $0x21c] sm:$0xf]
        %v3782 = vld [vmem:[#allocation8 + $0x220] sm:$0xf]
        %v3783 = vld [vmem:[#allocation8 + $0x224] sm:$0xf]
        %v3784 = vld [vmem:[#allocation8 + $0x228] sm:$0xf]
        %v3785 = vld [vmem:[#allocation8 + $0x22c] sm:$0xf]
        %v3786 = vld [vmem:[#allocation8 + $0x230] sm:$0xf]
        %v3787 = vld [vmem:[#allocation8 + $0x234] sm:$0xf]
        %v3788 = vld [vmem:[#allocation8 + $0x238] sm:$0xf]
        %v3789 = vld [vmem:[#allocation8 + $0x23c] sm:$0xf]
        %v3790 = vld [vmem:[%s7] sm:$0x1]
        %v3792 = vlaneseq
        %v3793 = vshrl.u32 %v3792, 7
        %v3794 = vsub.s32 0, %v3793
        %v3795 = vrot.slane %v3790, %v3794
        %v3837 = vunpack.c.l.b16 %v3606
        %v3838 = vunpack.c.h.b16 %v3606
        %v3839 = vunpack.c.l.b16 %v3607
        %v3840 = vunpack.c.h.b16 %v3607
        %v3841 = vunpack.c.l.b16 %v3608
        %v3842 = vunpack.c.h.b16 %v3608
        %v3843 = vunpack.c.l.b16 %v3609
        %v3844 = vunpack.c.h.b16 %v3609
        %v3845 = vunpack.c.l.b16 %v3610
        %v3846 = vunpack.c.l.b16 %v3611
        %v3847 = vunpack.c.h.b16 %v3611
        %v3848 = vunpack.c.l.b16 %v3612
        %v3849 = vunpack.c.h.b16 %v3612
        %v3850 = vunpack.c.l.b16 %v3613
        %v3851 = vunpack.c.h.b16 %v3613
        %v3852 = vunpack.c.l.b16 %v3614
        %v3853 = vunpack.c.h.b16 %v3614
        %v3854 = vunpack.c.l.b16 %v3615
        %v3855 = vunpack.c.l.b16 %v3616
        %v3856 = vunpack.c.h.b16 %v3616
        %v3857 = vunpack.c.l.b16 %v3617
        %v3858 = vunpack.c.h.b16 %v3617
        %v3859 = vunpack.c.l.b16 %v3618
        %v3860 = vunpack.c.h.b16 %v3618
        %v3861 = vunpack.c.l.b16 %v3619
        %v3862 = vunpack.c.h.b16 %v3619
        %v3863 = vunpack.c.l.b16 %v3620
        %v3864 = vunpack.c.l.b16 %v3621
        %v3865 = vunpack.c.h.b16 %v3621
        %v3866 = vunpack.c.l.b16 %v3622
        %v3867 = vunpack.c.h.b16 %v3622
        %v3868 = vunpack.c.l.b16 %v3623
        %v3869 = vunpack.c.h.b16 %v3623
        %v3870 = vunpack.c.l.b16 %v3624
        %v3871 = vunpack.c.h.b16 %v3624
        %v3872 = vunpack.c.l.b16 %v3625
        %v3873 = vunpack.c.l.b16 %v3626
        %v3874 = vunpack.c.h.b16 %v3626
        %v3875 = vunpack.c.l.b16 %v3627
        %v3876 = vunpack.c.h.b16 %v3627
        %v3877 = vunpack.c.l.b16 %v3628
        %v3878 = vunpack.c.h.b16 %v3628
        %v3879 = vunpack.c.l.b16 %v3629
        %v3880 = vunpack.c.h.b16 %v3629
        %v3881 = vunpack.c.l.b16 %v3630
        %v3882 = vunpack.c.l.b16 %v3631
        %v3883 = vunpack.c.h.b16 %v3631
        %v3884 = vunpack.c.l.b16 %v3632
        %v3885 = vunpack.c.h.b16 %v3632
        %v3886 = vunpack.c.l.b16 %v3633
        %v3887 = vunpack.c.h.b16 %v3633
        %v3888 = vunpack.c.l.b16 %v3634
        %v3889 = vunpack.c.h.b16 %v3634
        %v3890 = vunpack.c.l.b16 %v3635
        %v3891 = vunpack.c.l.b16 %v3636
        %v3892 = vunpack.c.h.b16 %v3636
        %v3893 = vunpack.c.l.b16 %v3637
        %v3894 = vunpack.c.h.b16 %v3637
        %v3895 = vunpack.c.l.b16 %v3638
        %v3896 = vunpack.c.h.b16 %v3638
        %v3897 = vunpack.c.l.b16 %v3639
        %v3898 = vunpack.c.h.b16 %v3639
        %v3899 = vunpack.c.l.b16 %v3640
        %v3900 = vunpack.c.l.b16 %v3641
        %v3901 = vunpack.c.h.b16 %v3641
        %v3902 = vunpack.c.l.b16 %v3642
        %v3903 = vunpack.c.h.b16 %v3642
        %v3904 = vunpack.c.l.b16 %v3643
        %v3905 = vunpack.c.h.b16 %v3643
        %v3906 = vunpack.c.l.b16 %v3644
        %v3907 = vunpack.c.h.b16 %v3644
        %v3908 = vunpack.c.l.b16 %v3645
        %v3909 = vpack.c.b16 %v3846, %v3837
        %v3910 = vpack.c.b16 %v3847, %v3838
        %v3911 = vpack.c.b16 %v3848, %v3839
        %v3912 = vpack.c.b16 %v3849, %v3840
        %v3913 = vpack.c.b16 %v3850, %v3841
        %v3914 = vpack.c.b16 %v3851, %v3842
        %v3915 = vpack.c.b16 %v3852, %v3843
        %v3916 = vpack.c.b16 %v3853, %v3844
        %v3917 = vpack.c.b16 %v3854, %v3845
        %v3918 = vpack.c.b16 %v3864, %v3855
        %v3919 = vpack.c.b16 %v3865, %v3856
        %v3920 = vpack.c.b16 %v3866, %v3857
        %v3921 = vpack.c.b16 %v3867, %v3858
        %v3922 = vpack.c.b16 %v3868, %v3859
        %v3923 = vpack.c.b16 %v3869, %v3860
        %v3924 = vpack.c.b16 %v3870, %v3861
        %v3925 = vpack.c.b16 %v3871, %v3862
        %v3926 = vpack.c.b16 %v3872, %v3863
        %v3927 = vpack.c.b16 %v3882, %v3873
        %v3928 = vpack.c.b16 %v3883, %v3874
        %v3929 = vpack.c.b16 %v3884, %v3875
        %v3930 = vpack.c.b16 %v3885, %v3876
        %v3931 = vpack.c.b16 %v3886, %v3877
        %v3932 = vpack.c.b16 %v3887, %v3878
        %v3933 = vpack.c.b16 %v3888, %v3879
        %v3934 = vpack.c.b16 %v3889, %v3880
        %v3935 = vpack.c.b16 %v3890, %v3881
        %v3936 = vpack.c.b16 %v3900, %v3891
        %v3937 = vpack.c.b16 %v3901, %v3892
        %v3938 = vpack.c.b16 %v3902, %v3893
        %v3939 = vpack.c.b16 %v3903, %v3894
        %v3940 = vpack.c.b16 %v3904, %v3895
        %v3941 = vpack.c.b16 %v3905, %v3896
        %v3942 = vpack.c.b16 %v3906, %v3897
        %v3943 = vpack.c.b16 %v3907, %v3898
        %v3944 = vpack.c.b16 %v3908, %v3899
        %v4125 = vunpack.c.l.b16 %v3646
        %v4126 = vunpack.c.l.b16 %v3647
        %v4127 = vunpack.c.l.b16 %v3648
        %v4128 = vunpack.c.l.b16 %v3649
        %v4129 = vunpack.c.l.b16 %v3650
        %v4130 = vunpack.c.l.b16 %v3651
        %v4131 = vunpack.c.l.b16 %v3652
        %v4132 = vunpack.c.l.b16 %v3653
        %v4133 = vunpack.c.l.b16 %v3654
        %v4134 = vunpack.c.l.b16 %v3655
        %v4135 = vunpack.c.l.b16 %v3656
        %v4136 = vunpack.c.l.b16 %v3657
        %v4137 = vunpack.c.l.b16 %v3658
        %v4138 = vunpack.c.l.b16 %v3659
        %v4139 = vunpack.c.l.b16 %v3660
        %v4140 = vunpack.c.l.b16 %v3661
        %v4141 = vunpack.c.l.b16 %v3662
        %v4142 = vunpack.c.l.b16 %v3663
        %v4143 = vunpack.c.l.b16 %v3664
        %v4144 = vunpack.c.l.b16 %v3665
        %v4145 = vunpack.c.l.b16 %v3666
        %v4146 = vunpack.c.l.b16 %v3667
        %v4147 = vunpack.c.l.b16 %v3668
        %v4148 = vunpack.c.l.b16 %v3669
        %v4149 = vunpack.c.l.b16 %v3670
        %v4150 = vunpack.c.l.b16 %v3671
        %v4151 = vunpack.c.l.b16 %v3672
        %v4152 = vunpack.c.l.b16 %v3673
        %v4153 = vunpack.c.l.b16 %v3674
        %v4154 = vunpack.c.l.b16 %v3675
        %v4155 = vunpack.c.l.b16 %v3676
        %v4156 = vunpack.c.l.b16 %v3677
        %v4157 = vunpack.c.l.b16 %v3678
        %v4158 = vunpack.c.l.b16 %v3679
        %v4159 = vunpack.c.l.b16 %v3680
        %v4160 = vunpack.c.l.b16 %v3681
        %v4161 = vunpack.c.l.b16 %v3682
        %v4162 = vunpack.c.l.b16 %v3683
        %v4163 = vunpack.c.l.b16 %v3684
        %v4164 = vunpack.c.l.b16 %v3685
        %v4165 = vunpack.c.l.b16 %v3686
        %v4166 = vunpack.c.l.b16 %v3687
        %v4167 = vunpack.c.l.b16 %v3688
        %v4168 = vunpack.c.l.b16 %v3689
        %v4169 = vunpack.c.l.b16 %v3690
        %v4170 = vunpack.c.l.b16 %v3691
        %v4171 = vunpack.c.l.b16 %v3692
        %v4172 = vunpack.c.l.b16 %v3693
        %v4173 = vunpack.c.l.b16 %v3694
        %v4174 = vunpack.c.l.b16 %v3695
        %v4175 = vunpack.c.l.b16 %v3696
        %v4176 = vunpack.c.l.b16 %v3697
        %v4177 = vunpack.c.l.b16 %v3698
        %v4178 = vunpack.c.l.b16 %v3699
        %v4179 = vunpack.c.l.b16 %v3700
        %v4180 = vunpack.c.l.b16 %v3701
        %v4181 = vunpack.c.l.b16 %v3702
        %v4182 = vunpack.c.l.b16 %v3703
        %v4183 = vunpack.c.l.b16 %v3704
        %v4184 = vunpack.c.l.b16 %v3705
        %v4185 = vunpack.c.l.b16 %v3706
        %v4186 = vunpack.c.l.b16 %v3707
        %v4187 = vunpack.c.l.b16 %v3708
        %v4188 = vunpack.c.l.b16 %v3709
        %v4189 = vunpack.c.l.b16 %v3710
        %v4190 = vunpack.c.l.b16 %v3711
        %v4191 = vunpack.c.l.b16 %v3712
        %v4192 = vunpack.c.l.b16 %v3713
        %v4193 = vunpack.c.l.b16 %v3714
        %v4194 = vunpack.c.l.b16 %v3715
        %v4195 = vunpack.c.l.b16 %v3716
        %v4196 = vunpack.c.l.b16 %v3717
        %v4197 = vunpack.c.l.b16 %v3718
        %v4198 = vunpack.c.l.b16 %v3719
        %v4199 = vunpack.c.l.b16 %v3720
        %v4200 = vunpack.c.l.b16 %v3721
        %v4201 = vunpack.c.l.b16 %v3722
        %v4202 = vunpack.c.l.b16 %v3723
        %v4203 = vunpack.c.l.b16 %v3724
        %v4204 = vunpack.c.l.b16 %v3725
        %v4205 = vunpack.c.l.b16 %v3726
        %v4206 = vunpack.c.l.b16 %v3727
        %v4207 = vunpack.c.l.b16 %v3728
        %v4208 = vunpack.c.l.b16 %v3729
        %v4209 = vunpack.c.l.b16 %v3730
        %v4210 = vunpack.c.l.b16 %v3731
        %v4211 = vunpack.c.l.b16 %v3732
        %v4212 = vunpack.c.l.b16 %v3733
        %v4213 = vunpack.c.l.b16 %v3734
        %v4214 = vunpack.c.l.b16 %v3735
        %v4215 = vunpack.c.l.b16 %v3736
        %v4216 = vunpack.c.l.b16 %v3737
        %v4217 = vunpack.c.l.b16 %v3738
        %v4218 = vunpack.c.l.b16 %v3739
        %v4219 = vunpack.c.l.b16 %v3740
        %v4220 = vunpack.c.l.b16 %v3741
        %v4221 = vunpack.c.l.b16 %v3742
        %v4222 = vunpack.c.l.b16 %v3743
        %v4223 = vunpack.c.l.b16 %v3744
        %v4224 = vunpack.c.l.b16 %v3745
        %v4225 = vunpack.c.l.b16 %v3746
        %v4226 = vunpack.c.l.b16 %v3747
        %v4227 = vunpack.c.l.b16 %v3748
        %v4228 = vunpack.c.l.b16 %v3749
        %v4229 = vunpack.c.l.b16 %v3750
        %v4230 = vunpack.c.l.b16 %v3751
        %v4231 = vunpack.c.l.b16 %v3752
        %v4232 = vunpack.c.l.b16 %v3753
        %v4233 = vunpack.c.l.b16 %v3754
        %v4234 = vunpack.c.l.b16 %v3755
        %v4235 = vunpack.c.l.b16 %v3756
        %v4236 = vunpack.c.l.b16 %v3757
        %v4237 = vunpack.c.l.b16 %v3758
        %v4238 = vunpack.c.l.b16 %v3759
        %v4239 = vunpack.c.l.b16 %v3760
        %v4240 = vunpack.c.l.b16 %v3761
        %v4241 = vunpack.c.l.b16 %v3762
        %v4242 = vunpack.c.l.b16 %v3763
        %v4243 = vunpack.c.l.b16 %v3764
        %v4244 = vunpack.c.l.b16 %v3765
        %v4245 = vunpack.c.l.b16 %v3766
        %v4246 = vunpack.c.l.b16 %v3767
        %v4247 = vunpack.c.l.b16 %v3768
        %v4248 = vunpack.c.l.b16 %v3769
        %v4249 = vunpack.c.l.b16 %v3770
        %v4250 = vunpack.c.l.b16 %v3771
        %v4251 = vunpack.c.l.b16 %v3772
        %v4252 = vunpack.c.l.b16 %v3773
        %v4253 = vunpack.c.l.b16 %v3774
        %v4254 = vunpack.c.l.b16 %v3775
        %v4255 = vunpack.c.l.b16 %v3776
        %v4256 = vunpack.c.l.b16 %v3777
        %v4257 = vunpack.c.l.b16 %v3778
        %v4258 = vunpack.c.l.b16 %v3779
        %v4259 = vunpack.c.l.b16 %v3780
        %v4260 = vunpack.c.l.b16 %v3781
        %v4261 = vunpack.c.l.b16 %v3782
        %v4262 = vunpack.c.l.b16 %v3783
        %v4263 = vunpack.c.l.b16 %v3784
        %v4264 = vunpack.c.l.b16 %v3785
        %v4265 = vunpack.c.l.b16 %v3786
        %v4266 = vunpack.c.l.b16 %v3787
        %v4267 = vunpack.c.l.b16 %v3788
        %v4268 = vunpack.c.l.b16 %v3789
        %v4269 = vpack.c.b16 %v4126, %v4125
        %v4270 = vpack.c.b16 %v4128, %v4127
        %v4271 = vpack.c.b16 %v4130, %v4129
        %v4272 = vpack.c.b16 %v4132, %v4131
        %v4273 = vpack.c.b16 %v4134, %v4133
        %v4274 = vpack.c.b16 %v4136, %v4135
        %v4275 = vpack.c.b16 %v4138, %v4137
        %v4276 = vpack.c.b16 %v4140, %v4139
        %v4277 = vpack.c.b16 %v4142, %v4141
        %v4278 = vpack.c.b16 %v4144, %v4143
        %v4279 = vpack.c.b16 %v4146, %v4145
        %v4280 = vpack.c.b16 %v4148, %v4147
        %v4281 = vpack.c.b16 %v4150, %v4149
        %v4282 = vpack.c.b16 %v4152, %v4151
        %v4283 = vpack.c.b16 %v4154, %v4153
        %v4284 = vpack.c.b16 %v4156, %v4155
        %v4285 = vpack.c.b16 %v4158, %v4157
        %v4286 = vpack.c.b16 %v4160, %v4159
        %v4287 = vpack.c.b16 %v4162, %v4161
        %v4288 = vpack.c.b16 %v4164, %v4163
        %v4289 = vpack.c.b16 %v4166, %v4165
        %v4290 = vpack.c.b16 %v4168, %v4167
        %v4291 = vpack.c.b16 %v4170, %v4169
        %v4292 = vpack.c.b16 %v4172, %v4171
        %v4293 = vpack.c.b16 %v4174, %v4173
        %v4294 = vpack.c.b16 %v4176, %v4175
        %v4295 = vpack.c.b16 %v4178, %v4177
        %v4296 = vpack.c.b16 %v4180, %v4179
        %v4297 = vpack.c.b16 %v4182, %v4181
        %v4298 = vpack.c.b16 %v4184, %v4183
        %v4299 = vpack.c.b16 %v4186, %v4185
        %v4300 = vpack.c.b16 %v4188, %v4187
        %v4301 = vpack.c.b16 %v4190, %v4189
        %v4302 = vpack.c.b16 %v4192, %v4191
        %v4303 = vpack.c.b16 %v4194, %v4193
        %v4304 = vpack.c.b16 %v4196, %v4195
        %v4305 = vpack.c.b16 %v4198, %v4197
        %v4306 = vpack.c.b16 %v4200, %v4199
        %v4307 = vpack.c.b16 %v4202, %v4201
        %v4308 = vpack.c.b16 %v4204, %v4203
        %v4309 = vpack.c.b16 %v4206, %v4205
        %v4310 = vpack.c.b16 %v4208, %v4207
        %v4311 = vpack.c.b16 %v4210, %v4209
        %v4312 = vpack.c.b16 %v4212, %v4211
        %v4313 = vpack.c.b16 %v4214, %v4213
        %v4314 = vpack.c.b16 %v4216, %v4215
        %v4315 = vpack.c.b16 %v4218, %v4217
        %v4316 = vpack.c.b16 %v4220, %v4219
        %v4317 = vpack.c.b16 %v4222, %v4221
        %v4318 = vpack.c.b16 %v4224, %v4223
        %v4319 = vpack.c.b16 %v4226, %v4225
        %v4320 = vpack.c.b16 %v4228, %v4227
        %v4321 = vpack.c.b16 %v4230, %v4229
        %v4322 = vpack.c.b16 %v4232, %v4231
        %v4323 = vpack.c.b16 %v4234, %v4233
        %v4324 = vpack.c.b16 %v4236, %v4235
        %v4325 = vpack.c.b16 %v4238, %v4237
        %v4326 = vpack.c.b16 %v4240, %v4239
        %v4327 = vpack.c.b16 %v4242, %v4241
        %v4328 = vpack.c.b16 %v4244, %v4243
        %v4329 = vpack.c.b16 %v4246, %v4245
        %v4330 = vpack.c.b16 %v4248, %v4247
        %v4331 = vpack.c.b16 %v4250, %v4249
        %v4332 = vpack.c.b16 %v4252, %v4251
        %v4333 = vpack.c.b16 %v4254, %v4253
        %v4334 = vpack.c.b16 %v4256, %v4255
        %v4335 = vpack.c.b16 %v4258, %v4257
        %v4336 = vpack.c.b16 %v4260, %v4259
        %v4337 = vpack.c.b16 %v4262, %v4261
        %v4338 = vpack.c.b16 %v4264, %v4263
        %v4339 = vpack.c.b16 %v4266, %v4265
        %v4340 = vpack.c.b16 %v4268, %v4267
        %4413 = vmatprep.subr.bf16.mxu0 0
        %4414 = vmatpush1.bf16.msra.mxu0 %v4276
        %4415 = vmatprep.subr.bf16.mxu0 0
        %4416 = vmatpush1.bf16.msra.mxu0 %v4275
        %4417 = vmatprep.subr.bf16.mxu0 0
        %4418 = vmatpush1.bf16.msra.mxu0 %v4274
        %4419 = vmatprep.subr.bf16.mxu0 0
        %4420 = vmatpush1.bf16.msra.mxu0 %v4273
        %4421 = vmatprep.subr.bf16.mxu0 0
        %4422 = vmatpush1.bf16.msra.mxu0 %v4272
        %4423 = vmatprep.subr.bf16.mxu0 0
        %4424 = vmatpush1.bf16.msra.mxu0 %v4271
        %4425 = vmatprep.subr.bf16.mxu0 0
        %4426 = vmatpush1.bf16.msra.mxu0 %v4270
        %4427 = vmatprep.subr.bf16.mxu0 0
        %4428 = vmatpush1.bf16.msra.mxu0 %v4269
        %4429 = vmatprep.subr.bf16.mxu0 0
        %4430 = vmatpush2.bf16.msra.mxu0 %v4284
        %4431 = vmatprep.subr.bf16.mxu0 0
        %4432 = vmatpush2.bf16.msra.mxu0 %v4283
        %4433 = vmatprep.subr.bf16.mxu0 0
        %4434 = vmatpush2.bf16.msra.mxu0 %v4282
        %4435 = vmatprep.subr.bf16.mxu0 0
        %4436 = vmatpush2.bf16.msra.mxu0 %v4281
        %4437 = vmatprep.subr.bf16.mxu0 0
        %4438 = vmatpush2.bf16.msra.mxu0 %v4280
        %4439 = vmatprep.subr.bf16.mxu0 0
        %4440 = vmatpush2.bf16.msra.mxu0 %v4279
        %4441 = vmatprep.subr.bf16.mxu0 0
        %4442 = vmatpush2.bf16.msra.mxu0 %v4278
        %4443 = vmatprep.subr.bf16.mxu0 0
        %4444 = vmatpush2.bf16.msra.mxu0 %v4277
        %4445 = vmatprep.mubr.bf16.mxu0 %v3910
        %4446 = vmatmul.mubr.bf16.gmra.mxu0 %v3909
        %v4447 = vpop.f32.mrf.mxu0
        %v4448 = vadd.f32 %v3795, %v4447
        %v4449 = vpop.f32.mrf.mxu0
        %v4450 = vpop.f32.mrf.mxu0
        %v4451 = vadd.f32 %v3795, %v4450
        %v4452 = vpop.f32.mrf.mxu0
        %4453 = vmatprep.mubr.bf16.mxu0 %v3919
        %4454 = vmatmul.mubr.bf16.gmra.mxu0 %v3918
        %v4455 = vpop.f32.mrf.mxu0
        %v4456 = vadd.f32 %v3795, %v4455
        %v4457 = vpop.f32.mrf.mxu0
        %v4458 = vpop.f32.mrf.mxu0
        %v4459 = vadd.f32 %v3795, %v4458
        %v4460 = vpop.f32.mrf.mxu0
        %4461 = vmatprep.mubr.bf16.mxu0 %v3928
        %4462 = vmatmul.mubr.bf16.gmra.mxu0 %v3927
        %v4463 = vpop.f32.mrf.mxu0
        %v4464 = vadd.f32 %v3795, %v4463
        %v4465 = vpop.f32.mrf.mxu0
        %v4466 = vpop.f32.mrf.mxu0
        %v4467 = vadd.f32 %v3795, %v4466
        %v4468 = vpop.f32.mrf.mxu0
        %4469 = vmatprep.mubr.bf16.mxu0 %v3937
        %4470 = vmatmul.mubr.bf16.gmra.mxu0 %v3936
        %v4471 = vpop.f32.mrf.mxu0
        %v4472 = vadd.f32 %v3795, %v4471
        %v4473 = vpop.f32.mrf.mxu0
        %v4474 = vpop.f32.mrf.mxu0
        %v4475 = vadd.f32 %v3795, %v4474
        %v4476 = vpop.f32.mrf.mxu0
        %4477 = vdwg.mxu0
        %4478 = vmatprep.subr.bf16.mxu0 0
        %4479 = vmatpush1.bf16.msra.mxu0 %v4292
        %4480 = vmatprep.subr.bf16.mxu0 0
        %4481 = vmatpush1.bf16.msra.mxu0 %v4291
        %4482 = vmatprep.subr.bf16.mxu0 0
        %4483 = vmatpush1.bf16.msra.mxu0 %v4290
        %4484 = vmatprep.subr.bf16.mxu0 0
        %4485 = vmatpush1.bf16.msra.mxu0 %v4289
        %4486 = vmatprep.subr.bf16.mxu0 0
        %4487 = vmatpush1.bf16.msra.mxu0 %v4288
        %4488 = vmatprep.subr.bf16.mxu0 0
        %4489 = vmatpush1.bf16.msra.mxu0 %v4287
        %4490 = vmatprep.subr.bf16.mxu0 0
        %4491 = vmatpush1.bf16.msra.mxu0 %v4286
        %4492 = vmatprep.subr.bf16.mxu0 0
        %4493 = vmatpush1.bf16.msra.mxu0 %v4285
        %4494 = vmatprep.subr.bf16.mxu0 0
        %4495 = vmatpush2.bf16.msra.mxu0 %v4300
        %4496 = vmatprep.subr.bf16.mxu0 0
        %4497 = vmatpush2.bf16.msra.mxu0 %v4299
        %4498 = vmatprep.subr.bf16.mxu0 0
        %4499 = vmatpush2.bf16.msra.mxu0 %v4298
        %4500 = vmatprep.subr.bf16.mxu0 0
        %4501 = vmatpush2.bf16.msra.mxu0 %v4297
        %4502 = vmatprep.subr.bf16.mxu0 0
        %4503 = vmatpush2.bf16.msra.mxu0 %v4296
        %4504 = vmatprep.subr.bf16.mxu0 0
        %4505 = vmatpush2.bf16.msra.mxu0 %v4295
        %4506 = vmatprep.subr.bf16.mxu0 0
        %4507 = vmatpush2.bf16.msra.mxu0 %v4294
        %4508 = vmatprep.subr.bf16.mxu0 0
        %4509 = vmatpush2.bf16.msra.mxu0 %v4293
        %4510 = vmatprep.mubr.bf16.mxu0 %v3912
        %4511 = vmatmul.mubr.bf16.gmra.mxu0 %v3911
        %v4512 = vpop.f32.mrf.mxu0
        %v4513 = vadd.f32 %v4448, %v4512
        %v4514 = vpop.f32.mrf.mxu0
        %v4515 = vpop.f32.mrf.mxu0
        %v4516 = vadd.f32 %v4451, %v4515
        %v4517 = vpop.f32.mrf.mxu0
        %4518 = vmatprep.mubr.bf16.mxu0 %v3921
        %4519 = vmatmul.mubr.bf16.gmra.mxu0 %v3920
        %v4520 = vpop.f32.mrf.mxu0
        %v4521 = vadd.f32 %v4456, %v4520
        %v4522 = vpop.f32.mrf.mxu0
        %v4523 = vpop.f32.mrf.mxu0
        %v4524 = vadd.f32 %v4459, %v4523
        %v4525 = vpop.f32.mrf.mxu0
        %4526 = vmatprep.mubr.bf16.mxu0 %v3930
        %4527 = vmatmul.mubr.bf16.gmra.mxu0 %v3929
        %v4528 = vpop.f32.mrf.mxu0
        %v4529 = vadd.f32 %v4464, %v4528
        %v4530 = vpop.f32.mrf.mxu0
        %v4531 = vpop.f32.mrf.mxu0
        %v4532 = vadd.f32 %v4467, %v4531
        %v4533 = vpop.f32.mrf.mxu0
        %4534 = vmatprep.mubr.bf16.mxu0 %v3939
        %4535 = vmatmul.mubr.bf16.gmra.mxu0 %v3938
        %v4536 = vpop.f32.mrf.mxu0
        %v4537 = vadd.f32 %v4472, %v4536
        %v4538 = vpop.f32.mrf.mxu0
        %v4539 = vpop.f32.mrf.mxu0
        %v4540 = vadd.f32 %v4475, %v4539
        %v4541 = vpop.f32.mrf.mxu0
        %4542 = vdwg.mxu0
        %4543 = vmatprep.subr.bf16.mxu0 0
        %4544 = vmatpush1.bf16.msra.mxu0 %v4308
        %4545 = vmatprep.subr.bf16.mxu0 0
        %4546 = vmatpush1.bf16.msra.mxu0 %v4307
        %4547 = vmatprep.subr.bf16.mxu0 0
        %4548 = vmatpush1.bf16.msra.mxu0 %v4306
        %4549 = vmatprep.subr.bf16.mxu0 0
        %4550 = vmatpush1.bf16.msra.mxu0 %v4305
        %4551 = vmatprep.subr.bf16.mxu0 0
        %4552 = vmatpush1.bf16.msra.mxu0 %v4304
        %4553 = vmatprep.subr.bf16.mxu0 0
        %4554 = vmatpush1.bf16.msra.mxu0 %v4303
        %4555 = vmatprep.subr.bf16.mxu0 0
        %4556 = vmatpush1.bf16.msra.mxu0 %v4302
        %4557 = vmatprep.subr.bf16.mxu0 0
        %4558 = vmatpush1.bf16.msra.mxu0 %v4301
        %4559 = vmatprep.subr.bf16.mxu0 0
        %4560 = vmatpush2.bf16.msra.mxu0 %v4316
        %4561 = vmatprep.subr.bf16.mxu0 0
        %4562 = vmatpush2.bf16.msra.mxu0 %v4315
        %4563 = vmatprep.subr.bf16.mxu0 0
        %4564 = vmatpush2.bf16.msra.mxu0 %v4314
        %4565 = vmatprep.subr.bf16.mxu0 0
        %4566 = vmatpush2.bf16.msra.mxu0 %v4313
        %4567 = vmatprep.subr.bf16.mxu0 0
        %4568 = vmatpush2.bf16.msra.mxu0 %v4312
        %4569 = vmatprep.subr.bf16.mxu0 0
        %4570 = vmatpush2.bf16.msra.mxu0 %v4311
        %4571 = vmatprep.subr.bf16.mxu0 0
        %4572 = vmatpush2.bf16.msra.mxu0 %v4310
        %4573 = vmatprep.subr.bf16.mxu0 0
        %4574 = vmatpush2.bf16.msra.mxu0 %v4309
        %4575 = vmatprep.mubr.bf16.mxu0 %v3914
        %4576 = vmatmul.mubr.bf16.gmra.mxu0 %v3913
        %v4577 = vpop.f32.mrf.mxu0
        %v4578 = vadd.f32 %v4513, %v4577
        %v4579 = vpop.f32.mrf.mxu0
        %v4580 = vpop.f32.mrf.mxu0
        %v4581 = vadd.f32 %v4516, %v4580
        %v4582 = vpop.f32.mrf.mxu0
        %4583 = vmatprep.mubr.bf16.mxu0 %v3923
        %4584 = vmatmul.mubr.bf16.gmra.mxu0 %v3922
        %v4585 = vpop.f32.mrf.mxu0
        %v4586 = vadd.f32 %v4521, %v4585
        %v4587 = vpop.f32.mrf.mxu0
        %v4588 = vpop.f32.mrf.mxu0
        %v4589 = vadd.f32 %v4524, %v4588
        %v4590 = vpop.f32.mrf.mxu0
        %4591 = vmatprep.mubr.bf16.mxu0 %v3932
        %4592 = vmatmul.mubr.bf16.gmra.mxu0 %v3931
        %v4593 = vpop.f32.mrf.mxu0
        %v4594 = vadd.f32 %v4529, %v4593
        %v4595 = vpop.f32.mrf.mxu0
        %v4596 = vpop.f32.mrf.mxu0
        %v4597 = vadd.f32 %v4532, %v4596
        %v4598 = vpop.f32.mrf.mxu0
        %4599 = vmatprep.mubr.bf16.mxu0 %v3941
        %4600 = vmatmul.mubr.bf16.gmra.mxu0 %v3940
        %v4601 = vpop.f32.mrf.mxu0
        %v4602 = vadd.f32 %v4537, %v4601
        %v4603 = vpop.f32.mrf.mxu0
        %v4604 = vpop.f32.mrf.mxu0
        %v4605 = vadd.f32 %v4540, %v4604
        %v4606 = vpop.f32.mrf.mxu0
        %4607 = vdwg.mxu0
        %4608 = vmatprep.subr.bf16.mxu0 0
        %4609 = vmatpush1.bf16.msra.mxu0 %v4324
        %4610 = vmatprep.subr.bf16.mxu0 0
        %4611 = vmatpush1.bf16.msra.mxu0 %v4323
        %4612 = vmatprep.subr.bf16.mxu0 0
        %4613 = vmatpush1.bf16.msra.mxu0 %v4322
        %4614 = vmatprep.subr.bf16.mxu0 0
        %4615 = vmatpush1.bf16.msra.mxu0 %v4321
        %4616 = vmatprep.subr.bf16.mxu0 0
        %4617 = vmatpush1.bf16.msra.mxu0 %v4320
        %4618 = vmatprep.subr.bf16.mxu0 0
        %4619 = vmatpush1.bf16.msra.mxu0 %v4319
        %4620 = vmatprep.subr.bf16.mxu0 0
        %4621 = vmatpush1.bf16.msra.mxu0 %v4318
        %4622 = vmatprep.subr.bf16.mxu0 0
        %4623 = vmatpush1.bf16.msra.mxu0 %v4317
        %4624 = vmatprep.subr.bf16.mxu0 0
        %4625 = vmatpush2.bf16.msra.mxu0 %v4332
        %4626 = vmatprep.subr.bf16.mxu0 0
        %4627 = vmatpush2.bf16.msra.mxu0 %v4331
        %4628 = vmatprep.subr.bf16.mxu0 0
        %4629 = vmatpush2.bf16.msra.mxu0 %v4330
        %4630 = vmatprep.subr.bf16.mxu0 0
        %4631 = vmatpush2.bf16.msra.mxu0 %v4329
        %4632 = vmatprep.subr.bf16.mxu0 0
        %4633 = vmatpush2.bf16.msra.mxu0 %v4328
        %4634 = vmatprep.subr.bf16.mxu0 0
        %4635 = vmatpush2.bf16.msra.mxu0 %v4327
        %4636 = vmatprep.subr.bf16.mxu0 0
        %4637 = vmatpush2.bf16.msra.mxu0 %v4326
        %4638 = vmatprep.subr.bf16.mxu0 0
        %4639 = vmatpush2.bf16.msra.mxu0 %v4325
        %4640 = vmatprep.mubr.bf16.mxu0 %v3916
        %4641 = vmatmul.mubr.bf16.gmra.mxu0 %v3915
        %v4642 = vpop.f32.mrf.mxu0
        %v4643 = vadd.f32 %v4578, %v4642
        %v4644 = vpop.f32.mrf.mxu0
        %v4645 = vpop.f32.mrf.mxu0
        %v4646 = vadd.f32 %v4581, %v4645
        %v4647 = vpop.f32.mrf.mxu0
        %4648 = vmatprep.mubr.bf16.mxu0 %v3925
        %4649 = vmatmul.mubr.bf16.gmra.mxu0 %v3924
        %v4650 = vpop.f32.mrf.mxu0
        %v4651 = vadd.f32 %v4586, %v4650
        %v4652 = vpop.f32.mrf.mxu0
        %v4653 = vpop.f32.mrf.mxu0
        %v4654 = vadd.f32 %v4589, %v4653
        %v4655 = vpop.f32.mrf.mxu0
        %4656 = vmatprep.mubr.bf16.mxu0 %v3934
        %4657 = vmatmul.mubr.bf16.gmra.mxu0 %v3933
        %v4658 = vpop.f32.mrf.mxu0
        %v4659 = vadd.f32 %v4594, %v4658
        %v4660 = vpop.f32.mrf.mxu0
        %v4661 = vpop.f32.mrf.mxu0
        %v4662 = vadd.f32 %v4597, %v4661
        %v4663 = vpop.f32.mrf.mxu0
        %4664 = vmatprep.mubr.bf16.mxu0 %v3943
        %4665 = vmatmul.mubr.bf16.gmra.mxu0 %v3942
        %v4666 = vpop.f32.mrf.mxu0
        %v4667 = vadd.f32 %v4602, %v4666
        %v4668 = vpop.f32.mrf.mxu0
        %v4669 = vpop.f32.mrf.mxu0
        %v4670 = vadd.f32 %v4605, %v4669
        %v4671 = vpop.f32.mrf.mxu0
        %4672 = vdwg.mxu0
        %4673 = vmatprep.subr.bf16.mxu0 0
        %4674 = vmatpush1.bf16.msra.mxu0 %v4340
        %4675 = vmatprep.subr.bf16.mxu0 0
        %4676 = vmatpush1.bf16.msra.mxu0 %v4339
        %4677 = vmatprep.subr.bf16.mxu0 0
        %4678 = vmatpush1.bf16.msra.mxu0 %v4338
        %4679 = vmatprep.subr.bf16.mxu0 0
        %4680 = vmatpush1.bf16.msra.mxu0 %v4337
        %4681 = vmatprep.subr.bf16.mxu0 0
        %4682 = vmatpush1.bf16.msra.mxu0 %v4336
        %4683 = vmatprep.subr.bf16.mxu0 0
        %4684 = vmatpush1.bf16.msra.mxu0 %v4335
        %4685 = vmatprep.subr.bf16.mxu0 0
        %4686 = vmatpush1.bf16.msra.mxu0 %v4334
        %4687 = vmatprep.subr.bf16.mxu0 0
        %4688 = vmatpush1.bf16.msra.mxu0 %v4333
        %4689 = vmatprep.subr.bf16.mxu0 0
        %4690 = vmatpush2.bf16.msra.mxu0 0
        %4691 = vmatprep.subr.bf16.mxu0 0
        %4692 = vmatpush2.bf16.msra.mxu0 0
        %4693 = vmatprep.subr.bf16.mxu0 0
        %4694 = vmatpush2.bf16.msra.mxu0 0
        %4695 = vmatprep.subr.bf16.mxu0 0
        %4696 = vmatpush2.bf16.msra.mxu0 0
        %4697 = vmatprep.subr.bf16.mxu0 0
        %4698 = vmatpush2.bf16.msra.mxu0 0
        %4699 = vmatprep.subr.bf16.mxu0 0
        %4700 = vmatpush2.bf16.msra.mxu0 0
        %4701 = vmatprep.subr.bf16.mxu0 0
        %4702 = vmatpush2.bf16.msra.mxu0 0
        %4703 = vmatprep.subr.bf16.mxu0 0
        %4704 = vmatpush2.bf16.msra.mxu0 0
        %4705 = vmatprep.mubr.bf16.mxu0 0
        %4706 = vmatmul.mubr.bf16.gmra.mxu0 %v3917
        %v4707 = vpop.f32.mrf.mxu0
        %v4708 = vadd.f32 %v4643, %v4707
        %v4709 = vpop.f32.mrf.mxu0
        %v4710 = vpop.f32.mrf.mxu0
        %v4711 = vadd.f32 %v4646, %v4710
        %v4712 = vpop.f32.mrf.mxu0
        %4713 = vmatprep.mubr.bf16.mxu0 0
        %4714 = vmatmul.mubr.bf16.gmra.mxu0 %v3926
        %v4715 = vpop.f32.mrf.mxu0
        %v4716 = vadd.f32 %v4651, %v4715
        %v4717 = vpop.f32.mrf.mxu0
        %v4718 = vpop.f32.mrf.mxu0
        %v4719 = vadd.f32 %v4654, %v4718
        %v4720 = vpop.f32.mrf.mxu0
        %4721 = vmatprep.mubr.bf16.mxu0 0
        %4722 = vmatmul.mubr.bf16.gmra.mxu0 %v3935
        %v4723 = vpop.f32.mrf.mxu0
        %v4724 = vadd.f32 %v4659, %v4723
        %v4725 = vpop.f32.mrf.mxu0
        %v4726 = vpop.f32.mrf.mxu0
        %v4727 = vadd.f32 %v4662, %v4726
        %v4728 = vpop.f32.mrf.mxu0
        %4729 = vmatprep.mubr.bf16.mxu0 0
        %4730 = vmatmul.mubr.bf16.gmra.mxu0 %v3944
        %v4731 = vpop.f32.mrf.mxu0
        %v4732 = vadd.f32 %v4667, %v4731
        %v4733 = vpop.f32.mrf.mxu0
        %v4734 = vpop.f32.mrf.mxu0
        %v4735 = vadd.f32 %v4670, %v4734
        %v4736 = vpop.f32.mrf.mxu0
        %4737 = vdwg.mxu0
        %v4738 = vmax.f32 %v4708, 0.0
        %v4739 = vmax.f32 %v4711, 0.0
        %v4740 = vmax.f32 %v4716, 0.0
        %v4741 = vmax.f32 %v4719, 0.0
        %v4742 = vmax.f32 %v4724, 0.0
        %v4743 = vmax.f32 %v4727, 0.0
        %v4744 = vmax.f32 %v4732, 0.0
        %v4745 = vmax.f32 %v4735, 0.0
        %v4746 = vpack.c.bf16 %v4739, %v4738
        %v4747 = vpack.c.bf16 %v4741, %v4740
        %v4748 = vpack.c.bf16 %v4743, %v4742
        %v4749 = vpack.c.bf16 %v4745, %v4744
        %v4754 = vunpack.c.l.b16 %v4746
        %v4755 = vunpack.c.h.b16 %v4746
        %v4756 = vunpack.c.l.b16 %v4747
        %v4757 = vunpack.c.h.b16 %v4747
        %v4758 = vunpack.c.l.b16 %v4748
        %v4759 = vunpack.c.h.b16 %v4748
        %v4760 = vunpack.c.l.b16 %v4749
        %v4761 = vunpack.c.h.b16 %v4749
        %v4762 = vpack.c.b16 %v4754, %v4754
        %v4763 = vpack.c.b16 %v4755, %v4755
        %v4764 = vpack.c.b16 %v4756, %v4756
        %v4765 = vpack.c.b16 %v4757, %v4757
        %v4766 = vpack.c.b16 %v4758, %v4758
        %v4767 = vpack.c.b16 %v4759, %v4759
        %v4768 = vpack.c.b16 %v4760, %v4760
        %v4769 = vpack.c.b16 %v4761, %v4761
        %4778 = vst [vmem:[%s480 + $0x8] sm:$0xf] %v4762
        %4779 = vst [vmem:[%s480 + $0x18] sm:$0xf] %v4763
        %4780 = vst [vmem:[%s480 + $0x28] sm:$0xf] %v4764
        %4781 = vst [vmem:[%s480 + $0x38] sm:$0xf] %v4765
        %4782 = vst [vmem:[%s480 + $0x48] sm:$0xf] %v4766
        %4783 = vst [vmem:[%s480 + $0x58] sm:$0xf] %v4767
        %4784 = vst [vmem:[%s480 + $0x68] sm:$0xf] %v4768
        %4785 = vst [vmem:[%s480 + $0x78] sm:$0xf] %v4769
        %v4786 = vld [vmem:[#allocation2 + $0x4] sm:$0x8]
        %v4787 = vld [vmem:[#allocation2 + $0x8] sm:$0xf]
        %v4788 = vld [vmem:[#allocation2 + $0x14] sm:$0x8]
        %v4789 = vld [vmem:[#allocation2 + $0x18] sm:$0xf]
        %v4790 = vld [vmem:[#allocation2 + $0x24] sm:$0x8]
        %v4791 = vld [vmem:[#allocation2 + $0x28] sm:$0xf]
        %v4792 = vld [vmem:[#allocation2 + $0x34] sm:$0x8]
        %v4793 = vld [vmem:[#allocation2 + $0x38] sm:$0xf]
        %v4794 = vld [vmem:[#allocation2 + $0x44] sm:$0x8]
        %v4795 = vld [vmem:[#allocation2 + $0x48] sm:$0xf]
        %v4796 = vld [vmem:[#allocation2 + $0x54] sm:$0x8]
        %v4797 = vld [vmem:[#allocation2 + $0x58] sm:$0xf]
        %v4798 = vld [vmem:[#allocation2 + $0x64] sm:$0x8]
        %v4799 = vld [vmem:[#allocation2 + $0x68] sm:$0xf]
        %v4800 = vld [vmem:[#allocation2 + $0x74] sm:$0x8]
        %v4801 = vld [vmem:[#allocation2 + $0x78] sm:$0xf]
        %v4803 = vshrl.u32 %v4786, 16
        %v4805 = vrot.slane %v4803, 7
        %v4806 = vrot.slane %v4805, 4
        %v4808 = vshrl.u32 %v4787, 16
        %v4810 = vrot.slane %v4808, 7
        %v4811 = vshll.u32 %v4787, 16
        %v4813 = vor.u32 %v4810, %v4811
        %v4814 = vsel %vm660, %v4806, %v4813
        %v4816 = vshrl.u32 %v4788, 16
        %v4818 = vrot.slane %v4816, 7
        %v4819 = vrot.slane %v4818, 4
        %v4821 = vshrl.u32 %v4789, 16
        %v4823 = vrot.slane %v4821, 7
        %v4824 = vshll.u32 %v4789, 16
        %v4826 = vor.u32 %v4823, %v4824
        %v4827 = vsel %vm660, %v4819, %v4826
        %v4829 = vshrl.u32 %v4790, 16
        %v4831 = vrot.slane %v4829, 7
        %v4832 = vrot.slane %v4831, 4
        %v4834 = vshrl.u32 %v4791, 16
        %v4836 = vrot.slane %v4834, 7
        %v4837 = vshll.u32 %v4791, 16
        %v4839 = vor.u32 %v4836, %v4837
        %v4840 = vsel %vm660, %v4832, %v4839
        %v4842 = vshrl.u32 %v4792, 16
        %v4844 = vrot.slane %v4842, 7
        %v4845 = vrot.slane %v4844, 4
        %v4847 = vshrl.u32 %v4793, 16
        %v4849 = vrot.slane %v4847, 7
        %v4850 = vshll.u32 %v4793, 16
        %v4852 = vor.u32 %v4849, %v4850
        %v4853 = vsel %vm660, %v4845, %v4852
        %v4855 = vshrl.u32 %v4794, 16
        %v4857 = vrot.slane %v4855, 7
        %v4858 = vrot.slane %v4857, 4
        %v4860 = vshrl.u32 %v4795, 16
        %v4862 = vrot.slane %v4860, 7
        %v4863 = vshll.u32 %v4795, 16
        %v4865 = vor.u32 %v4862, %v4863
        %v4866 = vsel %vm660, %v4858, %v4865
        %v4868 = vshrl.u32 %v4796, 16
        %v4870 = vrot.slane %v4868, 7
        %v4871 = vrot.slane %v4870, 4
        %v4873 = vshrl.u32 %v4797, 16
        %v4875 = vrot.slane %v4873, 7
        %v4876 = vshll.u32 %v4797, 16
        %v4878 = vor.u32 %v4875, %v4876
        %v4879 = vsel %vm660, %v4871, %v4878
        %v4881 = vshrl.u32 %v4798, 16
        %v4883 = vrot.slane %v4881, 7
        %v4884 = vrot.slane %v4883, 4
        %v4886 = vshrl.u32 %v4799, 16
        %v4888 = vrot.slane %v4886, 7
        %v4889 = vshll.u32 %v4799, 16
        %v4891 = vor.u32 %v4888, %v4889
        %v4892 = vsel %vm660, %v4884, %v4891
        %v4894 = vshrl.u32 %v4800, 16
        %v4896 = vrot.slane %v4894, 7
        %v4897 = vrot.slane %v4896, 4
        %v4899 = vshrl.u32 %v4801, 16
        %v4901 = vrot.slane %v4899, 7
        %v4902 = vshll.u32 %v4801, 16
        %v4904 = vor.u32 %v4901, %v4902
        %v4905 = vsel %vm660, %v4897, %v4904
        %4914 = vst [vmem:[#allocation4] sm:$0xf] %v4814
        %4915 = vst [vmem:[#allocation4 + $0x24] sm:$0xf] %v4827
        %4916 = vst [vmem:[#allocation4 + $0x48] sm:$0xf] %v4840
        %4917 = vst [vmem:[#allocation4 + $0x6c] sm:$0xf] %v4853
        %4918 = vst [vmem:[#allocation4 + $0x90] sm:$0xf] %v4866
        %4919 = vst [vmem:[#allocation4 + $0xb4] sm:$0xf] %v4879
        %4920 = vst [vmem:[#allocation4 + $0xd8] sm:$0xf] %v4892
        %4921 = vst [vmem:[#allocation4 + $0xfc] sm:$0xf] %v4905
        %v4922 = vld [vmem:[#allocation2 + $0x8] sm:$0xf]
        %v4923 = vld [vmem:[#allocation2 + $0x18] sm:$0xf]
        %v4924 = vld [vmem:[#allocation2 + $0x28] sm:$0xf]
        %v4925 = vld [vmem:[#allocation2 + $0x38] sm:$0xf]
        %v4926 = vld [vmem:[#allocation2 + $0x48] sm:$0xf]
        %v4927 = vld [vmem:[#allocation2 + $0x58] sm:$0xf]
        %v4928 = vld [vmem:[#allocation2 + $0x68] sm:$0xf]
        %v4929 = vld [vmem:[#allocation2 + $0x78] sm:$0xf]
        %4930 = vst [vmem:[#allocation4 + $0x4] sm:$0xf] %v4922
        %4931 = vst [vmem:[#allocation4 + $0x28] sm:$0xf] %v4923
        %4932 = vst [vmem:[#allocation4 + $0x4c] sm:$0xf] %v4924
        %4933 = vst [vmem:[#allocation4 + $0x70] sm:$0xf] %v4925
        %4934 = vst [vmem:[#allocation4 + $0x94] sm:$0xf] %v4926
        %4935 = vst [vmem:[#allocation4 + $0xb8] sm:$0xf] %v4927
        %4936 = vst [vmem:[#allocation4 + $0xdc] sm:$0xf] %v4928
        %4937 = vst [vmem:[#allocation4 + $0x100] sm:$0xf] %v4929
        %v4938 = vld [vmem:[#allocation2 + $0x8] sm:$0xf]
        %v4939 = vld [vmem:[#allocation2 + $0xc] sm:$0x1]
        %v4940 = vld [vmem:[#allocation2 + $0x18] sm:$0xf]
        %v4941 = vld [vmem:[#allocation2 + $0x1c] sm:$0x1]
        %v4942 = vld [vmem:[#allocation2 + $0x28] sm:$0xf]
        %v4943 = vld [vmem:[#allocation2 + $0x2c] sm:$0x1]
        %v4944 = vld [vmem:[#allocation2 + $0x38] sm:$0xf]
        %v4945 = vld [vmem:[#allocation2 + $0x3c] sm:$0x1]
        %v4946 = vld [vmem:[#allocation2 + $0x48] sm:$0xf]
        %v4947 = vld [vmem:[#allocation2 + $0x4c] sm:$0x1]
        %v4948 = vld [vmem:[#allocation2 + $0x58] sm:$0xf]
        %v4949 = vld [vmem:[#allocation2 + $0x5c] sm:$0x1]
        %v4950 = vld [vmem:[#allocation2 + $0x68] sm:$0xf]
        %v4951 = vld [vmem:[#allocation2 + $0x6c] sm:$0x1]
        %v4952 = vld [vmem:[#allocation2 + $0x78] sm:$0xf]
        %v4953 = vld [vmem:[#allocation2 + $0x7c] sm:$0x1]
        %v4955 = vshrl.u32 %v4938, 16
        %v4957 = vrot.slane %v4955, 4
        %v4958 = vshll.u32 %v4938, 16
        %v4960 = vrot.slane %v4958, 5
        %v4961 = vor.u32 %v4957, %v4960
        %v4962 = vrot.slane %v4961, 4
        %v4964 = vshll.u32 %v4939, 16
        %v4966 = vrot.slane %v4964, 5
        %v4967 = vsel %vm815, %v4962, %v4966
        %v4969 = vshrl.u32 %v4940, 16
        %v4971 = vrot.slane %v4969, 4
        %v4972 = vshll.u32 %v4940, 16
        %v4974 = vrot.slane %v4972, 5
        %v4975 = vor.u32 %v4971, %v4974
        %v4976 = vrot.slane %v4975, 4
        %v4978 = vshll.u32 %v4941, 16
        %v4980 = vrot.slane %v4978, 5
        %v4981 = vsel %vm815, %v4976, %v4980
        %v4983 = vshrl.u32 %v4942, 16
        %v4985 = vrot.slane %v4983, 4
        %v4986 = vshll.u32 %v4942, 16
        %v4988 = vrot.slane %v4986, 5
        %v4989 = vor.u32 %v4985, %v4988
        %v4990 = vrot.slane %v4989, 4
        %v4992 = vshll.u32 %v4943, 16
        %v4994 = vrot.slane %v4992, 5
        %v4995 = vsel %vm815, %v4990, %v4994
        %v4997 = vshrl.u32 %v4944, 16
        %v4999 = vrot.slane %v4997, 4
        %v5000 = vshll.u32 %v4944, 16
        %v5002 = vrot.slane %v5000, 5
        %v5003 = vor.u32 %v4999, %v5002
        %v5004 = vrot.slane %v5003, 4
        %v5006 = vshll.u32 %v4945, 16
        %v5008 = vrot.slane %v5006, 5
        %v5009 = vsel %vm815, %v5004, %v5008
        %v5011 = vshrl.u32 %v4946, 16
        %v5013 = vrot.slane %v5011, 4
        %v5014 = vshll.u32 %v4946, 16
        %v5016 = vrot.slane %v5014, 5
        %v5017 = vor.u32 %v5013, %v5016
        %v5018 = vrot.slane %v5017, 4
        %v5020 = vshll.u32 %v4947, 16
        %v5022 = vrot.slane %v5020, 5
        %v5023 = vsel %vm815, %v5018, %v5022
        %v5025 = vshrl.u32 %v4948, 16
        %v5027 = vrot.slane %v5025, 4
        %v5028 = vshll.u32 %v4948, 16
        %v5030 = vrot.slane %v5028, 5
        %v5031 = vor.u32 %v5027, %v5030
        %v5032 = vrot.slane %v5031, 4
        %v5034 = vshll.u32 %v4949, 16
        %v5036 = vrot.slane %v5034, 5
        %v5037 = vsel %vm815, %v5032, %v5036
        %v5039 = vshrl.u32 %v4950, 16
        %v5041 = vrot.slane %v5039, 4
        %v5042 = vshll.u32 %v4950, 16
        %v5044 = vrot.slane %v5042, 5
        %v5045 = vor.u32 %v5041, %v5044
        %v5046 = vrot.slane %v5045, 4
        %v5048 = vshll.u32 %v4951, 16
        %v5050 = vrot.slane %v5048, 5
        %v5051 = vsel %vm815, %v5046, %v5050
        %v5053 = vshrl.u32 %v4952, 16
        %v5055 = vrot.slane %v5053, 4
        %v5056 = vshll.u32 %v4952, 16
        %v5058 = vrot.slane %v5056, 5
        %v5059 = vor.u32 %v5055, %v5058
        %v5060 = vrot.slane %v5059, 4
        %v5062 = vshll.u32 %v4953, 16
        %v5064 = vrot.slane %v5062, 5
        %v5065 = vsel %vm815, %v5060, %v5064
        %5074 = vst [vmem:[#allocation4 + $0x8] sm:$0xf] %v4967
        %5075 = vst [vmem:[#allocation4 + $0x2c] sm:$0xf] %v4981
        %5076 = vst [vmem:[#allocation4 + $0x50] sm:$0xf] %v4995
        %5077 = vst [vmem:[#allocation4 + $0x74] sm:$0xf] %v5009
        %5078 = vst [vmem:[#allocation4 + $0x98] sm:$0xf] %v5023
        %5079 = vst [vmem:[#allocation4 + $0xbc] sm:$0xf] %v5037
        %5080 = vst [vmem:[#allocation4 + $0xe0] sm:$0xf] %v5051
        %5081 = vst [vmem:[#allocation4 + $0x104] sm:$0xf] %v5065
        %v5082 = vld [vmem:[%s480 + $0x4] sm:$0x8]
        %v5083 = vld [vmem:[%s480 + $0x8] sm:$0xf]
        %v5084 = vld [vmem:[%s480 + $0x14] sm:$0x8]
        %v5085 = vld [vmem:[%s480 + $0x18] sm:$0xf]
        %v5086 = vld [vmem:[%s480 + $0x24] sm:$0x8]
        %v5087 = vld [vmem:[%s480 + $0x28] sm:$0xf]
        %v5088 = vld [vmem:[%s480 + $0x34] sm:$0x8]
        %v5089 = vld [vmem:[%s480 + $0x38] sm:$0xf]
        %v5090 = vld [vmem:[%s480 + $0x44] sm:$0x8]
        %v5091 = vld [vmem:[%s480 + $0x48] sm:$0xf]
        %v5092 = vld [vmem:[%s480 + $0x54] sm:$0x8]
        %v5093 = vld [vmem:[%s480 + $0x58] sm:$0xf]
        %v5094 = vld [vmem:[%s480 + $0x64] sm:$0x8]
        %v5095 = vld [vmem:[%s480 + $0x68] sm:$0xf]
        %v5096 = vld [vmem:[%s480 + $0x74] sm:$0x8]
        %v5097 = vld [vmem:[%s480 + $0x78] sm:$0xf]
        %v5099 = vshrl.u32 %v5082, 16
        %v5101 = vrot.slane %v5099, 7
        %v5102 = vrot.slane %v5101, 4
        %v5104 = vshrl.u32 %v5083, 16
        %v5106 = vrot.slane %v5104, 7
        %v5107 = vshll.u32 %v5083, 16
        %v5109 = vor.u32 %v5106, %v5107
        %v5110 = vsel %vm660, %v5102, %v5109
        %v5112 = vshrl.u32 %v5084, 16
        %v5114 = vrot.slane %v5112, 7
        %v5115 = vrot.slane %v5114, 4
        %v5117 = vshrl.u32 %v5085, 16
        %v5119 = vrot.slane %v5117, 7
        %v5120 = vshll.u32 %v5085, 16
        %v5122 = vor.u32 %v5119, %v5120
        %v5123 = vsel %vm660, %v5115, %v5122
        %v5125 = vshrl.u32 %v5086, 16
        %v5127 = vrot.slane %v5125, 7
        %v5128 = vrot.slane %v5127, 4
        %v5130 = vshrl.u32 %v5087, 16
        %v5132 = vrot.slane %v5130, 7
        %v5133 = vshll.u32 %v5087, 16
        %v5135 = vor.u32 %v5132, %v5133
        %v5136 = vsel %vm660, %v5128, %v5135
        %v5138 = vshrl.u32 %v5088, 16
        %v5140 = vrot.slane %v5138, 7
        %v5141 = vrot.slane %v5140, 4
        %v5143 = vshrl.u32 %v5089, 16
        %v5145 = vrot.slane %v5143, 7
        %v5146 = vshll.u32 %v5089, 16
        %v5148 = vor.u32 %v5145, %v5146
        %v5149 = vsel %vm660, %v5141, %v5148
        %v5151 = vshrl.u32 %v5090, 16
        %v5153 = vrot.slane %v5151, 7
        %v5154 = vrot.slane %v5153, 4
        %v5156 = vshrl.u32 %v5091, 16
        %v5158 = vrot.slane %v5156, 7
        %v5159 = vshll.u32 %v5091, 16
        %v5161 = vor.u32 %v5158, %v5159
        %v5162 = vsel %vm660, %v5154, %v5161
        %v5164 = vshrl.u32 %v5092, 16
        %v5166 = vrot.slane %v5164, 7
        %v5167 = vrot.slane %v5166, 4
        %v5169 = vshrl.u32 %v5093, 16
        %v5171 = vrot.slane %v5169, 7
        %v5172 = vshll.u32 %v5093, 16
        %v5174 = vor.u32 %v5171, %v5172
        %v5175 = vsel %vm660, %v5167, %v5174
        %v5177 = vshrl.u32 %v5094, 16
        %v5179 = vrot.slane %v5177, 7
        %v5180 = vrot.slane %v5179, 4
        %v5182 = vshrl.u32 %v5095, 16
        %v5184 = vrot.slane %v5182, 7
        %v5185 = vshll.u32 %v5095, 16
        %v5187 = vor.u32 %v5184, %v5185
        %v5188 = vsel %vm660, %v5180, %v5187
        %v5190 = vshrl.u32 %v5096, 16
        %v5192 = vrot.slane %v5190, 7
        %v5193 = vrot.slane %v5192, 4
        %v5195 = vshrl.u32 %v5097, 16
        %v5197 = vrot.slane %v5195, 7
        %v5198 = vshll.u32 %v5097, 16
        %v5200 = vor.u32 %v5197, %v5198
        %v5201 = vsel %vm660, %v5193, %v5200
        %5210 = vst [vmem:[#allocation4 + $0xc] sm:$0xf] %v5110
        %5211 = vst [vmem:[#allocation4 + $0x30] sm:$0xf] %v5123
        %5212 = vst [vmem:[#allocation4 + $0x54] sm:$0xf] %v5136
        %5213 = vst [vmem:[#allocation4 + $0x78] sm:$0xf] %v5149
        %5214 = vst [vmem:[#allocation4 + $0x9c] sm:$0xf] %v5162
        %5215 = vst [vmem:[#allocation4 + $0xc0] sm:$0xf] %v5175
        %5216 = vst [vmem:[#allocation4 + $0xe4] sm:$0xf] %v5188
        %5217 = vst [vmem:[#allocation4 + $0x108] sm:$0xf] %v5201
        %v5218 = vld [vmem:[%s480 + $0x8] sm:$0xf]
        %v5219 = vld [vmem:[%s480 + $0x18] sm:$0xf]
        %v5220 = vld [vmem:[%s480 + $0x28] sm:$0xf]
        %v5221 = vld [vmem:[%s480 + $0x38] sm:$0xf]
        %v5222 = vld [vmem:[%s480 + $0x48] sm:$0xf]
        %v5223 = vld [vmem:[%s480 + $0x58] sm:$0xf]
        %v5224 = vld [vmem:[%s480 + $0x68] sm:$0xf]
        %v5225 = vld [vmem:[%s480 + $0x78] sm:$0xf]
        %5226 = vst [vmem:[#allocation4 + $0x10] sm:$0xf] %v5218
        %5227 = vst [vmem:[#allocation4 + $0x34] sm:$0xf] %v5219
        %5228 = vst [vmem:[#allocation4 + $0x58] sm:$0xf] %v5220
        %5229 = vst [vmem:[#allocation4 + $0x7c] sm:$0xf] %v5221
        %5230 = vst [vmem:[#allocation4 + $0xa0] sm:$0xf] %v5222
        %5231 = vst [vmem:[#allocation4 + $0xc4] sm:$0xf] %v5223
        %5232 = vst [vmem:[#allocation4 + $0xe8] sm:$0xf] %v5224
        %5233 = vst [vmem:[#allocation4 + $0x10c] sm:$0xf] %v5225
        %v5234 = vld [vmem:[%s480 + $0x8] sm:$0xf]
        %v5235 = vld [vmem:[%s480 + $0xc] sm:$0x1]
        %v5236 = vld [vmem:[%s480 + $0x18] sm:$0xf]
        %v5237 = vld [vmem:[%s480 + $0x1c] sm:$0x1]
        %v5238 = vld [vmem:[%s480 + $0x28] sm:$0xf]
        %v5239 = vld [vmem:[%s480 + $0x2c] sm:$0x1]
        %v5240 = vld [vmem:[%s480 + $0x38] sm:$0xf]
        %v5241 = vld [vmem:[%s480 + $0x3c] sm:$0x1]
        %v5242 = vld [vmem:[%s480 + $0x48] sm:$0xf]
        %v5243 = vld [vmem:[%s480 + $0x4c] sm:$0x1]
        %v5244 = vld [vmem:[%s480 + $0x58] sm:$0xf]
        %v5245 = vld [vmem:[%s480 + $0x5c] sm:$0x1]
        %v5246 = vld [vmem:[%s480 + $0x68] sm:$0xf]
        %v5247 = vld [vmem:[%s480 + $0x6c] sm:$0x1]
        %v5248 = vld [vmem:[%s480 + $0x78] sm:$0xf]
        %v5249 = vld [vmem:[%s480 + $0x7c] sm:$0x1]
        %v5251 = vshrl.u32 %v5234, 16
        %v5253 = vrot.slane %v5251, 4
        %v5254 = vshll.u32 %v5234, 16
        %v5256 = vrot.slane %v5254, 5
        %v5257 = vor.u32 %v5253, %v5256
        %v5258 = vrot.slane %v5257, 4
        %v5260 = vshll.u32 %v5235, 16
        %v5262 = vrot.slane %v5260, 5
        %v5263 = vsel %vm815, %v5258, %v5262
        %v5265 = vshrl.u32 %v5236, 16
        %v5267 = vrot.slane %v5265, 4
        %v5268 = vshll.u32 %v5236, 16
        %v5270 = vrot.slane %v5268, 5
        %v5271 = vor.u32 %v5267, %v5270
        %v5272 = vrot.slane %v5271, 4
        %v5274 = vshll.u32 %v5237, 16
        %v5276 = vrot.slane %v5274, 5
        %v5277 = vsel %vm815, %v5272, %v5276
        %v5279 = vshrl.u32 %v5238, 16
        %v5281 = vrot.slane %v5279, 4
        %v5282 = vshll.u32 %v5238, 16
        %v5284 = vrot.slane %v5282, 5
        %v5285 = vor.u32 %v5281, %v5284
        %v5286 = vrot.slane %v5285, 4
        %v5288 = vshll.u32 %v5239, 16
        %v5290 = vrot.slane %v5288, 5
        %v5291 = vsel %vm815, %v5286, %v5290
        %v5293 = vshrl.u32 %v5240, 16
        %v5295 = vrot.slane %v5293, 4
        %v5296 = vshll.u32 %v5240, 16
        %v5298 = vrot.slane %v5296, 5
        %v5299 = vor.u32 %v5295, %v5298
        %v5300 = vrot.slane %v5299, 4
        %v5302 = vshll.u32 %v5241, 16
        %v5304 = vrot.slane %v5302, 5
        %v5305 = vsel %vm815, %v5300, %v5304
        %v5307 = vshrl.u32 %v5242, 16
        %v5309 = vrot.slane %v5307, 4
        %v5310 = vshll.u32 %v5242, 16
        %v5312 = vrot.slane %v5310, 5
        %v5313 = vor.u32 %v5309, %v5312
        %v5314 = vrot.slane %v5313, 4
        %v5316 = vshll.u32 %v5243, 16
        %v5318 = vrot.slane %v5316, 5
        %v5319 = vsel %vm815, %v5314, %v5318
        %v5321 = vshrl.u32 %v5244, 16
        %v5323 = vrot.slane %v5321, 4
        %v5324 = vshll.u32 %v5244, 16
        %v5326 = vrot.slane %v5324, 5
        %v5327 = vor.u32 %v5323, %v5326
        %v5328 = vrot.slane %v5327, 4
        %v5330 = vshll.u32 %v5245, 16
        %v5332 = vrot.slane %v5330, 5
        %v5333 = vsel %vm815, %v5328, %v5332
        %v5335 = vshrl.u32 %v5246, 16
        %v5337 = vrot.slane %v5335, 4
        %v5338 = vshll.u32 %v5246, 16
        %v5340 = vrot.slane %v5338, 5
        %v5341 = vor.u32 %v5337, %v5340
        %v5342 = vrot.slane %v5341, 4
        %v5344 = vshll.u32 %v5247, 16
        %v5346 = vrot.slane %v5344, 5
        %v5347 = vsel %vm815, %v5342, %v5346
        %v5349 = vshrl.u32 %v5248, 16
        %v5351 = vrot.slane %v5349, 4
        %v5352 = vshll.u32 %v5248, 16
        %v5354 = vrot.slane %v5352, 5
        %v5355 = vor.u32 %v5351, %v5354
        %v5356 = vrot.slane %v5355, 4
        %v5358 = vshll.u32 %v5249, 16
        %v5360 = vrot.slane %v5358, 5
        %v5361 = vsel %vm815, %v5356, %v5360
        %5370 = vst [vmem:[#allocation4 + $0x14] sm:$0xf] %v5263
        %5371 = vst [vmem:[#allocation4 + $0x38] sm:$0xf] %v5277
        %5372 = vst [vmem:[#allocation4 + $0x5c] sm:$0xf] %v5291
        %5373 = vst [vmem:[#allocation4 + $0x80] sm:$0xf] %v5305
        %5374 = vst [vmem:[#allocation4 + $0xa4] sm:$0xf] %v5319
        %5375 = vst [vmem:[#allocation4 + $0xc8] sm:$0xf] %v5333
        %5376 = vst [vmem:[#allocation4 + $0xec] sm:$0xf] %v5347
        %5377 = vst [vmem:[#allocation4 + $0x110] sm:$0xf] %v5361
        %v5378 = vld [vmem:[%s1240 + $0x4] sm:$0x8]
        %v5379 = vld [vmem:[%s1240 + $0x8] sm:$0xf]
        %v5380 = vld [vmem:[%s1240 + $0x14] sm:$0x8]
        %v5381 = vld [vmem:[%s1240 + $0x18] sm:$0xf]
        %v5382 = vld [vmem:[%s1240 + $0x24] sm:$0x8]
        %v5383 = vld [vmem:[%s1240 + $0x28] sm:$0xf]
        %v5384 = vld [vmem:[%s1240 + $0x34] sm:$0x8]
        %v5385 = vld [vmem:[%s1240 + $0x38] sm:$0xf]
        %v5386 = vld [vmem:[%s1240 + $0x44] sm:$0x8]
        %v5387 = vld [vmem:[%s1240 + $0x48] sm:$0xf]
        %v5388 = vld [vmem:[%s1240 + $0x54] sm:$0x8]
        %v5389 = vld [vmem:[%s1240 + $0x58] sm:$0xf]
        %v5390 = vld [vmem:[%s1240 + $0x64] sm:$0x8]
        %v5391 = vld [vmem:[%s1240 + $0x68] sm:$0xf]
        %v5392 = vld [vmem:[%s1240 + $0x74] sm:$0x8]
        %v5393 = vld [vmem:[%s1240 + $0x78] sm:$0xf]
        %v5395 = vshrl.u32 %v5378, 16
        %v5397 = vrot.slane %v5395, 7
        %v5398 = vrot.slane %v5397, 4
        %v5400 = vshrl.u32 %v5379, 16
        %v5402 = vrot.slane %v5400, 7
        %v5403 = vshll.u32 %v5379, 16
        %v5405 = vor.u32 %v5402, %v5403
        %v5406 = vsel %vm660, %v5398, %v5405
        %v5408 = vshrl.u32 %v5380, 16
        %v5410 = vrot.slane %v5408, 7
        %v5411 = vrot.slane %v5410, 4
        %v5413 = vshrl.u32 %v5381, 16
        %v5415 = vrot.slane %v5413, 7
        %v5416 = vshll.u32 %v5381, 16
        %v5418 = vor.u32 %v5415, %v5416
        %v5419 = vsel %vm660, %v5411, %v5418
        %v5421 = vshrl.u32 %v5382, 16
        %v5423 = vrot.slane %v5421, 7
        %v5424 = vrot.slane %v5423, 4
        %v5426 = vshrl.u32 %v5383, 16
        %v5428 = vrot.slane %v5426, 7
        %v5429 = vshll.u32 %v5383, 16
        %v5431 = vor.u32 %v5428, %v5429
        %v5432 = vsel %vm660, %v5424, %v5431
        %v5434 = vshrl.u32 %v5384, 16
        %v5436 = vrot.slane %v5434, 7
        %v5437 = vrot.slane %v5436, 4
        %v5439 = vshrl.u32 %v5385, 16
        %v5441 = vrot.slane %v5439, 7
        %v5442 = vshll.u32 %v5385, 16
        %v5444 = vor.u32 %v5441, %v5442
        %v5445 = vsel %vm660, %v5437, %v5444
        %v5447 = vshrl.u32 %v5386, 16
        %v5449 = vrot.slane %v5447, 7
        %v5450 = vrot.slane %v5449, 4
        %v5452 = vshrl.u32 %v5387, 16
        %v5454 = vrot.slane %v5452, 7
        %v5455 = vshll.u32 %v5387, 16
        %v5457 = vor.u32 %v5454, %v5455
        %v5458 = vsel %vm660, %v5450, %v5457
        %v5460 = vshrl.u32 %v5388, 16
        %v5462 = vrot.slane %v5460, 7
        %v5463 = vrot.slane %v5462, 4
        %v5465 = vshrl.u32 %v5389, 16
        %v5467 = vrot.slane %v5465, 7
        %v5468 = vshll.u32 %v5389, 16
        %v5470 = vor.u32 %v5467, %v5468
        %v5471 = vsel %vm660, %v5463, %v5470
        %v5473 = vshrl.u32 %v5390, 16
        %v5475 = vrot.slane %v5473, 7
        %v5476 = vrot.slane %v5475, 4
        %v5478 = vshrl.u32 %v5391, 16
        %v5480 = vrot.slane %v5478, 7
        %v5481 = vshll.u32 %v5391, 16
        %v5483 = vor.u32 %v5480, %v5481
        %v5484 = vsel %vm660, %v5476, %v5483
        %v5486 = vshrl.u32 %v5392, 16
        %v5488 = vrot.slane %v5486, 7
        %v5489 = vrot.slane %v5488, 4
        %v5491 = vshrl.u32 %v5393, 16
        %v5493 = vrot.slane %v5491, 7
        %v5494 = vshll.u32 %v5393, 16
        %v5496 = vor.u32 %v5493, %v5494
        %v5497 = vsel %vm660, %v5489, %v5496
        %5506 = vst [vmem:[#allocation4 + $0x18] sm:$0xf] %v5406
        %5507 = vst [vmem:[#allocation4 + $0x3c] sm:$0xf] %v5419
        %5508 = vst [vmem:[#allocation4 + $0x60] sm:$0xf] %v5432
        %5509 = vst [vmem:[#allocation4 + $0x84] sm:$0xf] %v5445
        %5510 = vst [vmem:[#allocation4 + $0xa8] sm:$0xf] %v5458
        %5511 = vst [vmem:[#allocation4 + $0xcc] sm:$0xf] %v5471
        %5512 = vst [vmem:[#allocation4 + $0xf0] sm:$0xf] %v5484
        %5513 = vst [vmem:[#allocation4 + $0x114] sm:$0xf] %v5497
        %v5514 = vld [vmem:[%s1240 + $0x8] sm:$0xf]
        %v5515 = vld [vmem:[%s1240 + $0x18] sm:$0xf]
        %v5516 = vld [vmem:[%s1240 + $0x28] sm:$0xf]
        %v5517 = vld [vmem:[%s1240 + $0x38] sm:$0xf]
        %v5518 = vld [vmem:[%s1240 + $0x48] sm:$0xf]
        %v5519 = vld [vmem:[%s1240 + $0x58] sm:$0xf]
        %v5520 = vld [vmem:[%s1240 + $0x68] sm:$0xf]
        %v5521 = vld [vmem:[%s1240 + $0x78] sm:$0xf]
        %5522 = vst [vmem:[#allocation4 + $0x1c] sm:$0xf] %v5514
        %5523 = vst [vmem:[#allocation4 + $0x40] sm:$0xf] %v5515
        %5524 = vst [vmem:[#allocation4 + $0x64] sm:$0xf] %v5516
        %5525 = vst [vmem:[#allocation4 + $0x88] sm:$0xf] %v5517
        %5526 = vst [vmem:[#allocation4 + $0xac] sm:$0xf] %v5518
        %5527 = vst [vmem:[#allocation4 + $0xd0] sm:$0xf] %v5519
        %5528 = vst [vmem:[#allocation4 + $0xf4] sm:$0xf] %v5520
        %5529 = vst [vmem:[#allocation4 + $0x118] sm:$0xf] %v5521
        %v5530 = vld [vmem:[%s1240 + $0x8] sm:$0xf]
        %v5531 = vld [vmem:[%s1240 + $0xc] sm:$0x1]
        %v5532 = vld [vmem:[%s1240 + $0x18] sm:$0xf]
        %v5533 = vld [vmem:[%s1240 + $0x1c] sm:$0x1]
        %v5534 = vld [vmem:[%s1240 + $0x28] sm:$0xf]
        %v5535 = vld [vmem:[%s1240 + $0x2c] sm:$0x1]
        %v5536 = vld [vmem:[%s1240 + $0x38] sm:$0xf]
        %v5537 = vld [vmem:[%s1240 + $0x3c] sm:$0x1]
        %v5538 = vld [vmem:[%s1240 + $0x48] sm:$0xf]
        %v5539 = vld [vmem:[%s1240 + $0x4c] sm:$0x1]
        %v5540 = vld [vmem:[%s1240 + $0x58] sm:$0xf]
        %v5541 = vld [vmem:[%s1240 + $0x5c] sm:$0x1]
        %v5542 = vld [vmem:[%s1240 + $0x68] sm:$0xf]
        %v5543 = vld [vmem:[%s1240 + $0x6c] sm:$0x1]
        %v5544 = vld [vmem:[%s1240 + $0x78] sm:$0xf]
        %v5545 = vld [vmem:[%s1240 + $0x7c] sm:$0x1]
        %v5547 = vshrl.u32 %v5530, 16
        %v5549 = vrot.slane %v5547, 4
        %v5550 = vshll.u32 %v5530, 16
        %v5552 = vrot.slane %v5550, 5
        %v5553 = vor.u32 %v5549, %v5552
        %v5554 = vrot.slane %v5553, 4
        %v5556 = vshll.u32 %v5531, 16
        %v5558 = vrot.slane %v5556, 5
        %v5559 = vsel %vm815, %v5554, %v5558
        %v5561 = vshrl.u32 %v5532, 16
        %v5563 = vrot.slane %v5561, 4
        %v5564 = vshll.u32 %v5532, 16
        %v5566 = vrot.slane %v5564, 5
        %v5567 = vor.u32 %v5563, %v5566
        %v5568 = vrot.slane %v5567, 4
        %v5570 = vshll.u32 %v5533, 16
        %v5572 = vrot.slane %v5570, 5
        %v5573 = vsel %vm815, %v5568, %v5572
        %v5575 = vshrl.u32 %v5534, 16
        %v5577 = vrot.slane %v5575, 4
        %v5578 = vshll.u32 %v5534, 16
        %v5580 = vrot.slane %v5578, 5
        %v5581 = vor.u32 %v5577, %v5580
        %v5582 = vrot.slane %v5581, 4
        %v5584 = vshll.u32 %v5535, 16
        %v5586 = vrot.slane %v5584, 5
        %v5587 = vsel %vm815, %v5582, %v5586
        %v5589 = vshrl.u32 %v5536, 16
        %v5591 = vrot.slane %v5589, 4
        %v5592 = vshll.u32 %v5536, 16
        %v5594 = vrot.slane %v5592, 5
        %v5595 = vor.u32 %v5591, %v5594
        %v5596 = vrot.slane %v5595, 4
        %v5598 = vshll.u32 %v5537, 16
        %v5600 = vrot.slane %v5598, 5
        %v5601 = vsel %vm815, %v5596, %v5600
        %v5603 = vshrl.u32 %v5538, 16
        %v5605 = vrot.slane %v5603, 4
        %v5606 = vshll.u32 %v5538, 16
        %v5608 = vrot.slane %v5606, 5
        %v5609 = vor.u32 %v5605, %v5608
        %v5610 = vrot.slane %v5609, 4
        %v5612 = vshll.u32 %v5539, 16
        %v5614 = vrot.slane %v5612, 5
        %v5615 = vsel %vm815, %v5610, %v5614
        %v5617 = vshrl.u32 %v5540, 16
        %v5619 = vrot.slane %v5617, 4
        %v5620 = vshll.u32 %v5540, 16
        %v5622 = vrot.slane %v5620, 5
        %v5623 = vor.u32 %v5619, %v5622
        %v5624 = vrot.slane %v5623, 4
        %v5626 = vshll.u32 %v5541, 16
        %v5628 = vrot.slane %v5626, 5
        %v5629 = vsel %vm815, %v5624, %v5628
        %v5631 = vshrl.u32 %v5542, 16
        %v5633 = vrot.slane %v5631, 4
        %v5634 = vshll.u32 %v5542, 16
        %v5636 = vrot.slane %v5634, 5
        %v5637 = vor.u32 %v5633, %v5636
        %v5638 = vrot.slane %v5637, 4
        %v5640 = vshll.u32 %v5543, 16
        %v5642 = vrot.slane %v5640, 5
        %v5643 = vsel %vm815, %v5638, %v5642
        %v5645 = vshrl.u32 %v5544, 16
        %v5647 = vrot.slane %v5645, 4
        %v5648 = vshll.u32 %v5544, 16
        %v5650 = vrot.slane %v5648, 5
        %v5651 = vor.u32 %v5647, %v5650
        %v5652 = vrot.slane %v5651, 4
        %v5654 = vshll.u32 %v5545, 16
        %v5656 = vrot.slane %v5654, 5
        %v5657 = vsel %vm815, %v5652, %v5656
        %5666 = vst [vmem:[#allocation4 + $0x20] sm:$0xf] %v5559
        %5667 = vst [vmem:[#allocation4 + $0x44] sm:$0xf] %v5573
        %5668 = vst [vmem:[#allocation4 + $0x68] sm:$0xf] %v5587
        %5669 = vst [vmem:[#allocation4 + $0x8c] sm:$0xf] %v5601
        %5670 = vst [vmem:[#allocation4 + $0xb0] sm:$0xf] %v5615
        %5671 = vst [vmem:[#allocation4 + $0xd4] sm:$0xf] %v5629
        %5672 = vst [vmem:[#allocation4 + $0xf8] sm:$0xf] %v5643
        %5673 = vst [vmem:[#allocation4 + $0x11c] sm:$0xf] %v5657
        %v5674 = vld [vmem:[#allocation4] sm:$0xff]
        %v5675 = vld [vmem:[#allocation4 + $0x8] sm:$0xff]
        %v5676 = vld [vmem:[#allocation4 + $0x10] sm:$0xff]
        %v5677 = vld [vmem:[#allocation4 + $0x18] sm:$0xff]
        %v5678 = vld [vmem:[#allocation4 + $0x20] sm:$0xf]
        %v5679 = vld [vmem:[#allocation4 + $0x24] sm:$0xff]
        %v5680 = vld [vmem:[#allocation4 + $0x2c] sm:$0xff]
        %v5681 = vld [vmem:[#allocation4 + $0x34] sm:$0xff]
        %v5682 = vld [vmem:[#allocation4 + $0x3c] sm:$0xff]
        %v5683 = vld [vmem:[#allocation4 + $0x44] sm:$0xf]
        %v5684 = vld [vmem:[#allocation4 + $0x48] sm:$0xff]
        %v5685 = vld [vmem:[#allocation4 + $0x50] sm:$0xff]
        %v5686 = vld [vmem:[#allocation4 + $0x58] sm:$0xff]
        %v5687 = vld [vmem:[#allocation4 + $0x60] sm:$0xff]
        %v5688 = vld [vmem:[#allocation4 + $0x68] sm:$0xf]
        %v5689 = vld [vmem:[#allocation4 + $0x6c] sm:$0xff]
        %v5690 = vld [vmem:[#allocation4 + $0x74] sm:$0xff]
        %v5691 = vld [vmem:[#allocation4 + $0x7c] sm:$0xff]
        %v5692 = vld [vmem:[#allocation4 + $0x84] sm:$0xff]
        %v5693 = vld [vmem:[#allocation4 + $0x8c] sm:$0xf]
        %v5694 = vld [vmem:[#allocation4 + $0x90] sm:$0xff]
        %v5695 = vld [vmem:[#allocation4 + $0x98] sm:$0xff]
        %v5696 = vld [vmem:[#allocation4 + $0xa0] sm:$0xff]
        %v5697 = vld [vmem:[#allocation4 + $0xa8] sm:$0xff]
        %v5698 = vld [vmem:[#allocation4 + $0xb0] sm:$0xf]
        %v5699 = vld [vmem:[#allocation4 + $0xb4] sm:$0xff]
        %v5700 = vld [vmem:[#allocation4 + $0xbc] sm:$0xff]
        %v5701 = vld [vmem:[#allocation4 + $0xc4] sm:$0xff]
        %v5702 = vld [vmem:[#allocation4 + $0xcc] sm:$0xff]
        %v5703 = vld [vmem:[#allocation4 + $0xd4] sm:$0xf]
        %v5704 = vld [vmem:[#allocation4 + $0xd8] sm:$0xff]
        %v5705 = vld [vmem:[#allocation4 + $0xe0] sm:$0xff]
        %v5706 = vld [vmem:[#allocation4 + $0xe8] sm:$0xff]
        %v5707 = vld [vmem:[#allocation4 + $0xf0] sm:$0xff]
        %v5708 = vld [vmem:[#allocation4 + $0xf8] sm:$0xf]
        %v5709 = vld [vmem:[#allocation4 + $0xfc] sm:$0xff]
        %v5710 = vld [vmem:[#allocation4 + $0x104] sm:$0xff]
        %v5711 = vld [vmem:[#allocation4 + $0x10c] sm:$0xff]
        %v5712 = vld [vmem:[#allocation4 + $0x114] sm:$0xff]
        %v5713 = vld [vmem:[#allocation4 + $0x11c] sm:$0xf]
        %v5714 = vld [vmem:[#allocation10] sm:$0xf]
        %v5715 = vld [vmem:[#allocation10 + $0x4] sm:$0xf]
        %v5716 = vld [vmem:[#allocation10 + $0x8] sm:$0xf]
        %v5717 = vld [vmem:[#allocation10 + $0xc] sm:$0xf]
        %v5718 = vld [vmem:[#allocation10 + $0x10] sm:$0xf]
        %v5719 = vld [vmem:[#allocation10 + $0x14] sm:$0xf]
        %v5720 = vld [vmem:[#allocation10 + $0x18] sm:$0xf]
        %v5721 = vld [vmem:[#allocation10 + $0x1c] sm:$0xf]
        %v5722 = vld [vmem:[#allocation10 + $0x20] sm:$0xf]
        %v5723 = vld [vmem:[#allocation10 + $0x24] sm:$0xf]
        %v5724 = vld [vmem:[#allocation10 + $0x28] sm:$0xf]
        %v5725 = vld [vmem:[#allocation10 + $0x2c] sm:$0xf]
        %v5726 = vld [vmem:[#allocation10 + $0x30] sm:$0xf]
        %v5727 = vld [vmem:[#allocation10 + $0x34] sm:$0xf]
        %v5728 = vld [vmem:[#allocation10 + $0x38] sm:$0xf]
        %v5729 = vld [vmem:[#allocation10 + $0x3c] sm:$0xf]
        %v5730 = vld [vmem:[#allocation10 + $0x40] sm:$0xf]
        %v5731 = vld [vmem:[#allocation10 + $0x44] sm:$0xf]
        %v5732 = vld [vmem:[#allocation10 + $0x48] sm:$0xf]
        %v5733 = vld [vmem:[#allocation10 + $0x4c] sm:$0xf]
        %v5734 = vld [vmem:[#allocation10 + $0x50] sm:$0xf]
        %v5735 = vld [vmem:[#allocation10 + $0x54] sm:$0xf]
        %v5736 = vld [vmem:[#allocation10 + $0x58] sm:$0xf]
        %v5737 = vld [vmem:[#allocation10 + $0x5c] sm:$0xf]
        %v5738 = vld [vmem:[#allocation10 + $0x60] sm:$0xf]
        %v5739 = vld [vmem:[#allocation10 + $0x64] sm:$0xf]
        %v5740 = vld [vmem:[#allocation10 + $0x68] sm:$0xf]
        %v5741 = vld [vmem:[#allocation10 + $0x6c] sm:$0xf]
        %v5742 = vld [vmem:[#allocation10 + $0x70] sm:$0xf]
        %v5743 = vld [vmem:[#allocation10 + $0x74] sm:$0xf]
        %v5744 = vld [vmem:[#allocation10 + $0x78] sm:$0xf]
        %v5745 = vld [vmem:[#allocation10 + $0x7c] sm:$0xf]
        %v5746 = vld [vmem:[#allocation10 + $0x80] sm:$0xf]
        %v5747 = vld [vmem:[#allocation10 + $0x84] sm:$0xf]
        %v5748 = vld [vmem:[#allocation10 + $0x88] sm:$0xf]
        %v5749 = vld [vmem:[#allocation10 + $0x8c] sm:$0xf]
        %v5750 = vld [vmem:[#allocation10 + $0x90] sm:$0xf]
        %v5751 = vld [vmem:[#allocation10 + $0x94] sm:$0xf]
        %v5752 = vld [vmem:[#allocation10 + $0x98] sm:$0xf]
        %v5753 = vld [vmem:[#allocation10 + $0x9c] sm:$0xf]
        %v5754 = vld [vmem:[#allocation10 + $0xa0] sm:$0xf]
        %v5755 = vld [vmem:[#allocation10 + $0xa4] sm:$0xf]
        %v5756 = vld [vmem:[#allocation10 + $0xa8] sm:$0xf]
        %v5757 = vld [vmem:[#allocation10 + $0xac] sm:$0xf]
        %v5758 = vld [vmem:[#allocation10 + $0xb0] sm:$0xf]
        %v5759 = vld [vmem:[#allocation10 + $0xb4] sm:$0xf]
        %v5760 = vld [vmem:[#allocation10 + $0xb8] sm:$0xf]
        %v5761 = vld [vmem:[#allocation10 + $0xbc] sm:$0xf]
        %v5762 = vld [vmem:[#allocation10 + $0xc0] sm:$0xf]
        %v5763 = vld [vmem:[#allocation10 + $0xc4] sm:$0xf]
        %v5764 = vld [vmem:[#allocation10 + $0xc8] sm:$0xf]
        %v5765 = vld [vmem:[#allocation10 + $0xcc] sm:$0xf]
        %v5766 = vld [vmem:[#allocation10 + $0xd0] sm:$0xf]
        %v5767 = vld [vmem:[#allocation10 + $0xd4] sm:$0xf]
        %v5768 = vld [vmem:[#allocation10 + $0xd8] sm:$0xf]
        %v5769 = vld [vmem:[#allocation10 + $0xdc] sm:$0xf]
        %v5770 = vld [vmem:[#allocation10 + $0xe0] sm:$0xf]
        %v5771 = vld [vmem:[#allocation10 + $0xe4] sm:$0xf]
        %v5772 = vld [vmem:[#allocation10 + $0xe8] sm:$0xf]
        %v5773 = vld [vmem:[#allocation10 + $0xec] sm:$0xf]
        %v5774 = vld [vmem:[#allocation10 + $0xf0] sm:$0xf]
        %v5775 = vld [vmem:[#allocation10 + $0xf4] sm:$0xf]
        %v5776 = vld [vmem:[#allocation10 + $0xf8] sm:$0xf]
        %v5777 = vld [vmem:[#allocation10 + $0xfc] sm:$0xf]
        %v5778 = vld [vmem:[#allocation10 + $0x100] sm:$0xf]
        %v5779 = vld [vmem:[#allocation10 + $0x104] sm:$0xf]
        %v5780 = vld [vmem:[#allocation10 + $0x108] sm:$0xf]
        %v5781 = vld [vmem:[#allocation10 + $0x10c] sm:$0xf]
        %v5782 = vld [vmem:[#allocation10 + $0x110] sm:$0xf]
        %v5783 = vld [vmem:[#allocation10 + $0x114] sm:$0xf]
        %v5784 = vld [vmem:[#allocation10 + $0x118] sm:$0xf]
        %v5785 = vld [vmem:[#allocation10 + $0x11c] sm:$0xf]
        %v5786 = vld [vmem:[#allocation10 + $0x120] sm:$0xf]
        %v5787 = vld [vmem:[#allocation10 + $0x124] sm:$0xf]
        %v5788 = vld [vmem:[#allocation10 + $0x128] sm:$0xf]
        %v5789 = vld [vmem:[#allocation10 + $0x12c] sm:$0xf]
        %v5790 = vld [vmem:[#allocation10 + $0x130] sm:$0xf]
        %v5791 = vld [vmem:[#allocation10 + $0x134] sm:$0xf]
        %v5792 = vld [vmem:[#allocation10 + $0x138] sm:$0xf]
        %v5793 = vld [vmem:[#allocation10 + $0x13c] sm:$0xf]
        %v5794 = vld [vmem:[#allocation10 + $0x140] sm:$0xf]
        %v5795 = vld [vmem:[#allocation10 + $0x144] sm:$0xf]
        %v5796 = vld [vmem:[#allocation10 + $0x148] sm:$0xf]
        %v5797 = vld [vmem:[#allocation10 + $0x14c] sm:$0xf]
        %v5798 = vld [vmem:[#allocation10 + $0x150] sm:$0xf]
        %v5799 = vld [vmem:[#allocation10 + $0x154] sm:$0xf]
        %v5800 = vld [vmem:[#allocation10 + $0x158] sm:$0xf]
        %v5801 = vld [vmem:[#allocation10 + $0x15c] sm:$0xf]
        %v5802 = vld [vmem:[#allocation10 + $0x160] sm:$0xf]
        %v5803 = vld [vmem:[#allocation10 + $0x164] sm:$0xf]
        %v5804 = vld [vmem:[#allocation10 + $0x168] sm:$0xf]
        %v5805 = vld [vmem:[#allocation10 + $0x16c] sm:$0xf]
        %v5806 = vld [vmem:[#allocation10 + $0x170] sm:$0xf]
        %v5807 = vld [vmem:[#allocation10 + $0x174] sm:$0xf]
        %v5808 = vld [vmem:[#allocation10 + $0x178] sm:$0xf]
        %v5809 = vld [vmem:[#allocation10 + $0x17c] sm:$0xf]
        %v5810 = vld [vmem:[#allocation10 + $0x180] sm:$0xf]
        %v5811 = vld [vmem:[#allocation10 + $0x184] sm:$0xf]
        %v5812 = vld [vmem:[#allocation10 + $0x188] sm:$0xf]
        %v5813 = vld [vmem:[#allocation10 + $0x18c] sm:$0xf]
        %v5814 = vld [vmem:[#allocation10 + $0x190] sm:$0xf]
        %v5815 = vld [vmem:[#allocation10 + $0x194] sm:$0xf]
        %v5816 = vld [vmem:[#allocation10 + $0x198] sm:$0xf]
        %v5817 = vld [vmem:[#allocation10 + $0x19c] sm:$0xf]
        %v5818 = vld [vmem:[#allocation10 + $0x1a0] sm:$0xf]
        %v5819 = vld [vmem:[#allocation10 + $0x1a4] sm:$0xf]
        %v5820 = vld [vmem:[#allocation10 + $0x1a8] sm:$0xf]
        %v5821 = vld [vmem:[#allocation10 + $0x1ac] sm:$0xf]
        %v5822 = vld [vmem:[#allocation10 + $0x1b0] sm:$0xf]
        %v5823 = vld [vmem:[#allocation10 + $0x1b4] sm:$0xf]
        %v5824 = vld [vmem:[#allocation10 + $0x1b8] sm:$0xf]
        %v5825 = vld [vmem:[#allocation10 + $0x1bc] sm:$0xf]
        %v5826 = vld [vmem:[#allocation10 + $0x1c0] sm:$0xf]
        %v5827 = vld [vmem:[#allocation10 + $0x1c4] sm:$0xf]
        %v5828 = vld [vmem:[#allocation10 + $0x1c8] sm:$0xf]
        %v5829 = vld [vmem:[#allocation10 + $0x1cc] sm:$0xf]
        %v5830 = vld [vmem:[#allocation10 + $0x1d0] sm:$0xf]
        %v5831 = vld [vmem:[#allocation10 + $0x1d4] sm:$0xf]
        %v5832 = vld [vmem:[#allocation10 + $0x1d8] sm:$0xf]
        %v5833 = vld [vmem:[#allocation10 + $0x1dc] sm:$0xf]
        %v5834 = vld [vmem:[#allocation10 + $0x1e0] sm:$0xf]
        %v5835 = vld [vmem:[#allocation10 + $0x1e4] sm:$0xf]
        %v5836 = vld [vmem:[#allocation10 + $0x1e8] sm:$0xf]
        %v5837 = vld [vmem:[#allocation10 + $0x1ec] sm:$0xf]
        %v5838 = vld [vmem:[#allocation10 + $0x1f0] sm:$0xf]
        %v5839 = vld [vmem:[#allocation10 + $0x1f4] sm:$0xf]
        %v5840 = vld [vmem:[#allocation10 + $0x1f8] sm:$0xf]
        %v5841 = vld [vmem:[#allocation10 + $0x1fc] sm:$0xf]
        %v5842 = vld [vmem:[#allocation10 + $0x200] sm:$0xf]
        %v5843 = vld [vmem:[#allocation10 + $0x204] sm:$0xf]
        %v5844 = vld [vmem:[#allocation10 + $0x208] sm:$0xf]
        %v5845 = vld [vmem:[#allocation10 + $0x20c] sm:$0xf]
        %v5846 = vld [vmem:[#allocation10 + $0x210] sm:$0xf]
        %v5847 = vld [vmem:[#allocation10 + $0x214] sm:$0xf]
        %v5848 = vld [vmem:[#allocation10 + $0x218] sm:$0xf]
        %v5849 = vld [vmem:[#allocation10 + $0x21c] sm:$0xf]
        %v5850 = vld [vmem:[#allocation10 + $0x220] sm:$0xf]
        %v5851 = vld [vmem:[#allocation10 + $0x224] sm:$0xf]
        %v5852 = vld [vmem:[#allocation10 + $0x228] sm:$0xf]
        %v5853 = vld [vmem:[#allocation10 + $0x22c] sm:$0xf]
        %v5854 = vld [vmem:[#allocation10 + $0x230] sm:$0xf]
        %v5855 = vld [vmem:[#allocation10 + $0x234] sm:$0xf]
        %v5856 = vld [vmem:[#allocation10 + $0x238] sm:$0xf]
        %v5857 = vld [vmem:[#allocation10 + $0x23c] sm:$0xf]
        %v5858 = vld [vmem:[%s8] sm:$0x1]
        %v5860 = vlaneseq
        %v5861 = vshrl.u32 %v5860, 7
        %v5862 = vsub.s32 0, %v5861
        %v5863 = vrot.slane %v5858, %v5862
        %v5905 = vunpack.c.l.b16 %v5674
        %v5906 = vunpack.c.h.b16 %v5674
        %v5907 = vunpack.c.l.b16 %v5675
        %v5908 = vunpack.c.h.b16 %v5675
        %v5909 = vunpack.c.l.b16 %v5676
        %v5910 = vunpack.c.h.b16 %v5676
        %v5911 = vunpack.c.l.b16 %v5677
        %v5912 = vunpack.c.h.b16 %v5677
        %v5913 = vunpack.c.l.b16 %v5678
        %v5914 = vunpack.c.l.b16 %v5679
        %v5915 = vunpack.c.h.b16 %v5679
        %v5916 = vunpack.c.l.b16 %v5680
        %v5917 = vunpack.c.h.b16 %v5680
        %v5918 = vunpack.c.l.b16 %v5681
        %v5919 = vunpack.c.h.b16 %v5681
        %v5920 = vunpack.c.l.b16 %v5682
        %v5921 = vunpack.c.h.b16 %v5682
        %v5922 = vunpack.c.l.b16 %v5683
        %v5923 = vunpack.c.l.b16 %v5684
        %v5924 = vunpack.c.h.b16 %v5684
        %v5925 = vunpack.c.l.b16 %v5685
        %v5926 = vunpack.c.h.b16 %v5685
        %v5927 = vunpack.c.l.b16 %v5686
        %v5928 = vunpack.c.h.b16 %v5686
        %v5929 = vunpack.c.l.b16 %v5687
        %v5930 = vunpack.c.h.b16 %v5687
        %v5931 = vunpack.c.l.b16 %v5688
        %v5932 = vunpack.c.l.b16 %v5689
        %v5933 = vunpack.c.h.b16 %v5689
        %v5934 = vunpack.c.l.b16 %v5690
        %v5935 = vunpack.c.h.b16 %v5690
        %v5936 = vunpack.c.l.b16 %v5691
        %v5937 = vunpack.c.h.b16 %v5691
        %v5938 = vunpack.c.l.b16 %v5692
        %v5939 = vunpack.c.h.b16 %v5692
        %v5940 = vunpack.c.l.b16 %v5693
        %v5941 = vunpack.c.l.b16 %v5694
        %v5942 = vunpack.c.h.b16 %v5694
        %v5943 = vunpack.c.l.b16 %v5695
        %v5944 = vunpack.c.h.b16 %v5695
        %v5945 = vunpack.c.l.b16 %v5696
        %v5946 = vunpack.c.h.b16 %v5696
        %v5947 = vunpack.c.l.b16 %v5697
        %v5948 = vunpack.c.h.b16 %v5697
        %v5949 = vunpack.c.l.b16 %v5698
        %v5950 = vunpack.c.l.b16 %v5699
        %v5951 = vunpack.c.h.b16 %v5699
        %v5952 = vunpack.c.l.b16 %v5700
        %v5953 = vunpack.c.h.b16 %v5700
        %v5954 = vunpack.c.l.b16 %v5701
        %v5955 = vunpack.c.h.b16 %v5701
        %v5956 = vunpack.c.l.b16 %v5702
        %v5957 = vunpack.c.h.b16 %v5702
        %v5958 = vunpack.c.l.b16 %v5703
        %v5959 = vunpack.c.l.b16 %v5704
        %v5960 = vunpack.c.h.b16 %v5704
        %v5961 = vunpack.c.l.b16 %v5705
        %v5962 = vunpack.c.h.b16 %v5705
        %v5963 = vunpack.c.l.b16 %v5706
        %v5964 = vunpack.c.h.b16 %v5706
        %v5965 = vunpack.c.l.b16 %v5707
        %v5966 = vunpack.c.h.b16 %v5707
        %v5967 = vunpack.c.l.b16 %v5708
        %v5968 = vunpack.c.l.b16 %v5709
        %v5969 = vunpack.c.h.b16 %v5709
        %v5970 = vunpack.c.l.b16 %v5710
        %v5971 = vunpack.c.h.b16 %v5710
        %v5972 = vunpack.c.l.b16 %v5711
        %v5973 = vunpack.c.h.b16 %v5711
        %v5974 = vunpack.c.l.b16 %v5712
        %v5975 = vunpack.c.h.b16 %v5712
        %v5976 = vunpack.c.l.b16 %v5713
        %v5977 = vpack.c.b16 %v5914, %v5905
        %v5978 = vpack.c.b16 %v5915, %v5906
        %v5979 = vpack.c.b16 %v5916, %v5907
        %v5980 = vpack.c.b16 %v5917, %v5908
        %v5981 = vpack.c.b16 %v5918, %v5909
        %v5982 = vpack.c.b16 %v5919, %v5910
        %v5983 = vpack.c.b16 %v5920, %v5911
        %v5984 = vpack.c.b16 %v5921, %v5912
        %v5985 = vpack.c.b16 %v5922, %v5913
        %v5986 = vpack.c.b16 %v5932, %v5923
        %v5987 = vpack.c.b16 %v5933, %v5924
        %v5988 = vpack.c.b16 %v5934, %v5925
        %v5989 = vpack.c.b16 %v5935, %v5926
        %v5990 = vpack.c.b16 %v5936, %v5927
        %v5991 = vpack.c.b16 %v5937, %v5928
        %v5992 = vpack.c.b16 %v5938, %v5929
        %v5993 = vpack.c.b16 %v5939, %v5930
        %v5994 = vpack.c.b16 %v5940, %v5931
        %v5995 = vpack.c.b16 %v5950, %v5941
        %v5996 = vpack.c.b16 %v5951, %v5942
        %v5997 = vpack.c.b16 %v5952, %v5943
        %v5998 = vpack.c.b16 %v5953, %v5944
        %v5999 = vpack.c.b16 %v5954, %v5945
        %v6000 = vpack.c.b16 %v5955, %v5946
        %v6001 = vpack.c.b16 %v5956, %v5947
        %v6002 = vpack.c.b16 %v5957, %v5948
        %v6003 = vpack.c.b16 %v5958, %v5949
        %v6004 = vpack.c.b16 %v5968, %v5959
        %v6005 = vpack.c.b16 %v5969, %v5960
        %v6006 = vpack.c.b16 %v5970, %v5961
        %v6007 = vpack.c.b16 %v5971, %v5962
        %v6008 = vpack.c.b16 %v5972, %v5963
        %v6009 = vpack.c.b16 %v5973, %v5964
        %v6010 = vpack.c.b16 %v5974, %v5965
        %v6011 = vpack.c.b16 %v5975, %v5966
        %v6012 = vpack.c.b16 %v5976, %v5967
        %v6193 = vunpack.c.l.b16 %v5714
        %v6194 = vunpack.c.l.b16 %v5715
        %v6195 = vunpack.c.l.b16 %v5716
        %v6196 = vunpack.c.l.b16 %v5717
        %v6197 = vunpack.c.l.b16 %v5718
        %v6198 = vunpack.c.l.b16 %v5719
        %v6199 = vunpack.c.l.b16 %v5720
        %v6200 = vunpack.c.l.b16 %v5721
        %v6201 = vunpack.c.l.b16 %v5722
        %v6202 = vunpack.c.l.b16 %v5723
        %v6203 = vunpack.c.l.b16 %v5724
        %v6204 = vunpack.c.l.b16 %v5725
        %v6205 = vunpack.c.l.b16 %v5726
        %v6206 = vunpack.c.l.b16 %v5727
        %v6207 = vunpack.c.l.b16 %v5728
        %v6208 = vunpack.c.l.b16 %v5729
        %v6209 = vunpack.c.l.b16 %v5730
        %v6210 = vunpack.c.l.b16 %v5731
        %v6211 = vunpack.c.l.b16 %v5732
        %v6212 = vunpack.c.l.b16 %v5733
        %v6213 = vunpack.c.l.b16 %v5734
        %v6214 = vunpack.c.l.b16 %v5735
        %v6215 = vunpack.c.l.b16 %v5736
        %v6216 = vunpack.c.l.b16 %v5737
        %v6217 = vunpack.c.l.b16 %v5738
        %v6218 = vunpack.c.l.b16 %v5739
        %v6219 = vunpack.c.l.b16 %v5740
        %v6220 = vunpack.c.l.b16 %v5741
        %v6221 = vunpack.c.l.b16 %v5742
        %v6222 = vunpack.c.l.b16 %v5743
        %v6223 = vunpack.c.l.b16 %v5744
        %v6224 = vunpack.c.l.b16 %v5745
        %v6225 = vunpack.c.l.b16 %v5746
        %v6226 = vunpack.c.l.b16 %v5747
        %v6227 = vunpack.c.l.b16 %v5748
        %v6228 = vunpack.c.l.b16 %v5749
        %v6229 = vunpack.c.l.b16 %v5750
        %v6230 = vunpack.c.l.b16 %v5751
        %v6231 = vunpack.c.l.b16 %v5752
        %v6232 = vunpack.c.l.b16 %v5753
        %v6233 = vunpack.c.l.b16 %v5754
        %v6234 = vunpack.c.l.b16 %v5755
        %v6235 = vunpack.c.l.b16 %v5756
        %v6236 = vunpack.c.l.b16 %v5757
        %v6237 = vunpack.c.l.b16 %v5758
        %v6238 = vunpack.c.l.b16 %v5759
        %v6239 = vunpack.c.l.b16 %v5760
        %v6240 = vunpack.c.l.b16 %v5761
        %v6241 = vunpack.c.l.b16 %v5762
        %v6242 = vunpack.c.l.b16 %v5763
        %v6243 = vunpack.c.l.b16 %v5764
        %v6244 = vunpack.c.l.b16 %v5765
        %v6245 = vunpack.c.l.b16 %v5766
        %v6246 = vunpack.c.l.b16 %v5767
        %v6247 = vunpack.c.l.b16 %v5768
        %v6248 = vunpack.c.l.b16 %v5769
        %v6249 = vunpack.c.l.b16 %v5770
        %v6250 = vunpack.c.l.b16 %v5771
        %v6251 = vunpack.c.l.b16 %v5772
        %v6252 = vunpack.c.l.b16 %v5773
        %v6253 = vunpack.c.l.b16 %v5774
        %v6254 = vunpack.c.l.b16 %v5775
        %v6255 = vunpack.c.l.b16 %v5776
        %v6256 = vunpack.c.l.b16 %v5777
        %v6257 = vunpack.c.l.b16 %v5778
        %v6258 = vunpack.c.l.b16 %v5779
        %v6259 = vunpack.c.l.b16 %v5780
        %v6260 = vunpack.c.l.b16 %v5781
        %v6261 = vunpack.c.l.b16 %v5782
        %v6262 = vunpack.c.l.b16 %v5783
        %v6263 = vunpack.c.l.b16 %v5784
        %v6264 = vunpack.c.l.b16 %v5785
        %v6265 = vunpack.c.l.b16 %v5786
        %v6266 = vunpack.c.l.b16 %v5787
        %v6267 = vunpack.c.l.b16 %v5788
        %v6268 = vunpack.c.l.b16 %v5789
        %v6269 = vunpack.c.l.b16 %v5790
        %v6270 = vunpack.c.l.b16 %v5791
        %v6271 = vunpack.c.l.b16 %v5792
        %v6272 = vunpack.c.l.b16 %v5793
        %v6273 = vunpack.c.l.b16 %v5794
        %v6274 = vunpack.c.l.b16 %v5795
        %v6275 = vunpack.c.l.b16 %v5796
        %v6276 = vunpack.c.l.b16 %v5797
        %v6277 = vunpack.c.l.b16 %v5798
        %v6278 = vunpack.c.l.b16 %v5799
        %v6279 = vunpack.c.l.b16 %v5800
        %v6280 = vunpack.c.l.b16 %v5801
        %v6281 = vunpack.c.l.b16 %v5802
        %v6282 = vunpack.c.l.b16 %v5803
        %v6283 = vunpack.c.l.b16 %v5804
        %v6284 = vunpack.c.l.b16 %v5805
        %v6285 = vunpack.c.l.b16 %v5806
        %v6286 = vunpack.c.l.b16 %v5807
        %v6287 = vunpack.c.l.b16 %v5808
        %v6288 = vunpack.c.l.b16 %v5809
        %v6289 = vunpack.c.l.b16 %v5810
        %v6290 = vunpack.c.l.b16 %v5811
        %v6291 = vunpack.c.l.b16 %v5812
        %v6292 = vunpack.c.l.b16 %v5813
        %v6293 = vunpack.c.l.b16 %v5814
        %v6294 = vunpack.c.l.b16 %v5815
        %v6295 = vunpack.c.l.b16 %v5816
        %v6296 = vunpack.c.l.b16 %v5817
        %v6297 = vunpack.c.l.b16 %v5818
        %v6298 = vunpack.c.l.b16 %v5819
        %v6299 = vunpack.c.l.b16 %v5820
        %v6300 = vunpack.c.l.b16 %v5821
        %v6301 = vunpack.c.l.b16 %v5822
        %v6302 = vunpack.c.l.b16 %v5823
        %v6303 = vunpack.c.l.b16 %v5824
        %v6304 = vunpack.c.l.b16 %v5825
        %v6305 = vunpack.c.l.b16 %v5826
        %v6306 = vunpack.c.l.b16 %v5827
        %v6307 = vunpack.c.l.b16 %v5828
        %v6308 = vunpack.c.l.b16 %v5829
        %v6309 = vunpack.c.l.b16 %v5830
        %v6310 = vunpack.c.l.b16 %v5831
        %v6311 = vunpack.c.l.b16 %v5832
        %v6312 = vunpack.c.l.b16 %v5833
        %v6313 = vunpack.c.l.b16 %v5834
        %v6314 = vunpack.c.l.b16 %v5835
        %v6315 = vunpack.c.l.b16 %v5836
        %v6316 = vunpack.c.l.b16 %v5837
        %v6317 = vunpack.c.l.b16 %v5838
        %v6318 = vunpack.c.l.b16 %v5839
        %v6319 = vunpack.c.l.b16 %v5840
        %v6320 = vunpack.c.l.b16 %v5841
        %v6321 = vunpack.c.l.b16 %v5842
        %v6322 = vunpack.c.l.b16 %v5843
        %v6323 = vunpack.c.l.b16 %v5844
        %v6324 = vunpack.c.l.b16 %v5845
        %v6325 = vunpack.c.l.b16 %v5846
        %v6326 = vunpack.c.l.b16 %v5847
        %v6327 = vunpack.c.l.b16 %v5848
        %v6328 = vunpack.c.l.b16 %v5849
        %v6329 = vunpack.c.l.b16 %v5850
        %v6330 = vunpack.c.l.b16 %v5851
        %v6331 = vunpack.c.l.b16 %v5852
        %v6332 = vunpack.c.l.b16 %v5853
        %v6333 = vunpack.c.l.b16 %v5854
        %v6334 = vunpack.c.l.b16 %v5855
        %v6335 = vunpack.c.l.b16 %v5856
        %v6336 = vunpack.c.l.b16 %v5857
        %v6337 = vpack.c.b16 %v6194, %v6193
        %v6338 = vpack.c.b16 %v6196, %v6195
        %v6339 = vpack.c.b16 %v6198, %v6197
        %v6340 = vpack.c.b16 %v6200, %v6199
        %v6341 = vpack.c.b16 %v6202, %v6201
        %v6342 = vpack.c.b16 %v6204, %v6203
        %v6343 = vpack.c.b16 %v6206, %v6205
        %v6344 = vpack.c.b16 %v6208, %v6207
        %v6345 = vpack.c.b16 %v6210, %v6209
        %v6346 = vpack.c.b16 %v6212, %v6211
        %v6347 = vpack.c.b16 %v6214, %v6213
        %v6348 = vpack.c.b16 %v6216, %v6215
        %v6349 = vpack.c.b16 %v6218, %v6217
        %v6350 = vpack.c.b16 %v6220, %v6219
        %v6351 = vpack.c.b16 %v6222, %v6221
        %v6352 = vpack.c.b16 %v6224, %v6223
        %v6353 = vpack.c.b16 %v6226, %v6225
        %v6354 = vpack.c.b16 %v6228, %v6227
        %v6355 = vpack.c.b16 %v6230, %v6229
        %v6356 = vpack.c.b16 %v6232, %v6231
        %v6357 = vpack.c.b16 %v6234, %v6233
        %v6358 = vpack.c.b16 %v6236, %v6235
        %v6359 = vpack.c.b16 %v6238, %v6237
        %v6360 = vpack.c.b16 %v6240, %v6239
        %v6361 = vpack.c.b16 %v6242, %v6241
        %v6362 = vpack.c.b16 %v6244, %v6243
        %v6363 = vpack.c.b16 %v6246, %v6245
        %v6364 = vpack.c.b16 %v6248, %v6247
        %v6365 = vpack.c.b16 %v6250, %v6249
        %v6366 = vpack.c.b16 %v6252, %v6251
        %v6367 = vpack.c.b16 %v6254, %v6253
        %v6368 = vpack.c.b16 %v6256, %v6255
        %v6369 = vpack.c.b16 %v6258, %v6257
        %v6370 = vpack.c.b16 %v6260, %v6259
        %v6371 = vpack.c.b16 %v6262, %v6261
        %v6372 = vpack.c.b16 %v6264, %v6263
        %v6373 = vpack.c.b16 %v6266, %v6265
        %v6374 = vpack.c.b16 %v6268, %v6267
        %v6375 = vpack.c.b16 %v6270, %v6269
        %v6376 = vpack.c.b16 %v6272, %v6271
        %v6377 = vpack.c.b16 %v6274, %v6273
        %v6378 = vpack.c.b16 %v6276, %v6275
        %v6379 = vpack.c.b16 %v6278, %v6277
        %v6380 = vpack.c.b16 %v6280, %v6279
        %v6381 = vpack.c.b16 %v6282, %v6281
        %v6382 = vpack.c.b16 %v6284, %v6283
        %v6383 = vpack.c.b16 %v6286, %v6285
        %v6384 = vpack.c.b16 %v6288, %v6287
        %v6385 = vpack.c.b16 %v6290, %v6289
        %v6386 = vpack.c.b16 %v6292, %v6291
        %v6387 = vpack.c.b16 %v6294, %v6293
        %v6388 = vpack.c.b16 %v6296, %v6295
        %v6389 = vpack.c.b16 %v6298, %v6297
        %v6390 = vpack.c.b16 %v6300, %v6299
        %v6391 = vpack.c.b16 %v6302, %v6301
        %v6392 = vpack.c.b16 %v6304, %v6303
        %v6393 = vpack.c.b16 %v6306, %v6305
        %v6394 = vpack.c.b16 %v6308, %v6307
        %v6395 = vpack.c.b16 %v6310, %v6309
        %v6396 = vpack.c.b16 %v6312, %v6311
        %v6397 = vpack.c.b16 %v6314, %v6313
        %v6398 = vpack.c.b16 %v6316, %v6315
        %v6399 = vpack.c.b16 %v6318, %v6317
        %v6400 = vpack.c.b16 %v6320, %v6319
        %v6401 = vpack.c.b16 %v6322, %v6321
        %v6402 = vpack.c.b16 %v6324, %v6323
        %v6403 = vpack.c.b16 %v6326, %v6325
        %v6404 = vpack.c.b16 %v6328, %v6327
        %v6405 = vpack.c.b16 %v6330, %v6329
        %v6406 = vpack.c.b16 %v6332, %v6331
        %v6407 = vpack.c.b16 %v6334, %v6333
        %v6408 = vpack.c.b16 %v6336, %v6335
        %6481 = vmatprep.subr.bf16.mxu0 0
        %6482 = vmatpush1.bf16.msra.mxu0 %v6344
        %6483 = vmatprep.subr.bf16.mxu0 0
        %6484 = vmatpush1.bf16.msra.mxu0 %v6343
        %6485 = vmatprep.subr.bf16.mxu0 0
        %6486 = vmatpush1.bf16.msra.mxu0 %v6342
        %6487 = vmatprep.subr.bf16.mxu0 0
        %6488 = vmatpush1.bf16.msra.mxu0 %v6341
        %6489 = vmatprep.subr.bf16.mxu0 0
        %6490 = vmatpush1.bf16.msra.mxu0 %v6340
        %6491 = vmatprep.subr.bf16.mxu0 0
        %6492 = vmatpush1.bf16.msra.mxu0 %v6339
        %6493 = vmatprep.subr.bf16.mxu0 0
        %6494 = vmatpush1.bf16.msra.mxu0 %v6338
        %6495 = vmatprep.subr.bf16.mxu0 0
        %6496 = vmatpush1.bf16.msra.mxu0 %v6337
        %6497 = vmatprep.subr.bf16.mxu0 0
        %6498 = vmatpush2.bf16.msra.mxu0 %v6352
        %6499 = vmatprep.subr.bf16.mxu0 0
        %6500 = vmatpush2.bf16.msra.mxu0 %v6351
        %6501 = vmatprep.subr.bf16.mxu0 0
        %6502 = vmatpush2.bf16.msra.mxu0 %v6350
        %6503 = vmatprep.subr.bf16.mxu0 0
        %6504 = vmatpush2.bf16.msra.mxu0 %v6349
        %6505 = vmatprep.subr.bf16.mxu0 0
        %6506 = vmatpush2.bf16.msra.mxu0 %v6348
        %6507 = vmatprep.subr.bf16.mxu0 0
        %6508 = vmatpush2.bf16.msra.mxu0 %v6347
        %6509 = vmatprep.subr.bf16.mxu0 0
        %6510 = vmatpush2.bf16.msra.mxu0 %v6346
        %6511 = vmatprep.subr.bf16.mxu0 0
        %6512 = vmatpush2.bf16.msra.mxu0 %v6345
        %6513 = vmatprep.mubr.bf16.mxu0 %v5978
        %6514 = vmatmul.mubr.bf16.gmra.mxu0 %v5977
        %v6515 = vpop.f32.mrf.mxu0
        %v6516 = vadd.f32 %v5863, %v6515
        %v6517 = vpop.f32.mrf.mxu0
        %v6518 = vpop.f32.mrf.mxu0
        %v6519 = vadd.f32 %v5863, %v6518
        %v6520 = vpop.f32.mrf.mxu0
        %6521 = vmatprep.mubr.bf16.mxu0 %v5987
        %6522 = vmatmul.mubr.bf16.gmra.mxu0 %v5986
        %v6523 = vpop.f32.mrf.mxu0
        %v6524 = vadd.f32 %v5863, %v6523
        %v6525 = vpop.f32.mrf.mxu0
        %v6526 = vpop.f32.mrf.mxu0
        %v6527 = vadd.f32 %v5863, %v6526
        %v6528 = vpop.f32.mrf.mxu0
        %6529 = vmatprep.mubr.bf16.mxu0 %v5996
        %6530 = vmatmul.mubr.bf16.gmra.mxu0 %v5995
        %v6531 = vpop.f32.mrf.mxu0
        %v6532 = vadd.f32 %v5863, %v6531
        %v6533 = vpop.f32.mrf.mxu0
        %v6534 = vpop.f32.mrf.mxu0
        %v6535 = vadd.f32 %v5863, %v6534
        %v6536 = vpop.f32.mrf.mxu0
        %6537 = vmatprep.mubr.bf16.mxu0 %v6005
        %6538 = vmatmul.mubr.bf16.gmra.mxu0 %v6004
        %v6539 = vpop.f32.mrf.mxu0
        %v6540 = vadd.f32 %v5863, %v6539
        %v6541 = vpop.f32.mrf.mxu0
        %v6542 = vpop.f32.mrf.mxu0
        %v6543 = vadd.f32 %v5863, %v6542
        %v6544 = vpop.f32.mrf.mxu0
        %6545 = vdwg.mxu0
        %6546 = vmatprep.subr.bf16.mxu0 0
        %6547 = vmatpush1.bf16.msra.mxu0 %v6360
        %6548 = vmatprep.subr.bf16.mxu0 0
        %6549 = vmatpush1.bf16.msra.mxu0 %v6359
        %6550 = vmatprep.subr.bf16.mxu0 0
        %6551 = vmatpush1.bf16.msra.mxu0 %v6358
        %6552 = vmatprep.subr.bf16.mxu0 0
        %6553 = vmatpush1.bf16.msra.mxu0 %v6357
        %6554 = vmatprep.subr.bf16.mxu0 0
        %6555 = vmatpush1.bf16.msra.mxu0 %v6356
        %6556 = vmatprep.subr.bf16.mxu0 0
        %6557 = vmatpush1.bf16.msra.mxu0 %v6355
        %6558 = vmatprep.subr.bf16.mxu0 0
        %6559 = vmatpush1.bf16.msra.mxu0 %v6354
        %6560 = vmatprep.subr.bf16.mxu0 0
        %6561 = vmatpush1.bf16.msra.mxu0 %v6353
        %6562 = vmatprep.subr.bf16.mxu0 0
        %6563 = vmatpush2.bf16.msra.mxu0 %v6368
        %6564 = vmatprep.subr.bf16.mxu0 0
        %6565 = vmatpush2.bf16.msra.mxu0 %v6367
        %6566 = vmatprep.subr.bf16.mxu0 0
        %6567 = vmatpush2.bf16.msra.mxu0 %v6366
        %6568 = vmatprep.subr.bf16.mxu0 0
        %6569 = vmatpush2.bf16.msra.mxu0 %v6365
        %6570 = vmatprep.subr.bf16.mxu0 0
        %6571 = vmatpush2.bf16.msra.mxu0 %v6364
        %6572 = vmatprep.subr.bf16.mxu0 0
        %6573 = vmatpush2.bf16.msra.mxu0 %v6363
        %6574 = vmatprep.subr.bf16.mxu0 0
        %6575 = vmatpush2.bf16.msra.mxu0 %v6362
        %6576 = vmatprep.subr.bf16.mxu0 0
        %6577 = vmatpush2.bf16.msra.mxu0 %v6361
        %6578 = vmatprep.mubr.bf16.mxu0 %v5980
        %6579 = vmatmul.mubr.bf16.gmra.mxu0 %v5979
        %v6580 = vpop.f32.mrf.mxu0
        %v6581 = vadd.f32 %v6516, %v6580
        %v6582 = vpop.f32.mrf.mxu0
        %v6583 = vpop.f32.mrf.mxu0
        %v6584 = vadd.f32 %v6519, %v6583
        %v6585 = vpop.f32.mrf.mxu0
        %6586 = vmatprep.mubr.bf16.mxu0 %v5989
        %6587 = vmatmul.mubr.bf16.gmra.mxu0 %v5988
        %v6588 = vpop.f32.mrf.mxu0
        %v6589 = vadd.f32 %v6524, %v6588
        %v6590 = vpop.f32.mrf.mxu0
        %v6591 = vpop.f32.mrf.mxu0
        %v6592 = vadd.f32 %v6527, %v6591
        %v6593 = vpop.f32.mrf.mxu0
        %6594 = vmatprep.mubr.bf16.mxu0 %v5998
        %6595 = vmatmul.mubr.bf16.gmra.mxu0 %v5997
        %v6596 = vpop.f32.mrf.mxu0
        %v6597 = vadd.f32 %v6532, %v6596
        %v6598 = vpop.f32.mrf.mxu0
        %v6599 = vpop.f32.mrf.mxu0
        %v6600 = vadd.f32 %v6535, %v6599
        %v6601 = vpop.f32.mrf.mxu0
        %6602 = vmatprep.mubr.bf16.mxu0 %v6007
        %6603 = vmatmul.mubr.bf16.gmra.mxu0 %v6006
        %v6604 = vpop.f32.mrf.mxu0
        %v6605 = vadd.f32 %v6540, %v6604
        %v6606 = vpop.f32.mrf.mxu0
        %v6607 = vpop.f32.mrf.mxu0
        %v6608 = vadd.f32 %v6543, %v6607
        %v6609 = vpop.f32.mrf.mxu0
        %6610 = vdwg.mxu0
        %6611 = vmatprep.subr.bf16.mxu0 0
        %6612 = vmatpush1.bf16.msra.mxu0 %v6376
        %6613 = vmatprep.subr.bf16.mxu0 0
        %6614 = vmatpush1.bf16.msra.mxu0 %v6375
        %6615 = vmatprep.subr.bf16.mxu0 0
        %6616 = vmatpush1.bf16.msra.mxu0 %v6374
        %6617 = vmatprep.subr.bf16.mxu0 0
        %6618 = vmatpush1.bf16.msra.mxu0 %v6373
        %6619 = vmatprep.subr.bf16.mxu0 0
        %6620 = vmatpush1.bf16.msra.mxu0 %v6372
        %6621 = vmatprep.subr.bf16.mxu0 0
        %6622 = vmatpush1.bf16.msra.mxu0 %v6371
        %6623 = vmatprep.subr.bf16.mxu0 0
        %6624 = vmatpush1.bf16.msra.mxu0 %v6370
        %6625 = vmatprep.subr.bf16.mxu0 0
        %6626 = vmatpush1.bf16.msra.mxu0 %v6369
        %6627 = vmatprep.subr.bf16.mxu0 0
        %6628 = vmatpush2.bf16.msra.mxu0 %v6384
        %6629 = vmatprep.subr.bf16.mxu0 0
        %6630 = vmatpush2.bf16.msra.mxu0 %v6383
        %6631 = vmatprep.subr.bf16.mxu0 0
        %6632 = vmatpush2.bf16.msra.mxu0 %v6382
        %6633 = vmatprep.subr.bf16.mxu0 0
        %6634 = vmatpush2.bf16.msra.mxu0 %v6381
        %6635 = vmatprep.subr.bf16.mxu0 0
        %6636 = vmatpush2.bf16.msra.mxu0 %v6380
        %6637 = vmatprep.subr.bf16.mxu0 0
        %6638 = vmatpush2.bf16.msra.mxu0 %v6379
        %6639 = vmatprep.subr.bf16.mxu0 0
        %6640 = vmatpush2.bf16.msra.mxu0 %v6378
        %6641 = vmatprep.subr.bf16.mxu0 0
        %6642 = vmatpush2.bf16.msra.mxu0 %v6377
        %6643 = vmatprep.mubr.bf16.mxu0 %v5982
        %6644 = vmatmul.mubr.bf16.gmra.mxu0 %v5981
        %v6645 = vpop.f32.mrf.mxu0
        %v6646 = vadd.f32 %v6581, %v6645
        %v6647 = vpop.f32.mrf.mxu0
        %v6648 = vpop.f32.mrf.mxu0
        %v6649 = vadd.f32 %v6584, %v6648
        %v6650 = vpop.f32.mrf.mxu0
        %6651 = vmatprep.mubr.bf16.mxu0 %v5991
        %6652 = vmatmul.mubr.bf16.gmra.mxu0 %v5990
        %v6653 = vpop.f32.mrf.mxu0
        %v6654 = vadd.f32 %v6589, %v6653
        %v6655 = vpop.f32.mrf.mxu0
        %v6656 = vpop.f32.mrf.mxu0
        %v6657 = vadd.f32 %v6592, %v6656
        %v6658 = vpop.f32.mrf.mxu0
        %6659 = vmatprep.mubr.bf16.mxu0 %v6000
        %6660 = vmatmul.mubr.bf16.gmra.mxu0 %v5999
        %v6661 = vpop.f32.mrf.mxu0
        %v6662 = vadd.f32 %v6597, %v6661
        %v6663 = vpop.f32.mrf.mxu0
        %v6664 = vpop.f32.mrf.mxu0
        %v6665 = vadd.f32 %v6600, %v6664
        %v6666 = vpop.f32.mrf.mxu0
        %6667 = vmatprep.mubr.bf16.mxu0 %v6009
        %6668 = vmatmul.mubr.bf16.gmra.mxu0 %v6008
        %v6669 = vpop.f32.mrf.mxu0
        %v6670 = vadd.f32 %v6605, %v6669
        %v6671 = vpop.f32.mrf.mxu0
        %v6672 = vpop.f32.mrf.mxu0
        %v6673 = vadd.f32 %v6608, %v6672
        %v6674 = vpop.f32.mrf.mxu0
        %6675 = vdwg.mxu0
        %6676 = vmatprep.subr.bf16.mxu0 0
        %6677 = vmatpush1.bf16.msra.mxu0 %v6392
        %6678 = vmatprep.subr.bf16.mxu0 0
        %6679 = vmatpush1.bf16.msra.mxu0 %v6391
        %6680 = vmatprep.subr.bf16.mxu0 0
        %6681 = vmatpush1.bf16.msra.mxu0 %v6390
        %6682 = vmatprep.subr.bf16.mxu0 0
        %6683 = vmatpush1.bf16.msra.mxu0 %v6389
        %6684 = vmatprep.subr.bf16.mxu0 0
        %6685 = vmatpush1.bf16.msra.mxu0 %v6388
        %6686 = vmatprep.subr.bf16.mxu0 0
        %6687 = vmatpush1.bf16.msra.mxu0 %v6387
        %6688 = vmatprep.subr.bf16.mxu0 0
        %6689 = vmatpush1.bf16.msra.mxu0 %v6386
        %6690 = vmatprep.subr.bf16.mxu0 0
        %6691 = vmatpush1.bf16.msra.mxu0 %v6385
        %6692 = vmatprep.subr.bf16.mxu0 0
        %6693 = vmatpush2.bf16.msra.mxu0 %v6400
        %6694 = vmatprep.subr.bf16.mxu0 0
        %6695 = vmatpush2.bf16.msra.mxu0 %v6399
        %6696 = vmatprep.subr.bf16.mxu0 0
        %6697 = vmatpush2.bf16.msra.mxu0 %v6398
        %6698 = vmatprep.subr.bf16.mxu0 0
        %6699 = vmatpush2.bf16.msra.mxu0 %v6397
        %6700 = vmatprep.subr.bf16.mxu0 0
        %6701 = vmatpush2.bf16.msra.mxu0 %v6396
        %6702 = vmatprep.subr.bf16.mxu0 0
        %6703 = vmatpush2.bf16.msra.mxu0 %v6395
        %6704 = vmatprep.subr.bf16.mxu0 0
        %6705 = vmatpush2.bf16.msra.mxu0 %v6394
        %6706 = vmatprep.subr.bf16.mxu0 0
        %6707 = vmatpush2.bf16.msra.mxu0 %v6393
        %6708 = vmatprep.mubr.bf16.mxu0 %v5984
        %6709 = vmatmul.mubr.bf16.gmra.mxu0 %v5983
        %v6710 = vpop.f32.mrf.mxu0
        %v6711 = vadd.f32 %v6646, %v6710
        %v6712 = vpop.f32.mrf.mxu0
        %v6713 = vpop.f32.mrf.mxu0
        %v6714 = vadd.f32 %v6649, %v6713
        %v6715 = vpop.f32.mrf.mxu0
        %6716 = vmatprep.mubr.bf16.mxu0 %v5993
        %6717 = vmatmul.mubr.bf16.gmra.mxu0 %v5992
        %v6718 = vpop.f32.mrf.mxu0
        %v6719 = vadd.f32 %v6654, %v6718
        %v6720 = vpop.f32.mrf.mxu0
        %v6721 = vpop.f32.mrf.mxu0
        %v6722 = vadd.f32 %v6657, %v6721
        %v6723 = vpop.f32.mrf.mxu0
        %6724 = vmatprep.mubr.bf16.mxu0 %v6002
        %6725 = vmatmul.mubr.bf16.gmra.mxu0 %v6001
        %v6726 = vpop.f32.mrf.mxu0
        %v6727 = vadd.f32 %v6662, %v6726
        %v6728 = vpop.f32.mrf.mxu0
        %v6729 = vpop.f32.mrf.mxu0
        %v6730 = vadd.f32 %v6665, %v6729
        %v6731 = vpop.f32.mrf.mxu0
        %6732 = vmatprep.mubr.bf16.mxu0 %v6011
        %6733 = vmatmul.mubr.bf16.gmra.mxu0 %v6010
        %v6734 = vpop.f32.mrf.mxu0
        %v6735 = vadd.f32 %v6670, %v6734
        %v6736 = vpop.f32.mrf.mxu0
        %v6737 = vpop.f32.mrf.mxu0
        %v6738 = vadd.f32 %v6673, %v6737
        %v6739 = vpop.f32.mrf.mxu0
        %6740 = vdwg.mxu0
        %6741 = vmatprep.subr.bf16.mxu0 0
        %6742 = vmatpush1.bf16.msra.mxu0 %v6408
        %6743 = vmatprep.subr.bf16.mxu0 0
        %6744 = vmatpush1.bf16.msra.mxu0 %v6407
        %6745 = vmatprep.subr.bf16.mxu0 0
        %6746 = vmatpush1.bf16.msra.mxu0 %v6406
        %6747 = vmatprep.subr.bf16.mxu0 0
        %6748 = vmatpush1.bf16.msra.mxu0 %v6405
        %6749 = vmatprep.subr.bf16.mxu0 0
        %6750 = vmatpush1.bf16.msra.mxu0 %v6404
        %6751 = vmatprep.subr.bf16.mxu0 0
        %6752 = vmatpush1.bf16.msra.mxu0 %v6403
        %6753 = vmatprep.subr.bf16.mxu0 0
        %6754 = vmatpush1.bf16.msra.mxu0 %v6402
        %6755 = vmatprep.subr.bf16.mxu0 0
        %6756 = vmatpush1.bf16.msra.mxu0 %v6401
        %6757 = vmatprep.subr.bf16.mxu0 0
        %6758 = vmatpush2.bf16.msra.mxu0 0
        %6759 = vmatprep.subr.bf16.mxu0 0
        %6760 = vmatpush2.bf16.msra.mxu0 0
        %6761 = vmatprep.subr.bf16.mxu0 0
        %6762 = vmatpush2.bf16.msra.mxu0 0
        %6763 = vmatprep.subr.bf16.mxu0 0
        %6764 = vmatpush2.bf16.msra.mxu0 0
        %6765 = vmatprep.subr.bf16.mxu0 0
        %6766 = vmatpush2.bf16.msra.mxu0 0
        %6767 = vmatprep.subr.bf16.mxu0 0
        %6768 = vmatpush2.bf16.msra.mxu0 0
        %6769 = vmatprep.subr.bf16.mxu0 0
        %6770 = vmatpush2.bf16.msra.mxu0 0
        %6771 = vmatprep.subr.bf16.mxu0 0
        %6772 = vmatpush2.bf16.msra.mxu0 0
        %6773 = vmatprep.mubr.bf16.mxu0 0
        %6774 = vmatmul.mubr.bf16.gmra.mxu0 %v5985
        %v6775 = vpop.f32.mrf.mxu0
        %v6776 = vadd.f32 %v6711, %v6775
        %v6777 = vpop.f32.mrf.mxu0
        %v6778 = vpop.f32.mrf.mxu0
        %v6779 = vadd.f32 %v6714, %v6778
        %v6780 = vpop.f32.mrf.mxu0
        %6781 = vmatprep.mubr.bf16.mxu0 0
        %6782 = vmatmul.mubr.bf16.gmra.mxu0 %v5994
        %v6783 = vpop.f32.mrf.mxu0
        %v6784 = vadd.f32 %v6719, %v6783
        %v6785 = vpop.f32.mrf.mxu0
        %v6786 = vpop.f32.mrf.mxu0
        %v6787 = vadd.f32 %v6722, %v6786
        %v6788 = vpop.f32.mrf.mxu0
        %6789 = vmatprep.mubr.bf16.mxu0 0
        %6790 = vmatmul.mubr.bf16.gmra.mxu0 %v6003
        %v6791 = vpop.f32.mrf.mxu0
        %v6792 = vadd.f32 %v6727, %v6791
        %v6793 = vpop.f32.mrf.mxu0
        %v6794 = vpop.f32.mrf.mxu0
        %v6795 = vadd.f32 %v6730, %v6794
        %v6796 = vpop.f32.mrf.mxu0
        %6797 = vmatprep.mubr.bf16.mxu0 0
        %6798 = vmatmul.mubr.bf16.gmra.mxu0 %v6012
        %v6799 = vpop.f32.mrf.mxu0
        %v6800 = vadd.f32 %v6735, %v6799
        %v6801 = vpop.f32.mrf.mxu0
        %v6802 = vpop.f32.mrf.mxu0
        %v6803 = vadd.f32 %v6738, %v6802
        %v6804 = vpop.f32.mrf.mxu0
        %6805 = vdwg.mxu0
        %v6806 = vmax.f32 %v6776, 0.0
        %v6807 = vmax.f32 %v6779, 0.0
        %v6808 = vmax.f32 %v6784, 0.0
        %v6809 = vmax.f32 %v6787, 0.0
        %v6810 = vmax.f32 %v6792, 0.0
        %v6811 = vmax.f32 %v6795, 0.0
        %v6812 = vmax.f32 %v6800, 0.0
        %v6813 = vmax.f32 %v6803, 0.0
        %v6814 = vpack.c.bf16 %v6807, %v6806
        %v6815 = vpack.c.bf16 %v6809, %v6808
        %v6816 = vpack.c.bf16 %v6811, %v6810
        %v6817 = vpack.c.bf16 %v6813, %v6812
        %v6822 = vunpack.c.l.b16 %v6814
        %v6823 = vunpack.c.h.b16 %v6814
        %v6824 = vunpack.c.l.b16 %v6815
        %v6825 = vunpack.c.h.b16 %v6815
        %v6826 = vunpack.c.l.b16 %v6816
        %v6827 = vunpack.c.h.b16 %v6816
        %v6828 = vunpack.c.l.b16 %v6817
        %v6829 = vunpack.c.h.b16 %v6817
        %v6830 = vpack.c.b16 %v6822, %v6822
        %v6831 = vpack.c.b16 %v6823, %v6823
        %v6832 = vpack.c.b16 %v6824, %v6824
        %v6833 = vpack.c.b16 %v6825, %v6825
        %v6834 = vpack.c.b16 %v6826, %v6826
        %v6835 = vpack.c.b16 %v6827, %v6827
        %v6836 = vpack.c.b16 %v6828, %v6828
        %v6837 = vpack.c.b16 %v6829, %v6829
        %6846 = vst [vmem:[%s544 + $0x8] sm:$0xf] %v6830
        %6847 = vst [vmem:[%s544 + $0x18] sm:$0xf] %v6831
        %6848 = vst [vmem:[%s544 + $0x28] sm:$0xf] %v6832
        %6849 = vst [vmem:[%s544 + $0x38] sm:$0xf] %v6833
        %6850 = vst [vmem:[%s544 + $0x48] sm:$0xf] %v6834
        %6851 = vst [vmem:[%s544 + $0x58] sm:$0xf] %v6835
        %6852 = vst [vmem:[%s544 + $0x68] sm:$0xf] %v6836
        %6853 = vst [vmem:[%s544 + $0x78] sm:$0xf] %v6837
        %v6854 = vld [vmem:[#allocation3 + $0x4] sm:$0x8]
        %v6855 = vld [vmem:[#allocation3 + $0x8] sm:$0xf]
        %v6856 = vld [vmem:[#allocation3 + $0x14] sm:$0x8]
        %v6857 = vld [vmem:[#allocation3 + $0x18] sm:$0xf]
        %v6858 = vld [vmem:[#allocation3 + $0x24] sm:$0x8]
        %v6859 = vld [vmem:[#allocation3 + $0x28] sm:$0xf]
        %v6860 = vld [vmem:[#allocation3 + $0x34] sm:$0x8]
        %v6861 = vld [vmem:[#allocation3 + $0x38] sm:$0xf]
        %v6862 = vld [vmem:[#allocation3 + $0x44] sm:$0x8]
        %v6863 = vld [vmem:[#allocation3 + $0x48] sm:$0xf]
        %v6864 = vld [vmem:[#allocation3 + $0x54] sm:$0x8]
        %v6865 = vld [vmem:[#allocation3 + $0x58] sm:$0xf]
        %v6866 = vld [vmem:[#allocation3 + $0x64] sm:$0x8]
        %v6867 = vld [vmem:[#allocation3 + $0x68] sm:$0xf]
        %v6868 = vld [vmem:[#allocation3 + $0x74] sm:$0x8]
        %v6869 = vld [vmem:[#allocation3 + $0x78] sm:$0xf]
        %v6871 = vshrl.u32 %v6854, 16
        %v6873 = vrot.slane %v6871, 7
        %v6874 = vrot.slane %v6873, 4
        %v6876 = vshrl.u32 %v6855, 16
        %v6878 = vrot.slane %v6876, 7
        %v6879 = vshll.u32 %v6855, 16
        %v6881 = vor.u32 %v6878, %v6879
        %v6882 = vsel %vm660, %v6874, %v6881
        %v6884 = vshrl.u32 %v6856, 16
        %v6886 = vrot.slane %v6884, 7
        %v6887 = vrot.slane %v6886, 4
        %v6889 = vshrl.u32 %v6857, 16
        %v6891 = vrot.slane %v6889, 7
        %v6892 = vshll.u32 %v6857, 16
        %v6894 = vor.u32 %v6891, %v6892
        %v6895 = vsel %vm660, %v6887, %v6894
        %v6897 = vshrl.u32 %v6858, 16
        %v6899 = vrot.slane %v6897, 7
        %v6900 = vrot.slane %v6899, 4
        %v6902 = vshrl.u32 %v6859, 16
        %v6904 = vrot.slane %v6902, 7
        %v6905 = vshll.u32 %v6859, 16
        %v6907 = vor.u32 %v6904, %v6905
        %v6908 = vsel %vm660, %v6900, %v6907
        %v6910 = vshrl.u32 %v6860, 16
        %v6912 = vrot.slane %v6910, 7
        %v6913 = vrot.slane %v6912, 4
        %v6915 = vshrl.u32 %v6861, 16
        %v6917 = vrot.slane %v6915, 7
        %v6918 = vshll.u32 %v6861, 16
        %v6920 = vor.u32 %v6917, %v6918
        %v6921 = vsel %vm660, %v6913, %v6920
        %v6923 = vshrl.u32 %v6862, 16
        %v6925 = vrot.slane %v6923, 7
        %v6926 = vrot.slane %v6925, 4
        %v6928 = vshrl.u32 %v6863, 16
        %v6930 = vrot.slane %v6928, 7
        %v6931 = vshll.u32 %v6863, 16
        %v6933 = vor.u32 %v6930, %v6931
        %v6934 = vsel %vm660, %v6926, %v6933
        %v6936 = vshrl.u32 %v6864, 16
        %v6938 = vrot.slane %v6936, 7
        %v6939 = vrot.slane %v6938, 4
        %v6941 = vshrl.u32 %v6865, 16
        %v6943 = vrot.slane %v6941, 7
        %v6944 = vshll.u32 %v6865, 16
        %v6946 = vor.u32 %v6943, %v6944
        %v6947 = vsel %vm660, %v6939, %v6946
        %v6949 = vshrl.u32 %v6866, 16
        %v6951 = vrot.slane %v6949, 7
        %v6952 = vrot.slane %v6951, 4
        %v6954 = vshrl.u32 %v6867, 16
        %v6956 = vrot.slane %v6954, 7
        %v6957 = vshll.u32 %v6867, 16
        %v6959 = vor.u32 %v6956, %v6957
        %v6960 = vsel %vm660, %v6952, %v6959
        %v6962 = vshrl.u32 %v6868, 16
        %v6964 = vrot.slane %v6962, 7
        %v6965 = vrot.slane %v6964, 4
        %v6967 = vshrl.u32 %v6869, 16
        %v6969 = vrot.slane %v6967, 7
        %v6970 = vshll.u32 %v6869, 16
        %v6972 = vor.u32 %v6969, %v6970
        %v6973 = vsel %vm660, %v6965, %v6972
        %6982 = vst [vmem:[#allocation4] sm:$0xf] %v6882
        %6983 = vst [vmem:[#allocation4 + $0x24] sm:$0xf] %v6895
        %6984 = vst [vmem:[#allocation4 + $0x48] sm:$0xf] %v6908
        %6985 = vst [vmem:[#allocation4 + $0x6c] sm:$0xf] %v6921
        %6986 = vst [vmem:[#allocation4 + $0x90] sm:$0xf] %v6934
        %6987 = vst [vmem:[#allocation4 + $0xb4] sm:$0xf] %v6947
        %6988 = vst [vmem:[#allocation4 + $0xd8] sm:$0xf] %v6960
        %6989 = vst [vmem:[#allocation4 + $0xfc] sm:$0xf] %v6973
        %v6990 = vld [vmem:[#allocation3 + $0x8] sm:$0xf]
        %v6991 = vld [vmem:[#allocation3 + $0x18] sm:$0xf]
        %v6992 = vld [vmem:[#allocation3 + $0x28] sm:$0xf]
        %v6993 = vld [vmem:[#allocation3 + $0x38] sm:$0xf]
        %v6994 = vld [vmem:[#allocation3 + $0x48] sm:$0xf]
        %v6995 = vld [vmem:[#allocation3 + $0x58] sm:$0xf]
        %v6996 = vld [vmem:[#allocation3 + $0x68] sm:$0xf]
        %v6997 = vld [vmem:[#allocation3 + $0x78] sm:$0xf]
        %6998 = vst [vmem:[#allocation4 + $0x4] sm:$0xf] %v6990
        %6999 = vst [vmem:[#allocation4 + $0x28] sm:$0xf] %v6991
        %7000 = vst [vmem:[#allocation4 + $0x4c] sm:$0xf] %v6992
        %7001 = vst [vmem:[#allocation4 + $0x70] sm:$0xf] %v6993
        %7002 = vst [vmem:[#allocation4 + $0x94] sm:$0xf] %v6994
        %7003 = vst [vmem:[#allocation4 + $0xb8] sm:$0xf] %v6995
        %7004 = vst [vmem:[#allocation4 + $0xdc] sm:$0xf] %v6996
        %7005 = vst [vmem:[#allocation4 + $0x100] sm:$0xf] %v6997
        %v7006 = vld [vmem:[#allocation3 + $0x8] sm:$0xf]
        %v7007 = vld [vmem:[#allocation3 + $0xc] sm:$0x1]
        %v7008 = vld [vmem:[#allocation3 + $0x18] sm:$0xf]
        %v7009 = vld [vmem:[#allocation3 + $0x1c] sm:$0x1]
        %v7010 = vld [vmem:[#allocation3 + $0x28] sm:$0xf]
        %v7011 = vld [vmem:[#allocation3 + $0x2c] sm:$0x1]
        %v7012 = vld [vmem:[#allocation3 + $0x38] sm:$0xf]
        %v7013 = vld [vmem:[#allocation3 + $0x3c] sm:$0x1]
        %v7014 = vld [vmem:[#allocation3 + $0x48] sm:$0xf]
        %v7015 = vld [vmem:[#allocation3 + $0x4c] sm:$0x1]
        %v7016 = vld [vmem:[#allocation3 + $0x58] sm:$0xf]
        %v7017 = vld [vmem:[#allocation3 + $0x5c] sm:$0x1]
        %v7018 = vld [vmem:[#allocation3 + $0x68] sm:$0xf]
        %v7019 = vld [vmem:[#allocation3 + $0x6c] sm:$0x1]
        %v7020 = vld [vmem:[#allocation3 + $0x78] sm:$0xf]
        %v7021 = vld [vmem:[#allocation3 + $0x7c] sm:$0x1]
        %v7023 = vshrl.u32 %v7006, 16
        %v7025 = vrot.slane %v7023, 4
        %v7026 = vshll.u32 %v7006, 16
        %v7028 = vrot.slane %v7026, 5
        %v7029 = vor.u32 %v7025, %v7028
        %v7030 = vrot.slane %v7029, 4
        %v7032 = vshll.u32 %v7007, 16
        %v7034 = vrot.slane %v7032, 5
        %v7035 = vsel %vm815, %v7030, %v7034
        %v7037 = vshrl.u32 %v7008, 16
        %v7039 = vrot.slane %v7037, 4
        %v7040 = vshll.u32 %v7008, 16
        %v7042 = vrot.slane %v7040, 5
        %v7043 = vor.u32 %v7039, %v7042
        %v7044 = vrot.slane %v7043, 4
        %v7046 = vshll.u32 %v7009, 16
        %v7048 = vrot.slane %v7046, 5
        %v7049 = vsel %vm815, %v7044, %v7048
        %v7051 = vshrl.u32 %v7010, 16
        %v7053 = vrot.slane %v7051, 4
        %v7054 = vshll.u32 %v7010, 16
        %v7056 = vrot.slane %v7054, 5
        %v7057 = vor.u32 %v7053, %v7056
        %v7058 = vrot.slane %v7057, 4
        %v7060 = vshll.u32 %v7011, 16
        %v7062 = vrot.slane %v7060, 5
        %v7063 = vsel %vm815, %v7058, %v7062
        %v7065 = vshrl.u32 %v7012, 16
        %v7067 = vrot.slane %v7065, 4
        %v7068 = vshll.u32 %v7012, 16
        %v7070 = vrot.slane %v7068, 5
        %v7071 = vor.u32 %v7067, %v7070
        %v7072 = vrot.slane %v7071, 4
        %v7074 = vshll.u32 %v7013, 16
        %v7076 = vrot.slane %v7074, 5
        %v7077 = vsel %vm815, %v7072, %v7076
        %v7079 = vshrl.u32 %v7014, 16
        %v7081 = vrot.slane %v7079, 4
        %v7082 = vshll.u32 %v7014, 16
        %v7084 = vrot.slane %v7082, 5
        %v7085 = vor.u32 %v7081, %v7084
        %v7086 = vrot.slane %v7085, 4
        %v7088 = vshll.u32 %v7015, 16
        %v7090 = vrot.slane %v7088, 5
        %v7091 = vsel %vm815, %v7086, %v7090
        %v7093 = vshrl.u32 %v7016, 16
        %v7095 = vrot.slane %v7093, 4
        %v7096 = vshll.u32 %v7016, 16
        %v7098 = vrot.slane %v7096, 5
        %v7099 = vor.u32 %v7095, %v7098
        %v7100 = vrot.slane %v7099, 4
        %v7102 = vshll.u32 %v7017, 16
        %v7104 = vrot.slane %v7102, 5
        %v7105 = vsel %vm815, %v7100, %v7104
        %v7107 = vshrl.u32 %v7018, 16
        %v7109 = vrot.slane %v7107, 4
        %v7110 = vshll.u32 %v7018, 16
        %v7112 = vrot.slane %v7110, 5
        %v7113 = vor.u32 %v7109, %v7112
        %v7114 = vrot.slane %v7113, 4
        %v7116 = vshll.u32 %v7019, 16
        %v7118 = vrot.slane %v7116, 5
        %v7119 = vsel %vm815, %v7114, %v7118
        %v7121 = vshrl.u32 %v7020, 16
        %v7123 = vrot.slane %v7121, 4
        %v7124 = vshll.u32 %v7020, 16
        %v7126 = vrot.slane %v7124, 5
        %v7127 = vor.u32 %v7123, %v7126
        %v7128 = vrot.slane %v7127, 4
        %v7130 = vshll.u32 %v7021, 16
        %v7132 = vrot.slane %v7130, 5
        %v7133 = vsel %vm815, %v7128, %v7132
        %7142 = vst [vmem:[#allocation4 + $0x8] sm:$0xf] %v7035
        %7143 = vst [vmem:[#allocation4 + $0x2c] sm:$0xf] %v7049
        %7144 = vst [vmem:[#allocation4 + $0x50] sm:$0xf] %v7063
        %7145 = vst [vmem:[#allocation4 + $0x74] sm:$0xf] %v7077
        %7146 = vst [vmem:[#allocation4 + $0x98] sm:$0xf] %v7091
        %7147 = vst [vmem:[#allocation4 + $0xbc] sm:$0xf] %v7105
        %7148 = vst [vmem:[#allocation4 + $0xe0] sm:$0xf] %v7119
        %7149 = vst [vmem:[#allocation4 + $0x104] sm:$0xf] %v7133
        %v7150 = vld [vmem:[%s544 + $0x4] sm:$0x8]
        %v7151 = vld [vmem:[%s544 + $0x8] sm:$0xf]
        %v7152 = vld [vmem:[%s544 + $0x14] sm:$0x8]
        %v7153 = vld [vmem:[%s544 + $0x18] sm:$0xf]
        %v7154 = vld [vmem:[%s544 + $0x24] sm:$0x8]
        %v7155 = vld [vmem:[%s544 + $0x28] sm:$0xf]
        %v7156 = vld [vmem:[%s544 + $0x34] sm:$0x8]
        %v7157 = vld [vmem:[%s544 + $0x38] sm:$0xf]
        %v7158 = vld [vmem:[%s544 + $0x44] sm:$0x8]
        %v7159 = vld [vmem:[%s544 + $0x48] sm:$0xf]
        %v7160 = vld [vmem:[%s544 + $0x54] sm:$0x8]
        %v7161 = vld [vmem:[%s544 + $0x58] sm:$0xf]
        %v7162 = vld [vmem:[%s544 + $0x64] sm:$0x8]
        %v7163 = vld [vmem:[%s544 + $0x68] sm:$0xf]
        %v7164 = vld [vmem:[%s544 + $0x74] sm:$0x8]
        %v7165 = vld [vmem:[%s544 + $0x78] sm:$0xf]
        %v7167 = vshrl.u32 %v7150, 16
        %v7169 = vrot.slane %v7167, 7
        %v7170 = vrot.slane %v7169, 4
        %v7172 = vshrl.u32 %v7151, 16
        %v7174 = vrot.slane %v7172, 7
        %v7175 = vshll.u32 %v7151, 16
        %v7177 = vor.u32 %v7174, %v7175
        %v7178 = vsel %vm660, %v7170, %v7177
        %v7180 = vshrl.u32 %v7152, 16
        %v7182 = vrot.slane %v7180, 7
        %v7183 = vrot.slane %v7182, 4
        %v7185 = vshrl.u32 %v7153, 16
        %v7187 = vrot.slane %v7185, 7
        %v7188 = vshll.u32 %v7153, 16
        %v7190 = vor.u32 %v7187, %v7188
        %v7191 = vsel %vm660, %v7183, %v7190
        %v7193 = vshrl.u32 %v7154, 16
        %v7195 = vrot.slane %v7193, 7
        %v7196 = vrot.slane %v7195, 4
        %v7198 = vshrl.u32 %v7155, 16
        %v7200 = vrot.slane %v7198, 7
        %v7201 = vshll.u32 %v7155, 16
        %v7203 = vor.u32 %v7200, %v7201
        %v7204 = vsel %vm660, %v7196, %v7203
        %v7206 = vshrl.u32 %v7156, 16
        %v7208 = vrot.slane %v7206, 7
        %v7209 = vrot.slane %v7208, 4
        %v7211 = vshrl.u32 %v7157, 16
        %v7213 = vrot.slane %v7211, 7
        %v7214 = vshll.u32 %v7157, 16
        %v7216 = vor.u32 %v7213, %v7214
        %v7217 = vsel %vm660, %v7209, %v7216
        %v7219 = vshrl.u32 %v7158, 16
        %v7221 = vrot.slane %v7219, 7
        %v7222 = vrot.slane %v7221, 4
        %v7224 = vshrl.u32 %v7159, 16
        %v7226 = vrot.slane %v7224, 7
        %v7227 = vshll.u32 %v7159, 16
        %v7229 = vor.u32 %v7226, %v7227
        %v7230 = vsel %vm660, %v7222, %v7229
        %v7232 = vshrl.u32 %v7160, 16
        %v7234 = vrot.slane %v7232, 7
        %v7235 = vrot.slane %v7234, 4
        %v7237 = vshrl.u32 %v7161, 16
        %v7239 = vrot.slane %v7237, 7
        %v7240 = vshll.u32 %v7161, 16
        %v7242 = vor.u32 %v7239, %v7240
        %v7243 = vsel %vm660, %v7235, %v7242
        %v7245 = vshrl.u32 %v7162, 16
        %v7247 = vrot.slane %v7245, 7
        %v7248 = vrot.slane %v7247, 4
        %v7250 = vshrl.u32 %v7163, 16
        %v7252 = vrot.slane %v7250, 7
        %v7253 = vshll.u32 %v7163, 16
        %v7255 = vor.u32 %v7252, %v7253
        %v7256 = vsel %vm660, %v7248, %v7255
        %v7258 = vshrl.u32 %v7164, 16
        %v7260 = vrot.slane %v7258, 7
        %v7261 = vrot.slane %v7260, 4
        %v7263 = vshrl.u32 %v7165, 16
        %v7265 = vrot.slane %v7263, 7
        %v7266 = vshll.u32 %v7165, 16
        %v7268 = vor.u32 %v7265, %v7266
        %v7269 = vsel %vm660, %v7261, %v7268
        %7278 = vst [vmem:[#allocation4 + $0xc] sm:$0xf] %v7178
        %7279 = vst [vmem:[#allocation4 + $0x30] sm:$0xf] %v7191
        %7280 = vst [vmem:[#allocation4 + $0x54] sm:$0xf] %v7204
        %7281 = vst [vmem:[#allocation4 + $0x78] sm:$0xf] %v7217
        %7282 = vst [vmem:[#allocation4 + $0x9c] sm:$0xf] %v7230
        %7283 = vst [vmem:[#allocation4 + $0xc0] sm:$0xf] %v7243
        %7284 = vst [vmem:[#allocation4 + $0xe4] sm:$0xf] %v7256
        %7285 = vst [vmem:[#allocation4 + $0x108] sm:$0xf] %v7269
        %v7286 = vld [vmem:[%s544 + $0x8] sm:$0xf]
        %v7287 = vld [vmem:[%s544 + $0x18] sm:$0xf]
        %v7288 = vld [vmem:[%s544 + $0x28] sm:$0xf]
        %v7289 = vld [vmem:[%s544 + $0x38] sm:$0xf]
        %v7290 = vld [vmem:[%s544 + $0x48] sm:$0xf]
        %v7291 = vld [vmem:[%s544 + $0x58] sm:$0xf]
        %v7292 = vld [vmem:[%s544 + $0x68] sm:$0xf]
        %v7293 = vld [vmem:[%s544 + $0x78] sm:$0xf]
        %7294 = vst [vmem:[#allocation4 + $0x10] sm:$0xf] %v7286
        %7295 = vst [vmem:[#allocation4 + $0x34] sm:$0xf] %v7287
        %7296 = vst [vmem:[#allocation4 + $0x58] sm:$0xf] %v7288
        %7297 = vst [vmem:[#allocation4 + $0x7c] sm:$0xf] %v7289
        %7298 = vst [vmem:[#allocation4 + $0xa0] sm:$0xf] %v7290
        %7299 = vst [vmem:[#allocation4 + $0xc4] sm:$0xf] %v7291
        %7300 = vst [vmem:[#allocation4 + $0xe8] sm:$0xf] %v7292
        %7301 = vst [vmem:[#allocation4 + $0x10c] sm:$0xf] %v7293
        %v7302 = vld [vmem:[%s544 + $0x8] sm:$0xf]
        %v7303 = vld [vmem:[%s544 + $0xc] sm:$0x1]
        %v7304 = vld [vmem:[%s544 + $0x18] sm:$0xf]
        %v7305 = vld [vmem:[%s544 + $0x1c] sm:$0x1]
        %v7306 = vld [vmem:[%s544 + $0x28] sm:$0xf]
        %v7307 = vld [vmem:[%s544 + $0x2c] sm:$0x1]
        %v7308 = vld [vmem:[%s544 + $0x38] sm:$0xf]
        %v7309 = vld [vmem:[%s544 + $0x3c] sm:$0x1]
        %v7310 = vld [vmem:[%s544 + $0x48] sm:$0xf]
        %v7311 = vld [vmem:[%s544 + $0x4c] sm:$0x1]
        %v7312 = vld [vmem:[%s544 + $0x58] sm:$0xf]
        %v7313 = vld [vmem:[%s544 + $0x5c] sm:$0x1]
        %v7314 = vld [vmem:[%s544 + $0x68] sm:$0xf]
        %v7315 = vld [vmem:[%s544 + $0x6c] sm:$0x1]
        %v7316 = vld [vmem:[%s544 + $0x78] sm:$0xf]
        %v7317 = vld [vmem:[%s544 + $0x7c] sm:$0x1]
        %v7319 = vshrl.u32 %v7302, 16
        %v7321 = vrot.slane %v7319, 4
        %v7322 = vshll.u32 %v7302, 16
        %v7324 = vrot.slane %v7322, 5
        %v7325 = vor.u32 %v7321, %v7324
        %v7326 = vrot.slane %v7325, 4
        %v7328 = vshll.u32 %v7303, 16
        %v7330 = vrot.slane %v7328, 5
        %v7331 = vsel %vm815, %v7326, %v7330
        %v7333 = vshrl.u32 %v7304, 16
        %v7335 = vrot.slane %v7333, 4
        %v7336 = vshll.u32 %v7304, 16
        %v7338 = vrot.slane %v7336, 5
        %v7339 = vor.u32 %v7335, %v7338
        %v7340 = vrot.slane %v7339, 4
        %v7342 = vshll.u32 %v7305, 16
        %v7344 = vrot.slane %v7342, 5
        %v7345 = vsel %vm815, %v7340, %v7344
        %v7347 = vshrl.u32 %v7306, 16
        %v7349 = vrot.slane %v7347, 4
        %v7350 = vshll.u32 %v7306, 16
        %v7352 = vrot.slane %v7350, 5
        %v7353 = vor.u32 %v7349, %v7352
        %v7354 = vrot.slane %v7353, 4
        %v7356 = vshll.u32 %v7307, 16
        %v7358 = vrot.slane %v7356, 5
        %v7359 = vsel %vm815, %v7354, %v7358
        %v7361 = vshrl.u32 %v7308, 16
        %v7363 = vrot.slane %v7361, 4
        %v7364 = vshll.u32 %v7308, 16
        %v7366 = vrot.slane %v7364, 5
        %v7367 = vor.u32 %v7363, %v7366
        %v7368 = vrot.slane %v7367, 4
        %v7370 = vshll.u32 %v7309, 16
        %v7372 = vrot.slane %v7370, 5
        %v7373 = vsel %vm815, %v7368, %v7372
        %v7375 = vshrl.u32 %v7310, 16
        %v7377 = vrot.slane %v7375, 4
        %v7378 = vshll.u32 %v7310, 16
        %v7380 = vrot.slane %v7378, 5
        %v7381 = vor.u32 %v7377, %v7380
        %v7382 = vrot.slane %v7381, 4
        %v7384 = vshll.u32 %v7311, 16
        %v7386 = vrot.slane %v7384, 5
        %v7387 = vsel %vm815, %v7382, %v7386
        %v7389 = vshrl.u32 %v7312, 16
        %v7391 = vrot.slane %v7389, 4
        %v7392 = vshll.u32 %v7312, 16
        %v7394 = vrot.slane %v7392, 5
        %v7395 = vor.u32 %v7391, %v7394
        %v7396 = vrot.slane %v7395, 4
        %v7398 = vshll.u32 %v7313, 16
        %v7400 = vrot.slane %v7398, 5
        %v7401 = vsel %vm815, %v7396, %v7400
        %v7403 = vshrl.u32 %v7314, 16
        %v7405 = vrot.slane %v7403, 4
        %v7406 = vshll.u32 %v7314, 16
        %v7408 = vrot.slane %v7406, 5
        %v7409 = vor.u32 %v7405, %v7408
        %v7410 = vrot.slane %v7409, 4
        %v7412 = vshll.u32 %v7315, 16
        %v7414 = vrot.slane %v7412, 5
        %v7415 = vsel %vm815, %v7410, %v7414
        %v7417 = vshrl.u32 %v7316, 16
        %v7419 = vrot.slane %v7417, 4
        %v7420 = vshll.u32 %v7316, 16
        %v7422 = vrot.slane %v7420, 5
        %v7423 = vor.u32 %v7419, %v7422
        %v7424 = vrot.slane %v7423, 4
        %v7426 = vshll.u32 %v7317, 16
        %v7428 = vrot.slane %v7426, 5
        %v7429 = vsel %vm815, %v7424, %v7428
        %7438 = vst [vmem:[#allocation4 + $0x14] sm:$0xf] %v7331
        %7439 = vst [vmem:[#allocation4 + $0x38] sm:$0xf] %v7345
        %7440 = vst [vmem:[#allocation4 + $0x5c] sm:$0xf] %v7359
        %7441 = vst [vmem:[#allocation4 + $0x80] sm:$0xf] %v7373
        %7442 = vst [vmem:[#allocation4 + $0xa4] sm:$0xf] %v7387
        %7443 = vst [vmem:[#allocation4 + $0xc8] sm:$0xf] %v7401
        %7444 = vst [vmem:[#allocation4 + $0xec] sm:$0xf] %v7415
        %7445 = vst [vmem:[#allocation4 + $0x110] sm:$0xf] %v7429
        %v7446 = vld [vmem:[%s3309 + $0x4] sm:$0x8]
        %v7447 = vld [vmem:[%s3309 + $0x8] sm:$0xf]
        %v7448 = vld [vmem:[%s3309 + $0x14] sm:$0x8]
        %v7449 = vld [vmem:[%s3309 + $0x18] sm:$0xf]
        %v7450 = vld [vmem:[%s3309 + $0x24] sm:$0x8]
        %v7451 = vld [vmem:[%s3309 + $0x28] sm:$0xf]
        %v7452 = vld [vmem:[%s3309 + $0x34] sm:$0x8]
        %v7453 = vld [vmem:[%s3309 + $0x38] sm:$0xf]
        %v7454 = vld [vmem:[%s3309 + $0x44] sm:$0x8]
        %v7455 = vld [vmem:[%s3309 + $0x48] sm:$0xf]
        %v7456 = vld [vmem:[%s3309 + $0x54] sm:$0x8]
        %v7457 = vld [vmem:[%s3309 + $0x58] sm:$0xf]
        %v7458 = vld [vmem:[%s3309 + $0x64] sm:$0x8]
        %v7459 = vld [vmem:[%s3309 + $0x68] sm:$0xf]
        %v7460 = vld [vmem:[%s3309 + $0x74] sm:$0x8]
        %v7461 = vld [vmem:[%s3309 + $0x78] sm:$0xf]
        %v7463 = vshrl.u32 %v7446, 16
        %v7465 = vrot.slane %v7463, 7
        %v7466 = vrot.slane %v7465, 4
        %v7468 = vshrl.u32 %v7447, 16
        %v7470 = vrot.slane %v7468, 7
        %v7471 = vshll.u32 %v7447, 16
        %v7473 = vor.u32 %v7470, %v7471
        %v7474 = vsel %vm660, %v7466, %v7473
        %v7476 = vshrl.u32 %v7448, 16
        %v7478 = vrot.slane %v7476, 7
        %v7479 = vrot.slane %v7478, 4
        %v7481 = vshrl.u32 %v7449, 16
        %v7483 = vrot.slane %v7481, 7
        %v7484 = vshll.u32 %v7449, 16
        %v7486 = vor.u32 %v7483, %v7484
        %v7487 = vsel %vm660, %v7479, %v7486
        %v7489 = vshrl.u32 %v7450, 16
        %v7491 = vrot.slane %v7489, 7
        %v7492 = vrot.slane %v7491, 4
        %v7494 = vshrl.u32 %v7451, 16
        %v7496 = vrot.slane %v7494, 7
        %v7497 = vshll.u32 %v7451, 16
        %v7499 = vor.u32 %v7496, %v7497
        %v7500 = vsel %vm660, %v7492, %v7499
        %v7502 = vshrl.u32 %v7452, 16
        %v7504 = vrot.slane %v7502, 7
        %v7505 = vrot.slane %v7504, 4
        %v7507 = vshrl.u32 %v7453, 16
        %v7509 = vrot.slane %v7507, 7
        %v7510 = vshll.u32 %v7453, 16
        %v7512 = vor.u32 %v7509, %v7510
        %v7513 = vsel %vm660, %v7505, %v7512
        %v7515 = vshrl.u32 %v7454, 16
        %v7517 = vrot.slane %v7515, 7
        %v7518 = vrot.slane %v7517, 4
        %v7520 = vshrl.u32 %v7455, 16
        %v7522 = vrot.slane %v7520, 7
        %v7523 = vshll.u32 %v7455, 16
        %v7525 = vor.u32 %v7522, %v7523
        %v7526 = vsel %vm660, %v7518, %v7525
        %v7528 = vshrl.u32 %v7456, 16
        %v7530 = vrot.slane %v7528, 7
        %v7531 = vrot.slane %v7530, 4
        %v7533 = vshrl.u32 %v7457, 16
        %v7535 = vrot.slane %v7533, 7
        %v7536 = vshll.u32 %v7457, 16
        %v7538 = vor.u32 %v7535, %v7536
        %v7539 = vsel %vm660, %v7531, %v7538
        %v7541 = vshrl.u32 %v7458, 16
        %v7543 = vrot.slane %v7541, 7
        %v7544 = vrot.slane %v7543, 4
        %v7546 = vshrl.u32 %v7459, 16
        %v7548 = vrot.slane %v7546, 7
        %v7549 = vshll.u32 %v7459, 16
        %v7551 = vor.u32 %v7548, %v7549
        %v7552 = vsel %vm660, %v7544, %v7551
        %v7554 = vshrl.u32 %v7460, 16
        %v7556 = vrot.slane %v7554, 7
        %v7557 = vrot.slane %v7556, 4
        %v7559 = vshrl.u32 %v7461, 16
        %v7561 = vrot.slane %v7559, 7
        %v7562 = vshll.u32 %v7461, 16
        %v7564 = vor.u32 %v7561, %v7562
        %v7565 = vsel %vm660, %v7557, %v7564
        %7574 = vst [vmem:[#allocation4 + $0x18] sm:$0xf] %v7474
        %7575 = vst [vmem:[#allocation4 + $0x3c] sm:$0xf] %v7487
        %7576 = vst [vmem:[#allocation4 + $0x60] sm:$0xf] %v7500
        %7577 = vst [vmem:[#allocation4 + $0x84] sm:$0xf] %v7513
        %7578 = vst [vmem:[#allocation4 + $0xa8] sm:$0xf] %v7526
        %7579 = vst [vmem:[#allocation4 + $0xcc] sm:$0xf] %v7539
        %7580 = vst [vmem:[#allocation4 + $0xf0] sm:$0xf] %v7552
        %7581 = vst [vmem:[#allocation4 + $0x114] sm:$0xf] %v7565
        %v7582 = vld [vmem:[%s3309 + $0x8] sm:$0xf]
        %v7583 = vld [vmem:[%s3309 + $0x18] sm:$0xf]
        %v7584 = vld [vmem:[%s3309 + $0x28] sm:$0xf]
        %v7585 = vld [vmem:[%s3309 + $0x38] sm:$0xf]
        %v7586 = vld [vmem:[%s3309 + $0x48] sm:$0xf]
        %v7587 = vld [vmem:[%s3309 + $0x58] sm:$0xf]
        %v7588 = vld [vmem:[%s3309 + $0x68] sm:$0xf]
        %v7589 = vld [vmem:[%s3309 + $0x78] sm:$0xf]
        %7590 = vst [vmem:[#allocation4 + $0x1c] sm:$0xf] %v7582
        %7591 = vst [vmem:[#allocation4 + $0x40] sm:$0xf] %v7583
        %7592 = vst [vmem:[#allocation4 + $0x64] sm:$0xf] %v7584
        %7593 = vst [vmem:[#allocation4 + $0x88] sm:$0xf] %v7585
        %7594 = vst [vmem:[#allocation4 + $0xac] sm:$0xf] %v7586
        %7595 = vst [vmem:[#allocation4 + $0xd0] sm:$0xf] %v7587
        %7596 = vst [vmem:[#allocation4 + $0xf4] sm:$0xf] %v7588
        %7597 = vst [vmem:[#allocation4 + $0x118] sm:$0xf] %v7589
        %v7598 = vld [vmem:[%s3309 + $0x8] sm:$0xf]
        %v7599 = vld [vmem:[%s3309 + $0xc] sm:$0x1]
        %v7600 = vld [vmem:[%s3309 + $0x18] sm:$0xf]
        %v7601 = vld [vmem:[%s3309 + $0x1c] sm:$0x1]
        %v7602 = vld [vmem:[%s3309 + $0x28] sm:$0xf]
        %v7603 = vld [vmem:[%s3309 + $0x2c] sm:$0x1]
        %v7604 = vld [vmem:[%s3309 + $0x38] sm:$0xf]
        %v7605 = vld [vmem:[%s3309 + $0x3c] sm:$0x1]
        %v7606 = vld [vmem:[%s3309 + $0x48] sm:$0xf]
        %v7607 = vld [vmem:[%s3309 + $0x4c] sm:$0x1]
        %v7608 = vld [vmem:[%s3309 + $0x58] sm:$0xf]
        %v7609 = vld [vmem:[%s3309 + $0x5c] sm:$0x1]
        %v7610 = vld [vmem:[%s3309 + $0x68] sm:$0xf]
        %v7611 = vld [vmem:[%s3309 + $0x6c] sm:$0x1]
        %v7612 = vld [vmem:[%s3309 + $0x78] sm:$0xf]
        %v7613 = vld [vmem:[%s3309 + $0x7c] sm:$0x1]
        %v7615 = vshrl.u32 %v7598, 16
        %v7617 = vrot.slane %v7615, 4
        %v7618 = vshll.u32 %v7598, 16
        %v7620 = vrot.slane %v7618, 5
        %v7621 = vor.u32 %v7617, %v7620
        %v7622 = vrot.slane %v7621, 4
        %v7624 = vshll.u32 %v7599, 16
        %v7626 = vrot.slane %v7624, 5
        %v7627 = vsel %vm815, %v7622, %v7626
        %v7629 = vshrl.u32 %v7600, 16
        %v7631 = vrot.slane %v7629, 4
        %v7632 = vshll.u32 %v7600, 16
        %v7634 = vrot.slane %v7632, 5
        %v7635 = vor.u32 %v7631, %v7634
        %v7636 = vrot.slane %v7635, 4
        %v7638 = vshll.u32 %v7601, 16
        %v7640 = vrot.slane %v7638, 5
        %v7641 = vsel %vm815, %v7636, %v7640
        %v7643 = vshrl.u32 %v7602, 16
        %v7645 = vrot.slane %v7643, 4
        %v7646 = vshll.u32 %v7602, 16
        %v7648 = vrot.slane %v7646, 5
        %v7649 = vor.u32 %v7645, %v7648
        %v7650 = vrot.slane %v7649, 4
        %v7652 = vshll.u32 %v7603, 16
        %v7654 = vrot.slane %v7652, 5
        %v7655 = vsel %vm815, %v7650, %v7654
        %v7657 = vshrl.u32 %v7604, 16
        %v7659 = vrot.slane %v7657, 4
        %v7660 = vshll.u32 %v7604, 16
        %v7662 = vrot.slane %v7660, 5
        %v7663 = vor.u32 %v7659, %v7662
        %v7664 = vrot.slane %v7663, 4
        %v7666 = vshll.u32 %v7605, 16
        %v7668 = vrot.slane %v7666, 5
        %v7669 = vsel %vm815, %v7664, %v7668
        %v7671 = vshrl.u32 %v7606, 16
        %v7673 = vrot.slane %v7671, 4
        %v7674 = vshll.u32 %v7606, 16
        %v7676 = vrot.slane %v7674, 5
        %v7677 = vor.u32 %v7673, %v7676
        %v7678 = vrot.slane %v7677, 4
        %v7680 = vshll.u32 %v7607, 16
        %v7682 = vrot.slane %v7680, 5
        %v7683 = vsel %vm815, %v7678, %v7682
        %v7685 = vshrl.u32 %v7608, 16
        %v7687 = vrot.slane %v7685, 4
        %v7688 = vshll.u32 %v7608, 16
        %v7690 = vrot.slane %v7688, 5
        %v7691 = vor.u32 %v7687, %v7690
        %v7692 = vrot.slane %v7691, 4
        %v7694 = vshll.u32 %v7609, 16
        %v7696 = vrot.slane %v7694, 5
        %v7697 = vsel %vm815, %v7692, %v7696
        %v7699 = vshrl.u32 %v7610, 16
        %v7701 = vrot.slane %v7699, 4
        %v7702 = vshll.u32 %v7610, 16
        %v7704 = vrot.slane %v7702, 5
        %v7705 = vor.u32 %v7701, %v7704
        %v7706 = vrot.slane %v7705, 4
        %v7708 = vshll.u32 %v7611, 16
        %v7710 = vrot.slane %v7708, 5
        %v7711 = vsel %vm815, %v7706, %v7710
        %v7713 = vshrl.u32 %v7612, 16
        %v7715 = vrot.slane %v7713, 4
        %v7716 = vshll.u32 %v7612, 16
        %v7718 = vrot.slane %v7716, 5
        %v7719 = vor.u32 %v7715, %v7718
        %v7720 = vrot.slane %v7719, 4
        %v7722 = vshll.u32 %v7613, 16
        %v7724 = vrot.slane %v7722, 5
        %v7725 = vsel %vm815, %v7720, %v7724
        %7734 = vst [vmem:[#allocation4 + $0x20] sm:$0xf] %v7627
        %7735 = vst [vmem:[#allocation4 + $0x44] sm:$0xf] %v7641
        %7736 = vst [vmem:[#allocation4 + $0x68] sm:$0xf] %v7655
        %7737 = vst [vmem:[#allocation4 + $0x8c] sm:$0xf] %v7669
        %7738 = vst [vmem:[#allocation4 + $0xb0] sm:$0xf] %v7683
        %7739 = vst [vmem:[#allocation4 + $0xd4] sm:$0xf] %v7697
        %7740 = vst [vmem:[#allocation4 + $0xf8] sm:$0xf] %v7711
        %7741 = vst [vmem:[#allocation4 + $0x11c] sm:$0xf] %v7725
        %v7742 = vld [vmem:[#allocation4] sm:$0xff]
        %v7743 = vld [vmem:[#allocation4 + $0x8] sm:$0xff]
        %v7744 = vld [vmem:[#allocation4 + $0x10] sm:$0xff]
        %v7745 = vld [vmem:[#allocation4 + $0x18] sm:$0xff]
        %v7746 = vld [vmem:[#allocation4 + $0x20] sm:$0xf]
        %v7747 = vld [vmem:[#allocation4 + $0x24] sm:$0xff]
        %v7748 = vld [vmem:[#allocation4 + $0x2c] sm:$0xff]
        %v7749 = vld [vmem:[#allocation4 + $0x34] sm:$0xff]
        %v7750 = vld [vmem:[#allocation4 + $0x3c] sm:$0xff]
        %v7751 = vld [vmem:[#allocation4 + $0x44] sm:$0xf]
        %v7752 = vld [vmem:[#allocation4 + $0x48] sm:$0xff]
        %v7753 = vld [vmem:[#allocation4 + $0x50] sm:$0xff]
        %v7754 = vld [vmem:[#allocation4 + $0x58] sm:$0xff]
        %v7755 = vld [vmem:[#allocation4 + $0x60] sm:$0xff]
        %v7756 = vld [vmem:[#allocation4 + $0x68] sm:$0xf]
        %v7757 = vld [vmem:[#allocation4 + $0x6c] sm:$0xff]
        %v7758 = vld [vmem:[#allocation4 + $0x74] sm:$0xff]
        %v7759 = vld [vmem:[#allocation4 + $0x7c] sm:$0xff]
        %v7760 = vld [vmem:[#allocation4 + $0x84] sm:$0xff]
        %v7761 = vld [vmem:[#allocation4 + $0x8c] sm:$0xf]
        %v7762 = vld [vmem:[#allocation4 + $0x90] sm:$0xff]
        %v7763 = vld [vmem:[#allocation4 + $0x98] sm:$0xff]
        %v7764 = vld [vmem:[#allocation4 + $0xa0] sm:$0xff]
        %v7765 = vld [vmem:[#allocation4 + $0xa8] sm:$0xff]
        %v7766 = vld [vmem:[#allocation4 + $0xb0] sm:$0xf]
        %v7767 = vld [vmem:[#allocation4 + $0xb4] sm:$0xff]
        %v7768 = vld [vmem:[#allocation4 + $0xbc] sm:$0xff]
        %v7769 = vld [vmem:[#allocation4 + $0xc4] sm:$0xff]
        %v7770 = vld [vmem:[#allocation4 + $0xcc] sm:$0xff]
        %v7771 = vld [vmem:[#allocation4 + $0xd4] sm:$0xf]
        %v7772 = vld [vmem:[#allocation4 + $0xd8] sm:$0xff]
        %v7773 = vld [vmem:[#allocation4 + $0xe0] sm:$0xff]
        %v7774 = vld [vmem:[#allocation4 + $0xe8] sm:$0xff]
        %v7775 = vld [vmem:[#allocation4 + $0xf0] sm:$0xff]
        %v7776 = vld [vmem:[#allocation4 + $0xf8] sm:$0xf]
        %v7777 = vld [vmem:[#allocation4 + $0xfc] sm:$0xff]
        %v7778 = vld [vmem:[#allocation4 + $0x104] sm:$0xff]
        %v7779 = vld [vmem:[#allocation4 + $0x10c] sm:$0xff]
        %v7780 = vld [vmem:[#allocation4 + $0x114] sm:$0xff]
        %v7781 = vld [vmem:[#allocation4 + $0x11c] sm:$0xf]
        %v7782 = vld [vmem:[#allocation11] sm:$0xf]
        %v7783 = vld [vmem:[#allocation11 + $0x4] sm:$0xf]
        %v7784 = vld [vmem:[#allocation11 + $0x8] sm:$0xf]
        %v7785 = vld [vmem:[#allocation11 + $0xc] sm:$0xf]
        %v7786 = vld [vmem:[#allocation11 + $0x10] sm:$0xf]
        %v7787 = vld [vmem:[#allocation11 + $0x14] sm:$0xf]
        %v7788 = vld [vmem:[#allocation11 + $0x18] sm:$0xf]
        %v7789 = vld [vmem:[#allocation11 + $0x1c] sm:$0xf]
        %v7790 = vld [vmem:[#allocation11 + $0x20] sm:$0xf]
        %v7791 = vld [vmem:[#allocation11 + $0x24] sm:$0xf]
        %v7792 = vld [vmem:[#allocation11 + $0x28] sm:$0xf]
        %v7793 = vld [vmem:[#allocation11 + $0x2c] sm:$0xf]
        %v7794 = vld [vmem:[#allocation11 + $0x30] sm:$0xf]
        %v7795 = vld [vmem:[#allocation11 + $0x34] sm:$0xf]
        %v7796 = vld [vmem:[#allocation11 + $0x38] sm:$0xf]
        %v7797 = vld [vmem:[#allocation11 + $0x3c] sm:$0xf]
        %v7798 = vld [vmem:[#allocation11 + $0x40] sm:$0xf]
        %v7799 = vld [vmem:[#allocation11 + $0x44] sm:$0xf]
        %v7800 = vld [vmem:[#allocation11 + $0x48] sm:$0xf]
        %v7801 = vld [vmem:[#allocation11 + $0x4c] sm:$0xf]
        %v7802 = vld [vmem:[#allocation11 + $0x50] sm:$0xf]
        %v7803 = vld [vmem:[#allocation11 + $0x54] sm:$0xf]
        %v7804 = vld [vmem:[#allocation11 + $0x58] sm:$0xf]
        %v7805 = vld [vmem:[#allocation11 + $0x5c] sm:$0xf]
        %v7806 = vld [vmem:[#allocation11 + $0x60] sm:$0xf]
        %v7807 = vld [vmem:[#allocation11 + $0x64] sm:$0xf]
        %v7808 = vld [vmem:[#allocation11 + $0x68] sm:$0xf]
        %v7809 = vld [vmem:[#allocation11 + $0x6c] sm:$0xf]
        %v7810 = vld [vmem:[#allocation11 + $0x70] sm:$0xf]
        %v7811 = vld [vmem:[#allocation11 + $0x74] sm:$0xf]
        %v7812 = vld [vmem:[#allocation11 + $0x78] sm:$0xf]
        %v7813 = vld [vmem:[#allocation11 + $0x7c] sm:$0xf]
        %v7814 = vld [vmem:[#allocation11 + $0x80] sm:$0xf]
        %v7815 = vld [vmem:[#allocation11 + $0x84] sm:$0xf]
        %v7816 = vld [vmem:[#allocation11 + $0x88] sm:$0xf]
        %v7817 = vld [vmem:[#allocation11 + $0x8c] sm:$0xf]
        %v7818 = vld [vmem:[#allocation11 + $0x90] sm:$0xf]
        %v7819 = vld [vmem:[#allocation11 + $0x94] sm:$0xf]
        %v7820 = vld [vmem:[#allocation11 + $0x98] sm:$0xf]
        %v7821 = vld [vmem:[#allocation11 + $0x9c] sm:$0xf]
        %v7822 = vld [vmem:[#allocation11 + $0xa0] sm:$0xf]
        %v7823 = vld [vmem:[#allocation11 + $0xa4] sm:$0xf]
        %v7824 = vld [vmem:[#allocation11 + $0xa8] sm:$0xf]
        %v7825 = vld [vmem:[#allocation11 + $0xac] sm:$0xf]
        %v7826 = vld [vmem:[#allocation11 + $0xb0] sm:$0xf]
        %v7827 = vld [vmem:[#allocation11 + $0xb4] sm:$0xf]
        %v7828 = vld [vmem:[#allocation11 + $0xb8] sm:$0xf]
        %v7829 = vld [vmem:[#allocation11 + $0xbc] sm:$0xf]
        %v7830 = vld [vmem:[#allocation11 + $0xc0] sm:$0xf]
        %v7831 = vld [vmem:[#allocation11 + $0xc4] sm:$0xf]
        %v7832 = vld [vmem:[#allocation11 + $0xc8] sm:$0xf]
        %v7833 = vld [vmem:[#allocation11 + $0xcc] sm:$0xf]
        %v7834 = vld [vmem:[#allocation11 + $0xd0] sm:$0xf]
        %v7835 = vld [vmem:[#allocation11 + $0xd4] sm:$0xf]
        %v7836 = vld [vmem:[#allocation11 + $0xd8] sm:$0xf]
        %v7837 = vld [vmem:[#allocation11 + $0xdc] sm:$0xf]
        %v7838 = vld [vmem:[#allocation11 + $0xe0] sm:$0xf]
        %v7839 = vld [vmem:[#allocation11 + $0xe4] sm:$0xf]
        %v7840 = vld [vmem:[#allocation11 + $0xe8] sm:$0xf]
        %v7841 = vld [vmem:[#allocation11 + $0xec] sm:$0xf]
        %v7842 = vld [vmem:[#allocation11 + $0xf0] sm:$0xf]
        %v7843 = vld [vmem:[#allocation11 + $0xf4] sm:$0xf]
        %v7844 = vld [vmem:[#allocation11 + $0xf8] sm:$0xf]
        %v7845 = vld [vmem:[#allocation11 + $0xfc] sm:$0xf]
        %v7846 = vld [vmem:[#allocation11 + $0x100] sm:$0xf]
        %v7847 = vld [vmem:[#allocation11 + $0x104] sm:$0xf]
        %v7848 = vld [vmem:[#allocation11 + $0x108] sm:$0xf]
        %v7849 = vld [vmem:[#allocation11 + $0x10c] sm:$0xf]
        %v7850 = vld [vmem:[#allocation11 + $0x110] sm:$0xf]
        %v7851 = vld [vmem:[#allocation11 + $0x114] sm:$0xf]
        %v7852 = vld [vmem:[#allocation11 + $0x118] sm:$0xf]
        %v7853 = vld [vmem:[#allocation11 + $0x11c] sm:$0xf]
        %v7854 = vld [vmem:[#allocation11 + $0x120] sm:$0xf]
        %v7855 = vld [vmem:[#allocation11 + $0x124] sm:$0xf]
        %v7856 = vld [vmem:[#allocation11 + $0x128] sm:$0xf]
        %v7857 = vld [vmem:[#allocation11 + $0x12c] sm:$0xf]
        %v7858 = vld [vmem:[#allocation11 + $0x130] sm:$0xf]
        %v7859 = vld [vmem:[#allocation11 + $0x134] sm:$0xf]
        %v7860 = vld [vmem:[#allocation11 + $0x138] sm:$0xf]
        %v7861 = vld [vmem:[#allocation11 + $0x13c] sm:$0xf]
        %v7862 = vld [vmem:[#allocation11 + $0x140] sm:$0xf]
        %v7863 = vld [vmem:[#allocation11 + $0x144] sm:$0xf]
        %v7864 = vld [vmem:[#allocation11 + $0x148] sm:$0xf]
        %v7865 = vld [vmem:[#allocation11 + $0x14c] sm:$0xf]
        %v7866 = vld [vmem:[#allocation11 + $0x150] sm:$0xf]
        %v7867 = vld [vmem:[#allocation11 + $0x154] sm:$0xf]
        %v7868 = vld [vmem:[#allocation11 + $0x158] sm:$0xf]
        %v7869 = vld [vmem:[#allocation11 + $0x15c] sm:$0xf]
        %v7870 = vld [vmem:[#allocation11 + $0x160] sm:$0xf]
        %v7871 = vld [vmem:[#allocation11 + $0x164] sm:$0xf]
        %v7872 = vld [vmem:[#allocation11 + $0x168] sm:$0xf]
        %v7873 = vld [vmem:[#allocation11 + $0x16c] sm:$0xf]
        %v7874 = vld [vmem:[#allocation11 + $0x170] sm:$0xf]
        %v7875 = vld [vmem:[#allocation11 + $0x174] sm:$0xf]
        %v7876 = vld [vmem:[#allocation11 + $0x178] sm:$0xf]
        %v7877 = vld [vmem:[#allocation11 + $0x17c] sm:$0xf]
        %v7878 = vld [vmem:[#allocation11 + $0x180] sm:$0xf]
        %v7879 = vld [vmem:[#allocation11 + $0x184] sm:$0xf]
        %v7880 = vld [vmem:[#allocation11 + $0x188] sm:$0xf]
        %v7881 = vld [vmem:[#allocation11 + $0x18c] sm:$0xf]
        %v7882 = vld [vmem:[#allocation11 + $0x190] sm:$0xf]
        %v7883 = vld [vmem:[#allocation11 + $0x194] sm:$0xf]
        %v7884 = vld [vmem:[#allocation11 + $0x198] sm:$0xf]
        %v7885 = vld [vmem:[#allocation11 + $0x19c] sm:$0xf]
        %v7886 = vld [vmem:[#allocation11 + $0x1a0] sm:$0xf]
        %v7887 = vld [vmem:[#allocation11 + $0x1a4] sm:$0xf]
        %v7888 = vld [vmem:[#allocation11 + $0x1a8] sm:$0xf]
        %v7889 = vld [vmem:[#allocation11 + $0x1ac] sm:$0xf]
        %v7890 = vld [vmem:[#allocation11 + $0x1b0] sm:$0xf]
        %v7891 = vld [vmem:[#allocation11 + $0x1b4] sm:$0xf]
        %v7892 = vld [vmem:[#allocation11 + $0x1b8] sm:$0xf]
        %v7893 = vld [vmem:[#allocation11 + $0x1bc] sm:$0xf]
        %v7894 = vld [vmem:[#allocation11 + $0x1c0] sm:$0xf]
        %v7895 = vld [vmem:[#allocation11 + $0x1c4] sm:$0xf]
        %v7896 = vld [vmem:[#allocation11 + $0x1c8] sm:$0xf]
        %v7897 = vld [vmem:[#allocation11 + $0x1cc] sm:$0xf]
        %v7898 = vld [vmem:[#allocation11 + $0x1d0] sm:$0xf]
        %v7899 = vld [vmem:[#allocation11 + $0x1d4] sm:$0xf]
        %v7900 = vld [vmem:[#allocation11 + $0x1d8] sm:$0xf]
        %v7901 = vld [vmem:[#allocation11 + $0x1dc] sm:$0xf]
        %v7902 = vld [vmem:[#allocation11 + $0x1e0] sm:$0xf]
        %v7903 = vld [vmem:[#allocation11 + $0x1e4] sm:$0xf]
        %v7904 = vld [vmem:[#allocation11 + $0x1e8] sm:$0xf]
        %v7905 = vld [vmem:[#allocation11 + $0x1ec] sm:$0xf]
        %v7906 = vld [vmem:[#allocation11 + $0x1f0] sm:$0xf]
        %v7907 = vld [vmem:[#allocation11 + $0x1f4] sm:$0xf]
        %v7908 = vld [vmem:[#allocation11 + $0x1f8] sm:$0xf]
        %v7909 = vld [vmem:[#allocation11 + $0x1fc] sm:$0xf]
        %v7910 = vld [vmem:[#allocation11 + $0x200] sm:$0xf]
        %v7911 = vld [vmem:[#allocation11 + $0x204] sm:$0xf]
        %v7912 = vld [vmem:[#allocation11 + $0x208] sm:$0xf]
        %v7913 = vld [vmem:[#allocation11 + $0x20c] sm:$0xf]
        %v7914 = vld [vmem:[#allocation11 + $0x210] sm:$0xf]
        %v7915 = vld [vmem:[#allocation11 + $0x214] sm:$0xf]
        %v7916 = vld [vmem:[#allocation11 + $0x218] sm:$0xf]
        %v7917 = vld [vmem:[#allocation11 + $0x21c] sm:$0xf]
        %v7918 = vld [vmem:[#allocation11 + $0x220] sm:$0xf]
        %v7919 = vld [vmem:[#allocation11 + $0x224] sm:$0xf]
        %v7920 = vld [vmem:[#allocation11 + $0x228] sm:$0xf]
        %v7921 = vld [vmem:[#allocation11 + $0x22c] sm:$0xf]
        %v7922 = vld [vmem:[#allocation11 + $0x230] sm:$0xf]
        %v7923 = vld [vmem:[#allocation11 + $0x234] sm:$0xf]
        %v7924 = vld [vmem:[#allocation11 + $0x238] sm:$0xf]
        %v7925 = vld [vmem:[#allocation11 + $0x23c] sm:$0xf]
        %v7926 = vld [vmem:[%s9] sm:$0x1]
        %v7928 = vlaneseq
        %v7929 = vshrl.u32 %v7928, 7
        %v7930 = vsub.s32 0, %v7929
        %v7931 = vrot.slane %v7926, %v7930
        %v7973 = vunpack.c.l.b16 %v7742
        %v7974 = vunpack.c.h.b16 %v7742
        %v7975 = vunpack.c.l.b16 %v7743
        %v7976 = vunpack.c.h.b16 %v7743
        %v7977 = vunpack.c.l.b16 %v7744
        %v7978 = vunpack.c.h.b16 %v7744
        %v7979 = vunpack.c.l.b16 %v7745
        %v7980 = vunpack.c.h.b16 %v7745
        %v7981 = vunpack.c.l.b16 %v7746
        %v7982 = vunpack.c.l.b16 %v7747
        %v7983 = vunpack.c.h.b16 %v7747
        %v7984 = vunpack.c.l.b16 %v7748
        %v7985 = vunpack.c.h.b16 %v7748
        %v7986 = vunpack.c.l.b16 %v7749
        %v7987 = vunpack.c.h.b16 %v7749
        %v7988 = vunpack.c.l.b16 %v7750
        %v7989 = vunpack.c.h.b16 %v7750
        %v7990 = vunpack.c.l.b16 %v7751
        %v7991 = vunpack.c.l.b16 %v7752
        %v7992 = vunpack.c.h.b16 %v7752
        %v7993 = vunpack.c.l.b16 %v7753
        %v7994 = vunpack.c.h.b16 %v7753
        %v7995 = vunpack.c.l.b16 %v7754
        %v7996 = vunpack.c.h.b16 %v7754
        %v7997 = vunpack.c.l.b16 %v7755
        %v7998 = vunpack.c.h.b16 %v7755
        %v7999 = vunpack.c.l.b16 %v7756
        %v8000 = vunpack.c.l.b16 %v7757
        %v8001 = vunpack.c.h.b16 %v7757
        %v8002 = vunpack.c.l.b16 %v7758
        %v8003 = vunpack.c.h.b16 %v7758
        %v8004 = vunpack.c.l.b16 %v7759
        %v8005 = vunpack.c.h.b16 %v7759
        %v8006 = vunpack.c.l.b16 %v7760
        %v8007 = vunpack.c.h.b16 %v7760
        %v8008 = vunpack.c.l.b16 %v7761
        %v8009 = vunpack.c.l.b16 %v7762
        %v8010 = vunpack.c.h.b16 %v7762
        %v8011 = vunpack.c.l.b16 %v7763
        %v8012 = vunpack.c.h.b16 %v7763
        %v8013 = vunpack.c.l.b16 %v7764
        %v8014 = vunpack.c.h.b16 %v7764
        %v8015 = vunpack.c.l.b16 %v7765
        %v8016 = vunpack.c.h.b16 %v7765
        %v8017 = vunpack.c.l.b16 %v7766
        %v8018 = vunpack.c.l.b16 %v7767
        %v8019 = vunpack.c.h.b16 %v7767
        %v8020 = vunpack.c.l.b16 %v7768
        %v8021 = vunpack.c.h.b16 %v7768
        %v8022 = vunpack.c.l.b16 %v7769
        %v8023 = vunpack.c.h.b16 %v7769
        %v8024 = vunpack.c.l.b16 %v7770
        %v8025 = vunpack.c.h.b16 %v7770
        %v8026 = vunpack.c.l.b16 %v7771
        %v8027 = vunpack.c.l.b16 %v7772
        %v8028 = vunpack.c.h.b16 %v7772
        %v8029 = vunpack.c.l.b16 %v7773
        %v8030 = vunpack.c.h.b16 %v7773
        %v8031 = vunpack.c.l.b16 %v7774
        %v8032 = vunpack.c.h.b16 %v7774
        %v8033 = vunpack.c.l.b16 %v7775
        %v8034 = vunpack.c.h.b16 %v7775
        %v8035 = vunpack.c.l.b16 %v7776
        %v8036 = vunpack.c.l.b16 %v7777
        %v8037 = vunpack.c.h.b16 %v7777
        %v8038 = vunpack.c.l.b16 %v7778
        %v8039 = vunpack.c.h.b16 %v7778
        %v8040 = vunpack.c.l.b16 %v7779
        %v8041 = vunpack.c.h.b16 %v7779
        %v8042 = vunpack.c.l.b16 %v7780
        %v8043 = vunpack.c.h.b16 %v7780
        %v8044 = vunpack.c.l.b16 %v7781
        %v8045 = vpack.c.b16 %v7982, %v7973
        %v8046 = vpack.c.b16 %v7983, %v7974
        %v8047 = vpack.c.b16 %v7984, %v7975
        %v8048 = vpack.c.b16 %v7985, %v7976
        %v8049 = vpack.c.b16 %v7986, %v7977
        %v8050 = vpack.c.b16 %v7987, %v7978
        %v8051 = vpack.c.b16 %v7988, %v7979
        %v8052 = vpack.c.b16 %v7989, %v7980
        %v8053 = vpack.c.b16 %v7990, %v7981
        %v8054 = vpack.c.b16 %v8000, %v7991
        %v8055 = vpack.c.b16 %v8001, %v7992
        %v8056 = vpack.c.b16 %v8002, %v7993
        %v8057 = vpack.c.b16 %v8003, %v7994
        %v8058 = vpack.c.b16 %v8004, %v7995
        %v8059 = vpack.c.b16 %v8005, %v7996
        %v8060 = vpack.c.b16 %v8006, %v7997
        %v8061 = vpack.c.b16 %v8007, %v7998
        %v8062 = vpack.c.b16 %v8008, %v7999
        %v8063 = vpack.c.b16 %v8018, %v8009
        %v8064 = vpack.c.b16 %v8019, %v8010
        %v8065 = vpack.c.b16 %v8020, %v8011
        %v8066 = vpack.c.b16 %v8021, %v8012
        %v8067 = vpack.c.b16 %v8022, %v8013
        %v8068 = vpack.c.b16 %v8023, %v8014
        %v8069 = vpack.c.b16 %v8024, %v8015
        %v8070 = vpack.c.b16 %v8025, %v8016
        %v8071 = vpack.c.b16 %v8026, %v8017
        %v8072 = vpack.c.b16 %v8036, %v8027
        %v8073 = vpack.c.b16 %v8037, %v8028
        %v8074 = vpack.c.b16 %v8038, %v8029
        %v8075 = vpack.c.b16 %v8039, %v8030
        %v8076 = vpack.c.b16 %v8040, %v8031
        %v8077 = vpack.c.b16 %v8041, %v8032
        %v8078 = vpack.c.b16 %v8042, %v8033
        %v8079 = vpack.c.b16 %v8043, %v8034
        %v8080 = vpack.c.b16 %v8044, %v8035
        %v8261 = vunpack.c.l.b16 %v7782
        %v8262 = vunpack.c.l.b16 %v7783
        %v8263 = vunpack.c.l.b16 %v7784
        %v8264 = vunpack.c.l.b16 %v7785
        %v8265 = vunpack.c.l.b16 %v7786
        %v8266 = vunpack.c.l.b16 %v7787
        %v8267 = vunpack.c.l.b16 %v7788
        %v8268 = vunpack.c.l.b16 %v7789
        %v8269 = vunpack.c.l.b16 %v7790
        %v8270 = vunpack.c.l.b16 %v7791
        %v8271 = vunpack.c.l.b16 %v7792
        %v8272 = vunpack.c.l.b16 %v7793
        %v8273 = vunpack.c.l.b16 %v7794
        %v8274 = vunpack.c.l.b16 %v7795
        %v8275 = vunpack.c.l.b16 %v7796
        %v8276 = vunpack.c.l.b16 %v7797
        %v8277 = vunpack.c.l.b16 %v7798
        %v8278 = vunpack.c.l.b16 %v7799
        %v8279 = vunpack.c.l.b16 %v7800
        %v8280 = vunpack.c.l.b16 %v7801
        %v8281 = vunpack.c.l.b16 %v7802
        %v8282 = vunpack.c.l.b16 %v7803
        %v8283 = vunpack.c.l.b16 %v7804
        %v8284 = vunpack.c.l.b16 %v7805
        %v8285 = vunpack.c.l.b16 %v7806
        %v8286 = vunpack.c.l.b16 %v7807
        %v8287 = vunpack.c.l.b16 %v7808
        %v8288 = vunpack.c.l.b16 %v7809
        %v8289 = vunpack.c.l.b16 %v7810
        %v8290 = vunpack.c.l.b16 %v7811
        %v8291 = vunpack.c.l.b16 %v7812
        %v8292 = vunpack.c.l.b16 %v7813
        %v8293 = vunpack.c.l.b16 %v7814
        %v8294 = vunpack.c.l.b16 %v7815
        %v8295 = vunpack.c.l.b16 %v7816
        %v8296 = vunpack.c.l.b16 %v7817
        %v8297 = vunpack.c.l.b16 %v7818
        %v8298 = vunpack.c.l.b16 %v7819
        %v8299 = vunpack.c.l.b16 %v7820
        %v8300 = vunpack.c.l.b16 %v7821
        %v8301 = vunpack.c.l.b16 %v7822
        %v8302 = vunpack.c.l.b16 %v7823
        %v8303 = vunpack.c.l.b16 %v7824
        %v8304 = vunpack.c.l.b16 %v7825
        %v8305 = vunpack.c.l.b16 %v7826
        %v8306 = vunpack.c.l.b16 %v7827
        %v8307 = vunpack.c.l.b16 %v7828
        %v8308 = vunpack.c.l.b16 %v7829
        %v8309 = vunpack.c.l.b16 %v7830
        %v8310 = vunpack.c.l.b16 %v7831
        %v8311 = vunpack.c.l.b16 %v7832
        %v8312 = vunpack.c.l.b16 %v7833
        %v8313 = vunpack.c.l.b16 %v7834
        %v8314 = vunpack.c.l.b16 %v7835
        %v8315 = vunpack.c.l.b16 %v7836
        %v8316 = vunpack.c.l.b16 %v7837
        %v8317 = vunpack.c.l.b16 %v7838
        %v8318 = vunpack.c.l.b16 %v7839
        %v8319 = vunpack.c.l.b16 %v7840
        %v8320 = vunpack.c.l.b16 %v7841
        %v8321 = vunpack.c.l.b16 %v7842
        %v8322 = vunpack.c.l.b16 %v7843
        %v8323 = vunpack.c.l.b16 %v7844
        %v8324 = vunpack.c.l.b16 %v7845
        %v8325 = vunpack.c.l.b16 %v7846
        %v8326 = vunpack.c.l.b16 %v7847
        %v8327 = vunpack.c.l.b16 %v7848
        %v8328 = vunpack.c.l.b16 %v7849
        %v8329 = vunpack.c.l.b16 %v7850
        %v8330 = vunpack.c.l.b16 %v7851
        %v8331 = vunpack.c.l.b16 %v7852
        %v8332 = vunpack.c.l.b16 %v7853
        %v8333 = vunpack.c.l.b16 %v7854
        %v8334 = vunpack.c.l.b16 %v7855
        %v8335 = vunpack.c.l.b16 %v7856
        %v8336 = vunpack.c.l.b16 %v7857
        %v8337 = vunpack.c.l.b16 %v7858
        %v8338 = vunpack.c.l.b16 %v7859
        %v8339 = vunpack.c.l.b16 %v7860
        %v8340 = vunpack.c.l.b16 %v7861
        %v8341 = vunpack.c.l.b16 %v7862
        %v8342 = vunpack.c.l.b16 %v7863
        %v8343 = vunpack.c.l.b16 %v7864
        %v8344 = vunpack.c.l.b16 %v7865
        %v8345 = vunpack.c.l.b16 %v7866
        %v8346 = vunpack.c.l.b16 %v7867
        %v8347 = vunpack.c.l.b16 %v7868
        %v8348 = vunpack.c.l.b16 %v7869
        %v8349 = vunpack.c.l.b16 %v7870
        %v8350 = vunpack.c.l.b16 %v7871
        %v8351 = vunpack.c.l.b16 %v7872
        %v8352 = vunpack.c.l.b16 %v7873
        %v8353 = vunpack.c.l.b16 %v7874
        %v8354 = vunpack.c.l.b16 %v7875
        %v8355 = vunpack.c.l.b16 %v7876
        %v8356 = vunpack.c.l.b16 %v7877
        %v8357 = vunpack.c.l.b16 %v7878
        %v8358 = vunpack.c.l.b16 %v7879
        %v8359 = vunpack.c.l.b16 %v7880
        %v8360 = vunpack.c.l.b16 %v7881
        %v8361 = vunpack.c.l.b16 %v7882
        %v8362 = vunpack.c.l.b16 %v7883
        %v8363 = vunpack.c.l.b16 %v7884
        %v8364 = vunpack.c.l.b16 %v7885
        %v8365 = vunpack.c.l.b16 %v7886
        %v8366 = vunpack.c.l.b16 %v7887
        %v8367 = vunpack.c.l.b16 %v7888
        %v8368 = vunpack.c.l.b16 %v7889
        %v8369 = vunpack.c.l.b16 %v7890
        %v8370 = vunpack.c.l.b16 %v7891
        %v8371 = vunpack.c.l.b16 %v7892
        %v8372 = vunpack.c.l.b16 %v7893
        %v8373 = vunpack.c.l.b16 %v7894
        %v8374 = vunpack.c.l.b16 %v7895
        %v8375 = vunpack.c.l.b16 %v7896
        %v8376 = vunpack.c.l.b16 %v7897
        %v8377 = vunpack.c.l.b16 %v7898
        %v8378 = vunpack.c.l.b16 %v7899
        %v8379 = vunpack.c.l.b16 %v7900
        %v8380 = vunpack.c.l.b16 %v7901
        %v8381 = vunpack.c.l.b16 %v7902
        %v8382 = vunpack.c.l.b16 %v7903
        %v8383 = vunpack.c.l.b16 %v7904
        %v8384 = vunpack.c.l.b16 %v7905
        %v8385 = vunpack.c.l.b16 %v7906
        %v8386 = vunpack.c.l.b16 %v7907
        %v8387 = vunpack.c.l.b16 %v7908
        %v8388 = vunpack.c.l.b16 %v7909
        %v8389 = vunpack.c.l.b16 %v7910
        %v8390 = vunpack.c.l.b16 %v7911
        %v8391 = vunpack.c.l.b16 %v7912
        %v8392 = vunpack.c.l.b16 %v7913
        %v8393 = vunpack.c.l.b16 %v7914
        %v8394 = vunpack.c.l.b16 %v7915
        %v8395 = vunpack.c.l.b16 %v7916
        %v8396 = vunpack.c.l.b16 %v7917
        %v8397 = vunpack.c.l.b16 %v7918
        %v8398 = vunpack.c.l.b16 %v7919
        %v8399 = vunpack.c.l.b16 %v7920
        %v8400 = vunpack.c.l.b16 %v7921
        %v8401 = vunpack.c.l.b16 %v7922
        %v8402 = vunpack.c.l.b16 %v7923
        %v8403 = vunpack.c.l.b16 %v7924
        %v8404 = vunpack.c.l.b16 %v7925
        %v8405 = vpack.c.b16 %v8262, %v8261
        %v8406 = vpack.c.b16 %v8264, %v8263
        %v8407 = vpack.c.b16 %v8266, %v8265
        %v8408 = vpack.c.b16 %v8268, %v8267
        %v8409 = vpack.c.b16 %v8270, %v8269
        %v8410 = vpack.c.b16 %v8272, %v8271
        %v8411 = vpack.c.b16 %v8274, %v8273
        %v8412 = vpack.c.b16 %v8276, %v8275
        %v8413 = vpack.c.b16 %v8278, %v8277
        %v8414 = vpack.c.b16 %v8280, %v8279
        %v8415 = vpack.c.b16 %v8282, %v8281
        %v8416 = vpack.c.b16 %v8284, %v8283
        %v8417 = vpack.c.b16 %v8286, %v8285
        %v8418 = vpack.c.b16 %v8288, %v8287
        %v8419 = vpack.c.b16 %v8290, %v8289
        %v8420 = vpack.c.b16 %v8292, %v8291
        %v8421 = vpack.c.b16 %v8294, %v8293
        %v8422 = vpack.c.b16 %v8296, %v8295
        %v8423 = vpack.c.b16 %v8298, %v8297
        %v8424 = vpack.c.b16 %v8300, %v8299
        %v8425 = vpack.c.b16 %v8302, %v8301
        %v8426 = vpack.c.b16 %v8304, %v8303
        %v8427 = vpack.c.b16 %v8306, %v8305
        %v8428 = vpack.c.b16 %v8308, %v8307
        %v8429 = vpack.c.b16 %v8310, %v8309
        %v8430 = vpack.c.b16 %v8312, %v8311
        %v8431 = vpack.c.b16 %v8314, %v8313
        %v8432 = vpack.c.b16 %v8316, %v8315
        %v8433 = vpack.c.b16 %v8318, %v8317
        %v8434 = vpack.c.b16 %v8320, %v8319
        %v8435 = vpack.c.b16 %v8322, %v8321
        %v8436 = vpack.c.b16 %v8324, %v8323
        %v8437 = vpack.c.b16 %v8326, %v8325
        %v8438 = vpack.c.b16 %v8328, %v8327
        %v8439 = vpack.c.b16 %v8330, %v8329
        %v8440 = vpack.c.b16 %v8332, %v8331
        %v8441 = vpack.c.b16 %v8334, %v8333
        %v8442 = vpack.c.b16 %v8336, %v8335
        %v8443 = vpack.c.b16 %v8338, %v8337
        %v8444 = vpack.c.b16 %v8340, %v8339
        %v8445 = vpack.c.b16 %v8342, %v8341
        %v8446 = vpack.c.b16 %v8344, %v8343
        %v8447 = vpack.c.b16 %v8346, %v8345
        %v8448 = vpack.c.b16 %v8348, %v8347
        %v8449 = vpack.c.b16 %v8350, %v8349
        %v8450 = vpack.c.b16 %v8352, %v8351
        %v8451 = vpack.c.b16 %v8354, %v8353
        %v8452 = vpack.c.b16 %v8356, %v8355
        %v8453 = vpack.c.b16 %v8358, %v8357
        %v8454 = vpack.c.b16 %v8360, %v8359
        %v8455 = vpack.c.b16 %v8362, %v8361
        %v8456 = vpack.c.b16 %v8364, %v8363
        %v8457 = vpack.c.b16 %v8366, %v8365
        %v8458 = vpack.c.b16 %v8368, %v8367
        %v8459 = vpack.c.b16 %v8370, %v8369
        %v8460 = vpack.c.b16 %v8372, %v8371
        %v8461 = vpack.c.b16 %v8374, %v8373
        %v8462 = vpack.c.b16 %v8376, %v8375
        %v8463 = vpack.c.b16 %v8378, %v8377
        %v8464 = vpack.c.b16 %v8380, %v8379
        %v8465 = vpack.c.b16 %v8382, %v8381
        %v8466 = vpack.c.b16 %v8384, %v8383
        %v8467 = vpack.c.b16 %v8386, %v8385
        %v8468 = vpack.c.b16 %v8388, %v8387
        %v8469 = vpack.c.b16 %v8390, %v8389
        %v8470 = vpack.c.b16 %v8392, %v8391
        %v8471 = vpack.c.b16 %v8394, %v8393
        %v8472 = vpack.c.b16 %v8396, %v8395
        %v8473 = vpack.c.b16 %v8398, %v8397
        %v8474 = vpack.c.b16 %v8400, %v8399
        %v8475 = vpack.c.b16 %v8402, %v8401
        %v8476 = vpack.c.b16 %v8404, %v8403
        %8549 = vmatprep.subr.bf16.mxu0 0
        %8550 = vmatpush1.bf16.msra.mxu0 %v8412
        %8551 = vmatprep.subr.bf16.mxu0 0
        %8552 = vmatpush1.bf16.msra.mxu0 %v8411
        %8553 = vmatprep.subr.bf16.mxu0 0
        %8554 = vmatpush1.bf16.msra.mxu0 %v8410
        %8555 = vmatprep.subr.bf16.mxu0 0
        %8556 = vmatpush1.bf16.msra.mxu0 %v8409
        %8557 = vmatprep.subr.bf16.mxu0 0
        %8558 = vmatpush1.bf16.msra.mxu0 %v8408
        %8559 = vmatprep.subr.bf16.mxu0 0
        %8560 = vmatpush1.bf16.msra.mxu0 %v8407
        %8561 = vmatprep.subr.bf16.mxu0 0
        %8562 = vmatpush1.bf16.msra.mxu0 %v8406
        %8563 = vmatprep.subr.bf16.mxu0 0
        %8564 = vmatpush1.bf16.msra.mxu0 %v8405
        %8565 = vmatprep.subr.bf16.mxu0 0
        %8566 = vmatpush2.bf16.msra.mxu0 %v8420
        %8567 = vmatprep.subr.bf16.mxu0 0
        %8568 = vmatpush2.bf16.msra.mxu0 %v8419
        %8569 = vmatprep.subr.bf16.mxu0 0
        %8570 = vmatpush2.bf16.msra.mxu0 %v8418
        %8571 = vmatprep.subr.bf16.mxu0 0
        %8572 = vmatpush2.bf16.msra.mxu0 %v8417
        %8573 = vmatprep.subr.bf16.mxu0 0
        %8574 = vmatpush2.bf16.msra.mxu0 %v8416
        %8575 = vmatprep.subr.bf16.mxu0 0
        %8576 = vmatpush2.bf16.msra.mxu0 %v8415
        %8577 = vmatprep.subr.bf16.mxu0 0
        %8578 = vmatpush2.bf16.msra.mxu0 %v8414
        %8579 = vmatprep.subr.bf16.mxu0 0
        %8580 = vmatpush2.bf16.msra.mxu0 %v8413
        %8581 = vmatprep.mubr.bf16.mxu0 %v8046
        %8582 = vmatmul.mubr.bf16.gmra.mxu0 %v8045
        %v8583 = vpop.f32.mrf.mxu0
        %v8584 = vadd.f32 %v7931, %v8583
        %v8585 = vpop.f32.mrf.mxu0
        %v8586 = vpop.f32.mrf.mxu0
        %v8587 = vadd.f32 %v7931, %v8586
        %v8588 = vpop.f32.mrf.mxu0
        %8589 = vmatprep.mubr.bf16.mxu0 %v8055
        %8590 = vmatmul.mubr.bf16.gmra.mxu0 %v8054
        %v8591 = vpop.f32.mrf.mxu0
        %v8592 = vadd.f32 %v7931, %v8591
        %v8593 = vpop.f32.mrf.mxu0
        %v8594 = vpop.f32.mrf.mxu0
        %v8595 = vadd.f32 %v7931, %v8594
        %v8596 = vpop.f32.mrf.mxu0
        %8597 = vmatprep.mubr.bf16.mxu0 %v8064
        %8598 = vmatmul.mubr.bf16.gmra.mxu0 %v8063
        %v8599 = vpop.f32.mrf.mxu0
        %v8600 = vadd.f32 %v7931, %v8599
        %v8601 = vpop.f32.mrf.mxu0
        %v8602 = vpop.f32.mrf.mxu0
        %v8603 = vadd.f32 %v7931, %v8602
        %v8604 = vpop.f32.mrf.mxu0
        %8605 = vmatprep.mubr.bf16.mxu0 %v8073
        %8606 = vmatmul.mubr.bf16.gmra.mxu0 %v8072
        %v8607 = vpop.f32.mrf.mxu0
        %v8608 = vadd.f32 %v7931, %v8607
        %v8609 = vpop.f32.mrf.mxu0
        %v8610 = vpop.f32.mrf.mxu0
        %v8611 = vadd.f32 %v7931, %v8610
        %v8612 = vpop.f32.mrf.mxu0
        %8613 = vdwg.mxu0
        %8614 = vmatprep.subr.bf16.mxu0 0
        %8615 = vmatpush1.bf16.msra.mxu0 %v8428
        %8616 = vmatprep.subr.bf16.mxu0 0
        %8617 = vmatpush1.bf16.msra.mxu0 %v8427
        %8618 = vmatprep.subr.bf16.mxu0 0
        %8619 = vmatpush1.bf16.msra.mxu0 %v8426
        %8620 = vmatprep.subr.bf16.mxu0 0
        %8621 = vmatpush1.bf16.msra.mxu0 %v8425
        %8622 = vmatprep.subr.bf16.mxu0 0
        %8623 = vmatpush1.bf16.msra.mxu0 %v8424
        %8624 = vmatprep.subr.bf16.mxu0 0
        %8625 = vmatpush1.bf16.msra.mxu0 %v8423
        %8626 = vmatprep.subr.bf16.mxu0 0
        %8627 = vmatpush1.bf16.msra.mxu0 %v8422
        %8628 = vmatprep.subr.bf16.mxu0 0
        %8629 = vmatpush1.bf16.msra.mxu0 %v8421
        %8630 = vmatprep.subr.bf16.mxu0 0
        %8631 = vmatpush2.bf16.msra.mxu0 %v8436
        %8632 = vmatprep.subr.bf16.mxu0 0
        %8633 = vmatpush2.bf16.msra.mxu0 %v8435
        %8634 = vmatprep.subr.bf16.mxu0 0
        %8635 = vmatpush2.bf16.msra.mxu0 %v8434
        %8636 = vmatprep.subr.bf16.mxu0 0
        %8637 = vmatpush2.bf16.msra.mxu0 %v8433
        %8638 = vmatprep.subr.bf16.mxu0 0
        %8639 = vmatpush2.bf16.msra.mxu0 %v8432
        %8640 = vmatprep.subr.bf16.mxu0 0
        %8641 = vmatpush2.bf16.msra.mxu0 %v8431
        %8642 = vmatprep.subr.bf16.mxu0 0
        %8643 = vmatpush2.bf16.msra.mxu0 %v8430
        %8644 = vmatprep.subr.bf16.mxu0 0
        %8645 = vmatpush2.bf16.msra.mxu0 %v8429
        %8646 = vmatprep.mubr.bf16.mxu0 %v8048
        %8647 = vmatmul.mubr.bf16.gmra.mxu0 %v8047
        %v8648 = vpop.f32.mrf.mxu0
        %v8649 = vadd.f32 %v8584, %v8648
        %v8650 = vpop.f32.mrf.mxu0
        %v8651 = vpop.f32.mrf.mxu0
        %v8652 = vadd.f32 %v8587, %v8651
        %v8653 = vpop.f32.mrf.mxu0
        %8654 = vmatprep.mubr.bf16.mxu0 %v8057
        %8655 = vmatmul.mubr.bf16.gmra.mxu0 %v8056
        %v8656 = vpop.f32.mrf.mxu0
        %v8657 = vadd.f32 %v8592, %v8656
        %v8658 = vpop.f32.mrf.mxu0
        %v8659 = vpop.f32.mrf.mxu0
        %v8660 = vadd.f32 %v8595, %v8659
        %v8661 = vpop.f32.mrf.mxu0
        %8662 = vmatprep.mubr.bf16.mxu0 %v8066
        %8663 = vmatmul.mubr.bf16.gmra.mxu0 %v8065
        %v8664 = vpop.f32.mrf.mxu0
        %v8665 = vadd.f32 %v8600, %v8664
        %v8666 = vpop.f32.mrf.mxu0
        %v8667 = vpop.f32.mrf.mxu0
        %v8668 = vadd.f32 %v8603, %v8667
        %v8669 = vpop.f32.mrf.mxu0
        %8670 = vmatprep.mubr.bf16.mxu0 %v8075
        %8671 = vmatmul.mubr.bf16.gmra.mxu0 %v8074
        %v8672 = vpop.f32.mrf.mxu0
        %v8673 = vadd.f32 %v8608, %v8672
        %v8674 = vpop.f32.mrf.mxu0
        %v8675 = vpop.f32.mrf.mxu0
        %v8676 = vadd.f32 %v8611, %v8675
        %v8677 = vpop.f32.mrf.mxu0
        %8678 = vdwg.mxu0
        %8679 = vmatprep.subr.bf16.mxu0 0
        %8680 = vmatpush1.bf16.msra.mxu0 %v8444
        %8681 = vmatprep.subr.bf16.mxu0 0
        %8682 = vmatpush1.bf16.msra.mxu0 %v8443
        %8683 = vmatprep.subr.bf16.mxu0 0
        %8684 = vmatpush1.bf16.msra.mxu0 %v8442
        %8685 = vmatprep.subr.bf16.mxu0 0
        %8686 = vmatpush1.bf16.msra.mxu0 %v8441
        %8687 = vmatprep.subr.bf16.mxu0 0
        %8688 = vmatpush1.bf16.msra.mxu0 %v8440
        %8689 = vmatprep.subr.bf16.mxu0 0
        %8690 = vmatpush1.bf16.msra.mxu0 %v8439
        %8691 = vmatprep.subr.bf16.mxu0 0
        %8692 = vmatpush1.bf16.msra.mxu0 %v8438
        %8693 = vmatprep.subr.bf16.mxu0 0
        %8694 = vmatpush1.bf16.msra.mxu0 %v8437
        %8695 = vmatprep.subr.bf16.mxu0 0
        %8696 = vmatpush2.bf16.msra.mxu0 %v8452
        %8697 = vmatprep.subr.bf16.mxu0 0
        %8698 = vmatpush2.bf16.msra.mxu0 %v8451
        %8699 = vmatprep.subr.bf16.mxu0 0
        %8700 = vmatpush2.bf16.msra.mxu0 %v8450
        %8701 = vmatprep.subr.bf16.mxu0 0
        %8702 = vmatpush2.bf16.msra.mxu0 %v8449
        %8703 = vmatprep.subr.bf16.mxu0 0
        %8704 = vmatpush2.bf16.msra.mxu0 %v8448
        %8705 = vmatprep.subr.bf16.mxu0 0
        %8706 = vmatpush2.bf16.msra.mxu0 %v8447
        %8707 = vmatprep.subr.bf16.mxu0 0
        %8708 = vmatpush2.bf16.msra.mxu0 %v8446
        %8709 = vmatprep.subr.bf16.mxu0 0
        %8710 = vmatpush2.bf16.msra.mxu0 %v8445
        %8711 = vmatprep.mubr.bf16.mxu0 %v8050
        %8712 = vmatmul.mubr.bf16.gmra.mxu0 %v8049
        %v8713 = vpop.f32.mrf.mxu0
        %v8714 = vadd.f32 %v8649, %v8713
        %v8715 = vpop.f32.mrf.mxu0
        %v8716 = vpop.f32.mrf.mxu0
        %v8717 = vadd.f32 %v8652, %v8716
        %v8718 = vpop.f32.mrf.mxu0
        %8719 = vmatprep.mubr.bf16.mxu0 %v8059
        %8720 = vmatmul.mubr.bf16.gmra.mxu0 %v8058
        %v8721 = vpop.f32.mrf.mxu0
        %v8722 = vadd.f32 %v8657, %v8721
        %v8723 = vpop.f32.mrf.mxu0
        %v8724 = vpop.f32.mrf.mxu0
        %v8725 = vadd.f32 %v8660, %v8724
        %v8726 = vpop.f32.mrf.mxu0
        %8727 = vmatprep.mubr.bf16.mxu0 %v8068
        %8728 = vmatmul.mubr.bf16.gmra.mxu0 %v8067
        %v8729 = vpop.f32.mrf.mxu0
        %v8730 = vadd.f32 %v8665, %v8729
        %v8731 = vpop.f32.mrf.mxu0
        %v8732 = vpop.f32.mrf.mxu0
        %v8733 = vadd.f32 %v8668, %v8732
        %v8734 = vpop.f32.mrf.mxu0
        %8735 = vmatprep.mubr.bf16.mxu0 %v8077
        %8736 = vmatmul.mubr.bf16.gmra.mxu0 %v8076
        %v8737 = vpop.f32.mrf.mxu0
        %v8738 = vadd.f32 %v8673, %v8737
        %v8739 = vpop.f32.mrf.mxu0
        %v8740 = vpop.f32.mrf.mxu0
        %v8741 = vadd.f32 %v8676, %v8740
        %v8742 = vpop.f32.mrf.mxu0
        %8743 = vdwg.mxu0
        %8744 = vmatprep.subr.bf16.mxu0 0
        %8745 = vmatpush1.bf16.msra.mxu0 %v8460
        %8746 = vmatprep.subr.bf16.mxu0 0
        %8747 = vmatpush1.bf16.msra.mxu0 %v8459
        %8748 = vmatprep.subr.bf16.mxu0 0
        %8749 = vmatpush1.bf16.msra.mxu0 %v8458
        %8750 = vmatprep.subr.bf16.mxu0 0
        %8751 = vmatpush1.bf16.msra.mxu0 %v8457
        %8752 = vmatprep.subr.bf16.mxu0 0
        %8753 = vmatpush1.bf16.msra.mxu0 %v8456
        %8754 = vmatprep.subr.bf16.mxu0 0
        %8755 = vmatpush1.bf16.msra.mxu0 %v8455
        %8756 = vmatprep.subr.bf16.mxu0 0
        %8757 = vmatpush1.bf16.msra.mxu0 %v8454
        %8758 = vmatprep.subr.bf16.mxu0 0
        %8759 = vmatpush1.bf16.msra.mxu0 %v8453
        %8760 = vmatprep.subr.bf16.mxu0 0
        %8761 = vmatpush2.bf16.msra.mxu0 %v8468
        %8762 = vmatprep.subr.bf16.mxu0 0
        %8763 = vmatpush2.bf16.msra.mxu0 %v8467
        %8764 = vmatprep.subr.bf16.mxu0 0
        %8765 = vmatpush2.bf16.msra.mxu0 %v8466
        %8766 = vmatprep.subr.bf16.mxu0 0
        %8767 = vmatpush2.bf16.msra.mxu0 %v8465
        %8768 = vmatprep.subr.bf16.mxu0 0
        %8769 = vmatpush2.bf16.msra.mxu0 %v8464
        %8770 = vmatprep.subr.bf16.mxu0 0
        %8771 = vmatpush2.bf16.msra.mxu0 %v8463
        %8772 = vmatprep.subr.bf16.mxu0 0
        %8773 = vmatpush2.bf16.msra.mxu0 %v8462
        %8774 = vmatprep.subr.bf16.mxu0 0
        %8775 = vmatpush2.bf16.msra.mxu0 %v8461
        %8776 = vmatprep.mubr.bf16.mxu0 %v8052
        %8777 = vmatmul.mubr.bf16.gmra.mxu0 %v8051
        %v8778 = vpop.f32.mrf.mxu0
        %v8779 = vadd.f32 %v8714, %v8778
        %v8780 = vpop.f32.mrf.mxu0
        %v8781 = vpop.f32.mrf.mxu0
        %v8782 = vadd.f32 %v8717, %v8781
        %v8783 = vpop.f32.mrf.mxu0
        %8784 = vmatprep.mubr.bf16.mxu0 %v8061
        %8785 = vmatmul.mubr.bf16.gmra.mxu0 %v8060
        %v8786 = vpop.f32.mrf.mxu0
        %v8787 = vadd.f32 %v8722, %v8786
        %v8788 = vpop.f32.mrf.mxu0
        %v8789 = vpop.f32.mrf.mxu0
        %v8790 = vadd.f32 %v8725, %v8789
        %v8791 = vpop.f32.mrf.mxu0
        %8792 = vmatprep.mubr.bf16.mxu0 %v8070
        %8793 = vmatmul.mubr.bf16.gmra.mxu0 %v8069
        %v8794 = vpop.f32.mrf.mxu0
        %v8795 = vadd.f32 %v8730, %v8794
        %v8796 = vpop.f32.mrf.mxu0
        %v8797 = vpop.f32.mrf.mxu0
        %v8798 = vadd.f32 %v8733, %v8797
        %v8799 = vpop.f32.mrf.mxu0
        %8800 = vmatprep.mubr.bf16.mxu0 %v8079
        %8801 = vmatmul.mubr.bf16.gmra.mxu0 %v8078
        %v8802 = vpop.f32.mrf.mxu0
        %v8803 = vadd.f32 %v8738, %v8802
        %v8804 = vpop.f32.mrf.mxu0
        %v8805 = vpop.f32.mrf.mxu0
        %v8806 = vadd.f32 %v8741, %v8805
        %v8807 = vpop.f32.mrf.mxu0
        %8808 = vdwg.mxu0
        %8809 = vmatprep.subr.bf16.mxu0 0
        %8810 = vmatpush1.bf16.msra.mxu0 %v8476
        %8811 = vmatprep.subr.bf16.mxu0 0
        %8812 = vmatpush1.bf16.msra.mxu0 %v8475
        %8813 = vmatprep.subr.bf16.mxu0 0
        %8814 = vmatpush1.bf16.msra.mxu0 %v8474
        %8815 = vmatprep.subr.bf16.mxu0 0
        %8816 = vmatpush1.bf16.msra.mxu0 %v8473
        %8817 = vmatprep.subr.bf16.mxu0 0
        %8818 = vmatpush1.bf16.msra.mxu0 %v8472
        %8819 = vmatprep.subr.bf16.mxu0 0
        %8820 = vmatpush1.bf16.msra.mxu0 %v8471
        %8821 = vmatprep.subr.bf16.mxu0 0
        %8822 = vmatpush1.bf16.msra.mxu0 %v8470
        %8823 = vmatprep.subr.bf16.mxu0 0
        %8824 = vmatpush1.bf16.msra.mxu0 %v8469
        %8825 = vmatprep.subr.bf16.mxu0 0
        %8826 = vmatpush2.bf16.msra.mxu0 0
        %8827 = vmatprep.subr.bf16.mxu0 0
        %8828 = vmatpush2.bf16.msra.mxu0 0
        %8829 = vmatprep.subr.bf16.mxu0 0
        %8830 = vmatpush2.bf16.msra.mxu0 0
        %8831 = vmatprep.subr.bf16.mxu0 0
        %8832 = vmatpush2.bf16.msra.mxu0 0
        %8833 = vmatprep.subr.bf16.mxu0 0
        %8834 = vmatpush2.bf16.msra.mxu0 0
        %8835 = vmatprep.subr.bf16.mxu0 0
        %8836 = vmatpush2.bf16.msra.mxu0 0
        %8837 = vmatprep.subr.bf16.mxu0 0
        %8838 = vmatpush2.bf16.msra.mxu0 0
        %8839 = vmatprep.subr.bf16.mxu0 0
        %8840 = vmatpush2.bf16.msra.mxu0 0
        %8841 = vmatprep.mubr.bf16.mxu0 0
        %8842 = vmatmul.mubr.bf16.gmra.mxu0 %v8053
        %v8843 = vpop.f32.mrf.mxu0
        %v8844 = vadd.f32 %v8779, %v8843
        %v8845 = vpop.f32.mrf.mxu0
        %v8846 = vpop.f32.mrf.mxu0
        %v8847 = vadd.f32 %v8782, %v8846
        %v8848 = vpop.f32.mrf.mxu0
        %8849 = vmatprep.mubr.bf16.mxu0 0
        %8850 = vmatmul.mubr.bf16.gmra.mxu0 %v8062
        %v8851 = vpop.f32.mrf.mxu0
        %v8852 = vadd.f32 %v8787, %v8851
        %v8853 = vpop.f32.mrf.mxu0
        %v8854 = vpop.f32.mrf.mxu0
        %v8855 = vadd.f32 %v8790, %v8854
        %v8856 = vpop.f32.mrf.mxu0
        %8857 = vmatprep.mubr.bf16.mxu0 0
        %8858 = vmatmul.mubr.bf16.gmra.mxu0 %v8071
        %v8859 = vpop.f32.mrf.mxu0
        %v8860 = vadd.f32 %v8795, %v8859
        %v8861 = vpop.f32.mrf.mxu0
        %v8862 = vpop.f32.mrf.mxu0
        %v8863 = vadd.f32 %v8798, %v8862
        %v8864 = vpop.f32.mrf.mxu0
        %8865 = vmatprep.mubr.bf16.mxu0 0
        %8866 = vmatmul.mubr.bf16.gmra.mxu0 %v8080
        %v8867 = vpop.f32.mrf.mxu0
        %v8868 = vadd.f32 %v8803, %v8867
        %v8869 = vpop.f32.mrf.mxu0
        %v8870 = vpop.f32.mrf.mxu0
        %v8871 = vadd.f32 %v8806, %v8870
        %v8872 = vpop.f32.mrf.mxu0
        %8873 = vdwg.mxu0
        %v8874 = vmax.f32 %v8844, 0.0
        %v8875 = vmax.f32 %v8847, 0.0
        %v8876 = vmax.f32 %v8852, 0.0
        %v8877 = vmax.f32 %v8855, 0.0
        %v8878 = vmax.f32 %v8860, 0.0
        %v8879 = vmax.f32 %v8863, 0.0
        %v8880 = vmax.f32 %v8868, 0.0
        %v8881 = vmax.f32 %v8871, 0.0
        %v8882 = vpack.c.bf16 %v8875, %v8874
        %v8883 = vpack.c.bf16 %v8877, %v8876
        %v8884 = vpack.c.bf16 %v8879, %v8878
        %v8885 = vpack.c.bf16 %v8881, %v8880
        %v8890 = vunpack.c.l.b16 %v8882
        %v8891 = vunpack.c.h.b16 %v8882
        %v8892 = vunpack.c.l.b16 %v8883
        %v8893 = vunpack.c.h.b16 %v8883
        %v8894 = vunpack.c.l.b16 %v8884
        %v8895 = vunpack.c.h.b16 %v8884
        %v8896 = vunpack.c.l.b16 %v8885
        %v8897 = vunpack.c.h.b16 %v8885
        %v8898 = vpack.c.b16 %v8890, %v8890
        %v8899 = vpack.c.b16 %v8891, %v8891
        %v8900 = vpack.c.b16 %v8892, %v8892
        %v8901 = vpack.c.b16 %v8893, %v8893
        %v8902 = vpack.c.b16 %v8894, %v8894
        %v8903 = vpack.c.b16 %v8895, %v8895
        %v8904 = vpack.c.b16 %v8896, %v8896
        %v8905 = vpack.c.b16 %v8897, %v8897
        %8914 = vst [vmem:[%s480 + $0x8] sm:$0xf] %v8898
        %8915 = vst [vmem:[%s480 + $0x18] sm:$0xf] %v8899
        %8916 = vst [vmem:[%s480 + $0x28] sm:$0xf] %v8900
        %8917 = vst [vmem:[%s480 + $0x38] sm:$0xf] %v8901
        %8918 = vst [vmem:[%s480 + $0x48] sm:$0xf] %v8902
        %8919 = vst [vmem:[%s480 + $0x58] sm:$0xf] %v8903
        %8920 = vst [vmem:[%s480 + $0x68] sm:$0xf] %v8904
        %8921 = vst [vmem:[%s480 + $0x78] sm:$0xf] %v8905
        %v8922 = vld [vmem:[#allocation2 + $0x4] sm:$0x8]
        %v8923 = vld [vmem:[#allocation2 + $0x8] sm:$0xf]
        %v8924 = vld [vmem:[#allocation2 + $0x14] sm:$0x8]
        %v8925 = vld [vmem:[#allocation2 + $0x18] sm:$0xf]
        %v8926 = vld [vmem:[#allocation2 + $0x24] sm:$0x8]
        %v8927 = vld [vmem:[#allocation2 + $0x28] sm:$0xf]
        %v8928 = vld [vmem:[#allocation2 + $0x34] sm:$0x8]
        %v8929 = vld [vmem:[#allocation2 + $0x38] sm:$0xf]
        %v8930 = vld [vmem:[#allocation2 + $0x44] sm:$0x8]
        %v8931 = vld [vmem:[#allocation2 + $0x48] sm:$0xf]
        %v8932 = vld [vmem:[#allocation2 + $0x54] sm:$0x8]
        %v8933 = vld [vmem:[#allocation2 + $0x58] sm:$0xf]
        %v8934 = vld [vmem:[#allocation2 + $0x64] sm:$0x8]
        %v8935 = vld [vmem:[#allocation2 + $0x68] sm:$0xf]
        %v8936 = vld [vmem:[#allocation2 + $0x74] sm:$0x8]
        %v8937 = vld [vmem:[#allocation2 + $0x78] sm:$0xf]
        %v8939 = vshrl.u32 %v8922, 16
        %v8941 = vrot.slane %v8939, 7
        %v8942 = vrot.slane %v8941, 4
        %v8944 = vshrl.u32 %v8923, 16
        %v8946 = vrot.slane %v8944, 7
        %v8947 = vshll.u32 %v8923, 16
        %v8949 = vor.u32 %v8946, %v8947
        %v8950 = vsel %vm660, %v8942, %v8949
        %v8952 = vshrl.u32 %v8924, 16
        %v8954 = vrot.slane %v8952, 7
        %v8955 = vrot.slane %v8954, 4
        %v8957 = vshrl.u32 %v8925, 16
        %v8959 = vrot.slane %v8957, 7
        %v8960 = vshll.u32 %v8925, 16
        %v8962 = vor.u32 %v8959, %v8960
        %v8963 = vsel %vm660, %v8955, %v8962
        %v8965 = vshrl.u32 %v8926, 16
        %v8967 = vrot.slane %v8965, 7
        %v8968 = vrot.slane %v8967, 4
        %v8970 = vshrl.u32 %v8927, 16
        %v8972 = vrot.slane %v8970, 7
        %v8973 = vshll.u32 %v8927, 16
        %v8975 = vor.u32 %v8972, %v8973
        %v8976 = vsel %vm660, %v8968, %v8975
        %v8978 = vshrl.u32 %v8928, 16
        %v8980 = vrot.slane %v8978, 7
        %v8981 = vrot.slane %v8980, 4
        %v8983 = vshrl.u32 %v8929, 16
        %v8985 = vrot.slane %v8983, 7
        %v8986 = vshll.u32 %v8929, 16
        %v8988 = vor.u32 %v8985, %v8986
        %v8989 = vsel %vm660, %v8981, %v8988
        %v8991 = vshrl.u32 %v8930, 16
        %v8993 = vrot.slane %v8991, 7
        %v8994 = vrot.slane %v8993, 4
        %v8996 = vshrl.u32 %v8931, 16
        %v8998 = vrot.slane %v8996, 7
        %v8999 = vshll.u32 %v8931, 16
        %v9001 = vor.u32 %v8998, %v8999
        %v9002 = vsel %vm660, %v8994, %v9001
        %v9004 = vshrl.u32 %v8932, 16
        %v9006 = vrot.slane %v9004, 7
        %v9007 = vrot.slane %v9006, 4
        %v9009 = vshrl.u32 %v8933, 16
        %v9011 = vrot.slane %v9009, 7
        %v9012 = vshll.u32 %v8933, 16
        %v9014 = vor.u32 %v9011, %v9012
        %v9015 = vsel %vm660, %v9007, %v9014
        %v9017 = vshrl.u32 %v8934, 16
        %v9019 = vrot.slane %v9017, 7
        %v9020 = vrot.slane %v9019, 4
        %v9022 = vshrl.u32 %v8935, 16
        %v9024 = vrot.slane %v9022, 7
        %v9025 = vshll.u32 %v8935, 16
        %v9027 = vor.u32 %v9024, %v9025
        %v9028 = vsel %vm660, %v9020, %v9027
        %v9030 = vshrl.u32 %v8936, 16
        %v9032 = vrot.slane %v9030, 7
        %v9033 = vrot.slane %v9032, 4
        %v9035 = vshrl.u32 %v8937, 16
        %v9037 = vrot.slane %v9035, 7
        %v9038 = vshll.u32 %v8937, 16
        %v9040 = vor.u32 %v9037, %v9038
        %v9041 = vsel %vm660, %v9033, %v9040
        %9050 = vst [vmem:[#allocation4] sm:$0xf] %v8950
        %9051 = vst [vmem:[#allocation4 + $0x24] sm:$0xf] %v8963
        %9052 = vst [vmem:[#allocation4 + $0x48] sm:$0xf] %v8976
        %9053 = vst [vmem:[#allocation4 + $0x6c] sm:$0xf] %v8989
        %9054 = vst [vmem:[#allocation4 + $0x90] sm:$0xf] %v9002
        %9055 = vst [vmem:[#allocation4 + $0xb4] sm:$0xf] %v9015
        %9056 = vst [vmem:[#allocation4 + $0xd8] sm:$0xf] %v9028
        %9057 = vst [vmem:[#allocation4 + $0xfc] sm:$0xf] %v9041
        %v9058 = vld [vmem:[#allocation2 + $0x8] sm:$0xf]
        %v9059 = vld [vmem:[#allocation2 + $0x18] sm:$0xf]
        %v9060 = vld [vmem:[#allocation2 + $0x28] sm:$0xf]
        %v9061 = vld [vmem:[#allocation2 + $0x38] sm:$0xf]
        %v9062 = vld [vmem:[#allocation2 + $0x48] sm:$0xf]
        %v9063 = vld [vmem:[#allocation2 + $0x58] sm:$0xf]
        %v9064 = vld [vmem:[#allocation2 + $0x68] sm:$0xf]
        %v9065 = vld [vmem:[#allocation2 + $0x78] sm:$0xf]
        %9066 = vst [vmem:[#allocation4 + $0x4] sm:$0xf] %v9058
        %9067 = vst [vmem:[#allocation4 + $0x28] sm:$0xf] %v9059
        %9068 = vst [vmem:[#allocation4 + $0x4c] sm:$0xf] %v9060
        %9069 = vst [vmem:[#allocation4 + $0x70] sm:$0xf] %v9061
        %9070 = vst [vmem:[#allocation4 + $0x94] sm:$0xf] %v9062
        %9071 = vst [vmem:[#allocation4 + $0xb8] sm:$0xf] %v9063
        %9072 = vst [vmem:[#allocation4 + $0xdc] sm:$0xf] %v9064
        %9073 = vst [vmem:[#allocation4 + $0x100] sm:$0xf] %v9065
        %v9074 = vld [vmem:[#allocation2 + $0x8] sm:$0xf]
        %v9075 = vld [vmem:[#allocation2 + $0xc] sm:$0x1]
        %v9076 = vld [vmem:[#allocation2 + $0x18] sm:$0xf]
        %v9077 = vld [vmem:[#allocation2 + $0x1c] sm:$0x1]
        %v9078 = vld [vmem:[#allocation2 + $0x28] sm:$0xf]
        %v9079 = vld [vmem:[#allocation2 + $0x2c] sm:$0x1]
        %v9080 = vld [vmem:[#allocation2 + $0x38] sm:$0xf]
        %v9081 = vld [vmem:[#allocation2 + $0x3c] sm:$0x1]
        %v9082 = vld [vmem:[#allocation2 + $0x48] sm:$0xf]
        %v9083 = vld [vmem:[#allocation2 + $0x4c] sm:$0x1]
        %v9084 = vld [vmem:[#allocation2 + $0x58] sm:$0xf]
        %v9085 = vld [vmem:[#allocation2 + $0x5c] sm:$0x1]
        %v9086 = vld [vmem:[#allocation2 + $0x68] sm:$0xf]
        %v9087 = vld [vmem:[#allocation2 + $0x6c] sm:$0x1]
        %v9088 = vld [vmem:[#allocation2 + $0x78] sm:$0xf]
        %v9089 = vld [vmem:[#allocation2 + $0x7c] sm:$0x1]
        %v9091 = vshrl.u32 %v9074, 16
        %v9093 = vrot.slane %v9091, 4
        %v9094 = vshll.u32 %v9074, 16
        %v9096 = vrot.slane %v9094, 5
        %v9097 = vor.u32 %v9093, %v9096
        %v9098 = vrot.slane %v9097, 4
        %v9100 = vshll.u32 %v9075, 16
        %v9102 = vrot.slane %v9100, 5
        %v9103 = vsel %vm815, %v9098, %v9102
        %v9105 = vshrl.u32 %v9076, 16
        %v9107 = vrot.slane %v9105, 4
        %v9108 = vshll.u32 %v9076, 16
        %v9110 = vrot.slane %v9108, 5
        %v9111 = vor.u32 %v9107, %v9110
        %v9112 = vrot.slane %v9111, 4
        %v9114 = vshll.u32 %v9077, 16
        %v9116 = vrot.slane %v9114, 5
        %v9117 = vsel %vm815, %v9112, %v9116
        %v9119 = vshrl.u32 %v9078, 16
        %v9121 = vrot.slane %v9119, 4
        %v9122 = vshll.u32 %v9078, 16
        %v9124 = vrot.slane %v9122, 5
        %v9125 = vor.u32 %v9121, %v9124
        %v9126 = vrot.slane %v9125, 4
        %v9128 = vshll.u32 %v9079, 16
        %v9130 = vrot.slane %v9128, 5
        %v9131 = vsel %vm815, %v9126, %v9130
        %v9133 = vshrl.u32 %v9080, 16
        %v9135 = vrot.slane %v9133, 4
        %v9136 = vshll.u32 %v9080, 16
        %v9138 = vrot.slane %v9136, 5
        %v9139 = vor.u32 %v9135, %v9138
        %v9140 = vrot.slane %v9139, 4
        %v9142 = vshll.u32 %v9081, 16
        %v9144 = vrot.slane %v9142, 5
        %v9145 = vsel %vm815, %v9140, %v9144
        %v9147 = vshrl.u32 %v9082, 16
        %v9149 = vrot.slane %v9147, 4
        %v9150 = vshll.u32 %v9082, 16
        %v9152 = vrot.slane %v9150, 5
        %v9153 = vor.u32 %v9149, %v9152
        %v9154 = vrot.slane %v9153, 4
        %v9156 = vshll.u32 %v9083, 16
        %v9158 = vrot.slane %v9156, 5
        %v9159 = vsel %vm815, %v9154, %v9158
        %v9161 = vshrl.u32 %v9084, 16
        %v9163 = vrot.slane %v9161, 4
        %v9164 = vshll.u32 %v9084, 16
        %v9166 = vrot.slane %v9164, 5
        %v9167 = vor.u32 %v9163, %v9166
        %v9168 = vrot.slane %v9167, 4
        %v9170 = vshll.u32 %v9085, 16
        %v9172 = vrot.slane %v9170, 5
        %v9173 = vsel %vm815, %v9168, %v9172
        %v9175 = vshrl.u32 %v9086, 16
        %v9177 = vrot.slane %v9175, 4
        %v9178 = vshll.u32 %v9086, 16
        %v9180 = vrot.slane %v9178, 5
        %v9181 = vor.u32 %v9177, %v9180
        %v9182 = vrot.slane %v9181, 4
        %v9184 = vshll.u32 %v9087, 16
        %v9186 = vrot.slane %v9184, 5
        %v9187 = vsel %vm815, %v9182, %v9186
        %v9189 = vshrl.u32 %v9088, 16
        %v9191 = vrot.slane %v9189, 4
        %v9192 = vshll.u32 %v9088, 16
        %v9194 = vrot.slane %v9192, 5
        %v9195 = vor.u32 %v9191, %v9194
        %v9196 = vrot.slane %v9195, 4
        %v9198 = vshll.u32 %v9089, 16
        %v9200 = vrot.slane %v9198, 5
        %v9201 = vsel %vm815, %v9196, %v9200
        %9210 = vst [vmem:[#allocation4 + $0x8] sm:$0xf] %v9103
        %9211 = vst [vmem:[#allocation4 + $0x2c] sm:$0xf] %v9117
        %9212 = vst [vmem:[#allocation4 + $0x50] sm:$0xf] %v9131
        %9213 = vst [vmem:[#allocation4 + $0x74] sm:$0xf] %v9145
        %9214 = vst [vmem:[#allocation4 + $0x98] sm:$0xf] %v9159
        %9215 = vst [vmem:[#allocation4 + $0xbc] sm:$0xf] %v9173
        %9216 = vst [vmem:[#allocation4 + $0xe0] sm:$0xf] %v9187
        %9217 = vst [vmem:[#allocation4 + $0x104] sm:$0xf] %v9201
        %v9218 = vld [vmem:[%s480 + $0x4] sm:$0x8]
        %v9219 = vld [vmem:[%s480 + $0x8] sm:$0xf]
        %v9220 = vld [vmem:[%s480 + $0x14] sm:$0x8]
        %v9221 = vld [vmem:[%s480 + $0x18] sm:$0xf]
        %v9222 = vld [vmem:[%s480 + $0x24] sm:$0x8]
        %v9223 = vld [vmem:[%s480 + $0x28] sm:$0xf]
        %v9224 = vld [vmem:[%s480 + $0x34] sm:$0x8]
        %v9225 = vld [vmem:[%s480 + $0x38] sm:$0xf]
        %v9226 = vld [vmem:[%s480 + $0x44] sm:$0x8]
        %v9227 = vld [vmem:[%s480 + $0x48] sm:$0xf]
        %v9228 = vld [vmem:[%s480 + $0x54] sm:$0x8]
        %v9229 = vld [vmem:[%s480 + $0x58] sm:$0xf]
        %v9230 = vld [vmem:[%s480 + $0x64] sm:$0x8]
        %v9231 = vld [vmem:[%s480 + $0x68] sm:$0xf]
        %v9232 = vld [vmem:[%s480 + $0x74] sm:$0x8]
        %v9233 = vld [vmem:[%s480 + $0x78] sm:$0xf]
        %v9235 = vshrl.u32 %v9218, 16
        %v9237 = vrot.slane %v9235, 7
        %v9238 = vrot.slane %v9237, 4
        %v9240 = vshrl.u32 %v9219, 16
        %v9242 = vrot.slane %v9240, 7
        %v9243 = vshll.u32 %v9219, 16
        %v9245 = vor.u32 %v9242, %v9243
        %v9246 = vsel %vm660, %v9238, %v9245
        %v9248 = vshrl.u32 %v9220, 16
        %v9250 = vrot.slane %v9248, 7
        %v9251 = vrot.slane %v9250, 4
        %v9253 = vshrl.u32 %v9221, 16
        %v9255 = vrot.slane %v9253, 7
        %v9256 = vshll.u32 %v9221, 16
        %v9258 = vor.u32 %v9255, %v9256
        %v9259 = vsel %vm660, %v9251, %v9258
        %v9261 = vshrl.u32 %v9222, 16
        %v9263 = vrot.slane %v9261, 7
        %v9264 = vrot.slane %v9263, 4
        %v9266 = vshrl.u32 %v9223, 16
        %v9268 = vrot.slane %v9266, 7
        %v9269 = vshll.u32 %v9223, 16
        %v9271 = vor.u32 %v9268, %v9269
        %v9272 = vsel %vm660, %v9264, %v9271
        %v9274 = vshrl.u32 %v9224, 16
        %v9276 = vrot.slane %v9274, 7
        %v9277 = vrot.slane %v9276, 4
        %v9279 = vshrl.u32 %v9225, 16
        %v9281 = vrot.slane %v9279, 7
        %v9282 = vshll.u32 %v9225, 16
        %v9284 = vor.u32 %v9281, %v9282
        %v9285 = vsel %vm660, %v9277, %v9284
        %v9287 = vshrl.u32 %v9226, 16
        %v9289 = vrot.slane %v9287, 7
        %v9290 = vrot.slane %v9289, 4
        %v9292 = vshrl.u32 %v9227, 16
        %v9294 = vrot.slane %v9292, 7
        %v9295 = vshll.u32 %v9227, 16
        %v9297 = vor.u32 %v9294, %v9295
        %v9298 = vsel %vm660, %v9290, %v9297
        %v9300 = vshrl.u32 %v9228, 16
        %v9302 = vrot.slane %v9300, 7
        %v9303 = vrot.slane %v9302, 4
        %v9305 = vshrl.u32 %v9229, 16
        %v9307 = vrot.slane %v9305, 7
        %v9308 = vshll.u32 %v9229, 16
        %v9310 = vor.u32 %v9307, %v9308
        %v9311 = vsel %vm660, %v9303, %v9310
        %v9313 = vshrl.u32 %v9230, 16
        %v9315 = vrot.slane %v9313, 7
        %v9316 = vrot.slane %v9315, 4
        %v9318 = vshrl.u32 %v9231, 16
        %v9320 = vrot.slane %v9318, 7
        %v9321 = vshll.u32 %v9231, 16
        %v9323 = vor.u32 %v9320, %v9321
        %v9324 = vsel %vm660, %v9316, %v9323
        %v9326 = vshrl.u32 %v9232, 16
        %v9328 = vrot.slane %v9326, 7
        %v9329 = vrot.slane %v9328, 4
        %v9331 = vshrl.u32 %v9233, 16
        %v9333 = vrot.slane %v9331, 7
        %v9334 = vshll.u32 %v9233, 16
        %v9336 = vor.u32 %v9333, %v9334
        %v9337 = vsel %vm660, %v9329, %v9336
        %9346 = vst [vmem:[#allocation4 + $0xc] sm:$0xf] %v9246
        %9347 = vst [vmem:[#allocation4 + $0x30] sm:$0xf] %v9259
        %9348 = vst [vmem:[#allocation4 + $0x54] sm:$0xf] %v9272
        %9349 = vst [vmem:[#allocation4 + $0x78] sm:$0xf] %v9285
        %9350 = vst [vmem:[#allocation4 + $0x9c] sm:$0xf] %v9298
        %9351 = vst [vmem:[#allocation4 + $0xc0] sm:$0xf] %v9311
        %9352 = vst [vmem:[#allocation4 + $0xe4] sm:$0xf] %v9324
        %9353 = vst [vmem:[#allocation4 + $0x108] sm:$0xf] %v9337
        %v9354 = vld [vmem:[%s480 + $0x8] sm:$0xf]
        %v9355 = vld [vmem:[%s480 + $0x18] sm:$0xf]
        %v9356 = vld [vmem:[%s480 + $0x28] sm:$0xf]
        %v9357 = vld [vmem:[%s480 + $0x38] sm:$0xf]
        %v9358 = vld [vmem:[%s480 + $0x48] sm:$0xf]
        %v9359 = vld [vmem:[%s480 + $0x58] sm:$0xf]
        %v9360 = vld [vmem:[%s480 + $0x68] sm:$0xf]
        %v9361 = vld [vmem:[%s480 + $0x78] sm:$0xf]
        %9362 = vst [vmem:[#allocation4 + $0x10] sm:$0xf] %v9354
        %9363 = vst [vmem:[#allocation4 + $0x34] sm:$0xf] %v9355
        %9364 = vst [vmem:[#allocation4 + $0x58] sm:$0xf] %v9356
        %9365 = vst [vmem:[#allocation4 + $0x7c] sm:$0xf] %v9357
        %9366 = vst [vmem:[#allocation4 + $0xa0] sm:$0xf] %v9358
        %9367 = vst [vmem:[#allocation4 + $0xc4] sm:$0xf] %v9359
        %9368 = vst [vmem:[#allocation4 + $0xe8] sm:$0xf] %v9360
        %9369 = vst [vmem:[#allocation4 + $0x10c] sm:$0xf] %v9361
        %v9370 = vld [vmem:[%s480 + $0x8] sm:$0xf]
        %v9371 = vld [vmem:[%s480 + $0xc] sm:$0x1]
        %v9372 = vld [vmem:[%s480 + $0x18] sm:$0xf]
        %v9373 = vld [vmem:[%s480 + $0x1c] sm:$0x1]
        %v9374 = vld [vmem:[%s480 + $0x28] sm:$0xf]
        %v9375 = vld [vmem:[%s480 + $0x2c] sm:$0x1]
        %v9376 = vld [vmem:[%s480 + $0x38] sm:$0xf]
        %v9377 = vld [vmem:[%s480 + $0x3c] sm:$0x1]
        %v9378 = vld [vmem:[%s480 + $0x48] sm:$0xf]
        %v9379 = vld [vmem:[%s480 + $0x4c] sm:$0x1]
        %v9380 = vld [vmem:[%s480 + $0x58] sm:$0xf]
        %v9381 = vld [vmem:[%s480 + $0x5c] sm:$0x1]
        %v9382 = vld [vmem:[%s480 + $0x68] sm:$0xf]
        %v9383 = vld [vmem:[%s480 + $0x6c] sm:$0x1]
        %v9384 = vld [vmem:[%s480 + $0x78] sm:$0xf]
        %v9385 = vld [vmem:[%s480 + $0x7c] sm:$0x1]
        %v9387 = vshrl.u32 %v9370, 16
        %v9389 = vrot.slane %v9387, 4
        %v9390 = vshll.u32 %v9370, 16
        %v9392 = vrot.slane %v9390, 5
        %v9393 = vor.u32 %v9389, %v9392
        %v9394 = vrot.slane %v9393, 4
        %v9396 = vshll.u32 %v9371, 16
        %v9398 = vrot.slane %v9396, 5
        %v9399 = vsel %vm815, %v9394, %v9398
        %v9401 = vshrl.u32 %v9372, 16
        %v9403 = vrot.slane %v9401, 4
        %v9404 = vshll.u32 %v9372, 16
        %v9406 = vrot.slane %v9404, 5
        %v9407 = vor.u32 %v9403, %v9406
        %v9408 = vrot.slane %v9407, 4
        %v9410 = vshll.u32 %v9373, 16
        %v9412 = vrot.slane %v9410, 5
        %v9413 = vsel %vm815, %v9408, %v9412
        %v9415 = vshrl.u32 %v9374, 16
        %v9417 = vrot.slane %v9415, 4
        %v9418 = vshll.u32 %v9374, 16
        %v9420 = vrot.slane %v9418, 5
        %v9421 = vor.u32 %v9417, %v9420
        %v9422 = vrot.slane %v9421, 4
        %v9424 = vshll.u32 %v9375, 16
        %v9426 = vrot.slane %v9424, 5
        %v9427 = vsel %vm815, %v9422, %v9426
        %v9429 = vshrl.u32 %v9376, 16
        %v9431 = vrot.slane %v9429, 4
        %v9432 = vshll.u32 %v9376, 16
        %v9434 = vrot.slane %v9432, 5
        %v9435 = vor.u32 %v9431, %v9434
        %v9436 = vrot.slane %v9435, 4
        %v9438 = vshll.u32 %v9377, 16
        %v9440 = vrot.slane %v9438, 5
        %v9441 = vsel %vm815, %v9436, %v9440
        %v9443 = vshrl.u32 %v9378, 16
        %v9445 = vrot.slane %v9443, 4
        %v9446 = vshll.u32 %v9378, 16
        %v9448 = vrot.slane %v9446, 5
        %v9449 = vor.u32 %v9445, %v9448
        %v9450 = vrot.slane %v9449, 4
        %v9452 = vshll.u32 %v9379, 16
        %v9454 = vrot.slane %v9452, 5
        %v9455 = vsel %vm815, %v9450, %v9454
        %v9457 = vshrl.u32 %v9380, 16
        %v9459 = vrot.slane %v9457, 4
        %v9460 = vshll.u32 %v9380, 16
        %v9462 = vrot.slane %v9460, 5
        %v9463 = vor.u32 %v9459, %v9462
        %v9464 = vrot.slane %v9463, 4
        %v9466 = vshll.u32 %v9381, 16
        %v9468 = vrot.slane %v9466, 5
        %v9469 = vsel %vm815, %v9464, %v9468
        %v9471 = vshrl.u32 %v9382, 16
        %v9473 = vrot.slane %v9471, 4
        %v9474 = vshll.u32 %v9382, 16
        %v9476 = vrot.slane %v9474, 5
        %v9477 = vor.u32 %v9473, %v9476
        %v9478 = vrot.slane %v9477, 4
        %v9480 = vshll.u32 %v9383, 16
        %v9482 = vrot.slane %v9480, 5
        %v9483 = vsel %vm815, %v9478, %v9482
        %v9485 = vshrl.u32 %v9384, 16
        %v9487 = vrot.slane %v9485, 4
        %v9488 = vshll.u32 %v9384, 16
        %v9490 = vrot.slane %v9488, 5
        %v9491 = vor.u32 %v9487, %v9490
        %v9492 = vrot.slane %v9491, 4
        %v9494 = vshll.u32 %v9385, 16
        %v9496 = vrot.slane %v9494, 5
        %v9497 = vsel %vm815, %v9492, %v9496
        %9506 = vst [vmem:[#allocation4 + $0x14] sm:$0xf] %v9399
        %9507 = vst [vmem:[#allocation4 + $0x38] sm:$0xf] %v9413
        %9508 = vst [vmem:[#allocation4 + $0x5c] sm:$0xf] %v9427
        %9509 = vst [vmem:[#allocation4 + $0x80] sm:$0xf] %v9441
        %9510 = vst [vmem:[#allocation4 + $0xa4] sm:$0xf] %v9455
        %9511 = vst [vmem:[#allocation4 + $0xc8] sm:$0xf] %v9469
        %9512 = vst [vmem:[#allocation4 + $0xec] sm:$0xf] %v9483
        %9513 = vst [vmem:[#allocation4 + $0x110] sm:$0xf] %v9497
        %v9514 = vld [vmem:[%s1240 + $0x4] sm:$0x8]
        %v9515 = vld [vmem:[%s1240 + $0x8] sm:$0xf]
        %v9516 = vld [vmem:[%s1240 + $0x14] sm:$0x8]
        %v9517 = vld [vmem:[%s1240 + $0x18] sm:$0xf]
        %v9518 = vld [vmem:[%s1240 + $0x24] sm:$0x8]
        %v9519 = vld [vmem:[%s1240 + $0x28] sm:$0xf]
        %v9520 = vld [vmem:[%s1240 + $0x34] sm:$0x8]
        %v9521 = vld [vmem:[%s1240 + $0x38] sm:$0xf]
        %v9522 = vld [vmem:[%s1240 + $0x44] sm:$0x8]
        %v9523 = vld [vmem:[%s1240 + $0x48] sm:$0xf]
        %v9524 = vld [vmem:[%s1240 + $0x54] sm:$0x8]
        %v9525 = vld [vmem:[%s1240 + $0x58] sm:$0xf]
        %v9526 = vld [vmem:[%s1240 + $0x64] sm:$0x8]
        %v9527 = vld [vmem:[%s1240 + $0x68] sm:$0xf]
        %v9528 = vld [vmem:[%s1240 + $0x74] sm:$0x8]
        %v9529 = vld [vmem:[%s1240 + $0x78] sm:$0xf]
        %v9531 = vshrl.u32 %v9514, 16
        %v9533 = vrot.slane %v9531, 7
        %v9534 = vrot.slane %v9533, 4
        %v9536 = vshrl.u32 %v9515, 16
        %v9538 = vrot.slane %v9536, 7
        %v9539 = vshll.u32 %v9515, 16
        %v9541 = vor.u32 %v9538, %v9539
        %v9542 = vsel %vm660, %v9534, %v9541
        %v9544 = vshrl.u32 %v9516, 16
        %v9546 = vrot.slane %v9544, 7
        %v9547 = vrot.slane %v9546, 4
        %v9549 = vshrl.u32 %v9517, 16
        %v9551 = vrot.slane %v9549, 7
        %v9552 = vshll.u32 %v9517, 16
        %v9554 = vor.u32 %v9551, %v9552
        %v9555 = vsel %vm660, %v9547, %v9554
        %v9557 = vshrl.u32 %v9518, 16
        %v9559 = vrot.slane %v9557, 7
        %v9560 = vrot.slane %v9559, 4
        %v9562 = vshrl.u32 %v9519, 16
        %v9564 = vrot.slane %v9562, 7
        %v9565 = vshll.u32 %v9519, 16
        %v9567 = vor.u32 %v9564, %v9565
        %v9568 = vsel %vm660, %v9560, %v9567
        %v9570 = vshrl.u32 %v9520, 16
        %v9572 = vrot.slane %v9570, 7
        %v9573 = vrot.slane %v9572, 4
        %v9575 = vshrl.u32 %v9521, 16
        %v9577 = vrot.slane %v9575, 7
        %v9578 = vshll.u32 %v9521, 16
        %v9580 = vor.u32 %v9577, %v9578
        %v9581 = vsel %vm660, %v9573, %v9580
        %v9583 = vshrl.u32 %v9522, 16
        %v9585 = vrot.slane %v9583, 7
        %v9586 = vrot.slane %v9585, 4
        %v9588 = vshrl.u32 %v9523, 16
        %v9590 = vrot.slane %v9588, 7
        %v9591 = vshll.u32 %v9523, 16
        %v9593 = vor.u32 %v9590, %v9591
        %v9594 = vsel %vm660, %v9586, %v9593
        %v9596 = vshrl.u32 %v9524, 16
        %v9598 = vrot.slane %v9596, 7
        %v9599 = vrot.slane %v9598, 4
        %v9601 = vshrl.u32 %v9525, 16
        %v9603 = vrot.slane %v9601, 7
        %v9604 = vshll.u32 %v9525, 16
        %v9606 = vor.u32 %v9603, %v9604
        %v9607 = vsel %vm660, %v9599, %v9606
        %v9609 = vshrl.u32 %v9526, 16
        %v9611 = vrot.slane %v9609, 7
        %v9612 = vrot.slane %v9611, 4
        %v9614 = vshrl.u32 %v9527, 16
        %v9616 = vrot.slane %v9614, 7
        %v9617 = vshll.u32 %v9527, 16
        %v9619 = vor.u32 %v9616, %v9617
        %v9620 = vsel %vm660, %v9612, %v9619
        %v9622 = vshrl.u32 %v9528, 16
        %v9624 = vrot.slane %v9622, 7
        %v9625 = vrot.slane %v9624, 4
        %v9627 = vshrl.u32 %v9529, 16
        %v9629 = vrot.slane %v9627, 7
        %v9630 = vshll.u32 %v9529, 16
        %v9632 = vor.u32 %v9629, %v9630
        %v9633 = vsel %vm660, %v9625, %v9632
        %9642 = vst [vmem:[#allocation4 + $0x18] sm:$0xf] %v9542
        %9643 = vst [vmem:[#allocation4 + $0x3c] sm:$0xf] %v9555
        %9644 = vst [vmem:[#allocation4 + $0x60] sm:$0xf] %v9568
        %9645 = vst [vmem:[#allocation4 + $0x84] sm:$0xf] %v9581
        %9646 = vst [vmem:[#allocation4 + $0xa8] sm:$0xf] %v9594
        %9647 = vst [vmem:[#allocation4 + $0xcc] sm:$0xf] %v9607
        %9648 = vst [vmem:[#allocation4 + $0xf0] sm:$0xf] %v9620
        %9649 = vst [vmem:[#allocation4 + $0x114] sm:$0xf] %v9633
        %v9650 = vld [vmem:[%s1240 + $0x8] sm:$0xf]
        %v9651 = vld [vmem:[%s1240 + $0x18] sm:$0xf]
        %v9652 = vld [vmem:[%s1240 + $0x28] sm:$0xf]
        %v9653 = vld [vmem:[%s1240 + $0x38] sm:$0xf]
        %v9654 = vld [vmem:[%s1240 + $0x48] sm:$0xf]
        %v9655 = vld [vmem:[%s1240 + $0x58] sm:$0xf]
        %v9656 = vld [vmem:[%s1240 + $0x68] sm:$0xf]
        %v9657 = vld [vmem:[%s1240 + $0x78] sm:$0xf]
        %9658 = vst [vmem:[#allocation4 + $0x1c] sm:$0xf] %v9650
        %9659 = vst [vmem:[#allocation4 + $0x40] sm:$0xf] %v9651
        %9660 = vst [vmem:[#allocation4 + $0x64] sm:$0xf] %v9652
        %9661 = vst [vmem:[#allocation4 + $0x88] sm:$0xf] %v9653
        %9662 = vst [vmem:[#allocation4 + $0xac] sm:$0xf] %v9654
        %9663 = vst [vmem:[#allocation4 + $0xd0] sm:$0xf] %v9655
        %9664 = vst [vmem:[#allocation4 + $0xf4] sm:$0xf] %v9656
        %9665 = vst [vmem:[#allocation4 + $0x118] sm:$0xf] %v9657
        %v9666 = vld [vmem:[%s1240 + $0x8] sm:$0xf]
        %v9667 = vld [vmem:[%s1240 + $0xc] sm:$0x1]
        %v9668 = vld [vmem:[%s1240 + $0x18] sm:$0xf]
        %v9669 = vld [vmem:[%s1240 + $0x1c] sm:$0x1]
        %v9670 = vld [vmem:[%s1240 + $0x28] sm:$0xf]
        %v9671 = vld [vmem:[%s1240 + $0x2c] sm:$0x1]
        %v9672 = vld [vmem:[%s1240 + $0x38] sm:$0xf]
        %v9673 = vld [vmem:[%s1240 + $0x3c] sm:$0x1]
        %v9674 = vld [vmem:[%s1240 + $0x48] sm:$0xf]
        %v9675 = vld [vmem:[%s1240 + $0x4c] sm:$0x1]
        %v9676 = vld [vmem:[%s1240 + $0x58] sm:$0xf]
        %v9677 = vld [vmem:[%s1240 + $0x5c] sm:$0x1]
        %v9678 = vld [vmem:[%s1240 + $0x68] sm:$0xf]
        %v9679 = vld [vmem:[%s1240 + $0x6c] sm:$0x1]
        %v9680 = vld [vmem:[%s1240 + $0x78] sm:$0xf]
        %v9681 = vld [vmem:[%s1240 + $0x7c] sm:$0x1]
        %v9683 = vshrl.u32 %v9666, 16
        %v9685 = vrot.slane %v9683, 4
        %v9686 = vshll.u32 %v9666, 16
        %v9688 = vrot.slane %v9686, 5
        %v9689 = vor.u32 %v9685, %v9688
        %v9690 = vrot.slane %v9689, 4
        %v9692 = vshll.u32 %v9667, 16
        %v9694 = vrot.slane %v9692, 5
        %v9695 = vsel %vm815, %v9690, %v9694
        %v9697 = vshrl.u32 %v9668, 16
        %v9699 = vrot.slane %v9697, 4
        %v9700 = vshll.u32 %v9668, 16
        %v9702 = vrot.slane %v9700, 5
        %v9703 = vor.u32 %v9699, %v9702
        %v9704 = vrot.slane %v9703, 4
        %v9706 = vshll.u32 %v9669, 16
        %v9708 = vrot.slane %v9706, 5
        %v9709 = vsel %vm815, %v9704, %v9708
        %v9711 = vshrl.u32 %v9670, 16
        %v9713 = vrot.slane %v9711, 4
        %v9714 = vshll.u32 %v9670, 16
        %v9716 = vrot.slane %v9714, 5
        %v9717 = vor.u32 %v9713, %v9716
        %v9718 = vrot.slane %v9717, 4
        %v9720 = vshll.u32 %v9671, 16
        %v9722 = vrot.slane %v9720, 5
        %v9723 = vsel %vm815, %v9718, %v9722
        %v9725 = vshrl.u32 %v9672, 16
        %v9727 = vrot.slane %v9725, 4
        %v9728 = vshll.u32 %v9672, 16
        %v9730 = vrot.slane %v9728, 5
        %v9731 = vor.u32 %v9727, %v9730
        %v9732 = vrot.slane %v9731, 4
        %v9734 = vshll.u32 %v9673, 16
        %v9736 = vrot.slane %v9734, 5
        %v9737 = vsel %vm815, %v9732, %v9736
        %v9739 = vshrl.u32 %v9674, 16
        %v9741 = vrot.slane %v9739, 4
        %v9742 = vshll.u32 %v9674, 16
        %v9744 = vrot.slane %v9742, 5
        %v9745 = vor.u32 %v9741, %v9744
        %v9746 = vrot.slane %v9745, 4
        %v9748 = vshll.u32 %v9675, 16
        %v9750 = vrot.slane %v9748, 5
        %v9751 = vsel %vm815, %v9746, %v9750
        %v9753 = vshrl.u32 %v9676, 16
        %v9755 = vrot.slane %v9753, 4
        %v9756 = vshll.u32 %v9676, 16
        %v9758 = vrot.slane %v9756, 5
        %v9759 = vor.u32 %v9755, %v9758
        %v9760 = vrot.slane %v9759, 4
        %v9762 = vshll.u32 %v9677, 16
        %v9764 = vrot.slane %v9762, 5
        %v9765 = vsel %vm815, %v9760, %v9764
        %v9767 = vshrl.u32 %v9678, 16
        %v9769 = vrot.slane %v9767, 4
        %v9770 = vshll.u32 %v9678, 16
        %v9772 = vrot.slane %v9770, 5
        %v9773 = vor.u32 %v9769, %v9772
        %v9774 = vrot.slane %v9773, 4
        %v9776 = vshll.u32 %v9679, 16
        %v9778 = vrot.slane %v9776, 5
        %v9779 = vsel %vm815, %v9774, %v9778
        %v9781 = vshrl.u32 %v9680, 16
        %v9783 = vrot.slane %v9781, 4
        %v9784 = vshll.u32 %v9680, 16
        %v9786 = vrot.slane %v9784, 5
        %v9787 = vor.u32 %v9783, %v9786
        %v9788 = vrot.slane %v9787, 4
        %v9790 = vshll.u32 %v9681, 16
        %v9792 = vrot.slane %v9790, 5
        %v9793 = vsel %vm815, %v9788, %v9792
        %9802 = vst [vmem:[#allocation4 + $0x20] sm:$0xf] %v9695
        %9803 = vst [vmem:[#allocation4 + $0x44] sm:$0xf] %v9709
        %9804 = vst [vmem:[#allocation4 + $0x68] sm:$0xf] %v9723
        %9805 = vst [vmem:[#allocation4 + $0x8c] sm:$0xf] %v9737
        %9806 = vst [vmem:[#allocation4 + $0xb0] sm:$0xf] %v9751
        %9807 = vst [vmem:[#allocation4 + $0xd4] sm:$0xf] %v9765
        %9808 = vst [vmem:[#allocation4 + $0xf8] sm:$0xf] %v9779
        %9809 = vst [vmem:[#allocation4 + $0x11c] sm:$0xf] %v9793
        %v9810 = vld [vmem:[#allocation4] sm:$0xff]
        %v9811 = vld [vmem:[#allocation4 + $0x8] sm:$0xff]
        %v9812 = vld [vmem:[#allocation4 + $0x10] sm:$0xff]
        %v9813 = vld [vmem:[#allocation4 + $0x18] sm:$0xff]
        %v9814 = vld [vmem:[#allocation4 + $0x20] sm:$0xf]
        %v9815 = vld [vmem:[#allocation4 + $0x24] sm:$0xff]
        %v9816 = vld [vmem:[#allocation4 + $0x2c] sm:$0xff]
        %v9817 = vld [vmem:[#allocation4 + $0x34] sm:$0xff]
        %v9818 = vld [vmem:[#allocation4 + $0x3c] sm:$0xff]
        %v9819 = vld [vmem:[#allocation4 + $0x44] sm:$0xf]
        %v9820 = vld [vmem:[#allocation4 + $0x48] sm:$0xff]
        %v9821 = vld [vmem:[#allocation4 + $0x50] sm:$0xff]
        %v9822 = vld [vmem:[#allocation4 + $0x58] sm:$0xff]
        %v9823 = vld [vmem:[#allocation4 + $0x60] sm:$0xff]
        %v9824 = vld [vmem:[#allocation4 + $0x68] sm:$0xf]
        %v9825 = vld [vmem:[#allocation4 + $0x6c] sm:$0xff]
        %v9826 = vld [vmem:[#allocation4 + $0x74] sm:$0xff]
        %v9827 = vld [vmem:[#allocation4 + $0x7c] sm:$0xff]
        %v9828 = vld [vmem:[#allocation4 + $0x84] sm:$0xff]
        %v9829 = vld [vmem:[#allocation4 + $0x8c] sm:$0xf]
        %v9830 = vld [vmem:[#allocation4 + $0x90] sm:$0xff]
        %v9831 = vld [vmem:[#allocation4 + $0x98] sm:$0xff]
        %v9832 = vld [vmem:[#allocation4 + $0xa0] sm:$0xff]
        %v9833 = vld [vmem:[#allocation4 + $0xa8] sm:$0xff]
        %v9834 = vld [vmem:[#allocation4 + $0xb0] sm:$0xf]
        %v9835 = vld [vmem:[#allocation4 + $0xb4] sm:$0xff]
        %v9836 = vld [vmem:[#allocation4 + $0xbc] sm:$0xff]
        %v9837 = vld [vmem:[#allocation4 + $0xc4] sm:$0xff]
        %v9838 = vld [vmem:[#allocation4 + $0xcc] sm:$0xff]
        %v9839 = vld [vmem:[#allocation4 + $0xd4] sm:$0xf]
        %v9840 = vld [vmem:[#allocation4 + $0xd8] sm:$0xff]
        %v9841 = vld [vmem:[#allocation4 + $0xe0] sm:$0xff]
        %v9842 = vld [vmem:[#allocation4 + $0xe8] sm:$0xff]
        %v9843 = vld [vmem:[#allocation4 + $0xf0] sm:$0xff]
        %v9844 = vld [vmem:[#allocation4 + $0xf8] sm:$0xf]
        %v9845 = vld [vmem:[#allocation4 + $0xfc] sm:$0xff]
        %v9846 = vld [vmem:[#allocation4 + $0x104] sm:$0xff]
        %v9847 = vld [vmem:[#allocation4 + $0x10c] sm:$0xff]
        %v9848 = vld [vmem:[#allocation4 + $0x114] sm:$0xff]
        %v9849 = vld [vmem:[#allocation4 + $0x11c] sm:$0xf]
        %v9850 = vld [vmem:[#allocation13] sm:$0xf]
        %v9851 = vld [vmem:[#allocation13 + $0x4] sm:$0xf]
        %v9852 = vld [vmem:[#allocation13 + $0x8] sm:$0xf]
        %v9853 = vld [vmem:[#allocation13 + $0xc] sm:$0xf]
        %v9854 = vld [vmem:[#allocation13 + $0x10] sm:$0xf]
        %v9855 = vld [vmem:[#allocation13 + $0x14] sm:$0xf]
        %v9856 = vld [vmem:[#allocation13 + $0x18] sm:$0xf]
        %v9857 = vld [vmem:[#allocation13 + $0x1c] sm:$0xf]
        %v9858 = vld [vmem:[#allocation13 + $0x20] sm:$0xf]
        %v9859 = vld [vmem:[#allocation13 + $0x24] sm:$0xf]
        %v9860 = vld [vmem:[#allocation13 + $0x28] sm:$0xf]
        %v9861 = vld [vmem:[#allocation13 + $0x2c] sm:$0xf]
        %v9862 = vld [vmem:[#allocation13 + $0x30] sm:$0xf]
        %v9863 = vld [vmem:[#allocation13 + $0x34] sm:$0xf]
        %v9864 = vld [vmem:[#allocation13 + $0x38] sm:$0xf]
        %v9865 = vld [vmem:[#allocation13 + $0x3c] sm:$0xf]
        %v9866 = vld [vmem:[#allocation13 + $0x40] sm:$0xf]
        %v9867 = vld [vmem:[#allocation13 + $0x44] sm:$0xf]
        %v9868 = vld [vmem:[#allocation13 + $0x48] sm:$0xf]
        %v9869 = vld [vmem:[#allocation13 + $0x4c] sm:$0xf]
        %v9870 = vld [vmem:[#allocation13 + $0x50] sm:$0xf]
        %v9871 = vld [vmem:[#allocation13 + $0x54] sm:$0xf]
        %v9872 = vld [vmem:[#allocation13 + $0x58] sm:$0xf]
        %v9873 = vld [vmem:[#allocation13 + $0x5c] sm:$0xf]
        %v9874 = vld [vmem:[#allocation13 + $0x60] sm:$0xf]
        %v9875 = vld [vmem:[#allocation13 + $0x64] sm:$0xf]
        %v9876 = vld [vmem:[#allocation13 + $0x68] sm:$0xf]
        %v9877 = vld [vmem:[#allocation13 + $0x6c] sm:$0xf]
        %v9878 = vld [vmem:[#allocation13 + $0x70] sm:$0xf]
        %v9879 = vld [vmem:[#allocation13 + $0x74] sm:$0xf]
        %v9880 = vld [vmem:[#allocation13 + $0x78] sm:$0xf]
        %v9881 = vld [vmem:[#allocation13 + $0x7c] sm:$0xf]
        %v9882 = vld [vmem:[#allocation13 + $0x80] sm:$0xf]
        %v9883 = vld [vmem:[#allocation13 + $0x84] sm:$0xf]
        %v9884 = vld [vmem:[#allocation13 + $0x88] sm:$0xf]
        %v9885 = vld [vmem:[#allocation13 + $0x8c] sm:$0xf]
        %v9886 = vld [vmem:[#allocation13 + $0x90] sm:$0xf]
        %v9887 = vld [vmem:[#allocation13 + $0x94] sm:$0xf]
        %v9888 = vld [vmem:[#allocation13 + $0x98] sm:$0xf]
        %v9889 = vld [vmem:[#allocation13 + $0x9c] sm:$0xf]
        %v9890 = vld [vmem:[#allocation13 + $0xa0] sm:$0xf]
        %v9891 = vld [vmem:[#allocation13 + $0xa4] sm:$0xf]
        %v9892 = vld [vmem:[#allocation13 + $0xa8] sm:$0xf]
        %v9893 = vld [vmem:[#allocation13 + $0xac] sm:$0xf]
        %v9894 = vld [vmem:[#allocation13 + $0xb0] sm:$0xf]
        %v9895 = vld [vmem:[#allocation13 + $0xb4] sm:$0xf]
        %v9896 = vld [vmem:[#allocation13 + $0xb8] sm:$0xf]
        %v9897 = vld [vmem:[#allocation13 + $0xbc] sm:$0xf]
        %v9898 = vld [vmem:[#allocation13 + $0xc0] sm:$0xf]
        %v9899 = vld [vmem:[#allocation13 + $0xc4] sm:$0xf]
        %v9900 = vld [vmem:[#allocation13 + $0xc8] sm:$0xf]
        %v9901 = vld [vmem:[#allocation13 + $0xcc] sm:$0xf]
        %v9902 = vld [vmem:[#allocation13 + $0xd0] sm:$0xf]
        %v9903 = vld [vmem:[#allocation13 + $0xd4] sm:$0xf]
        %v9904 = vld [vmem:[#allocation13 + $0xd8] sm:$0xf]
        %v9905 = vld [vmem:[#allocation13 + $0xdc] sm:$0xf]
        %v9906 = vld [vmem:[#allocation13 + $0xe0] sm:$0xf]
        %v9907 = vld [vmem:[#allocation13 + $0xe4] sm:$0xf]
        %v9908 = vld [vmem:[#allocation13 + $0xe8] sm:$0xf]
        %v9909 = vld [vmem:[#allocation13 + $0xec] sm:$0xf]
        %v9910 = vld [vmem:[#allocation13 + $0xf0] sm:$0xf]
        %v9911 = vld [vmem:[#allocation13 + $0xf4] sm:$0xf]
        %v9912 = vld [vmem:[#allocation13 + $0xf8] sm:$0xf]
        %v9913 = vld [vmem:[#allocation13 + $0xfc] sm:$0xf]
        %v9914 = vld [vmem:[#allocation13 + $0x100] sm:$0xf]
        %v9915 = vld [vmem:[#allocation13 + $0x104] sm:$0xf]
        %v9916 = vld [vmem:[#allocation13 + $0x108] sm:$0xf]
        %v9917 = vld [vmem:[#allocation13 + $0x10c] sm:$0xf]
        %v9918 = vld [vmem:[#allocation13 + $0x110] sm:$0xf]
        %v9919 = vld [vmem:[#allocation13 + $0x114] sm:$0xf]
        %v9920 = vld [vmem:[#allocation13 + $0x118] sm:$0xf]
        %v9921 = vld [vmem:[#allocation13 + $0x11c] sm:$0xf]
        %v9922 = vld [vmem:[#allocation13 + $0x120] sm:$0xf]
        %v9923 = vld [vmem:[#allocation13 + $0x124] sm:$0xf]
        %v9924 = vld [vmem:[#allocation13 + $0x128] sm:$0xf]
        %v9925 = vld [vmem:[#allocation13 + $0x12c] sm:$0xf]
        %v9926 = vld [vmem:[#allocation13 + $0x130] sm:$0xf]
        %v9927 = vld [vmem:[#allocation13 + $0x134] sm:$0xf]
        %v9928 = vld [vmem:[#allocation13 + $0x138] sm:$0xf]
        %v9929 = vld [vmem:[#allocation13 + $0x13c] sm:$0xf]
        %v9930 = vld [vmem:[#allocation13 + $0x140] sm:$0xf]
        %v9931 = vld [vmem:[#allocation13 + $0x144] sm:$0xf]
        %v9932 = vld [vmem:[#allocation13 + $0x148] sm:$0xf]
        %v9933 = vld [vmem:[#allocation13 + $0x14c] sm:$0xf]
        %v9934 = vld [vmem:[#allocation13 + $0x150] sm:$0xf]
        %v9935 = vld [vmem:[#allocation13 + $0x154] sm:$0xf]
        %v9936 = vld [vmem:[#allocation13 + $0x158] sm:$0xf]
        %v9937 = vld [vmem:[#allocation13 + $0x15c] sm:$0xf]
        %v9938 = vld [vmem:[#allocation13 + $0x160] sm:$0xf]
        %v9939 = vld [vmem:[#allocation13 + $0x164] sm:$0xf]
        %v9940 = vld [vmem:[#allocation13 + $0x168] sm:$0xf]
        %v9941 = vld [vmem:[#allocation13 + $0x16c] sm:$0xf]
        %v9942 = vld [vmem:[#allocation13 + $0x170] sm:$0xf]
        %v9943 = vld [vmem:[#allocation13 + $0x174] sm:$0xf]
        %v9944 = vld [vmem:[#allocation13 + $0x178] sm:$0xf]
        %v9945 = vld [vmem:[#allocation13 + $0x17c] sm:$0xf]
        %v9946 = vld [vmem:[#allocation13 + $0x180] sm:$0xf]
        %v9947 = vld [vmem:[#allocation13 + $0x184] sm:$0xf]
        %v9948 = vld [vmem:[#allocation13 + $0x188] sm:$0xf]
        %v9949 = vld [vmem:[#allocation13 + $0x18c] sm:$0xf]
        %v9950 = vld [vmem:[#allocation13 + $0x190] sm:$0xf]
        %v9951 = vld [vmem:[#allocation13 + $0x194] sm:$0xf]
        %v9952 = vld [vmem:[#allocation13 + $0x198] sm:$0xf]
        %v9953 = vld [vmem:[#allocation13 + $0x19c] sm:$0xf]
        %v9954 = vld [vmem:[#allocation13 + $0x1a0] sm:$0xf]
        %v9955 = vld [vmem:[#allocation13 + $0x1a4] sm:$0xf]
        %v9956 = vld [vmem:[#allocation13 + $0x1a8] sm:$0xf]
        %v9957 = vld [vmem:[#allocation13 + $0x1ac] sm:$0xf]
        %v9958 = vld [vmem:[#allocation13 + $0x1b0] sm:$0xf]
        %v9959 = vld [vmem:[#allocation13 + $0x1b4] sm:$0xf]
        %v9960 = vld [vmem:[#allocation13 + $0x1b8] sm:$0xf]
        %v9961 = vld [vmem:[#allocation13 + $0x1bc] sm:$0xf]
        %v9962 = vld [vmem:[#allocation13 + $0x1c0] sm:$0xf]
        %v9963 = vld [vmem:[#allocation13 + $0x1c4] sm:$0xf]
        %v9964 = vld [vmem:[#allocation13 + $0x1c8] sm:$0xf]
        %v9965 = vld [vmem:[#allocation13 + $0x1cc] sm:$0xf]
        %v9966 = vld [vmem:[#allocation13 + $0x1d0] sm:$0xf]
        %v9967 = vld [vmem:[#allocation13 + $0x1d4] sm:$0xf]
        %v9968 = vld [vmem:[#allocation13 + $0x1d8] sm:$0xf]
        %v9969 = vld [vmem:[#allocation13 + $0x1dc] sm:$0xf]
        %v9970 = vld [vmem:[#allocation13 + $0x1e0] sm:$0xf]
        %v9971 = vld [vmem:[#allocation13 + $0x1e4] sm:$0xf]
        %v9972 = vld [vmem:[#allocation13 + $0x1e8] sm:$0xf]
        %v9973 = vld [vmem:[#allocation13 + $0x1ec] sm:$0xf]
        %v9974 = vld [vmem:[#allocation13 + $0x1f0] sm:$0xf]
        %v9975 = vld [vmem:[#allocation13 + $0x1f4] sm:$0xf]
        %v9976 = vld [vmem:[#allocation13 + $0x1f8] sm:$0xf]
        %v9977 = vld [vmem:[#allocation13 + $0x1fc] sm:$0xf]
        %v9978 = vld [vmem:[#allocation13 + $0x200] sm:$0xf]
        %v9979 = vld [vmem:[#allocation13 + $0x204] sm:$0xf]
        %v9980 = vld [vmem:[#allocation13 + $0x208] sm:$0xf]
        %v9981 = vld [vmem:[#allocation13 + $0x20c] sm:$0xf]
        %v9982 = vld [vmem:[#allocation13 + $0x210] sm:$0xf]
        %v9983 = vld [vmem:[#allocation13 + $0x214] sm:$0xf]
        %v9984 = vld [vmem:[#allocation13 + $0x218] sm:$0xf]
        %v9985 = vld [vmem:[#allocation13 + $0x21c] sm:$0xf]
        %v9986 = vld [vmem:[#allocation13 + $0x220] sm:$0xf]
        %v9987 = vld [vmem:[#allocation13 + $0x224] sm:$0xf]
        %v9988 = vld [vmem:[#allocation13 + $0x228] sm:$0xf]
        %v9989 = vld [vmem:[#allocation13 + $0x22c] sm:$0xf]
        %v9990 = vld [vmem:[#allocation13 + $0x230] sm:$0xf]
        %v9991 = vld [vmem:[#allocation13 + $0x234] sm:$0xf]
        %v9992 = vld [vmem:[#allocation13 + $0x238] sm:$0xf]
        %v9993 = vld [vmem:[#allocation13 + $0x23c] sm:$0xf]
        %v9994 = vld [vmem:[%s10] sm:$0x1]
        %v9996 = vlaneseq
        %v9997 = vshrl.u32 %v9996, 7
        %v9998 = vsub.s32 0, %v9997
        %v9999 = vrot.slane %v9994, %v9998
        %v10041 = vunpack.c.l.b16 %v9810
        %v10042 = vunpack.c.h.b16 %v9810
        %v10043 = vunpack.c.l.b16 %v9811
        %v10044 = vunpack.c.h.b16 %v9811
        %v10045 = vunpack.c.l.b16 %v9812
        %v10046 = vunpack.c.h.b16 %v9812
        %v10047 = vunpack.c.l.b16 %v9813
        %v10048 = vunpack.c.h.b16 %v9813
        %v10049 = vunpack.c.l.b16 %v9814
        %v10050 = vunpack.c.l.b16 %v9815
        %v10051 = vunpack.c.h.b16 %v9815
        %v10052 = vunpack.c.l.b16 %v9816
        %v10053 = vunpack.c.h.b16 %v9816
        %v10054 = vunpack.c.l.b16 %v9817
        %v10055 = vunpack.c.h.b16 %v9817
        %v10056 = vunpack.c.l.b16 %v9818
        %v10057 = vunpack.c.h.b16 %v9818
        %v10058 = vunpack.c.l.b16 %v9819
        %v10059 = vunpack.c.l.b16 %v9820
        %v10060 = vunpack.c.h.b16 %v9820
        %v10061 = vunpack.c.l.b16 %v9821
        %v10062 = vunpack.c.h.b16 %v9821
        %v10063 = vunpack.c.l.b16 %v9822
        %v10064 = vunpack.c.h.b16 %v9822
        %v10065 = vunpack.c.l.b16 %v9823
        %v10066 = vunpack.c.h.b16 %v9823
        %v10067 = vunpack.c.l.b16 %v9824
        %v10068 = vunpack.c.l.b16 %v9825
        %v10069 = vunpack.c.h.b16 %v9825
        %v10070 = vunpack.c.l.b16 %v9826
        %v10071 = vunpack.c.h.b16 %v9826
        %v10072 = vunpack.c.l.b16 %v9827
        %v10073 = vunpack.c.h.b16 %v9827
        %v10074 = vunpack.c.l.b16 %v9828
        %v10075 = vunpack.c.h.b16 %v9828
        %v10076 = vunpack.c.l.b16 %v9829
        %v10077 = vunpack.c.l.b16 %v9830
        %v10078 = vunpack.c.h.b16 %v9830
        %v10079 = vunpack.c.l.b16 %v9831
        %v10080 = vunpack.c.h.b16 %v9831
        %v10081 = vunpack.c.l.b16 %v9832
        %v10082 = vunpack.c.h.b16 %v9832
        %v10083 = vunpack.c.l.b16 %v9833
        %v10084 = vunpack.c.h.b16 %v9833
        %v10085 = vunpack.c.l.b16 %v9834
        %v10086 = vunpack.c.l.b16 %v9835
        %v10087 = vunpack.c.h.b16 %v9835
        %v10088 = vunpack.c.l.b16 %v9836
        %v10089 = vunpack.c.h.b16 %v9836
        %v10090 = vunpack.c.l.b16 %v9837
        %v10091 = vunpack.c.h.b16 %v9837
        %v10092 = vunpack.c.l.b16 %v9838
        %v10093 = vunpack.c.h.b16 %v9838
        %v10094 = vunpack.c.l.b16 %v9839
        %v10095 = vunpack.c.l.b16 %v9840
        %v10096 = vunpack.c.h.b16 %v9840
        %v10097 = vunpack.c.l.b16 %v9841
        %v10098 = vunpack.c.h.b16 %v9841
        %v10099 = vunpack.c.l.b16 %v9842
        %v10100 = vunpack.c.h.b16 %v9842
        %v10101 = vunpack.c.l.b16 %v9843
        %v10102 = vunpack.c.h.b16 %v9843
        %v10103 = vunpack.c.l.b16 %v9844
        %v10104 = vunpack.c.l.b16 %v9845
        %v10105 = vunpack.c.h.b16 %v9845
        %v10106 = vunpack.c.l.b16 %v9846
        %v10107 = vunpack.c.h.b16 %v9846
        %v10108 = vunpack.c.l.b16 %v9847
        %v10109 = vunpack.c.h.b16 %v9847
        %v10110 = vunpack.c.l.b16 %v9848
        %v10111 = vunpack.c.h.b16 %v9848
        %v10112 = vunpack.c.l.b16 %v9849
        %v10113 = vpack.c.b16 %v10050, %v10041
        %v10114 = vpack.c.b16 %v10051, %v10042
        %v10115 = vpack.c.b16 %v10052, %v10043
        %v10116 = vpack.c.b16 %v10053, %v10044
        %v10117 = vpack.c.b16 %v10054, %v10045
        %v10118 = vpack.c.b16 %v10055, %v10046
        %v10119 = vpack.c.b16 %v10056, %v10047
        %v10120 = vpack.c.b16 %v10057, %v10048
        %v10121 = vpack.c.b16 %v10058, %v10049
        %v10122 = vpack.c.b16 %v10068, %v10059
        %v10123 = vpack.c.b16 %v10069, %v10060
        %v10124 = vpack.c.b16 %v10070, %v10061
        %v10125 = vpack.c.b16 %v10071, %v10062
        %v10126 = vpack.c.b16 %v10072, %v10063
        %v10127 = vpack.c.b16 %v10073, %v10064
        %v10128 = vpack.c.b16 %v10074, %v10065
        %v10129 = vpack.c.b16 %v10075, %v10066
        %v10130 = vpack.c.b16 %v10076, %v10067
        %v10131 = vpack.c.b16 %v10086, %v10077
        %v10132 = vpack.c.b16 %v10087, %v10078
        %v10133 = vpack.c.b16 %v10088, %v10079
        %v10134 = vpack.c.b16 %v10089, %v10080
        %v10135 = vpack.c.b16 %v10090, %v10081
        %v10136 = vpack.c.b16 %v10091, %v10082
        %v10137 = vpack.c.b16 %v10092, %v10083
        %v10138 = vpack.c.b16 %v10093, %v10084
        %v10139 = vpack.c.b16 %v10094, %v10085
        %v10140 = vpack.c.b16 %v10104, %v10095
        %v10141 = vpack.c.b16 %v10105, %v10096
        %v10142 = vpack.c.b16 %v10106, %v10097
        %v10143 = vpack.c.b16 %v10107, %v10098
        %v10144 = vpack.c.b16 %v10108, %v10099
        %v10145 = vpack.c.b16 %v10109, %v10100
        %v10146 = vpack.c.b16 %v10110, %v10101
        %v10147 = vpack.c.b16 %v10111, %v10102
        %v10148 = vpack.c.b16 %v10112, %v10103
        %v10329 = vunpack.c.l.b16 %v9850
        %v10330 = vunpack.c.l.b16 %v9851
        %v10331 = vunpack.c.l.b16 %v9852
        %v10332 = vunpack.c.l.b16 %v9853
        %v10333 = vunpack.c.l.b16 %v9854
        %v10334 = vunpack.c.l.b16 %v9855
        %v10335 = vunpack.c.l.b16 %v9856
        %v10336 = vunpack.c.l.b16 %v9857
        %v10337 = vunpack.c.l.b16 %v9858
        %v10338 = vunpack.c.l.b16 %v9859
        %v10339 = vunpack.c.l.b16 %v9860
        %v10340 = vunpack.c.l.b16 %v9861
        %v10341 = vunpack.c.l.b16 %v9862
        %v10342 = vunpack.c.l.b16 %v9863
        %v10343 = vunpack.c.l.b16 %v9864
        %v10344 = vunpack.c.l.b16 %v9865
        %v10345 = vunpack.c.l.b16 %v9866
        %v10346 = vunpack.c.l.b16 %v9867
        %v10347 = vunpack.c.l.b16 %v9868
        %v10348 = vunpack.c.l.b16 %v9869
        %v10349 = vunpack.c.l.b16 %v9870
        %v10350 = vunpack.c.l.b16 %v9871
        %v10351 = vunpack.c.l.b16 %v9872
        %v10352 = vunpack.c.l.b16 %v9873
        %v10353 = vunpack.c.l.b16 %v9874
        %v10354 = vunpack.c.l.b16 %v9875
        %v10355 = vunpack.c.l.b16 %v9876
        %v10356 = vunpack.c.l.b16 %v9877
        %v10357 = vunpack.c.l.b16 %v9878
        %v10358 = vunpack.c.l.b16 %v9879
        %v10359 = vunpack.c.l.b16 %v9880
        %v10360 = vunpack.c.l.b16 %v9881
        %v10361 = vunpack.c.l.b16 %v9882
        %v10362 = vunpack.c.l.b16 %v9883
        %v10363 = vunpack.c.l.b16 %v9884
        %v10364 = vunpack.c.l.b16 %v9885
        %v10365 = vunpack.c.l.b16 %v9886
        %v10366 = vunpack.c.l.b16 %v9887
        %v10367 = vunpack.c.l.b16 %v9888
        %v10368 = vunpack.c.l.b16 %v9889
        %v10369 = vunpack.c.l.b16 %v9890
        %v10370 = vunpack.c.l.b16 %v9891
        %v10371 = vunpack.c.l.b16 %v9892
        %v10372 = vunpack.c.l.b16 %v9893
        %v10373 = vunpack.c.l.b16 %v9894
        %v10374 = vunpack.c.l.b16 %v9895
        %v10375 = vunpack.c.l.b16 %v9896
        %v10376 = vunpack.c.l.b16 %v9897
        %v10377 = vunpack.c.l.b16 %v9898
        %v10378 = vunpack.c.l.b16 %v9899
        %v10379 = vunpack.c.l.b16 %v9900
        %v10380 = vunpack.c.l.b16 %v9901
        %v10381 = vunpack.c.l.b16 %v9902
        %v10382 = vunpack.c.l.b16 %v9903
        %v10383 = vunpack.c.l.b16 %v9904
        %v10384 = vunpack.c.l.b16 %v9905
        %v10385 = vunpack.c.l.b16 %v9906
        %v10386 = vunpack.c.l.b16 %v9907
        %v10387 = vunpack.c.l.b16 %v9908
        %v10388 = vunpack.c.l.b16 %v9909
        %v10389 = vunpack.c.l.b16 %v9910
        %v10390 = vunpack.c.l.b16 %v9911
        %v10391 = vunpack.c.l.b16 %v9912
        %v10392 = vunpack.c.l.b16 %v9913
        %v10393 = vunpack.c.l.b16 %v9914
        %v10394 = vunpack.c.l.b16 %v9915
        %v10395 = vunpack.c.l.b16 %v9916
        %v10396 = vunpack.c.l.b16 %v9917
        %v10397 = vunpack.c.l.b16 %v9918
        %v10398 = vunpack.c.l.b16 %v9919
        %v10399 = vunpack.c.l.b16 %v9920
        %v10400 = vunpack.c.l.b16 %v9921
        %v10401 = vunpack.c.l.b16 %v9922
        %v10402 = vunpack.c.l.b16 %v9923
        %v10403 = vunpack.c.l.b16 %v9924
        %v10404 = vunpack.c.l.b16 %v9925
        %v10405 = vunpack.c.l.b16 %v9926
        %v10406 = vunpack.c.l.b16 %v9927
        %v10407 = vunpack.c.l.b16 %v9928
        %v10408 = vunpack.c.l.b16 %v9929
        %v10409 = vunpack.c.l.b16 %v9930
        %v10410 = vunpack.c.l.b16 %v9931
        %v10411 = vunpack.c.l.b16 %v9932
        %v10412 = vunpack.c.l.b16 %v9933
        %v10413 = vunpack.c.l.b16 %v9934
        %v10414 = vunpack.c.l.b16 %v9935
        %v10415 = vunpack.c.l.b16 %v9936
        %v10416 = vunpack.c.l.b16 %v9937
        %v10417 = vunpack.c.l.b16 %v9938
        %v10418 = vunpack.c.l.b16 %v9939
        %v10419 = vunpack.c.l.b16 %v9940
        %v10420 = vunpack.c.l.b16 %v9941
        %v10421 = vunpack.c.l.b16 %v9942
        %v10422 = vunpack.c.l.b16 %v9943
        %v10423 = vunpack.c.l.b16 %v9944
        %v10424 = vunpack.c.l.b16 %v9945
        %v10425 = vunpack.c.l.b16 %v9946
        %v10426 = vunpack.c.l.b16 %v9947
        %v10427 = vunpack.c.l.b16 %v9948
        %v10428 = vunpack.c.l.b16 %v9949
        %v10429 = vunpack.c.l.b16 %v9950
        %v10430 = vunpack.c.l.b16 %v9951
        %v10431 = vunpack.c.l.b16 %v9952
        %v10432 = vunpack.c.l.b16 %v9953
        %v10433 = vunpack.c.l.b16 %v9954
        %v10434 = vunpack.c.l.b16 %v9955
        %v10435 = vunpack.c.l.b16 %v9956
        %v10436 = vunpack.c.l.b16 %v9957
        %v10437 = vunpack.c.l.b16 %v9958
        %v10438 = vunpack.c.l.b16 %v9959
        %v10439 = vunpack.c.l.b16 %v9960
        %v10440 = vunpack.c.l.b16 %v9961
        %v10441 = vunpack.c.l.b16 %v9962
        %v10442 = vunpack.c.l.b16 %v9963
        %v10443 = vunpack.c.l.b16 %v9964
        %v10444 = vunpack.c.l.b16 %v9965
        %v10445 = vunpack.c.l.b16 %v9966
        %v10446 = vunpack.c.l.b16 %v9967
        %v10447 = vunpack.c.l.b16 %v9968
        %v10448 = vunpack.c.l.b16 %v9969
        %v10449 = vunpack.c.l.b16 %v9970
        %v10450 = vunpack.c.l.b16 %v9971
        %v10451 = vunpack.c.l.b16 %v9972
        %v10452 = vunpack.c.l.b16 %v9973
        %v10453 = vunpack.c.l.b16 %v9974
        %v10454 = vunpack.c.l.b16 %v9975
        %v10455 = vunpack.c.l.b16 %v9976
        %v10456 = vunpack.c.l.b16 %v9977
        %v10457 = vunpack.c.l.b16 %v9978
        %v10458 = vunpack.c.l.b16 %v9979
        %v10459 = vunpack.c.l.b16 %v9980
        %v10460 = vunpack.c.l.b16 %v9981
        %v10461 = vunpack.c.l.b16 %v9982
        %v10462 = vunpack.c.l.b16 %v9983
        %v10463 = vunpack.c.l.b16 %v9984
        %v10464 = vunpack.c.l.b16 %v9985
        %v10465 = vunpack.c.l.b16 %v9986
        %v10466 = vunpack.c.l.b16 %v9987
        %v10467 = vunpack.c.l.b16 %v9988
        %v10468 = vunpack.c.l.b16 %v9989
        %v10469 = vunpack.c.l.b16 %v9990
        %v10470 = vunpack.c.l.b16 %v9991
        %v10471 = vunpack.c.l.b16 %v9992
        %v10472 = vunpack.c.l.b16 %v9993
        %v10473 = vpack.c.b16 %v10330, %v10329
        %v10474 = vpack.c.b16 %v10332, %v10331
        %v10475 = vpack.c.b16 %v10334, %v10333
        %v10476 = vpack.c.b16 %v10336, %v10335
        %v10477 = vpack.c.b16 %v10338, %v10337
        %v10478 = vpack.c.b16 %v10340, %v10339
        %v10479 = vpack.c.b16 %v10342, %v10341
        %v10480 = vpack.c.b16 %v10344, %v10343
        %v10481 = vpack.c.b16 %v10346, %v10345
        %v10482 = vpack.c.b16 %v10348, %v10347
        %v10483 = vpack.c.b16 %v10350, %v10349
        %v10484 = vpack.c.b16 %v10352, %v10351
        %v10485 = vpack.c.b16 %v10354, %v10353
        %v10486 = vpack.c.b16 %v10356, %v10355
        %v10487 = vpack.c.b16 %v10358, %v10357
        %v10488 = vpack.c.b16 %v10360, %v10359
        %v10489 = vpack.c.b16 %v10362, %v10361
        %v10490 = vpack.c.b16 %v10364, %v10363
        %v10491 = vpack.c.b16 %v10366, %v10365
        %v10492 = vpack.c.b16 %v10368, %v10367
        %v10493 = vpack.c.b16 %v10370, %v10369
        %v10494 = vpack.c.b16 %v10372, %v10371
        %v10495 = vpack.c.b16 %v10374, %v10373
        %v10496 = vpack.c.b16 %v10376, %v10375
        %v10497 = vpack.c.b16 %v10378, %v10377
        %v10498 = vpack.c.b16 %v10380, %v10379
        %v10499 = vpack.c.b16 %v10382, %v10381
        %v10500 = vpack.c.b16 %v10384, %v10383
        %v10501 = vpack.c.b16 %v10386, %v10385
        %v10502 = vpack.c.b16 %v10388, %v10387
        %v10503 = vpack.c.b16 %v10390, %v10389
        %v10504 = vpack.c.b16 %v10392, %v10391
        %v10505 = vpack.c.b16 %v10394, %v10393
        %v10506 = vpack.c.b16 %v10396, %v10395
        %v10507 = vpack.c.b16 %v10398, %v10397
        %v10508 = vpack.c.b16 %v10400, %v10399
        %v10509 = vpack.c.b16 %v10402, %v10401
        %v10510 = vpack.c.b16 %v10404, %v10403
        %v10511 = vpack.c.b16 %v10406, %v10405
        %v10512 = vpack.c.b16 %v10408, %v10407
        %v10513 = vpack.c.b16 %v10410, %v10409
        %v10514 = vpack.c.b16 %v10412, %v10411
        %v10515 = vpack.c.b16 %v10414, %v10413
        %v10516 = vpack.c.b16 %v10416, %v10415
        %v10517 = vpack.c.b16 %v10418, %v10417
        %v10518 = vpack.c.b16 %v10420, %v10419
        %v10519 = vpack.c.b16 %v10422, %v10421
        %v10520 = vpack.c.b16 %v10424, %v10423
        %v10521 = vpack.c.b16 %v10426, %v10425
        %v10522 = vpack.c.b16 %v10428, %v10427
        %v10523 = vpack.c.b16 %v10430, %v10429
        %v10524 = vpack.c.b16 %v10432, %v10431
        %v10525 = vpack.c.b16 %v10434, %v10433
        %v10526 = vpack.c.b16 %v10436, %v10435
        %v10527 = vpack.c.b16 %v10438, %v10437
        %v10528 = vpack.c.b16 %v10440, %v10439
        %v10529 = vpack.c.b16 %v10442, %v10441
        %v10530 = vpack.c.b16 %v10444, %v10443
        %v10531 = vpack.c.b16 %v10446, %v10445
        %v10532 = vpack.c.b16 %v10448, %v10447
        %v10533 = vpack.c.b16 %v10450, %v10449
        %v10534 = vpack.c.b16 %v10452, %v10451
        %v10535 = vpack.c.b16 %v10454, %v10453
        %v10536 = vpack.c.b16 %v10456, %v10455
        %v10537 = vpack.c.b16 %v10458, %v10457
        %v10538 = vpack.c.b16 %v10460, %v10459
        %v10539 = vpack.c.b16 %v10462, %v10461
        %v10540 = vpack.c.b16 %v10464, %v10463
        %v10541 = vpack.c.b16 %v10466, %v10465
        %v10542 = vpack.c.b16 %v10468, %v10467
        %v10543 = vpack.c.b16 %v10470, %v10469
        %v10544 = vpack.c.b16 %v10472, %v10471
        %10617 = vmatprep.subr.bf16.mxu0 0
        %10618 = vmatpush1.bf16.msra.mxu0 %v10480
        %10619 = vmatprep.subr.bf16.mxu0 0
        %10620 = vmatpush1.bf16.msra.mxu0 %v10479
        %10621 = vmatprep.subr.bf16.mxu0 0
        %10622 = vmatpush1.bf16.msra.mxu0 %v10478
        %10623 = vmatprep.subr.bf16.mxu0 0
        %10624 = vmatpush1.bf16.msra.mxu0 %v10477
        %10625 = vmatprep.subr.bf16.mxu0 0
        %10626 = vmatpush1.bf16.msra.mxu0 %v10476
        %10627 = vmatprep.subr.bf16.mxu0 0
        %10628 = vmatpush1.bf16.msra.mxu0 %v10475
        %10629 = vmatprep.subr.bf16.mxu0 0
        %10630 = vmatpush1.bf16.msra.mxu0 %v10474
        %10631 = vmatprep.subr.bf16.mxu0 0
        %10632 = vmatpush1.bf16.msra.mxu0 %v10473
        %10633 = vmatprep.subr.bf16.mxu0 0
        %10634 = vmatpush2.bf16.msra.mxu0 %v10488
        %10635 = vmatprep.subr.bf16.mxu0 0
        %10636 = vmatpush2.bf16.msra.mxu0 %v10487
        %10637 = vmatprep.subr.bf16.mxu0 0
        %10638 = vmatpush2.bf16.msra.mxu0 %v10486
        %10639 = vmatprep.subr.bf16.mxu0 0
        %10640 = vmatpush2.bf16.msra.mxu0 %v10485
        %10641 = vmatprep.subr.bf16.mxu0 0
        %10642 = vmatpush2.bf16.msra.mxu0 %v10484
        %10643 = vmatprep.subr.bf16.mxu0 0
        %10644 = vmatpush2.bf16.msra.mxu0 %v10483
        %10645 = vmatprep.subr.bf16.mxu0 0
        %10646 = vmatpush2.bf16.msra.mxu0 %v10482
        %10647 = vmatprep.subr.bf16.mxu0 0
        %10648 = vmatpush2.bf16.msra.mxu0 %v10481
        %10649 = vmatprep.mubr.bf16.mxu0 %v10114
        %10650 = vmatmul.mubr.bf16.gmra.mxu0 %v10113
        %v10651 = vpop.f32.mrf.mxu0
        %v10652 = vadd.f32 %v9999, %v10651
        %v10653 = vpop.f32.mrf.mxu0
        %v10654 = vpop.f32.mrf.mxu0
        %v10655 = vadd.f32 %v9999, %v10654
        %v10656 = vpop.f32.mrf.mxu0
        %10657 = vmatprep.mubr.bf16.mxu0 %v10123
        %10658 = vmatmul.mubr.bf16.gmra.mxu0 %v10122
        %v10659 = vpop.f32.mrf.mxu0
        %v10660 = vadd.f32 %v9999, %v10659
        %v10661 = vpop.f32.mrf.mxu0
        %v10662 = vpop.f32.mrf.mxu0
        %v10663 = vadd.f32 %v9999, %v10662
        %v10664 = vpop.f32.mrf.mxu0
        %10665 = vmatprep.mubr.bf16.mxu0 %v10132
        %10666 = vmatmul.mubr.bf16.gmra.mxu0 %v10131
        %v10667 = vpop.f32.mrf.mxu0
        %v10668 = vadd.f32 %v9999, %v10667
        %v10669 = vpop.f32.mrf.mxu0
        %v10670 = vpop.f32.mrf.mxu0
        %v10671 = vadd.f32 %v9999, %v10670
        %v10672 = vpop.f32.mrf.mxu0
        %10673 = vmatprep.mubr.bf16.mxu0 %v10141
        %10674 = vmatmul.mubr.bf16.gmra.mxu0 %v10140
        %v10675 = vpop.f32.mrf.mxu0
        %v10676 = vadd.f32 %v9999, %v10675
        %v10677 = vpop.f32.mrf.mxu0
        %v10678 = vpop.f32.mrf.mxu0
        %v10679 = vadd.f32 %v9999, %v10678
        %v10680 = vpop.f32.mrf.mxu0
        %10681 = vdwg.mxu0
        %10682 = vmatprep.subr.bf16.mxu0 0
        %10683 = vmatpush1.bf16.msra.mxu0 %v10496
        %10684 = vmatprep.subr.bf16.mxu0 0
        %10685 = vmatpush1.bf16.msra.mxu0 %v10495
        %10686 = vmatprep.subr.bf16.mxu0 0
        %10687 = vmatpush1.bf16.msra.mxu0 %v10494
        %10688 = vmatprep.subr.bf16.mxu0 0
        %10689 = vmatpush1.bf16.msra.mxu0 %v10493
        %10690 = vmatprep.subr.bf16.mxu0 0
        %10691 = vmatpush1.bf16.msra.mxu0 %v10492
        %10692 = vmatprep.subr.bf16.mxu0 0
        %10693 = vmatpush1.bf16.msra.mxu0 %v10491
        %10694 = vmatprep.subr.bf16.mxu0 0
        %10695 = vmatpush1.bf16.msra.mxu0 %v10490
        %10696 = vmatprep.subr.bf16.mxu0 0
        %10697 = vmatpush1.bf16.msra.mxu0 %v10489
        %10698 = vmatprep.subr.bf16.mxu0 0
        %10699 = vmatpush2.bf16.msra.mxu0 %v10504
        %10700 = vmatprep.subr.bf16.mxu0 0
        %10701 = vmatpush2.bf16.msra.mxu0 %v10503
        %10702 = vmatprep.subr.bf16.mxu0 0
        %10703 = vmatpush2.bf16.msra.mxu0 %v10502
        %10704 = vmatprep.subr.bf16.mxu0 0
        %10705 = vmatpush2.bf16.msra.mxu0 %v10501
        %10706 = vmatprep.subr.bf16.mxu0 0
        %10707 = vmatpush2.bf16.msra.mxu0 %v10500
        %10708 = vmatprep.subr.bf16.mxu0 0
        %10709 = vmatpush2.bf16.msra.mxu0 %v10499
        %10710 = vmatprep.subr.bf16.mxu0 0
        %10711 = vmatpush2.bf16.msra.mxu0 %v10498
        %10712 = vmatprep.subr.bf16.mxu0 0
        %10713 = vmatpush2.bf16.msra.mxu0 %v10497
        %10714 = vmatprep.mubr.bf16.mxu0 %v10116
        %10715 = vmatmul.mubr.bf16.gmra.mxu0 %v10115
        %v10716 = vpop.f32.mrf.mxu0
        %v10717 = vadd.f32 %v10652, %v10716
        %v10718 = vpop.f32.mrf.mxu0
        %v10719 = vpop.f32.mrf.mxu0
        %v10720 = vadd.f32 %v10655, %v10719
        %v10721 = vpop.f32.mrf.mxu0
        %10722 = vmatprep.mubr.bf16.mxu0 %v10125
        %10723 = vmatmul.mubr.bf16.gmra.mxu0 %v10124
        %v10724 = vpop.f32.mrf.mxu0
        %v10725 = vadd.f32 %v10660, %v10724
        %v10726 = vpop.f32.mrf.mxu0
        %v10727 = vpop.f32.mrf.mxu0
        %v10728 = vadd.f32 %v10663, %v10727
        %v10729 = vpop.f32.mrf.mxu0
        %10730 = vmatprep.mubr.bf16.mxu0 %v10134
        %10731 = vmatmul.mubr.bf16.gmra.mxu0 %v10133
        %v10732 = vpop.f32.mrf.mxu0
        %v10733 = vadd.f32 %v10668, %v10732
        %v10734 = vpop.f32.mrf.mxu0
        %v10735 = vpop.f32.mrf.mxu0
        %v10736 = vadd.f32 %v10671, %v10735
        %v10737 = vpop.f32.mrf.mxu0
        %10738 = vmatprep.mubr.bf16.mxu0 %v10143
        %10739 = vmatmul.mubr.bf16.gmra.mxu0 %v10142
        %v10740 = vpop.f32.mrf.mxu0
        %v10741 = vadd.f32 %v10676, %v10740
        %v10742 = vpop.f32.mrf.mxu0
        %v10743 = vpop.f32.mrf.mxu0
        %v10744 = vadd.f32 %v10679, %v10743
        %v10745 = vpop.f32.mrf.mxu0
        %10746 = vdwg.mxu0
        %10747 = vmatprep.subr.bf16.mxu0 0
        %10748 = vmatpush1.bf16.msra.mxu0 %v10512
        %10749 = vmatprep.subr.bf16.mxu0 0
        %10750 = vmatpush1.bf16.msra.mxu0 %v10511
        %10751 = vmatprep.subr.bf16.mxu0 0
        %10752 = vmatpush1.bf16.msra.mxu0 %v10510
        %10753 = vmatprep.subr.bf16.mxu0 0
        %10754 = vmatpush1.bf16.msra.mxu0 %v10509
        %10755 = vmatprep.subr.bf16.mxu0 0
        %10756 = vmatpush1.bf16.msra.mxu0 %v10508
        %10757 = vmatprep.subr.bf16.mxu0 0
        %10758 = vmatpush1.bf16.msra.mxu0 %v10507
        %10759 = vmatprep.subr.bf16.mxu0 0
        %10760 = vmatpush1.bf16.msra.mxu0 %v10506
        %10761 = vmatprep.subr.bf16.mxu0 0
        %10762 = vmatpush1.bf16.msra.mxu0 %v10505
        %10763 = vmatprep.subr.bf16.mxu0 0
        %10764 = vmatpush2.bf16.msra.mxu0 %v10520
        %10765 = vmatprep.subr.bf16.mxu0 0
        %10766 = vmatpush2.bf16.msra.mxu0 %v10519
        %10767 = vmatprep.subr.bf16.mxu0 0
        %10768 = vmatpush2.bf16.msra.mxu0 %v10518
        %10769 = vmatprep.subr.bf16.mxu0 0
        %10770 = vmatpush2.bf16.msra.mxu0 %v10517
        %10771 = vmatprep.subr.bf16.mxu0 0
        %10772 = vmatpush2.bf16.msra.mxu0 %v10516
        %10773 = vmatprep.subr.bf16.mxu0 0
        %10774 = vmatpush2.bf16.msra.mxu0 %v10515
        %10775 = vmatprep.subr.bf16.mxu0 0
        %10776 = vmatpush2.bf16.msra.mxu0 %v10514
        %10777 = vmatprep.subr.bf16.mxu0 0
        %10778 = vmatpush2.bf16.msra.mxu0 %v10513
        %10779 = vmatprep.mubr.bf16.mxu0 %v10118
        %10780 = vmatmul.mubr.bf16.gmra.mxu0 %v10117
        %v10781 = vpop.f32.mrf.mxu0
        %v10782 = vadd.f32 %v10717, %v10781
        %v10783 = vpop.f32.mrf.mxu0
        %v10784 = vpop.f32.mrf.mxu0
        %v10785 = vadd.f32 %v10720, %v10784
        %v10786 = vpop.f32.mrf.mxu0
        %10787 = vmatprep.mubr.bf16.mxu0 %v10127
        %10788 = vmatmul.mubr.bf16.gmra.mxu0 %v10126
        %v10789 = vpop.f32.mrf.mxu0
        %v10790 = vadd.f32 %v10725, %v10789
        %v10791 = vpop.f32.mrf.mxu0
        %v10792 = vpop.f32.mrf.mxu0
        %v10793 = vadd.f32 %v10728, %v10792
        %v10794 = vpop.f32.mrf.mxu0
        %10795 = vmatprep.mubr.bf16.mxu0 %v10136
        %10796 = vmatmul.mubr.bf16.gmra.mxu0 %v10135
        %v10797 = vpop.f32.mrf.mxu0
        %v10798 = vadd.f32 %v10733, %v10797
        %v10799 = vpop.f32.mrf.mxu0
        %v10800 = vpop.f32.mrf.mxu0
        %v10801 = vadd.f32 %v10736, %v10800
        %v10802 = vpop.f32.mrf.mxu0
        %10803 = vmatprep.mubr.bf16.mxu0 %v10145
        %10804 = vmatmul.mubr.bf16.gmra.mxu0 %v10144
        %v10805 = vpop.f32.mrf.mxu0
        %v10806 = vadd.f32 %v10741, %v10805
        %v10807 = vpop.f32.mrf.mxu0
        %v10808 = vpop.f32.mrf.mxu0
        %v10809 = vadd.f32 %v10744, %v10808
        %v10810 = vpop.f32.mrf.mxu0
        %10811 = vdwg.mxu0
        %10812 = vmatprep.subr.bf16.mxu0 0
        %10813 = vmatpush1.bf16.msra.mxu0 %v10528
        %10814 = vmatprep.subr.bf16.mxu0 0
        %10815 = vmatpush1.bf16.msra.mxu0 %v10527
        %10816 = vmatprep.subr.bf16.mxu0 0
        %10817 = vmatpush1.bf16.msra.mxu0 %v10526
        %10818 = vmatprep.subr.bf16.mxu0 0
        %10819 = vmatpush1.bf16.msra.mxu0 %v10525
        %10820 = vmatprep.subr.bf16.mxu0 0
        %10821 = vmatpush1.bf16.msra.mxu0 %v10524
        %10822 = vmatprep.subr.bf16.mxu0 0
        %10823 = vmatpush1.bf16.msra.mxu0 %v10523
        %10824 = vmatprep.subr.bf16.mxu0 0
        %10825 = vmatpush1.bf16.msra.mxu0 %v10522
        %10826 = vmatprep.subr.bf16.mxu0 0
        %10827 = vmatpush1.bf16.msra.mxu0 %v10521
        %10828 = vmatprep.subr.bf16.mxu0 0
        %10829 = vmatpush2.bf16.msra.mxu0 %v10536
        %10830 = vmatprep.subr.bf16.mxu0 0
        %10831 = vmatpush2.bf16.msra.mxu0 %v10535
        %10832 = vmatprep.subr.bf16.mxu0 0
        %10833 = vmatpush2.bf16.msra.mxu0 %v10534
        %10834 = vmatprep.subr.bf16.mxu0 0
        %10835 = vmatpush2.bf16.msra.mxu0 %v10533
        %10836 = vmatprep.subr.bf16.mxu0 0
        %10837 = vmatpush2.bf16.msra.mxu0 %v10532
        %10838 = vmatprep.subr.bf16.mxu0 0
        %10839 = vmatpush2.bf16.msra.mxu0 %v10531
        %10840 = vmatprep.subr.bf16.mxu0 0
        %10841 = vmatpush2.bf16.msra.mxu0 %v10530
        %10842 = vmatprep.subr.bf16.mxu0 0
        %10843 = vmatpush2.bf16.msra.mxu0 %v10529
        %10844 = vmatprep.mubr.bf16.mxu0 %v10120
        %10845 = vmatmul.mubr.bf16.gmra.mxu0 %v10119
        %v10846 = vpop.f32.mrf.mxu0
        %v10847 = vadd.f32 %v10782, %v10846
        %v10848 = vpop.f32.mrf.mxu0
        %v10849 = vpop.f32.mrf.mxu0
        %v10850 = vadd.f32 %v10785, %v10849
        %v10851 = vpop.f32.mrf.mxu0
        %10852 = vmatprep.mubr.bf16.mxu0 %v10129
        %10853 = vmatmul.mubr.bf16.gmra.mxu0 %v10128
        %v10854 = vpop.f32.mrf.mxu0
        %v10855 = vadd.f32 %v10790, %v10854
        %v10856 = vpop.f32.mrf.mxu0
        %v10857 = vpop.f32.mrf.mxu0
        %v10858 = vadd.f32 %v10793, %v10857
        %v10859 = vpop.f32.mrf.mxu0
        %10860 = vmatprep.mubr.bf16.mxu0 %v10138
        %10861 = vmatmul.mubr.bf16.gmra.mxu0 %v10137
        %v10862 = vpop.f32.mrf.mxu0
        %v10863 = vadd.f32 %v10798, %v10862
        %v10864 = vpop.f32.mrf.mxu0
        %v10865 = vpop.f32.mrf.mxu0
        %v10866 = vadd.f32 %v10801, %v10865
        %v10867 = vpop.f32.mrf.mxu0
        %10868 = vmatprep.mubr.bf16.mxu0 %v10147
        %10869 = vmatmul.mubr.bf16.gmra.mxu0 %v10146
        %v10870 = vpop.f32.mrf.mxu0
        %v10871 = vadd.f32 %v10806, %v10870
        %v10872 = vpop.f32.mrf.mxu0
        %v10873 = vpop.f32.mrf.mxu0
        %v10874 = vadd.f32 %v10809, %v10873
        %v10875 = vpop.f32.mrf.mxu0
        %10876 = vdwg.mxu0
        %10877 = vmatprep.subr.bf16.mxu0 0
        %10878 = vmatpush1.bf16.msra.mxu0 %v10544
        %10879 = vmatprep.subr.bf16.mxu0 0
        %10880 = vmatpush1.bf16.msra.mxu0 %v10543
        %10881 = vmatprep.subr.bf16.mxu0 0
        %10882 = vmatpush1.bf16.msra.mxu0 %v10542
        %10883 = vmatprep.subr.bf16.mxu0 0
        %10884 = vmatpush1.bf16.msra.mxu0 %v10541
        %10885 = vmatprep.subr.bf16.mxu0 0
        %10886 = vmatpush1.bf16.msra.mxu0 %v10540
        %10887 = vmatprep.subr.bf16.mxu0 0
        %10888 = vmatpush1.bf16.msra.mxu0 %v10539
        %10889 = vmatprep.subr.bf16.mxu0 0
        %10890 = vmatpush1.bf16.msra.mxu0 %v10538
        %10891 = vmatprep.subr.bf16.mxu0 0
        %10892 = vmatpush1.bf16.msra.mxu0 %v10537
        %10893 = vmatprep.subr.bf16.mxu0 0
        %10894 = vmatpush2.bf16.msra.mxu0 0
        %10895 = vmatprep.subr.bf16.mxu0 0
        %10896 = vmatpush2.bf16.msra.mxu0 0
        %10897 = vmatprep.subr.bf16.mxu0 0
        %10898 = vmatpush2.bf16.msra.mxu0 0
        %10899 = vmatprep.subr.bf16.mxu0 0
        %10900 = vmatpush2.bf16.msra.mxu0 0
        %10901 = vmatprep.subr.bf16.mxu0 0
        %10902 = vmatpush2.bf16.msra.mxu0 0
        %10903 = vmatprep.subr.bf16.mxu0 0
        %10904 = vmatpush2.bf16.msra.mxu0 0
        %10905 = vmatprep.subr.bf16.mxu0 0
        %10906 = vmatpush2.bf16.msra.mxu0 0
        %10907 = vmatprep.subr.bf16.mxu0 0
        %10908 = vmatpush2.bf16.msra.mxu0 0
        %10909 = vmatprep.mubr.bf16.mxu0 0
        %10910 = vmatmul.mubr.bf16.gmra.mxu0 %v10121
        %v10911 = vpop.f32.mrf.mxu0
        %v10912 = vadd.f32 %v10847, %v10911
        %v10913 = vpop.f32.mrf.mxu0
        %v10914 = vpop.f32.mrf.mxu0
        %v10915 = vadd.f32 %v10850, %v10914
        %v10916 = vpop.f32.mrf.mxu0
        %10917 = vmatprep.mubr.bf16.mxu0 0
        %10918 = vmatmul.mubr.bf16.gmra.mxu0 %v10130
        %v10919 = vpop.f32.mrf.mxu0
        %v10920 = vadd.f32 %v10855, %v10919
        %v10921 = vpop.f32.mrf.mxu0
        %v10922 = vpop.f32.mrf.mxu0
        %v10923 = vadd.f32 %v10858, %v10922
        %v10924 = vpop.f32.mrf.mxu0
        %10925 = vmatprep.mubr.bf16.mxu0 0
        %10926 = vmatmul.mubr.bf16.gmra.mxu0 %v10139
        %v10927 = vpop.f32.mrf.mxu0
        %v10928 = vadd.f32 %v10863, %v10927
        %v10929 = vpop.f32.mrf.mxu0
        %v10930 = vpop.f32.mrf.mxu0
        %v10931 = vadd.f32 %v10866, %v10930
        %v10932 = vpop.f32.mrf.mxu0
        %10933 = vmatprep.mubr.bf16.mxu0 0
        %10934 = vmatmul.mubr.bf16.gmra.mxu0 %v10148
        %v10935 = vpop.f32.mrf.mxu0
        %v10936 = vadd.f32 %v10871, %v10935
        %v10937 = vpop.f32.mrf.mxu0
        %v10938 = vpop.f32.mrf.mxu0
        %v10939 = vadd.f32 %v10874, %v10938
        %v10940 = vpop.f32.mrf.mxu0
        %10941 = vdwg.mxu0
        %10942 = vst [vmem:[%s452] sm:$0xff] %v10912
        %10943 = vst [vmem:[%s452 + $0x8] sm:$0xff] %v10915
        %10944 = vst [vmem:[%s452 + $0x10] sm:$0xff] %v10920
        %10945 = vst [vmem:[%s452 + $0x18] sm:$0xff] %v10923
        %10946 = vst [vmem:[%s452 + $0x20] sm:$0xff] %v10928
        %10947 = vst [vmem:[%s452 + $0x28] sm:$0xff] %v10931
        %10948 = vst [vmem:[%s452 + $0x30] sm:$0xff] %v10936
        %10949 = vst [vmem:[%s452 + $0x38] sm:$0xff] %v10939
        %s10950 = sand.u32 %s272, 1
        %s10951 = scalar_lea.sflag [#allocation7], %s10950
        %s10952 = sand.u32 %s272, 1
        %s10953 = smul.addr %s10952, 64
        %s10954 = scalar_lea.vmem [#allocation14], %s10953
        // Predicated region
        $region85: #{tpu_custom_call.1} parent=63 // pred_check
          %p10955 = pneg %p282
        $region86: #{tpu_custom_call.1} parent=63 // pred_check_branch
          %10957 = sbr.rel (%p10955) target = $region88
        $region87: #{tpu_custom_call.1} parent=63 // pred_region
          %s10959 = ssub.s32 1024, 1024
          %10960 = vsyncadd %s10951, %s10959
          %s10961 = smul.addr %s28, 8
          %s10962 = smul.addr %s10961, 128
          %s10963 = scalar_lea.hbm %s11, %s10962
          %s10964 = sshll.u32 %s10954, 4
          %s10965 = int_to_ptr.vmem [resolvable:$true] %s10964
          %10970 = dma.vmem_to_hbm [thread:$0]  %s10965, 1024, %s10963, %s10951, 128, 128, 8
        $region88: #{tpu_custom_call.1} parent=63 // pred_fallthru
          _
      $region64: #{tpu_custom_call.1} parent=5 // pred_fallthru
        _
      %p10971 = scmp.le.s32.totalorder 2, %s23
      // Predicated region
      $region89: #{tpu_custom_call.1} parent=5 // pred_check
        %p10972 = pneg %p10971
      $region90: #{tpu_custom_call.1} parent=5 // pred_check_branch
        %10974 = sbr.rel (%p10972) target = $region92
      $region91: #{tpu_custom_call.1} parent=5 // pred_region
        %s10975 = ssub.s32 %s23, 2
        // Predicated region
        $region93: #{tpu_custom_call.1} parent=91 // pred_check
          %p10976 = pneg %p288
        $region94: #{tpu_custom_call.1} parent=91 // pred_check_branch
          %10978 = sbr.rel (%p10976) target = $region96
        $region95: #{tpu_custom_call.1} parent=91 // pred_region
          %s10979 = sand.u32 %s273, 1
          %s10980 = scalar_lea.sflag [#allocation7], %s10979
          %s10981 = sand.u32 %s273, 1
          %s10982 = smul.addr %s10981, 64
          %s10983 = scalar_lea.vmem [#allocation14], %s10982
          %10984 = dma.done %s10980, 1024
        $region96: #{tpu_custom_call.1} parent=91 // pred_fallthru
          _
      $region92: #{tpu_custom_call.1} parent=5 // pred_fallthru
        _
    $region6: #{tpu_custom_call.1} parent=1 // loop_footer
      %s27 = sadd.s32 1, %s23
    $region7: #{tpu_custom_call.1} parent=1 // loop_footer_branch
      %22 = sbr.rel target = $region3
    $region8: #{tpu_custom_call.1} parent=1 // loop_exit
      _
    %10985 = vsyncpa [#allocation6], 1
    %s10986 = scalar_lea.sflag [#allocation6], 1
    %10987 = vsyncpa %s10986, 1
    %10988 = vsyncpa [#allocation9], 1
    %10989 = vsyncpa [#allocation12], 1
    %10990 = vsyncpa [#allocation7], 1
    %s10991 = scalar_lea.sflag [#allocation7], 1
    %10992 = vsyncpa %s10991, 1

</llo_original>
